<compile_context>
chip_gen: v6e
topology: v6e:2x2x1
jax: 0.10.0
libtpu: 0.0.40
codegen_flags: <defaults>
</compile_context>

<pallas_src>
import functools

import jax
import jax.numpy as jnp
from jax.experimental import pallas as pl
from jax.experimental.pallas import tpu as pltpu

NUM_FTRS = 2048   # resnet152.fc.in_features
HIDDEN = 512      # class_fc1 out_features
NUM_OUT = 9       # class_fc2 out_features (8 species + 1 length)
OUT_PAD = 128     # lane-dense padded output width (sliced to 9 in wrapper)
P_DROP = 0.05


def _fused_kernel(patches_ref, convw_ref, convb_ref, w1_hbm_ref, b1_ref,
                  mask_ref, w2_ref, b2_ref, out_ref,
                  feat_ref, w1_vmem_ref, w1_sem, *, hw):
    """Streamed im2col-conv -> ReLU -> GAP, then fc1 -> ReLU -> dropout ->
    fc2 -> (log_softmax | ReLU) head at the last grid step."""
    c = pl.program_id(0)
    nc = pl.num_programs(0)
    n, tms, _ = patches_ref.shape

    @pl.when(c == 0)
    def _():
        feat_ref[...] = jnp.zeros_like(feat_ref)
        # Kick off the 2 MiB fc1-weight HBM->VMEM copy now; it completes while
        # the conv chunks stream through the MXU and is awaited before fc1.
        pltpu.make_async_copy(w1_hbm_ref, w1_vmem_ref, w1_sem).start()

    # ---- backbone stand-in, one spatial chunk per grid step --------------
    # patches block: (N, TMS, 27) bf16.  K=27 is unpadded; Mosaic masks the
    # lane-padded contraction remainder for dot operands.
    convw = convw_ref[...]            # (27, 2048) bf16
    convb = convb_ref[...]            # (1, 2048) f32
    for i in range(n):                # n is a small static batch size
        xi = patches_ref[i]                                          # (TMS, 27)
        ci = jnp.dot(xi, convw, preferred_element_type=jnp.float32)  # (TMS, 2048)
        ci = jnp.maximum(ci + convb, 0.0)
        # accumulate pooled sums per batch row (divide by hw at the end)
        feat_ref[pl.ds(i, 1), :] += jnp.sum(ci, axis=0, keepdims=True)

    # ---- classifier head, only on the last chunk -------------------------
    @pl.when(c == nc - 1)
    def _():
        pltpu.make_async_copy(w1_hbm_ref, w1_vmem_ref, w1_sem).wait()

        feat = (feat_ref[...] * jnp.float32(1.0 / hw)).astype(jnp.bfloat16)

        # class_fc1 -> ReLU  (MXU in bf16, epilogue in f32)
        h = jnp.dot(feat, w1_vmem_ref[...], preferred_element_type=jnp.float32)
        h = jnp.maximum(h + b1_ref[...], 0.0)                 # (N, 512) f32

        # Dropout(p=0.05): mask already holds keep/(1-p) (inverted dropout)
        h = h * mask_ref[...]

        # class_fc2 (output columns padded to 128 for a lane-dense store)
        logits = jnp.dot(h.astype(jnp.bfloat16), w2_ref[...],
                         preferred_element_type=jnp.float32) + b2_ref[...]

        col = jax.lax.broadcasted_iota(jnp.int32, logits.shape, 1)
        is_species = col < 8

        # log_softmax over the 8 species columns only (nn.LogSoftmax, dim=1).
        # Non-species lanes get -1e30 before exp, so no inf is ever produced.
        masked = jnp.where(is_species, logits, jnp.float32(-1e30))
        m = jnp.max(masked, axis=1, keepdims=True)
        p = jnp.exp(masked - m)
        lse = jnp.log(jnp.sum(p, axis=1, keepdims=True))

        # species cols -> log-probs, col 8 -> ReLU(length); padded cols are
        # junk (zero here) and sliced off in the wrapper.
        out_ref[...] = jnp.where(is_species, logits - m - lse,
                                 jnp.maximum(logits, 0.0))


def _spatial_chunk(hw):
    # largest spatial chunk (rows per image per grid step) that divides hw
    for t in (128, 64, 32, 16, 8):
        if hw % t == 0:
            return t
    return hw


def fishnet_forward(x_nchw, conv_w, conv_b, w1, b1, w2, b2, drop_key):
    n, cin, h, w = x_nchw.shape
    hw = h * w
    k = 9 * cin

    # ----- layout plumbing in XLA (wrapper): im2col + bf16 casts ----------
    # TODO(synk): at real ResNet resolutions, move im2col into the kernel as
    # 9 shifted reads (or use lax.conv_general_dilated_patches) to avoid the
    # wrapper-side HBM copy.
    xt = jnp.transpose(x_nchw, (0, 2, 3, 1))                   # NCHW -> NHWC
    xpad = jnp.pad(xt, ((0, 0), (1, 1), (1, 1), (0, 0)))       # pad=1, 3x3
    taps = [xpad[:, kh:kh + h, kw:kw + w, :]
            for kh in range(3) for kw in range(3)]
    patches = jnp.concatenate(taps, axis=-1).reshape(n, hw, k)
    patches = patches.astype(jnp.bfloat16)                     # (N, HW, 27)

    convw = conv_w.reshape(k, NUM_FTRS).astype(jnp.bfloat16)   # (27, 2048)
    w1_b = w1.astype(jnp.bfloat16)                             # (2048, 512)
    w2_p = jnp.pad(w2, ((0, 0), (0, OUT_PAD - NUM_OUT))).astype(jnp.bfloat16)
    b2_p = jnp.pad(b2, ((0, 0), (0, OUT_PAD - NUM_OUT)))

    # Dropout keep mask with the 1/(1-p) scale folded in (inverted dropout).
    # Generated with jax.random in the wrapper: pltpu's in-kernel PRNG has no
    # interpret-mode lowering, and the mask is only N*512 floats.
    keep = jax.random.bernoulli(drop_key, 1.0 - P_DROP, (n, HIDDEN))
    mask = keep.astype(jnp.float32) * jnp.float32(1.0 / (1.0 - P_DROP))

    tms = _spatial_chunk(hw)
    assert hw % tms == 0
    nc = hw // tms

    kernel = functools.partial(_fused_kernel, hw=hw)

    out_pad = pl.pallas_call(
        kernel,
        out_shape=jax.ShapeDtypeStruct((n, OUT_PAD), jnp.float32),
        grid_spec=pltpu.PrefetchScalarGridSpec(
            num_scalar_prefetch=0,
            grid=(nc,),
            in_specs=[
                pl.BlockSpec((n, tms, k), lambda c: (0, c, 0)),     # patches
                pl.BlockSpec((k, NUM_FTRS), lambda c: (0, 0)),      # conv w
                pl.BlockSpec((1, NUM_FTRS), lambda c: (0, 0)),      # conv b
                pl.BlockSpec(memory_space=pl.ANY),                  # w1 (HBM)
                pl.BlockSpec((1, HIDDEN), lambda c: (0, 0)),        # b1
                pl.BlockSpec((n, HIDDEN), lambda c: (0, 0)),        # dropout mask
                pl.BlockSpec((HIDDEN, OUT_PAD), lambda c: (0, 0)),  # w2 (padded)
                pl.BlockSpec((1, OUT_PAD), lambda c: (0, 0)),       # b2 (padded)
            ],
            out_specs=pl.BlockSpec((n, OUT_PAD), lambda c: (0, 0)),
            scratch_shapes=[
                pltpu.VMEM((n, NUM_FTRS), jnp.float32),         # pooled-sum acc
                pltpu.VMEM((NUM_FTRS, HIDDEN), jnp.bfloat16),   # w1 landing buf
                pltpu.SemaphoreType.DMA(()),                    # w1 copy sem
            ]),
        # Reduction axis (pooled-sum accumulator lives across grid steps).
        # TODO(synk): for v7x, split the spatial axis across the 2 TensorCores
        # with per-core partial pooled sums once NHW is non-trivial.
        compiler_params=pltpu.CompilerParams(
            dimension_semantics=("arbitrary",),
            vmem_limit_bytes=16 << 20),
    )(patches, convw, conv_b, w1_b, b1, mask, w2_p, b2_p)

    species_length = out_pad[:, :NUM_OUT]
    # second return value of forward(): Variable(FloatTensor([0.0]))
    return species_length, jnp.array([0.0], dtype=jnp.float32)


fishnet_forward = jax.jit(fishnet_forward)


if __name__ == "__main__":
    key = jax.random.PRNGKey(0)
    ks = jax.random.split(key, 8)

    N, CIN, H, W = 2, 3, 16, 16
    x = jax.random.normal(ks[0], (N, CIN, H, W), jnp.float32)

    # deterministic synthetic parameters
    conv_w = jax.random.normal(ks[1], (3, 3, CIN, NUM_FTRS), jnp.float32) * 0.05
    conv_b = jnp.zeros((1, NUM_FTRS), jnp.float32)
    w1 = jax.random.normal(ks[2], (NUM_FTRS, HIDDEN), jnp.float32) * (NUM_FTRS ** -0.5)
    b1 = jax.random.normal(ks[3], (1, HIDDEN), jnp.float32) * 0.01
    w2 = jax.random.normal(ks[4], (HIDDEN, NUM_OUT), jnp.float32) * (HIDDEN ** -0.5)
    b2 = jax.random.normal(ks[5], (1, NUM_OUT), jnp.float32) * 0.01

    drop_key = ks[6]   # dropout key (fresh randomness per call)

    species_length, zero = fishnet_forward(x, conv_w, conv_b, w1, b1, w2, b2, drop_key)
    jax.block_until_ready(species_length)
    jax.block_until_ready(zero)

    assert species_length.shape == (N, NUM_OUT)
    assert species_length.dtype == jnp.float32
    # sanity: species log-probs exponentiate-and-sum to ~1, length is >= 0
    probs_sum = jnp.sum(jnp.exp(species_length[:, :8]), axis=1)
    assert bool(jnp.all(jnp.abs(probs_sum - 1.0) < 1e-3))
    assert bool(jnp.all(species_length[:, 8] >= 0.0))
    assert zero.shape == (1,)

    print("KERNEL_OK")
</pallas_src>

<mosaic_0001>
module attributes {stable_mosaic.version = 11 : i64} {
  func.func @_fused_kernel(%arg0: i32, %arg1: memref<2x128x27xbf16, #tpu.memory_space<vmem>>, %arg2: memref<27x2048xbf16, #tpu.memory_space<vmem>>, %arg3: memref<1x2048xf32, #tpu.memory_space<vmem>>, %arg4: memref<2048x512xbf16, #tpu.memory_space<any>>, %arg5: memref<1x512xf32, #tpu.memory_space<vmem>>, %arg6: memref<2x512xf32, #tpu.memory_space<vmem>>, %arg7: memref<512x128xbf16, #tpu.memory_space<vmem>>, %arg8: memref<1x128xf32, #tpu.memory_space<vmem>>, %arg9: memref<2x128xf32, #tpu.memory_space<vmem>>, %arg10: memref<2x2048xf32, #tpu.memory_space<vmem>>, %arg11: memref<2048x512xbf16, #tpu.memory_space<vmem>>, %arg12: memref<!tpu.dma_semaphore, #tpu.memory_space<semaphore_mem>>) attributes {dimension_semantics = [#tpu.dimension_semantics<arbitrary>], iteration_bounds = array<i64: 2>, scalar_prefetch = 0 : i64, scratch_operands = 3 : i64, tpu.core_type = #tpu.core_type<tc>, window_params = [{transform_indices = @transform_0, window_bounds = array<i64: 2, 128, 27>}, {pipeline_mode = #tpu.pipeline_mode<synchronous>, transform_indices = @transform_1, window_bounds = array<i64: 27, 2048>}, {pipeline_mode = #tpu.pipeline_mode<synchronous>, transform_indices = @transform_2, window_bounds = array<i64: 1, 2048>}, {}, {pipeline_mode = #tpu.pipeline_mode<synchronous>, transform_indices = @transform_4, window_bounds = array<i64: 1, 512>}, {pipeline_mode = #tpu.pipeline_mode<synchronous>, transform_indices = @transform_5, window_bounds = array<i64: 2, 512>}, {pipeline_mode = #tpu.pipeline_mode<synchronous>, transform_indices = @transform_6, window_bounds = array<i64: 512, 128>}, {pipeline_mode = #tpu.pipeline_mode<synchronous>, transform_indices = @transform_7, window_bounds = array<i64: 1, 128>}, {pipeline_mode = #tpu.pipeline_mode<synchronous>, transform_indices = @transform_8, window_bounds = array<i64: 2, 128>}]} {
    %c0_i32 = arith.constant 0 : i32
    %0 = arith.cmpi eq, %arg0, %c0_i32 : i32
    %1 = arith.extui %0 : i1 to i32
    %c0_i32_0 = arith.constant 0 : i32
    %2 = arith.cmpi ne, %1, %c0_i32_0 : i32
    scf.if %2 {
      %cst_23 = arith.constant 0.000000e+00 : f32
      %32 = vector.broadcast %cst_23 : f32 to vector<2x2048xf32>
      %c0_24 = arith.constant 0 : index
      %c0_25 = arith.constant 0 : index
      %33 = vector.load %arg10[%c0_24, %c0_25] : memref<2x2048xf32, #tpu.memory_space<vmem>>, vector<2x2048xf32>
      tpu.vector_store %arg10[%c0_24, %c0_25], %32 {strides = array<i32>} : memref<2x2048xf32, #tpu.memory_space<vmem>>, vector<2x2048xf32>,
      tpu.enqueue_dma source(%arg4 : memref<2048x512xbf16, #tpu.memory_space<any>>) target(%arg11 : memref<2048x512xbf16, #tpu.memory_space<vmem>>) target_semaphore(%arg12 : memref<!tpu.dma_semaphore, #tpu.memory_space<semaphore_mem>>)
    } else {
    }
    %c0 = arith.constant 0 : index
    %c0_1 = arith.constant 0 : index
    %3 = vector.load %arg2[%c0, %c0_1] : memref<27x2048xbf16, #tpu.memory_space<vmem>>, vector<27x2048xbf16>
    %c0_2 = arith.constant 0 : index
    %c0_3 = arith.constant 0 : index
    %4 = vector.load %arg3[%c0_2, %c0_3] : memref<1x2048xf32, #tpu.memory_space<vmem>>, vector<1x2048xf32>
    %c0_4 = arith.constant 0 : index
    %c0_5 = arith.constant 0 : index
    %c0_6 = arith.constant 0 : index
    %5 = vector.load %arg1[%c0_4, %c0_5, %c0_6] : memref<2x128x27xbf16, #tpu.memory_space<vmem>>, vector<1x128x27xbf16>
    %6 = vector.shape_cast %5 : vector<1x128x27xbf16> to vector<128x27xbf16>
    %cst = arith.constant dense<0.000000e+00> : vector<128x2048xf32>
    %7 = tpu.matmul %6, %3, %cst {dimension_numbers = #tpu.dot_dimension_numbers<[1], [0], [0], [1], [0, 0, 1, 1], [], []>} : vector<128x27xbf16>, vector<27x2048xbf16>, vector<128x2048xf32> -> vector<128x2048xf32>
    %8 = vector.broadcast %4 : vector<1x2048xf32> to vector<128x2048xf32>
    %9 = arith.addf %7, %8 : vector<128x2048xf32>
    %cst_7 = arith.constant 0.000000e+00 : f32
    %10 = vector.broadcast %cst_7 : f32 to vector<128x2048xf32>
    %11 = arith.maximumf %9, %10 : vector<128x2048xf32>
    %c0_8 = arith.constant 0 : index
    %c0_9 = arith.constant 0 : index
    %12 = vector.load %arg10[%c0_8, %c0_9] : memref<2x2048xf32, #tpu.memory_space<vmem>>, vector<1x2048xf32>
    %cst_10 = arith.constant dense<0.000000e+00> : vector<2048xf32>
    %13 = vector.multi_reduction <add>, %11, %cst_10 [0] : vector<128x2048xf32> to vector<2048xf32>
    %14 = vector.shape_cast %13 : vector<2048xf32> to vector<1x2048xf32>
    %15 = arith.addf %12, %14 : vector<1x2048xf32>
    %c0_11 = arith.constant 0 : index
    %c0_12 = arith.constant 0 : index
    %16 = vector.load %arg10[%c0_11, %c0_12] : memref<2x2048xf32, #tpu.memory_space<vmem>>, vector<1x2048xf32>
    tpu.vector_store %arg10[%c0_11, %c0_12], %15 {strides = array<i32>} : memref<2x2048xf32, #tpu.memory_space<vmem>>, vector<1x2048xf32>,
    %c1 = arith.constant 1 : index
    %c0_13 = arith.constant 0 : index
    %c0_14 = arith.constant 0 : index
    %17 = vector.load %arg1[%c1, %c0_13, %c0_14] : memref<2x128x27xbf16, #tpu.memory_space<vmem>>, vector<1x128x27xbf16>
    %18 = vector.shape_cast %17 : vector<1x128x27xbf16> to vector<128x27xbf16>
    %cst_15 = arith.constant dense<0.000000e+00> : vector<128x2048xf32>
    %19 = tpu.matmul %18, %3, %cst_15 {dimension_numbers = #tpu.dot_dimension_numbers<[1], [0], [0], [1], [0, 0, 1, 1], [], []>} : vector<128x27xbf16>, vector<27x2048xbf16>, vector<128x2048xf32> -> vector<128x2048xf32>
    %20 = vector.broadcast %4 : vector<1x2048xf32> to vector<128x2048xf32>
    %21 = arith.addf %19, %20 : vector<128x2048xf32>
    %cst_16 = arith.constant 0.000000e+00 : f32
    %22 = vector.broadcast %cst_16 : f32 to vector<128x2048xf32>
    %23 = arith.maximumf %21, %22 : vector<128x2048xf32>
    %c1_17 = arith.constant 1 : index
    %c0_18 = arith.constant 0 : index
    %24 = vector.load %arg10[%c1_17, %c0_18] : memref<2x2048xf32, #tpu.memory_space<vmem>>, vector<1x2048xf32>
    %cst_19 = arith.constant dense<0.000000e+00> : vector<2048xf32>
    %25 = vector.multi_reduction <add>, %23, %cst_19 [0] : vector<128x2048xf32> to vector<2048xf32>
    %26 = vector.shape_cast %25 : vector<2048xf32> to vector<1x2048xf32>
    %27 = arith.addf %24, %26 : vector<1x2048xf32>
    %c1_20 = arith.constant 1 : index
    %c0_21 = arith.constant 0 : index
    %28 = vector.load %arg10[%c1_20, %c0_21] : memref<2x2048xf32, #tpu.memory_space<vmem>>, vector<1x2048xf32>
    tpu.vector_store %arg10[%c1_20, %c0_21], %27 {strides = array<i32>} : memref<2x2048xf32, #tpu.memory_space<vmem>>, vector<1x2048xf32>,
    %c1_i32 = arith.constant 1 : i32
    %29 = arith.cmpi eq, %arg0, %c1_i32 : i32
    %30 = arith.extui %29 : i1 to i32
    %c0_i32_22 = arith.constant 0 : i32
    %31 = arith.cmpi ne, %30, %c0_i32_22 : i32
    scf.if %31 {
      tpu.wait_dma2 semaphore(%arg12 : memref<!tpu.dma_semaphore, #tpu.memory_space<semaphore_mem>>) src(%arg4 : memref<2048x512xbf16, #tpu.memory_space<any>>) dst(%arg11 : memref<2048x512xbf16, #tpu.memory_space<vmem>>)
      %c0_23 = arith.constant 0 : index
      %c0_24 = arith.constant 0 : index
      %32 = vector.load %arg10[%c0_23, %c0_24] : memref<2x2048xf32, #tpu.memory_space<vmem>>, vector<2x2048xf32>
      %cst_25 = arith.constant 3.906250e-03 : f32
      %33 = vector.broadcast %cst_25 : f32 to vector<2x2048xf32>
      %34 = arith.mulf %32, %33 : vector<2x2048xf32>
      %35 = arith.truncf %34 : vector<2x2048xf32> to vector<2x2048xbf16>
      %c0_26 = arith.constant 0 : index
      %c0_27 = arith.constant 0 : index
      %36 = vector.load %arg11[%c0_26, %c0_27] : memref<2048x512xbf16, #tpu.memory_space<vmem>>, vector<2048x512xbf16>
      %cst_28 = arith.constant dense<0.000000e+00> : vector<2x512xf32>
      %37 = tpu.matmul %35, %36, %cst_28 {dimension_numbers = #tpu.dot_dimension_numbers<[1], [0], [0], [1], [0, 0, 1, 1], [], []>} : vector<2x2048xbf16>, vector<2048x512xbf16>, vector<2x512xf32> -> vector<2x512xf32>
      %c0_29 = arith.constant 0 : index
      %c0_30 = arith.constant 0 : index
      %38 = vector.load %arg5[%c0_29, %c0_30] : memref<1x512xf32, #tpu.memory_space<vmem>>, vector<1x512xf32>
      %39 = vector.broadcast %38 : vector<1x512xf32> to vector<2x512xf32>
      %40 = arith.addf %37, %39 : vector<2x512xf32>
      %cst_31 = arith.constant 0.000000e+00 : f32
      %41 = vector.broadcast %cst_31 : f32 to vector<2x512xf32>
      %42 = arith.maximumf %40, %41 : vector<2x512xf32>
      %c0_32 = arith.constant 0 : index
      %c0_33 = arith.constant 0 : index
      %43 = vector.load %arg6[%c0_32, %c0_33] : memref<2x512xf32, #tpu.memory_space<vmem>>, vector<2x512xf32>
      %44 = arith.mulf %42, %43 : vector<2x512xf32>
      %45 = arith.truncf %44 : vector<2x512xf32> to vector<2x512xbf16>
      %c0_34 = arith.constant 0 : index
      %c0_35 = arith.constant 0 : index
      %46 = vector.load %arg7[%c0_34, %c0_35] : memref<512x128xbf16, #tpu.memory_space<vmem>>, vector<512x128xbf16>
      %cst_36 = arith.constant dense<0.000000e+00> : vector<2x128xf32>
      %47 = tpu.matmul %45, %46, %cst_36 {dimension_numbers = #tpu.dot_dimension_numbers<[1], [0], [0], [1], [0, 0, 1, 1], [], []>} : vector<2x512xbf16>, vector<512x128xbf16>, vector<2x128xf32> -> vector<2x128xf32>
      %c0_37 = arith.constant 0 : index
      %c0_38 = arith.constant 0 : index
      %48 = vector.load %arg8[%c0_37, %c0_38] : memref<1x128xf32, #tpu.memory_space<vmem>>, vector<1x128xf32>
      %49 = vector.broadcast %48 : vector<1x128xf32> to vector<2x128xf32>
      %50 = arith.addf %47, %49 : vector<2x128xf32>
      %51 = tpu.iota {dimensions = array<i32: 1>} : vector<2x128xi32>
      %c8_i32 = arith.constant 8 : i32
      %52 = vector.broadcast %c8_i32 : i32 to vector<2x128xi32>
      %53 = arith.cmpi slt, %51, %52 : vector<2x128xi32>
      %cst_39 = arith.constant -1.000000e+30 : f32
      %54 = vector.broadcast %cst_39 : f32 to vector<2x128xf32>
      %55 = arith.select %53, %50, %54 : vector<2x128xi1>, vector<2x128xf32>
      %cst_40 = arith.constant dense<0xFF800000> : vector<2xf32>
      %56 = vector.multi_reduction <maximumf>, %55, %cst_40 [1] : vector<2x128xf32> to vector<2xf32>
      %57 = vector.shape_cast %56 : vector<2xf32> to vector<2x1xf32>
      %58 = vector.broadcast %57 : vector<2x1xf32> to vector<2x128xf32>
      %59 = arith.subf %55, %58 : vector<2x128xf32>
      %60 = math.exp %59 : vector<2x128xf32>
      %cst_41 = arith.constant dense<0.000000e+00> : vector<2xf32>
      %61 = vector.multi_reduction <add>, %60, %cst_41 [1] : vector<2x128xf32> to vector<2xf32>
      %62 = vector.shape_cast %61 : vector<2xf32> to vector<2x1xf32>
      %63 = math.log %62 : vector<2x1xf32>
      %64 = vector.broadcast %57 : vector<2x1xf32> to vector<2x128xf32>
      %65 = arith.subf %50, %64 : vector<2x128xf32>
      %66 = vector.broadcast %63 : vector<2x1xf32> to vector<2x128xf32>
      %67 = arith.subf %65, %66 : vector<2x128xf32>
      %cst_42 = arith.constant 0.000000e+00 : f32
      %68 = vector.broadcast %cst_42 : f32 to vector<2x128xf32>
      %69 = arith.maximumf %50, %68 : vector<2x128xf32>
      %70 = arith.select %53, %67, %69 : vector<2x128xi1>, vector<2x128xf32>
      %c0_43 = arith.constant 0 : index
      %c0_44 = arith.constant 0 : index
      %71 = vector.load %arg9[%c0_43, %c0_44] : memref<2x128xf32, #tpu.memory_space<vmem>>, vector<2x128xf32>
      tpu.vector_store %arg9[%c0_43, %c0_44], %70 {strides = array<i32>} : memref<2x128xf32, #tpu.memory_space<vmem>>, vector<2x128xf32>,
    } else {
    }
    return
  }
  func.func @transform_0(%arg0: i32) -> (i32, i32, i32) {
    %c0_i32 = arith.constant 0 : i32
    %c0_i32_0 = arith.constant 0 : i32
    %c0_i32_1 = arith.constant 0 : i32
    return %c0_i32, %arg0, %c0_i32_0 : i32, i32, i32
  }
  func.func @transform_1(%arg0: i32) -> (i32, i32) {
    %c0_i32 = arith.constant 0 : i32
    %c0_i32_0 = arith.constant 0 : i32
    %c0_i32_1 = arith.constant 0 : i32
    return %c0_i32, %c0_i32_0 : i32, i32
  }
  func.func @transform_2(%arg0: i32) -> (i32, i32) {
    %c0_i32 = arith.constant 0 : i32
    %c0_i32_0 = arith.constant 0 : i32
    %c0_i32_1 = arith.constant 0 : i32
    return %c0_i32, %c0_i32_0 : i32, i32
  }
  func.func @transform_4(%arg0: i32) -> (i32, i32) {
    %c0_i32 = arith.constant 0 : i32
    %c0_i32_0 = arith.constant 0 : i32
    %c0_i32_1 = arith.constant 0 : i32
    return %c0_i32, %c0_i32_0 : i32, i32
  }
  func.func @transform_5(%arg0: i32) -> (i32, i32) {
    %c0_i32 = arith.constant 0 : i32
    %c0_i32_0 = arith.constant 0 : i32
    %c0_i32_1 = arith.constant 0 : i32
    return %c0_i32, %c0_i32_0 : i32, i32
  }
  func.func @transform_6(%arg0: i32) -> (i32, i32) {
    %c0_i32 = arith.constant 0 : i32
    %c0_i32_0 = arith.constant 0 : i32
    %c0_i32_1 = arith.constant 0 : i32
    return %c0_i32, %c0_i32_0 : i32, i32
  }
  func.func @transform_7(%arg0: i32) -> (i32, i32) {
    %c0_i32 = arith.constant 0 : i32
    %c0_i32_0 = arith.constant 0 : i32
    %c0_i32_1 = arith.constant 0 : i32
    return %c0_i32, %c0_i32_0 : i32, i32
  }
  func.func @transform_8(%arg0: i32) -> (i32, i32) {
    %c0_i32 = arith.constant 0 : i32
    %c0_i32_0 = arith.constant 0 : i32
    %c0_i32_1 = arith.constant 0 : i32
    return %c0_i32, %c0_i32_0 : i32, i32
  }
}

</mosaic_0001>

<llo_original>
// kernel: fishnet_forward.1
$region0: #{fishnet_forward.1}
  #allocation0 [shape = 'u32[]', space=smem, size = 0x4, offset = 0x4, fixed_abs, tag = 'smem constant byte address 0x4 - core index']
  #allocation1 [shape = 'u32[144,128]{1,0:T(1,128)}', space=vmem, size = 0x12000, scoped, tag = 'internal scratch']
  #allocation2 [shape = 'f32[2,2048]{1,0:T(2,128)}', space=vmem, size = 0x4000, scoped, tag = 'scratch operand']
  #allocation3 [shape = 'bf16[2048,512]{1,0:T(8,128)(2,1)}', space=vmem, size = 0x200000, scoped, tag = 'scratch operand']
  #allocation4 [shape = 's32[1]{0}', space=sflag, size = 0x4, scoped, tag = 'scratch operand']
  #allocation8 [shape = 's32[]', space=sflag, size = 0x4, offset = 0, fixed_abs, tag = 'sflag constant byte address 0x0 - dummy sync flag']
  %s0 = inlined_call_operand.vmem [shape: bf16[2,256,27], index: 0, kind: input, shape index: {}]
  %s1 = inlined_call_operand.vmem [shape: bf16[27,2048], index: 1, kind: input, shape index: {}]
  %s2 = inlined_call_operand.vmem [shape: f32[1,2048], index: 2, kind: input, shape index: {}]
  %s3 = inlined_call_operand.vmem [shape: bf16[2048,512], index: 3, kind: input, shape index: {}]
  %s4 = inlined_call_operand.vmem [shape: f32[1,512], index: 4, kind: input, shape index: {}]
  %s5 = inlined_call_operand.vmem [shape: f32[2,512], index: 5, kind: input, shape index: {}]
  %s6 = inlined_call_operand.vmem [shape: bf16[512,128], index: 6, kind: input, shape index: {}]
  %s7 = inlined_call_operand.vmem [shape: f32[1,128], index: 7, kind: input, shape index: {}]
  %s8 = inlined_call_operand.hbm [shape: f32[2,128], index: 8, kind: output, shape index: {}]
  %s9 = sld [smem:[#allocation0]]
  $region144: #{fishnet_forward.1} parent=0
    _
  %s11 = ssub.s32 1, %s9
  %s12 = scalar_select 0, %s11, %s9
  $region1: #{fishnet_forward.1} parent=0
    #allocation5 [shape = 'u8[131072]{0}', space=vmem, size = 0x20000, scoped, tag = 'input window, operand 0']
    #allocation6 [shape = 'u8[1024]{0}', space=vmem, size = 0x400, scoped, tag = 'output window, operand 0, single buffered']
    #allocation7 [shape = 's32[2]{0}', space=sflag, size = 0x8, scoped, tag = 'scoped memory for fishnet_forward.1']
    %13 = vsyncpa [#allocation7], 0
    loop: start=0, step=1, limit=4
    $region2: #{fishnet_forward.1} parent=1 // loop_pre_header
      _
    $region3: #{fishnet_forward.1} parent=1 // loop_header
      %s15 = sphi 0, %s19
      %p16 = scmp.ge.s32.totalorder %s15, 4
      %s25 = sphi 0, %s27
      %s28 = sphi 0, %s25
      %s29 = sphi 0, %s28
      %s45 = sphi 0, %s29
      %s49 = sphi 0, %s49
      %s51 = sphi 0, %s49
      %s52 = sphi 0, %s51
      %s66 = sphi 0, %s52
      %s70 = sphi 0, %s70
      %s72 = sphi 0, %s70
      %s73 = sphi 0, %s72
      %s87 = sphi 0, %s73
      %s91 = sphi 0, %s91
      %s93 = sphi 0, %s91
      %s94 = sphi 0, %s93
      %s108 = sphi 0, %s94
      %s112 = sphi 0, %s112
      %s114 = sphi 0, %s112
      %s115 = sphi 0, %s114
      %s129 = sphi 0, %s115
      %s133 = sphi 0, %s133
      %s135 = sphi 0, %s133
      %s136 = sphi 0, %s135
      %s150 = sphi 0, %s136
      %s154 = sphi 0, %s154
      %s156 = sphi 0, %s154
      %s157 = sphi 0, %s156
      %s171 = sphi 0, %s157
      %s175 = sphi 0, %s175
      %s177 = sphi 0, %s175
      %s178 = sphi 0, %s177
      %s192 = sphi 0, %s178
    $region4: #{fishnet_forward.1} parent=1 // loop_header_branch
      %18 = sbr.rel (%p16) target = $region8
    $region5: #{fishnet_forward.1} parent=1 // loop_body
      %s20 = ssub.s32 %s15, 1
      %s21 = ssub.s32 %s15, 2
      %s22 = sadd.s32 %s15, 1
      %s23 = ssub.s32 %s15, %s22
      %p24 = scmp.eq.s32.totalorder %s23, 0
      %s26 = sadd.s32 %s25, 1
      %s27 = scalar_select %p24, %s25, %s26
      %p30 = pneg %p24
      %p31 = scmp.eq.s32.totalorder %s15, 1
      %p32 = por %p30, %p31
      %p33 = scmp.ne.s32.totalorder %s25, %s28
      %p34 = scmp.eq.s32.totalorder %s15, 0
      %p35 = por %p33, %p34
      %p36 = scmp.ne.s32.totalorder %s25, %s28
      %p37 = scmp.eq.s32.totalorder %s20, 1
      %p38 = por %p36, %p37
      %p39 = scmp.ne.s32.totalorder %s28, %s29
      %p40 = scmp.eq.s32.totalorder %s20, 0
      %p41 = por %p39, %p40
      %p42 = scmp.ne.s32.totalorder %s28, %s29
      %p43 = scmp.eq.s32.totalorder %s21, 1
      %p44 = por %p42, %p43
      %p46 = scmp.ne.s32.totalorder %s29, %s45
      %p47 = scmp.eq.s32.totalorder %s21, 0
      %p48 = por %p46, %p47
      %s50 = sadd.s32 %s49, 1
      %p53 = scmp.eq.s32.totalorder %s15, 1
      %p54 = scmp.ne.s32.totalorder %s49, %s51
      %p55 = scmp.eq.s32.totalorder %s15, 0
      %p56 = por %p54, %p55
      %p57 = scmp.ne.s32.totalorder %s49, %s51
      %p58 = scmp.eq.s32.totalorder %s20, 1
      %p59 = por %p57, %p58
      %p60 = scmp.ne.s32.totalorder %s51, %s52
      %p61 = scmp.eq.s32.totalorder %s20, 0
      %p62 = por %p60, %p61
      %p63 = scmp.ne.s32.totalorder %s51, %s52
      %p64 = scmp.eq.s32.totalorder %s21, 1
      %p65 = por %p63, %p64
      %p67 = scmp.ne.s32.totalorder %s52, %s66
      %p68 = scmp.eq.s32.totalorder %s21, 0
      %p69 = por %p67, %p68
      %s71 = sadd.s32 %s70, 1
      %p74 = scmp.eq.s32.totalorder %s15, 1
      %p75 = scmp.ne.s32.totalorder %s70, %s72
      %p76 = scmp.eq.s32.totalorder %s15, 0
      %p77 = por %p75, %p76
      %p78 = scmp.ne.s32.totalorder %s70, %s72
      %p79 = scmp.eq.s32.totalorder %s20, 1
      %p80 = por %p78, %p79
      %p81 = scmp.ne.s32.totalorder %s72, %s73
      %p82 = scmp.eq.s32.totalorder %s20, 0
      %p83 = por %p81, %p82
      %p84 = scmp.ne.s32.totalorder %s72, %s73
      %p85 = scmp.eq.s32.totalorder %s21, 1
      %p86 = por %p84, %p85
      %p88 = scmp.ne.s32.totalorder %s73, %s87
      %p89 = scmp.eq.s32.totalorder %s21, 0
      %p90 = por %p88, %p89
      %s92 = sadd.s32 %s91, 1
      %p95 = scmp.eq.s32.totalorder %s15, 1
      %p96 = scmp.ne.s32.totalorder %s91, %s93
      %p97 = scmp.eq.s32.totalorder %s15, 0
      %p98 = por %p96, %p97
      %p99 = scmp.ne.s32.totalorder %s91, %s93
      %p100 = scmp.eq.s32.totalorder %s20, 1
      %p101 = por %p99, %p100
      %p102 = scmp.ne.s32.totalorder %s93, %s94
      %p103 = scmp.eq.s32.totalorder %s20, 0
      %p104 = por %p102, %p103
      %p105 = scmp.ne.s32.totalorder %s93, %s94
      %p106 = scmp.eq.s32.totalorder %s21, 1
      %p107 = por %p105, %p106
      %p109 = scmp.ne.s32.totalorder %s94, %s108
      %p110 = scmp.eq.s32.totalorder %s21, 0
      %p111 = por %p109, %p110
      %s113 = sadd.s32 %s112, 1
      %p116 = scmp.eq.s32.totalorder %s15, 1
      %p117 = scmp.ne.s32.totalorder %s112, %s114
      %p118 = scmp.eq.s32.totalorder %s15, 0
      %p119 = por %p117, %p118
      %p120 = scmp.ne.s32.totalorder %s112, %s114
      %p121 = scmp.eq.s32.totalorder %s20, 1
      %p122 = por %p120, %p121
      %p123 = scmp.ne.s32.totalorder %s114, %s115
      %p124 = scmp.eq.s32.totalorder %s20, 0
      %p125 = por %p123, %p124
      %p126 = scmp.ne.s32.totalorder %s114, %s115
      %p127 = scmp.eq.s32.totalorder %s21, 1
      %p128 = por %p126, %p127
      %p130 = scmp.ne.s32.totalorder %s115, %s129
      %p131 = scmp.eq.s32.totalorder %s21, 0
      %p132 = por %p130, %p131
      %s134 = sadd.s32 %s133, 1
      %p137 = scmp.eq.s32.totalorder %s15, 1
      %p138 = scmp.ne.s32.totalorder %s133, %s135
      %p139 = scmp.eq.s32.totalorder %s15, 0
      %p140 = por %p138, %p139
      %p141 = scmp.ne.s32.totalorder %s133, %s135
      %p142 = scmp.eq.s32.totalorder %s20, 1
      %p143 = por %p141, %p142
      %p144 = scmp.ne.s32.totalorder %s135, %s136
      %p145 = scmp.eq.s32.totalorder %s20, 0
      %p146 = por %p144, %p145
      %p147 = scmp.ne.s32.totalorder %s135, %s136
      %p148 = scmp.eq.s32.totalorder %s21, 1
      %p149 = por %p147, %p148
      %p151 = scmp.ne.s32.totalorder %s136, %s150
      %p152 = scmp.eq.s32.totalorder %s21, 0
      %p153 = por %p151, %p152
      %s155 = sadd.s32 %s154, 1
      %p158 = scmp.eq.s32.totalorder %s15, 1
      %p159 = scmp.ne.s32.totalorder %s154, %s156
      %p160 = scmp.eq.s32.totalorder %s15, 0
      %p161 = por %p159, %p160
      %p162 = scmp.ne.s32.totalorder %s154, %s156
      %p163 = scmp.eq.s32.totalorder %s20, 1
      %p164 = por %p162, %p163
      %p165 = scmp.ne.s32.totalorder %s156, %s157
      %p166 = scmp.eq.s32.totalorder %s20, 0
      %p167 = por %p165, %p166
      %p168 = scmp.ne.s32.totalorder %s156, %s157
      %p169 = scmp.eq.s32.totalorder %s21, 1
      %p170 = por %p168, %p169
      %p172 = scmp.ne.s32.totalorder %s157, %s171
      %p173 = scmp.eq.s32.totalorder %s21, 0
      %p174 = por %p172, %p173
      %s176 = sadd.s32 %s175, 1
      %p179 = scmp.eq.s32.totalorder %s15, 1
      %p180 = scmp.ne.s32.totalorder %s175, %s177
      %p181 = scmp.eq.s32.totalorder %s15, 0
      %p182 = por %p180, %p181
      %p183 = scmp.ne.s32.totalorder %s175, %s177
      %p184 = scmp.eq.s32.totalorder %s20, 1
      %p185 = por %p183, %p184
      %p186 = scmp.ne.s32.totalorder %s177, %s178
      %p187 = scmp.eq.s32.totalorder %s20, 0
      %p188 = por %p186, %p187
      %p189 = scmp.ne.s32.totalorder %s177, %s178
      %p190 = scmp.eq.s32.totalorder %s21, 1
      %p191 = por %p189, %p190
      %p193 = scmp.ne.s32.totalorder %s178, %s192
      %p194 = scmp.eq.s32.totalorder %s21, 0
      %p195 = por %p193, %p194
      %p196 = scmp.le.s32.totalorder 1, %s15
      %p197 = scmp.lt.s32.totalorder %s15, 3
      %p198 = pnand %p196, %p197
      %p199 = pneg %p198
      // Predicated region
      $region9: #{fishnet_forward.1} parent=5 // pred_check
        _
      $region10: #{fishnet_forward.1} parent=5 // pred_check_branch
        %201 = sbr.rel (%p198) target = $region12
      $region11: #{fishnet_forward.1} parent=5 // pred_region
        %s202 = ssub.s32 %s15, 1
        // Predicated region
        $region13: #{fishnet_forward.1} parent=11 // pred_check
          %p203 = pneg %p62
        $region14: #{fishnet_forward.1} parent=11 // pred_check_branch
          %205 = sbr.rel (%p203) target = $region16
        $region15: #{fishnet_forward.1} parent=11 // pred_region
          _
        $region16: #{fishnet_forward.1} parent=11 // pred_fallthru
          _
        // Predicated region
        $region17: #{fishnet_forward.1} parent=11 // pred_check
          %p206 = pneg %p83
        $region18: #{fishnet_forward.1} parent=11 // pred_check_branch
          %208 = sbr.rel (%p206) target = $region20
        $region19: #{fishnet_forward.1} parent=11 // pred_region
          _
        $region20: #{fishnet_forward.1} parent=11 // pred_fallthru
          _
        // Predicated region
        $region21: #{fishnet_forward.1} parent=11 // pred_check
          %p209 = pneg %p104
        $region22: #{fishnet_forward.1} parent=11 // pred_check_branch
          %211 = sbr.rel (%p209) target = $region24
        $region23: #{fishnet_forward.1} parent=11 // pred_region
          _
        $region24: #{fishnet_forward.1} parent=11 // pred_fallthru
          _
        // Predicated region
        $region25: #{fishnet_forward.1} parent=11 // pred_check
          %p212 = pneg %p125
        $region26: #{fishnet_forward.1} parent=11 // pred_check_branch
          %214 = sbr.rel (%p212) target = $region28
        $region27: #{fishnet_forward.1} parent=11 // pred_region
          _
        $region28: #{fishnet_forward.1} parent=11 // pred_fallthru
          _
        // Predicated region
        $region29: #{fishnet_forward.1} parent=11 // pred_check
          %p215 = pneg %p146
        $region30: #{fishnet_forward.1} parent=11 // pred_check_branch
          %217 = sbr.rel (%p215) target = $region32
        $region31: #{fishnet_forward.1} parent=11 // pred_region
          _
        $region32: #{fishnet_forward.1} parent=11 // pred_fallthru
          _
        // Predicated region
        $region33: #{fishnet_forward.1} parent=11 // pred_check
          %p218 = pneg %p167
        $region34: #{fishnet_forward.1} parent=11 // pred_check_branch
          %220 = sbr.rel (%p218) target = $region36
        $region35: #{fishnet_forward.1} parent=11 // pred_region
          _
        $region36: #{fishnet_forward.1} parent=11 // pred_fallthru
          _
      $region12: #{fishnet_forward.1} parent=5 // pred_fallthru
        _
      %p221 = scmp.lt.s32.totalorder %s15, 2
      // Predicated region
      $region37: #{fishnet_forward.1} parent=5 // pred_check
        %p222 = pneg %p221
      $region38: #{fishnet_forward.1} parent=5 // pred_check_branch
        %224 = sbr.rel (%p222) target = $region40
      $region39: #{fishnet_forward.1} parent=5 // pred_region
        // Predicated region
        $region41: #{fishnet_forward.1} parent=39 // pred_check
          %p225 = pneg %p35
        $region42: #{fishnet_forward.1} parent=39 // pred_check_branch
          %227 = sbr.rel (%p225) target = $region44
        $region43: #{fishnet_forward.1} parent=39 // pred_region
          %s228 = sand.u32 %s25, 1
          %s229 = sand.u32 %s25, 1
          %s230 = smul.addr %s229, 128
          %s231 = scalar_lea.vmem [#allocation5], %s230
          %s232 = smul.u32 16, %s15
          %s233 = smul.addr %s232, 4
          %s234 = scalar_lea.vmem %s0, %s233
          // Predicated region
          $region45: #{fishnet_forward.1} parent=43 // pred_check
            _
          $region46: #{fishnet_forward.1} parent=43 // pred_check_branch
            %236 = sbr.rel (0) target = $region48
          $region47: #{fishnet_forward.1} parent=43 // pred_region
            // Predicated region
            $region49: #{fishnet_forward.1} parent=47 // pred_check
              _
            $region50: #{fishnet_forward.1} parent=47 // pred_check_branch
              %238 = sbr.rel target = $region52
            $region51: #{fishnet_forward.1} parent=47 // pred_region
              // Predicated region
              $region64: #{fishnet_forward.1} parent=51 // pred_check
                _
              $region65: #{fishnet_forward.1} parent=51 // pred_check_branch
                %316 = sbr.rel (0) target = $region67
              $region66: #{fishnet_forward.1} parent=51 // pred_region
                loop: start=0, step=1, limit=1
                $region68: #{fishnet_forward.1} parent=66 // loop_pre_header
                  _
                $region69: #{fishnet_forward.1} parent=66 // loop_header
                  %s318 = sphi 0, %s322
                  %p319 = scmp.ge.s32.totalorder %s318, 1
                  %s323 = sphi %s234, %s234
                  %s324 = sphi %s231, %s231
                $region70: #{fishnet_forward.1} parent=66 // loop_header_branch
                  %321 = sbr.rel (%p319) target = $region74
                $region71: #{fishnet_forward.1} parent=66 // loop_body
                  _
                $region72: #{fishnet_forward.1} parent=66 // loop_footer
                  %s322 = sadd.s32 1, %s318
                $region73: #{fishnet_forward.1} parent=66 // loop_footer_branch
                  %317 = sbr.rel target = $region69
                $region74: #{fishnet_forward.1} parent=66 // loop_exit
                  _
                %s326 = ssub.s32 16, 1
                loop: start=0, step=1, limit=1
                $region75: #{fishnet_forward.1} parent=66 // loop_pre_header
                  _
                $region76: #{fishnet_forward.1} parent=66 // loop_header
                  %s328 = sphi 0, %s332
                  %p329 = scmp.ge.s32.totalorder %s328, 1
                  %s333 = sphi %s234, %s234
                  %s334 = sphi %s231, %s231
                $region77: #{fishnet_forward.1} parent=66 // loop_header_branch
                  %331 = sbr.rel (%p329) target = $region81
                $region78: #{fishnet_forward.1} parent=66 // loop_body
                  %v335 = vld [vmem:[%s333] sm:%s326]
                  %336 = vst [vmem:[%s334] sm:%s326] %v335
                  %v337 = vld [vmem:[%s333 + $0x4] sm:%s326]
                  %338 = vst [vmem:[%s334 + $0x4] sm:%s326] %v337
                  %v339 = vld [vmem:[%s333 + $0x8] sm:%s326]
                  %340 = vst [vmem:[%s334 + $0x8] sm:%s326] %v339
                  %v341 = vld [vmem:[%s333 + $0xc] sm:%s326]
                  %342 = vst [vmem:[%s334 + $0xc] sm:%s326] %v341
                  %v343 = vld [vmem:[%s333 + $0x10] sm:%s326]
                  %344 = vst [vmem:[%s334 + $0x10] sm:%s326] %v343
                  %v345 = vld [vmem:[%s333 + $0x14] sm:%s326]
                  %346 = vst [vmem:[%s334 + $0x14] sm:%s326] %v345
                  %v347 = vld [vmem:[%s333 + $0x18] sm:%s326]
                  %348 = vst [vmem:[%s334 + $0x18] sm:%s326] %v347
                  %v349 = vld [vmem:[%s333 + $0x1c] sm:%s326]
                  %350 = vst [vmem:[%s334 + $0x1c] sm:%s326] %v349
                  %v351 = vld [vmem:[%s333 + $0x20] sm:%s326]
                  %352 = vst [vmem:[%s334 + $0x20] sm:%s326] %v351
                  %v353 = vld [vmem:[%s333 + $0x24] sm:%s326]
                  %354 = vst [vmem:[%s334 + $0x24] sm:%s326] %v353
                  %v355 = vld [vmem:[%s333 + $0x28] sm:%s326]
                  %356 = vst [vmem:[%s334 + $0x28] sm:%s326] %v355
                  %v357 = vld [vmem:[%s333 + $0x2c] sm:%s326]
                  %358 = vst [vmem:[%s334 + $0x2c] sm:%s326] %v357
                  %v359 = vld [vmem:[%s333 + $0x30] sm:%s326]
                  %360 = vst [vmem:[%s334 + $0x30] sm:%s326] %v359
                  %v361 = vld [vmem:[%s333 + $0x34] sm:%s326]
                  %362 = vst [vmem:[%s334 + $0x34] sm:%s326] %v361
                  %v363 = vld [vmem:[%s333 + $0x38] sm:%s326]
                  %364 = vst [vmem:[%s334 + $0x38] sm:%s326] %v363
                  %v365 = vld [vmem:[%s333 + $0x3c] sm:%s326]
                  %366 = vst [vmem:[%s334 + $0x3c] sm:%s326] %v365
                  %v367 = vld [vmem:[%s333 + $0x80] sm:%s326]
                  %368 = vst [vmem:[%s334 + $0x40] sm:%s326] %v367
                  %v369 = vld [vmem:[%s333 + $0x84] sm:%s326]
                  %370 = vst [vmem:[%s334 + $0x44] sm:%s326] %v369
                  %v371 = vld [vmem:[%s333 + $0x88] sm:%s326]
                  %372 = vst [vmem:[%s334 + $0x48] sm:%s326] %v371
                  %v373 = vld [vmem:[%s333 + $0x8c] sm:%s326]
                  %374 = vst [vmem:[%s334 + $0x4c] sm:%s326] %v373
                  %v375 = vld [vmem:[%s333 + $0x90] sm:%s326]
                  %376 = vst [vmem:[%s334 + $0x50] sm:%s326] %v375
                  %v377 = vld [vmem:[%s333 + $0x94] sm:%s326]
                  %378 = vst [vmem:[%s334 + $0x54] sm:%s326] %v377
                  %v379 = vld [vmem:[%s333 + $0x98] sm:%s326]
                  %380 = vst [vmem:[%s334 + $0x58] sm:%s326] %v379
                  %v381 = vld [vmem:[%s333 + $0x9c] sm:%s326]
                  %382 = vst [vmem:[%s334 + $0x5c] sm:%s326] %v381
                  %v383 = vld [vmem:[%s333 + $0xa0] sm:%s326]
                  %384 = vst [vmem:[%s334 + $0x60] sm:%s326] %v383
                  %v385 = vld [vmem:[%s333 + $0xa4] sm:%s326]
                  %386 = vst [vmem:[%s334 + $0x64] sm:%s326] %v385
                  %v387 = vld [vmem:[%s333 + $0xa8] sm:%s326]
                  %388 = vst [vmem:[%s334 + $0x68] sm:%s326] %v387
                  %v389 = vld [vmem:[%s333 + $0xac] sm:%s326]
                  %390 = vst [vmem:[%s334 + $0x6c] sm:%s326] %v389
                  %v391 = vld [vmem:[%s333 + $0xb0] sm:%s326]
                  %392 = vst [vmem:[%s334 + $0x70] sm:%s326] %v391
                  %v393 = vld [vmem:[%s333 + $0xb4] sm:%s326]
                  %394 = vst [vmem:[%s334 + $0x74] sm:%s326] %v393
                  %v395 = vld [vmem:[%s333 + $0xb8] sm:%s326]
                  %396 = vst [vmem:[%s334 + $0x78] sm:%s326] %v395
                  %v397 = vld [vmem:[%s333 + $0xbc] sm:%s326]
                  %398 = vst [vmem:[%s334 + $0x7c] sm:%s326] %v397
                $region79: #{fishnet_forward.1} parent=66 // loop_footer
                  %s332 = sadd.s32 1, %s328
                $region80: #{fishnet_forward.1} parent=66 // loop_footer_branch
                  %327 = sbr.rel target = $region76
                $region81: #{fishnet_forward.1} parent=66 // loop_exit
                  _
              $region67: #{fishnet_forward.1} parent=51 // pred_fallthru
                _
            $region52: #{fishnet_forward.1} parent=47 // pred_fallthru
              _
            // Predicated region
            $region53: #{fishnet_forward.1} parent=47 // pred_check
              _
            $region54: #{fishnet_forward.1} parent=47 // pred_check_branch
              %240 = sbr.rel (0) target = $region56
            $region55: #{fishnet_forward.1} parent=47 // pred_region
              %s242 = ssub.s32 16, 1
              loop: start=0, step=1, limit=1
              $region57: #{fishnet_forward.1} parent=55 // loop_pre_header
                _
              $region58: #{fishnet_forward.1} parent=55 // loop_header
                %s244 = sphi 0, %s248
                %p245 = scmp.ge.s32.totalorder %s244, 1
                %s249 = sphi %s234, %s234
                %s250 = sphi %s231, %s231
              $region59: #{fishnet_forward.1} parent=55 // loop_header_branch
                %247 = sbr.rel (%p245) target = $region63
              $region60: #{fishnet_forward.1} parent=55 // loop_body
                %v251 = vld [vmem:[%s249] sm:%s242]
                %252 = vst [vmem:[%s250] sm:%s242] %v251
                %v253 = vld [vmem:[%s249 + $0x4] sm:%s242]
                %254 = vst [vmem:[%s250 + $0x4] sm:%s242] %v253
                %v255 = vld [vmem:[%s249 + $0x8] sm:%s242]
                %256 = vst [vmem:[%s250 + $0x8] sm:%s242] %v255
                %v257 = vld [vmem:[%s249 + $0xc] sm:%s242]
                %258 = vst [vmem:[%s250 + $0xc] sm:%s242] %v257
                %v259 = vld [vmem:[%s249 + $0x10] sm:%s242]
                %260 = vst [vmem:[%s250 + $0x10] sm:%s242] %v259
                %v261 = vld [vmem:[%s249 + $0x14] sm:%s242]
                %262 = vst [vmem:[%s250 + $0x14] sm:%s242] %v261
                %v263 = vld [vmem:[%s249 + $0x18] sm:%s242]
                %264 = vst [vmem:[%s250 + $0x18] sm:%s242] %v263
                %v265 = vld [vmem:[%s249 + $0x1c] sm:%s242]
                %266 = vst [vmem:[%s250 + $0x1c] sm:%s242] %v265
                %v267 = vld [vmem:[%s249 + $0x20] sm:%s242]
                %268 = vst [vmem:[%s250 + $0x20] sm:%s242] %v267
                %v269 = vld [vmem:[%s249 + $0x24] sm:%s242]
                %270 = vst [vmem:[%s250 + $0x24] sm:%s242] %v269
                %v271 = vld [vmem:[%s249 + $0x28] sm:%s242]
                %272 = vst [vmem:[%s250 + $0x28] sm:%s242] %v271
                %v273 = vld [vmem:[%s249 + $0x2c] sm:%s242]
                %274 = vst [vmem:[%s250 + $0x2c] sm:%s242] %v273
                %v275 = vld [vmem:[%s249 + $0x30] sm:%s242]
                %276 = vst [vmem:[%s250 + $0x30] sm:%s242] %v275
                %v277 = vld [vmem:[%s249 + $0x34] sm:%s242]
                %278 = vst [vmem:[%s250 + $0x34] sm:%s242] %v277
                %v279 = vld [vmem:[%s249 + $0x38] sm:%s242]
                %280 = vst [vmem:[%s250 + $0x38] sm:%s242] %v279
                %v281 = vld [vmem:[%s249 + $0x3c] sm:%s242]
                %282 = vst [vmem:[%s250 + $0x3c] sm:%s242] %v281
                %v283 = vld [vmem:[%s249 + $0x80] sm:%s242]
                %284 = vst [vmem:[%s250 + $0x40] sm:%s242] %v283
                %v285 = vld [vmem:[%s249 + $0x84] sm:%s242]
                %286 = vst [vmem:[%s250 + $0x44] sm:%s242] %v285
                %v287 = vld [vmem:[%s249 + $0x88] sm:%s242]
                %288 = vst [vmem:[%s250 + $0x48] sm:%s242] %v287
                %v289 = vld [vmem:[%s249 + $0x8c] sm:%s242]
                %290 = vst [vmem:[%s250 + $0x4c] sm:%s242] %v289
                %v291 = vld [vmem:[%s249 + $0x90] sm:%s242]
                %292 = vst [vmem:[%s250 + $0x50] sm:%s242] %v291
                %v293 = vld [vmem:[%s249 + $0x94] sm:%s242]
                %294 = vst [vmem:[%s250 + $0x54] sm:%s242] %v293
                %v295 = vld [vmem:[%s249 + $0x98] sm:%s242]
                %296 = vst [vmem:[%s250 + $0x58] sm:%s242] %v295
                %v297 = vld [vmem:[%s249 + $0x9c] sm:%s242]
                %298 = vst [vmem:[%s250 + $0x5c] sm:%s242] %v297
                %v299 = vld [vmem:[%s249 + $0xa0] sm:%s242]
                %300 = vst [vmem:[%s250 + $0x60] sm:%s242] %v299
                %v301 = vld [vmem:[%s249 + $0xa4] sm:%s242]
                %302 = vst [vmem:[%s250 + $0x64] sm:%s242] %v301
                %v303 = vld [vmem:[%s249 + $0xa8] sm:%s242]
                %304 = vst [vmem:[%s250 + $0x68] sm:%s242] %v303
                %v305 = vld [vmem:[%s249 + $0xac] sm:%s242]
                %306 = vst [vmem:[%s250 + $0x6c] sm:%s242] %v305
                %v307 = vld [vmem:[%s249 + $0xb0] sm:%s242]
                %308 = vst [vmem:[%s250 + $0x70] sm:%s242] %v307
                %v309 = vld [vmem:[%s249 + $0xb4] sm:%s242]
                %310 = vst [vmem:[%s250 + $0x74] sm:%s242] %v309
                %v311 = vld [vmem:[%s249 + $0xb8] sm:%s242]
                %312 = vst [vmem:[%s250 + $0x78] sm:%s242] %v311
                %v313 = vld [vmem:[%s249 + $0xbc] sm:%s242]
                %314 = vst [vmem:[%s250 + $0x7c] sm:%s242] %v313
              $region61: #{fishnet_forward.1} parent=55 // loop_footer
                %s248 = sadd.s32 1, %s244
              $region62: #{fishnet_forward.1} parent=55 // loop_footer_branch
                %243 = sbr.rel target = $region58
              $region63: #{fishnet_forward.1} parent=55 // loop_exit
                _
            $region56: #{fishnet_forward.1} parent=47 // pred_fallthru
              _
          $region48: #{fishnet_forward.1} parent=43 // pred_fallthru
            _
          %399 = vnop
        $region44: #{fishnet_forward.1} parent=39 // pred_fallthru
          _
      $region40: #{fishnet_forward.1} parent=5 // pred_fallthru
        _
      %p400 = scmp.le.s32.totalorder 1, %s15
      %p401 = scmp.lt.s32.totalorder %s15, 3
      %p402 = pnand %p400, %p401
      %p403 = pneg %p402
      // Predicated region
      $region82: #{fishnet_forward.1} parent=5 // pred_check
        _
      $region83: #{fishnet_forward.1} parent=5 // pred_check_branch
        %405 = sbr.rel (%p402) target = $region85
      $region84: #{fishnet_forward.1} parent=5 // pred_region
        %s406 = ssub.s32 %s15, 1
        %s407 = sand.u32 %s28, 1
        %s408 = sand.u32 %s28, 1
        %s409 = smul.addr %s408, 128
        %s410 = scalar_lea.vmem [#allocation5], %s409
        // Predicated region
        $region86: #{fishnet_forward.1} parent=84 // pred_check
          %p411 = pneg %p41
        $region87: #{fishnet_forward.1} parent=84 // pred_check_branch
          %413 = sbr.rel (%p411) target = $region89
        $region88: #{fishnet_forward.1} parent=84 // pred_region
          _
        $region89: #{fishnet_forward.1} parent=84 // pred_fallthru
          _
        %s414 = sand.u32 %s28, 1
        %s415 = sand.u32 %s28, 1
        %s416 = smul.addr %s415, 128
        %s417 = scalar_lea.vmem [#allocation5], %s416
        %p418 = pneg %p41
        %p419 = pneg %p38
        %p420 = pneg %p62
        %p421 = pneg %p59
        %p422 = pneg %p83
        %p423 = pneg %p80
        %p424 = pneg %p104
        %p425 = pneg %p101
        %p426 = pneg %p125
        %p427 = pneg %p122
        %p428 = pneg %p146
        %p429 = pneg %p143
        %p430 = pneg %p167
        %p431 = pneg %p164
        %p432 = pneg %p188
        %p433 = pneg %p185
        %s434 = smul.u32 16, %s20
        %p436 = scmp.eq.s32.totalorder %s20, 0
        // Predicated region
        $region90: #{fishnet_forward.1} parent=84 // pred_check
          %p437 = pneg %p436
        $region91: #{fishnet_forward.1} parent=84 // pred_check_branch
          %439 = sbr.rel (%p437) target = $region93
        $region92: #{fishnet_forward.1} parent=84 // pred_region
          %440 = vst [vmem:[#allocation2] sm:$0xff] 0.0
          %441 = vst [vmem:[#allocation2 + $0x8] sm:$0xff] 0.0
          %442 = vst [vmem:[#allocation2 + $0x10] sm:$0xff] 0.0
          %443 = vst [vmem:[#allocation2 + $0x18] sm:$0xff] 0.0
          %p445 = scmp.lt.u32.totalorder 4096, 8
          %p446 = pneg %p445
          // Predicated region
          $region94: #{fishnet_forward.1} parent=92 // pred_check
            _
          $region95: #{fishnet_forward.1} parent=92 // pred_check_branch
            %448 = sbr.rel (%p445) target = $region97
          $region96: #{fishnet_forward.1} parent=92 // pred_region
            %s464 = sand.u32 4096, 7
            %p465 = scmp.eq.s32.totalorder %s464, 0
            // Predicated region
            $region109: #{fishnet_forward.1} parent=96 // pred_check
              %p466 = pneg %p465
            $region110: #{fishnet_forward.1} parent=96 // pred_check_branch
              %468 = sbr.rel (%p466) target = $region112
            $region111: #{fishnet_forward.1} parent=96 // pred_region
              loop: start=0, step=1, limit=1
              $region113: #{fishnet_forward.1} parent=111 // loop_pre_header
                _
              $region114: #{fishnet_forward.1} parent=111 // loop_header
                %s470 = sphi 0, %s474
                %p471 = scmp.ge.s32.totalorder %s470, 1
                %s475 = sphi %s3, %s3
                %s476 = sphi [#allocation3], [#allocation3]
              $region115: #{fishnet_forward.1} parent=111 // loop_header_branch
                %473 = sbr.rel (%p471) target = $region119
              $region116: #{fishnet_forward.1} parent=111 // loop_body
                %v477 = vld [vmem:[%s475] sm:$0xff]
                %478 = vst [vmem:[%s476] sm:$0xff] %v477
                %v479 = vld [vmem:[%s475 + $0x8] sm:$0xff]
                %480 = vst [vmem:[%s476 + $0x8] sm:$0xff] %v479
                %v481 = vld [vmem:[%s475 + $0x10] sm:$0xff]
                %482 = vst [vmem:[%s476 + $0x10] sm:$0xff] %v481
                %v483 = vld [vmem:[%s475 + $0x18] sm:$0xff]
                %484 = vst [vmem:[%s476 + $0x18] sm:$0xff] %v483
                %v485 = vld [vmem:[%s475 + $0x20] sm:$0xff]
                %486 = vst [vmem:[%s476 + $0x20] sm:$0xff] %v485
                %v487 = vld [vmem:[%s475 + $0x28] sm:$0xff]
                %488 = vst [vmem:[%s476 + $0x28] sm:$0xff] %v487
                %v489 = vld [vmem:[%s475 + $0x30] sm:$0xff]
                %490 = vst [vmem:[%s476 + $0x30] sm:$0xff] %v489
                %v491 = vld [vmem:[%s475 + $0x38] sm:$0xff]
                %492 = vst [vmem:[%s476 + $0x38] sm:$0xff] %v491
                %v493 = vld [vmem:[%s475 + $0x40] sm:$0xff]
                %494 = vst [vmem:[%s476 + $0x40] sm:$0xff] %v493
                %v495 = vld [vmem:[%s475 + $0x48] sm:$0xff]
                %496 = vst [vmem:[%s476 + $0x48] sm:$0xff] %v495
                %v497 = vld [vmem:[%s475 + $0x50] sm:$0xff]
                %498 = vst [vmem:[%s476 + $0x50] sm:$0xff] %v497
                %v499 = vld [vmem:[%s475 + $0x58] sm:$0xff]
                %500 = vst [vmem:[%s476 + $0x58] sm:$0xff] %v499
                %v501 = vld [vmem:[%s475 + $0x60] sm:$0xff]
                %502 = vst [vmem:[%s476 + $0x60] sm:$0xff] %v501
                %v503 = vld [vmem:[%s475 + $0x68] sm:$0xff]
                %504 = vst [vmem:[%s476 + $0x68] sm:$0xff] %v503
                %v505 = vld [vmem:[%s475 + $0x70] sm:$0xff]
                %506 = vst [vmem:[%s476 + $0x70] sm:$0xff] %v505
                %v507 = vld [vmem:[%s475 + $0x78] sm:$0xff]
                %508 = vst [vmem:[%s476 + $0x78] sm:$0xff] %v507
                %v509 = vld [vmem:[%s475 + $0x80] sm:$0xff]
                %510 = vst [vmem:[%s476 + $0x80] sm:$0xff] %v509
                %v511 = vld [vmem:[%s475 + $0x88] sm:$0xff]
                %512 = vst [vmem:[%s476 + $0x88] sm:$0xff] %v511
                %v513 = vld [vmem:[%s475 + $0x90] sm:$0xff]
                %514 = vst [vmem:[%s476 + $0x90] sm:$0xff] %v513
                %v515 = vld [vmem:[%s475 + $0x98] sm:$0xff]
                %516 = vst [vmem:[%s476 + $0x98] sm:$0xff] %v515
                %v517 = vld [vmem:[%s475 + $0xa0] sm:$0xff]
                %518 = vst [vmem:[%s476 + $0xa0] sm:$0xff] %v517
                %v519 = vld [vmem:[%s475 + $0xa8] sm:$0xff]
                %520 = vst [vmem:[%s476 + $0xa8] sm:$0xff] %v519
                %v521 = vld [vmem:[%s475 + $0xb0] sm:$0xff]
                %522 = vst [vmem:[%s476 + $0xb0] sm:$0xff] %v521
                %v523 = vld [vmem:[%s475 + $0xb8] sm:$0xff]
                %524 = vst [vmem:[%s476 + $0xb8] sm:$0xff] %v523
                %v525 = vld [vmem:[%s475 + $0xc0] sm:$0xff]
                %526 = vst [vmem:[%s476 + $0xc0] sm:$0xff] %v525
                %v527 = vld [vmem:[%s475 + $0xc8] sm:$0xff]
                %528 = vst [vmem:[%s476 + $0xc8] sm:$0xff] %v527
                %v529 = vld [vmem:[%s475 + $0xd0] sm:$0xff]
                %530 = vst [vmem:[%s476 + $0xd0] sm:$0xff] %v529
                %v531 = vld [vmem:[%s475 + $0xd8] sm:$0xff]
                %532 = vst [vmem:[%s476 + $0xd8] sm:$0xff] %v531
                %v533 = vld [vmem:[%s475 + $0xe0] sm:$0xff]
                %534 = vst [vmem:[%s476 + $0xe0] sm:$0xff] %v533
                %v535 = vld [vmem:[%s475 + $0xe8] sm:$0xff]
                %536 = vst [vmem:[%s476 + $0xe8] sm:$0xff] %v535
                %v537 = vld [vmem:[%s475 + $0xf0] sm:$0xff]
                %538 = vst [vmem:[%s476 + $0xf0] sm:$0xff] %v537
                %v539 = vld [vmem:[%s475 + $0xf8] sm:$0xff]
                %540 = vst [vmem:[%s476 + $0xf8] sm:$0xff] %v539
                %v541 = vld [vmem:[%s475 + $0x100] sm:$0xff]
                %542 = vst [vmem:[%s476 + $0x100] sm:$0xff] %v541
                %v543 = vld [vmem:[%s475 + $0x108] sm:$0xff]
                %544 = vst [vmem:[%s476 + $0x108] sm:$0xff] %v543
                %v545 = vld [vmem:[%s475 + $0x110] sm:$0xff]
                %546 = vst [vmem:[%s476 + $0x110] sm:$0xff] %v545
                %v547 = vld [vmem:[%s475 + $0x118] sm:$0xff]
                %548 = vst [vmem:[%s476 + $0x118] sm:$0xff] %v547
                %v549 = vld [vmem:[%s475 + $0x120] sm:$0xff]
                %550 = vst [vmem:[%s476 + $0x120] sm:$0xff] %v549
                %v551 = vld [vmem:[%s475 + $0x128] sm:$0xff]
                %552 = vst [vmem:[%s476 + $0x128] sm:$0xff] %v551
                %v553 = vld [vmem:[%s475 + $0x130] sm:$0xff]
                %554 = vst [vmem:[%s476 + $0x130] sm:$0xff] %v553
                %v555 = vld [vmem:[%s475 + $0x138] sm:$0xff]
                %556 = vst [vmem:[%s476 + $0x138] sm:$0xff] %v555
                %v557 = vld [vmem:[%s475 + $0x140] sm:$0xff]
                %558 = vst [vmem:[%s476 + $0x140] sm:$0xff] %v557
                %v559 = vld [vmem:[%s475 + $0x148] sm:$0xff]
                %560 = vst [vmem:[%s476 + $0x148] sm:$0xff] %v559
                %v561 = vld [vmem:[%s475 + $0x150] sm:$0xff]
                %562 = vst [vmem:[%s476 + $0x150] sm:$0xff] %v561
                %v563 = vld [vmem:[%s475 + $0x158] sm:$0xff]
                %564 = vst [vmem:[%s476 + $0x158] sm:$0xff] %v563
                %v565 = vld [vmem:[%s475 + $0x160] sm:$0xff]
                %566 = vst [vmem:[%s476 + $0x160] sm:$0xff] %v565
                %v567 = vld [vmem:[%s475 + $0x168] sm:$0xff]
                %568 = vst [vmem:[%s476 + $0x168] sm:$0xff] %v567
                %v569 = vld [vmem:[%s475 + $0x170] sm:$0xff]
                %570 = vst [vmem:[%s476 + $0x170] sm:$0xff] %v569
                %v571 = vld [vmem:[%s475 + $0x178] sm:$0xff]
                %572 = vst [vmem:[%s476 + $0x178] sm:$0xff] %v571
                %v573 = vld [vmem:[%s475 + $0x180] sm:$0xff]
                %574 = vst [vmem:[%s476 + $0x180] sm:$0xff] %v573
                %v575 = vld [vmem:[%s475 + $0x188] sm:$0xff]
                %576 = vst [vmem:[%s476 + $0x188] sm:$0xff] %v575
                %v577 = vld [vmem:[%s475 + $0x190] sm:$0xff]
                %578 = vst [vmem:[%s476 + $0x190] sm:$0xff] %v577
                %v579 = vld [vmem:[%s475 + $0x198] sm:$0xff]
                %580 = vst [vmem:[%s476 + $0x198] sm:$0xff] %v579
                %v581 = vld [vmem:[%s475 + $0x1a0] sm:$0xff]
                %582 = vst [vmem:[%s476 + $0x1a0] sm:$0xff] %v581
                %v583 = vld [vmem:[%s475 + $0x1a8] sm:$0xff]
                %584 = vst [vmem:[%s476 + $0x1a8] sm:$0xff] %v583
                %v585 = vld [vmem:[%s475 + $0x1b0] sm:$0xff]
                %586 = vst [vmem:[%s476 + $0x1b0] sm:$0xff] %v585
                %v587 = vld [vmem:[%s475 + $0x1b8] sm:$0xff]
                %588 = vst [vmem:[%s476 + $0x1b8] sm:$0xff] %v587
                %v589 = vld [vmem:[%s475 + $0x1c0] sm:$0xff]
                %590 = vst [vmem:[%s476 + $0x1c0] sm:$0xff] %v589
                %v591 = vld [vmem:[%s475 + $0x1c8] sm:$0xff]
                %592 = vst [vmem:[%s476 + $0x1c8] sm:$0xff] %v591
                %v593 = vld [vmem:[%s475 + $0x1d0] sm:$0xff]
                %594 = vst [vmem:[%s476 + $0x1d0] sm:$0xff] %v593
                %v595 = vld [vmem:[%s475 + $0x1d8] sm:$0xff]
                %596 = vst [vmem:[%s476 + $0x1d8] sm:$0xff] %v595
                %v597 = vld [vmem:[%s475 + $0x1e0] sm:$0xff]
                %598 = vst [vmem:[%s476 + $0x1e0] sm:$0xff] %v597
                %v599 = vld [vmem:[%s475 + $0x1e8] sm:$0xff]
                %600 = vst [vmem:[%s476 + $0x1e8] sm:$0xff] %v599
                %v601 = vld [vmem:[%s475 + $0x1f0] sm:$0xff]
                %602 = vst [vmem:[%s476 + $0x1f0] sm:$0xff] %v601
                %v603 = vld [vmem:[%s475 + $0x1f8] sm:$0xff]
                %604 = vst [vmem:[%s476 + $0x1f8] sm:$0xff] %v603
                %v605 = vld [vmem:[%s475 + $0x200] sm:$0xff]
                %606 = vst [vmem:[%s476 + $0x200] sm:$0xff] %v605
                %v607 = vld [vmem:[%s475 + $0x208] sm:$0xff]
                %608 = vst [vmem:[%s476 + $0x208] sm:$0xff] %v607
                %v609 = vld [vmem:[%s475 + $0x210] sm:$0xff]
                %610 = vst [vmem:[%s476 + $0x210] sm:$0xff] %v609
                %v611 = vld [vmem:[%s475 + $0x218] sm:$0xff]
                %612 = vst [vmem:[%s476 + $0x218] sm:$0xff] %v611
                %v613 = vld [vmem:[%s475 + $0x220] sm:$0xff]
                %614 = vst [vmem:[%s476 + $0x220] sm:$0xff] %v613
                %v615 = vld [vmem:[%s475 + $0x228] sm:$0xff]
                %616 = vst [vmem:[%s476 + $0x228] sm:$0xff] %v615
                %v617 = vld [vmem:[%s475 + $0x230] sm:$0xff]
                %618 = vst [vmem:[%s476 + $0x230] sm:$0xff] %v617
                %v619 = vld [vmem:[%s475 + $0x238] sm:$0xff]
                %620 = vst [vmem:[%s476 + $0x238] sm:$0xff] %v619
                %v621 = vld [vmem:[%s475 + $0x240] sm:$0xff]
                %622 = vst [vmem:[%s476 + $0x240] sm:$0xff] %v621
                %v623 = vld [vmem:[%s475 + $0x248] sm:$0xff]
                %624 = vst [vmem:[%s476 + $0x248] sm:$0xff] %v623
                %v625 = vld [vmem:[%s475 + $0x250] sm:$0xff]
                %626 = vst [vmem:[%s476 + $0x250] sm:$0xff] %v625
                %v627 = vld [vmem:[%s475 + $0x258] sm:$0xff]
                %628 = vst [vmem:[%s476 + $0x258] sm:$0xff] %v627
                %v629 = vld [vmem:[%s475 + $0x260] sm:$0xff]
                %630 = vst [vmem:[%s476 + $0x260] sm:$0xff] %v629
                %v631 = vld [vmem:[%s475 + $0x268] sm:$0xff]
                %632 = vst [vmem:[%s476 + $0x268] sm:$0xff] %v631
                %v633 = vld [vmem:[%s475 + $0x270] sm:$0xff]
                %634 = vst [vmem:[%s476 + $0x270] sm:$0xff] %v633
                %v635 = vld [vmem:[%s475 + $0x278] sm:$0xff]
                %636 = vst [vmem:[%s476 + $0x278] sm:$0xff] %v635
                %v637 = vld [vmem:[%s475 + $0x280] sm:$0xff]
                %638 = vst [vmem:[%s476 + $0x280] sm:$0xff] %v637
                %v639 = vld [vmem:[%s475 + $0x288] sm:$0xff]
                %640 = vst [vmem:[%s476 + $0x288] sm:$0xff] %v639
                %v641 = vld [vmem:[%s475 + $0x290] sm:$0xff]
                %642 = vst [vmem:[%s476 + $0x290] sm:$0xff] %v641
                %v643 = vld [vmem:[%s475 + $0x298] sm:$0xff]
                %644 = vst [vmem:[%s476 + $0x298] sm:$0xff] %v643
                %v645 = vld [vmem:[%s475 + $0x2a0] sm:$0xff]
                %646 = vst [vmem:[%s476 + $0x2a0] sm:$0xff] %v645
                %v647 = vld [vmem:[%s475 + $0x2a8] sm:$0xff]
                %648 = vst [vmem:[%s476 + $0x2a8] sm:$0xff] %v647
                %v649 = vld [vmem:[%s475 + $0x2b0] sm:$0xff]
                %650 = vst [vmem:[%s476 + $0x2b0] sm:$0xff] %v649
                %v651 = vld [vmem:[%s475 + $0x2b8] sm:$0xff]
                %652 = vst [vmem:[%s476 + $0x2b8] sm:$0xff] %v651
                %v653 = vld [vmem:[%s475 + $0x2c0] sm:$0xff]
                %654 = vst [vmem:[%s476 + $0x2c0] sm:$0xff] %v653
                %v655 = vld [vmem:[%s475 + $0x2c8] sm:$0xff]
                %656 = vst [vmem:[%s476 + $0x2c8] sm:$0xff] %v655
                %v657 = vld [vmem:[%s475 + $0x2d0] sm:$0xff]
                %658 = vst [vmem:[%s476 + $0x2d0] sm:$0xff] %v657
                %v659 = vld [vmem:[%s475 + $0x2d8] sm:$0xff]
                %660 = vst [vmem:[%s476 + $0x2d8] sm:$0xff] %v659
                %v661 = vld [vmem:[%s475 + $0x2e0] sm:$0xff]
                %662 = vst [vmem:[%s476 + $0x2e0] sm:$0xff] %v661
                %v663 = vld [vmem:[%s475 + $0x2e8] sm:$0xff]
                %664 = vst [vmem:[%s476 + $0x2e8] sm:$0xff] %v663
                %v665 = vld [vmem:[%s475 + $0x2f0] sm:$0xff]
                %666 = vst [vmem:[%s476 + $0x2f0] sm:$0xff] %v665
                %v667 = vld [vmem:[%s475 + $0x2f8] sm:$0xff]
                %668 = vst [vmem:[%s476 + $0x2f8] sm:$0xff] %v667
                %v669 = vld [vmem:[%s475 + $0x300] sm:$0xff]
                %670 = vst [vmem:[%s476 + $0x300] sm:$0xff] %v669
                %v671 = vld [vmem:[%s475 + $0x308] sm:$0xff]
                %672 = vst [vmem:[%s476 + $0x308] sm:$0xff] %v671
                %v673 = vld [vmem:[%s475 + $0x310] sm:$0xff]
                %674 = vst [vmem:[%s476 + $0x310] sm:$0xff] %v673
                %v675 = vld [vmem:[%s475 + $0x318] sm:$0xff]
                %676 = vst [vmem:[%s476 + $0x318] sm:$0xff] %v675
                %v677 = vld [vmem:[%s475 + $0x320] sm:$0xff]
                %678 = vst [vmem:[%s476 + $0x320] sm:$0xff] %v677
                %v679 = vld [vmem:[%s475 + $0x328] sm:$0xff]
                %680 = vst [vmem:[%s476 + $0x328] sm:$0xff] %v679
                %v681 = vld [vmem:[%s475 + $0x330] sm:$0xff]
                %682 = vst [vmem:[%s476 + $0x330] sm:$0xff] %v681
                %v683 = vld [vmem:[%s475 + $0x338] sm:$0xff]
                %684 = vst [vmem:[%s476 + $0x338] sm:$0xff] %v683
                %v685 = vld [vmem:[%s475 + $0x340] sm:$0xff]
                %686 = vst [vmem:[%s476 + $0x340] sm:$0xff] %v685
                %v687 = vld [vmem:[%s475 + $0x348] sm:$0xff]
                %688 = vst [vmem:[%s476 + $0x348] sm:$0xff] %v687
                %v689 = vld [vmem:[%s475 + $0x350] sm:$0xff]
                %690 = vst [vmem:[%s476 + $0x350] sm:$0xff] %v689
                %v691 = vld [vmem:[%s475 + $0x358] sm:$0xff]
                %692 = vst [vmem:[%s476 + $0x358] sm:$0xff] %v691
                %v693 = vld [vmem:[%s475 + $0x360] sm:$0xff]
                %694 = vst [vmem:[%s476 + $0x360] sm:$0xff] %v693
                %v695 = vld [vmem:[%s475 + $0x368] sm:$0xff]
                %696 = vst [vmem:[%s476 + $0x368] sm:$0xff] %v695
                %v697 = vld [vmem:[%s475 + $0x370] sm:$0xff]
                %698 = vst [vmem:[%s476 + $0x370] sm:$0xff] %v697
                %v699 = vld [vmem:[%s475 + $0x378] sm:$0xff]
                %700 = vst [vmem:[%s476 + $0x378] sm:$0xff] %v699
                %v701 = vld [vmem:[%s475 + $0x380] sm:$0xff]
                %702 = vst [vmem:[%s476 + $0x380] sm:$0xff] %v701
                %v703 = vld [vmem:[%s475 + $0x388] sm:$0xff]
                %704 = vst [vmem:[%s476 + $0x388] sm:$0xff] %v703
                %v705 = vld [vmem:[%s475 + $0x390] sm:$0xff]
                %706 = vst [vmem:[%s476 + $0x390] sm:$0xff] %v705
                %v707 = vld [vmem:[%s475 + $0x398] sm:$0xff]
                %708 = vst [vmem:[%s476 + $0x398] sm:$0xff] %v707
                %v709 = vld [vmem:[%s475 + $0x3a0] sm:$0xff]
                %710 = vst [vmem:[%s476 + $0x3a0] sm:$0xff] %v709
                %v711 = vld [vmem:[%s475 + $0x3a8] sm:$0xff]
                %712 = vst [vmem:[%s476 + $0x3a8] sm:$0xff] %v711
                %v713 = vld [vmem:[%s475 + $0x3b0] sm:$0xff]
                %714 = vst [vmem:[%s476 + $0x3b0] sm:$0xff] %v713
                %v715 = vld [vmem:[%s475 + $0x3b8] sm:$0xff]
                %716 = vst [vmem:[%s476 + $0x3b8] sm:$0xff] %v715
                %v717 = vld [vmem:[%s475 + $0x3c0] sm:$0xff]
                %718 = vst [vmem:[%s476 + $0x3c0] sm:$0xff] %v717
                %v719 = vld [vmem:[%s475 + $0x3c8] sm:$0xff]
                %720 = vst [vmem:[%s476 + $0x3c8] sm:$0xff] %v719
                %v721 = vld [vmem:[%s475 + $0x3d0] sm:$0xff]
                %722 = vst [vmem:[%s476 + $0x3d0] sm:$0xff] %v721
                %v723 = vld [vmem:[%s475 + $0x3d8] sm:$0xff]
                %724 = vst [vmem:[%s476 + $0x3d8] sm:$0xff] %v723
                %v725 = vld [vmem:[%s475 + $0x3e0] sm:$0xff]
                %726 = vst [vmem:[%s476 + $0x3e0] sm:$0xff] %v725
                %v727 = vld [vmem:[%s475 + $0x3e8] sm:$0xff]
                %728 = vst [vmem:[%s476 + $0x3e8] sm:$0xff] %v727
                %v729 = vld [vmem:[%s475 + $0x3f0] sm:$0xff]
                %730 = vst [vmem:[%s476 + $0x3f0] sm:$0xff] %v729
                %v731 = vld [vmem:[%s475 + $0x3f8] sm:$0xff]
                %732 = vst [vmem:[%s476 + $0x3f8] sm:$0xff] %v731
                %v733 = vld [vmem:[%s475 + $0x400] sm:$0xff]
                %734 = vst [vmem:[%s476 + $0x400] sm:$0xff] %v733
                %v735 = vld [vmem:[%s475 + $0x408] sm:$0xff]
                %736 = vst [vmem:[%s476 + $0x408] sm:$0xff] %v735
                %v737 = vld [vmem:[%s475 + $0x410] sm:$0xff]
                %738 = vst [vmem:[%s476 + $0x410] sm:$0xff] %v737
                %v739 = vld [vmem:[%s475 + $0x418] sm:$0xff]
                %740 = vst [vmem:[%s476 + $0x418] sm:$0xff] %v739
                %v741 = vld [vmem:[%s475 + $0x420] sm:$0xff]
                %742 = vst [vmem:[%s476 + $0x420] sm:$0xff] %v741
                %v743 = vld [vmem:[%s475 + $0x428] sm:$0xff]
                %744 = vst [vmem:[%s476 + $0x428] sm:$0xff] %v743
                %v745 = vld [vmem:[%s475 + $0x430] sm:$0xff]
                %746 = vst [vmem:[%s476 + $0x430] sm:$0xff] %v745
                %v747 = vld [vmem:[%s475 + $0x438] sm:$0xff]
                %748 = vst [vmem:[%s476 + $0x438] sm:$0xff] %v747
                %v749 = vld [vmem:[%s475 + $0x440] sm:$0xff]
                %750 = vst [vmem:[%s476 + $0x440] sm:$0xff] %v749
                %v751 = vld [vmem:[%s475 + $0x448] sm:$0xff]
                %752 = vst [vmem:[%s476 + $0x448] sm:$0xff] %v751
                %v753 = vld [vmem:[%s475 + $0x450] sm:$0xff]
                %754 = vst [vmem:[%s476 + $0x450] sm:$0xff] %v753
                %v755 = vld [vmem:[%s475 + $0x458] sm:$0xff]
                %756 = vst [vmem:[%s476 + $0x458] sm:$0xff] %v755
                %v757 = vld [vmem:[%s475 + $0x460] sm:$0xff]
                %758 = vst [vmem:[%s476 + $0x460] sm:$0xff] %v757
                %v759 = vld [vmem:[%s475 + $0x468] sm:$0xff]
                %760 = vst [vmem:[%s476 + $0x468] sm:$0xff] %v759
                %v761 = vld [vmem:[%s475 + $0x470] sm:$0xff]
                %762 = vst [vmem:[%s476 + $0x470] sm:$0xff] %v761
                %v763 = vld [vmem:[%s475 + $0x478] sm:$0xff]
                %764 = vst [vmem:[%s476 + $0x478] sm:$0xff] %v763
                %v765 = vld [vmem:[%s475 + $0x480] sm:$0xff]
                %766 = vst [vmem:[%s476 + $0x480] sm:$0xff] %v765
                %v767 = vld [vmem:[%s475 + $0x488] sm:$0xff]
                %768 = vst [vmem:[%s476 + $0x488] sm:$0xff] %v767
                %v769 = vld [vmem:[%s475 + $0x490] sm:$0xff]
                %770 = vst [vmem:[%s476 + $0x490] sm:$0xff] %v769
                %v771 = vld [vmem:[%s475 + $0x498] sm:$0xff]
                %772 = vst [vmem:[%s476 + $0x498] sm:$0xff] %v771
                %v773 = vld [vmem:[%s475 + $0x4a0] sm:$0xff]
                %774 = vst [vmem:[%s476 + $0x4a0] sm:$0xff] %v773
                %v775 = vld [vmem:[%s475 + $0x4a8] sm:$0xff]
                %776 = vst [vmem:[%s476 + $0x4a8] sm:$0xff] %v775
                %v777 = vld [vmem:[%s475 + $0x4b0] sm:$0xff]
                %778 = vst [vmem:[%s476 + $0x4b0] sm:$0xff] %v777
                %v779 = vld [vmem:[%s475 + $0x4b8] sm:$0xff]
                %780 = vst [vmem:[%s476 + $0x4b8] sm:$0xff] %v779
                %v781 = vld [vmem:[%s475 + $0x4c0] sm:$0xff]
                %782 = vst [vmem:[%s476 + $0x4c0] sm:$0xff] %v781
                %v783 = vld [vmem:[%s475 + $0x4c8] sm:$0xff]
                %784 = vst [vmem:[%s476 + $0x4c8] sm:$0xff] %v783
                %v785 = vld [vmem:[%s475 + $0x4d0] sm:$0xff]
                %786 = vst [vmem:[%s476 + $0x4d0] sm:$0xff] %v785
                %v787 = vld [vmem:[%s475 + $0x4d8] sm:$0xff]
                %788 = vst [vmem:[%s476 + $0x4d8] sm:$0xff] %v787
                %v789 = vld [vmem:[%s475 + $0x4e0] sm:$0xff]
                %790 = vst [vmem:[%s476 + $0x4e0] sm:$0xff] %v789
                %v791 = vld [vmem:[%s475 + $0x4e8] sm:$0xff]
                %792 = vst [vmem:[%s476 + $0x4e8] sm:$0xff] %v791
                %v793 = vld [vmem:[%s475 + $0x4f0] sm:$0xff]
                %794 = vst [vmem:[%s476 + $0x4f0] sm:$0xff] %v793
                %v795 = vld [vmem:[%s475 + $0x4f8] sm:$0xff]
                %796 = vst [vmem:[%s476 + $0x4f8] sm:$0xff] %v795
                %v797 = vld [vmem:[%s475 + $0x500] sm:$0xff]
                %798 = vst [vmem:[%s476 + $0x500] sm:$0xff] %v797
                %v799 = vld [vmem:[%s475 + $0x508] sm:$0xff]
                %800 = vst [vmem:[%s476 + $0x508] sm:$0xff] %v799
                %v801 = vld [vmem:[%s475 + $0x510] sm:$0xff]
                %802 = vst [vmem:[%s476 + $0x510] sm:$0xff] %v801
                %v803 = vld [vmem:[%s475 + $0x518] sm:$0xff]
                %804 = vst [vmem:[%s476 + $0x518] sm:$0xff] %v803
                %v805 = vld [vmem:[%s475 + $0x520] sm:$0xff]
                %806 = vst [vmem:[%s476 + $0x520] sm:$0xff] %v805
                %v807 = vld [vmem:[%s475 + $0x528] sm:$0xff]
                %808 = vst [vmem:[%s476 + $0x528] sm:$0xff] %v807
                %v809 = vld [vmem:[%s475 + $0x530] sm:$0xff]
                %810 = vst [vmem:[%s476 + $0x530] sm:$0xff] %v809
                %v811 = vld [vmem:[%s475 + $0x538] sm:$0xff]
                %812 = vst [vmem:[%s476 + $0x538] sm:$0xff] %v811
                %v813 = vld [vmem:[%s475 + $0x540] sm:$0xff]
                %814 = vst [vmem:[%s476 + $0x540] sm:$0xff] %v813
                %v815 = vld [vmem:[%s475 + $0x548] sm:$0xff]
                %816 = vst [vmem:[%s476 + $0x548] sm:$0xff] %v815
                %v817 = vld [vmem:[%s475 + $0x550] sm:$0xff]
                %818 = vst [vmem:[%s476 + $0x550] sm:$0xff] %v817
                %v819 = vld [vmem:[%s475 + $0x558] sm:$0xff]
                %820 = vst [vmem:[%s476 + $0x558] sm:$0xff] %v819
                %v821 = vld [vmem:[%s475 + $0x560] sm:$0xff]
                %822 = vst [vmem:[%s476 + $0x560] sm:$0xff] %v821
                %v823 = vld [vmem:[%s475 + $0x568] sm:$0xff]
                %824 = vst [vmem:[%s476 + $0x568] sm:$0xff] %v823
                %v825 = vld [vmem:[%s475 + $0x570] sm:$0xff]
                %826 = vst [vmem:[%s476 + $0x570] sm:$0xff] %v825
                %v827 = vld [vmem:[%s475 + $0x578] sm:$0xff]
                %828 = vst [vmem:[%s476 + $0x578] sm:$0xff] %v827
                %v829 = vld [vmem:[%s475 + $0x580] sm:$0xff]
                %830 = vst [vmem:[%s476 + $0x580] sm:$0xff] %v829
                %v831 = vld [vmem:[%s475 + $0x588] sm:$0xff]
                %832 = vst [vmem:[%s476 + $0x588] sm:$0xff] %v831
                %v833 = vld [vmem:[%s475 + $0x590] sm:$0xff]
                %834 = vst [vmem:[%s476 + $0x590] sm:$0xff] %v833
                %v835 = vld [vmem:[%s475 + $0x598] sm:$0xff]
                %836 = vst [vmem:[%s476 + $0x598] sm:$0xff] %v835
                %v837 = vld [vmem:[%s475 + $0x5a0] sm:$0xff]
                %838 = vst [vmem:[%s476 + $0x5a0] sm:$0xff] %v837
                %v839 = vld [vmem:[%s475 + $0x5a8] sm:$0xff]
                %840 = vst [vmem:[%s476 + $0x5a8] sm:$0xff] %v839
                %v841 = vld [vmem:[%s475 + $0x5b0] sm:$0xff]
                %842 = vst [vmem:[%s476 + $0x5b0] sm:$0xff] %v841
                %v843 = vld [vmem:[%s475 + $0x5b8] sm:$0xff]
                %844 = vst [vmem:[%s476 + $0x5b8] sm:$0xff] %v843
                %v845 = vld [vmem:[%s475 + $0x5c0] sm:$0xff]
                %846 = vst [vmem:[%s476 + $0x5c0] sm:$0xff] %v845
                %v847 = vld [vmem:[%s475 + $0x5c8] sm:$0xff]
                %848 = vst [vmem:[%s476 + $0x5c8] sm:$0xff] %v847
                %v849 = vld [vmem:[%s475 + $0x5d0] sm:$0xff]
                %850 = vst [vmem:[%s476 + $0x5d0] sm:$0xff] %v849
                %v851 = vld [vmem:[%s475 + $0x5d8] sm:$0xff]
                %852 = vst [vmem:[%s476 + $0x5d8] sm:$0xff] %v851
                %v853 = vld [vmem:[%s475 + $0x5e0] sm:$0xff]
                %854 = vst [vmem:[%s476 + $0x5e0] sm:$0xff] %v853
                %v855 = vld [vmem:[%s475 + $0x5e8] sm:$0xff]
                %856 = vst [vmem:[%s476 + $0x5e8] sm:$0xff] %v855
                %v857 = vld [vmem:[%s475 + $0x5f0] sm:$0xff]
                %858 = vst [vmem:[%s476 + $0x5f0] sm:$0xff] %v857
                %v859 = vld [vmem:[%s475 + $0x5f8] sm:$0xff]
                %860 = vst [vmem:[%s476 + $0x5f8] sm:$0xff] %v859
                %v861 = vld [vmem:[%s475 + $0x600] sm:$0xff]
                %862 = vst [vmem:[%s476 + $0x600] sm:$0xff] %v861
                %v863 = vld [vmem:[%s475 + $0x608] sm:$0xff]
                %864 = vst [vmem:[%s476 + $0x608] sm:$0xff] %v863
                %v865 = vld [vmem:[%s475 + $0x610] sm:$0xff]
                %866 = vst [vmem:[%s476 + $0x610] sm:$0xff] %v865
                %v867 = vld [vmem:[%s475 + $0x618] sm:$0xff]
                %868 = vst [vmem:[%s476 + $0x618] sm:$0xff] %v867
                %v869 = vld [vmem:[%s475 + $0x620] sm:$0xff]
                %870 = vst [vmem:[%s476 + $0x620] sm:$0xff] %v869
                %v871 = vld [vmem:[%s475 + $0x628] sm:$0xff]
                %872 = vst [vmem:[%s476 + $0x628] sm:$0xff] %v871
                %v873 = vld [vmem:[%s475 + $0x630] sm:$0xff]
                %874 = vst [vmem:[%s476 + $0x630] sm:$0xff] %v873
                %v875 = vld [vmem:[%s475 + $0x638] sm:$0xff]
                %876 = vst [vmem:[%s476 + $0x638] sm:$0xff] %v875
                %v877 = vld [vmem:[%s475 + $0x640] sm:$0xff]
                %878 = vst [vmem:[%s476 + $0x640] sm:$0xff] %v877
                %v879 = vld [vmem:[%s475 + $0x648] sm:$0xff]
                %880 = vst [vmem:[%s476 + $0x648] sm:$0xff] %v879
                %v881 = vld [vmem:[%s475 + $0x650] sm:$0xff]
                %882 = vst [vmem:[%s476 + $0x650] sm:$0xff] %v881
                %v883 = vld [vmem:[%s475 + $0x658] sm:$0xff]
                %884 = vst [vmem:[%s476 + $0x658] sm:$0xff] %v883
                %v885 = vld [vmem:[%s475 + $0x660] sm:$0xff]
                %886 = vst [vmem:[%s476 + $0x660] sm:$0xff] %v885
                %v887 = vld [vmem:[%s475 + $0x668] sm:$0xff]
                %888 = vst [vmem:[%s476 + $0x668] sm:$0xff] %v887
                %v889 = vld [vmem:[%s475 + $0x670] sm:$0xff]
                %890 = vst [vmem:[%s476 + $0x670] sm:$0xff] %v889
                %v891 = vld [vmem:[%s475 + $0x678] sm:$0xff]
                %892 = vst [vmem:[%s476 + $0x678] sm:$0xff] %v891
                %v893 = vld [vmem:[%s475 + $0x680] sm:$0xff]
                %894 = vst [vmem:[%s476 + $0x680] sm:$0xff] %v893
                %v895 = vld [vmem:[%s475 + $0x688] sm:$0xff]
                %896 = vst [vmem:[%s476 + $0x688] sm:$0xff] %v895
                %v897 = vld [vmem:[%s475 + $0x690] sm:$0xff]
                %898 = vst [vmem:[%s476 + $0x690] sm:$0xff] %v897
                %v899 = vld [vmem:[%s475 + $0x698] sm:$0xff]
                %900 = vst [vmem:[%s476 + $0x698] sm:$0xff] %v899
                %v901 = vld [vmem:[%s475 + $0x6a0] sm:$0xff]
                %902 = vst [vmem:[%s476 + $0x6a0] sm:$0xff] %v901
                %v903 = vld [vmem:[%s475 + $0x6a8] sm:$0xff]
                %904 = vst [vmem:[%s476 + $0x6a8] sm:$0xff] %v903
                %v905 = vld [vmem:[%s475 + $0x6b0] sm:$0xff]
                %906 = vst [vmem:[%s476 + $0x6b0] sm:$0xff] %v905
                %v907 = vld [vmem:[%s475 + $0x6b8] sm:$0xff]
                %908 = vst [vmem:[%s476 + $0x6b8] sm:$0xff] %v907
                %v909 = vld [vmem:[%s475 + $0x6c0] sm:$0xff]
                %910 = vst [vmem:[%s476 + $0x6c0] sm:$0xff] %v909
                %v911 = vld [vmem:[%s475 + $0x6c8] sm:$0xff]
                %912 = vst [vmem:[%s476 + $0x6c8] sm:$0xff] %v911
                %v913 = vld [vmem:[%s475 + $0x6d0] sm:$0xff]
                %914 = vst [vmem:[%s476 + $0x6d0] sm:$0xff] %v913
                %v915 = vld [vmem:[%s475 + $0x6d8] sm:$0xff]
                %916 = vst [vmem:[%s476 + $0x6d8] sm:$0xff] %v915
                %v917 = vld [vmem:[%s475 + $0x6e0] sm:$0xff]
                %918 = vst [vmem:[%s476 + $0x6e0] sm:$0xff] %v917
                %v919 = vld [vmem:[%s475 + $0x6e8] sm:$0xff]
                %920 = vst [vmem:[%s476 + $0x6e8] sm:$0xff] %v919
                %v921 = vld [vmem:[%s475 + $0x6f0] sm:$0xff]
                %922 = vst [vmem:[%s476 + $0x6f0] sm:$0xff] %v921
                %v923 = vld [vmem:[%s475 + $0x6f8] sm:$0xff]
                %924 = vst [vmem:[%s476 + $0x6f8] sm:$0xff] %v923
                %v925 = vld [vmem:[%s475 + $0x700] sm:$0xff]
                %926 = vst [vmem:[%s476 + $0x700] sm:$0xff] %v925
                %v927 = vld [vmem:[%s475 + $0x708] sm:$0xff]
                %928 = vst [vmem:[%s476 + $0x708] sm:$0xff] %v927
                %v929 = vld [vmem:[%s475 + $0x710] sm:$0xff]
                %930 = vst [vmem:[%s476 + $0x710] sm:$0xff] %v929
                %v931 = vld [vmem:[%s475 + $0x718] sm:$0xff]
                %932 = vst [vmem:[%s476 + $0x718] sm:$0xff] %v931
                %v933 = vld [vmem:[%s475 + $0x720] sm:$0xff]
                %934 = vst [vmem:[%s476 + $0x720] sm:$0xff] %v933
                %v935 = vld [vmem:[%s475 + $0x728] sm:$0xff]
                %936 = vst [vmem:[%s476 + $0x728] sm:$0xff] %v935
                %v937 = vld [vmem:[%s475 + $0x730] sm:$0xff]
                %938 = vst [vmem:[%s476 + $0x730] sm:$0xff] %v937
                %v939 = vld [vmem:[%s475 + $0x738] sm:$0xff]
                %940 = vst [vmem:[%s476 + $0x738] sm:$0xff] %v939
                %v941 = vld [vmem:[%s475 + $0x740] sm:$0xff]
                %942 = vst [vmem:[%s476 + $0x740] sm:$0xff] %v941
                %v943 = vld [vmem:[%s475 + $0x748] sm:$0xff]
                %944 = vst [vmem:[%s476 + $0x748] sm:$0xff] %v943
                %v945 = vld [vmem:[%s475 + $0x750] sm:$0xff]
                %946 = vst [vmem:[%s476 + $0x750] sm:$0xff] %v945
                %v947 = vld [vmem:[%s475 + $0x758] sm:$0xff]
                %948 = vst [vmem:[%s476 + $0x758] sm:$0xff] %v947
                %v949 = vld [vmem:[%s475 + $0x760] sm:$0xff]
                %950 = vst [vmem:[%s476 + $0x760] sm:$0xff] %v949
                %v951 = vld [vmem:[%s475 + $0x768] sm:$0xff]
                %952 = vst [vmem:[%s476 + $0x768] sm:$0xff] %v951
                %v953 = vld [vmem:[%s475 + $0x770] sm:$0xff]
                %954 = vst [vmem:[%s476 + $0x770] sm:$0xff] %v953
                %v955 = vld [vmem:[%s475 + $0x778] sm:$0xff]
                %956 = vst [vmem:[%s476 + $0x778] sm:$0xff] %v955
                %v957 = vld [vmem:[%s475 + $0x780] sm:$0xff]
                %958 = vst [vmem:[%s476 + $0x780] sm:$0xff] %v957
                %v959 = vld [vmem:[%s475 + $0x788] sm:$0xff]
                %960 = vst [vmem:[%s476 + $0x788] sm:$0xff] %v959
                %v961 = vld [vmem:[%s475 + $0x790] sm:$0xff]
                %962 = vst [vmem:[%s476 + $0x790] sm:$0xff] %v961
                %v963 = vld [vmem:[%s475 + $0x798] sm:$0xff]
                %964 = vst [vmem:[%s476 + $0x798] sm:$0xff] %v963
                %v965 = vld [vmem:[%s475 + $0x7a0] sm:$0xff]
                %966 = vst [vmem:[%s476 + $0x7a0] sm:$0xff] %v965
                %v967 = vld [vmem:[%s475 + $0x7a8] sm:$0xff]
                %968 = vst [vmem:[%s476 + $0x7a8] sm:$0xff] %v967
                %v969 = vld [vmem:[%s475 + $0x7b0] sm:$0xff]
                %970 = vst [vmem:[%s476 + $0x7b0] sm:$0xff] %v969
                %v971 = vld [vmem:[%s475 + $0x7b8] sm:$0xff]
                %972 = vst [vmem:[%s476 + $0x7b8] sm:$0xff] %v971
                %v973 = vld [vmem:[%s475 + $0x7c0] sm:$0xff]
                %974 = vst [vmem:[%s476 + $0x7c0] sm:$0xff] %v973
                %v975 = vld [vmem:[%s475 + $0x7c8] sm:$0xff]
                %976 = vst [vmem:[%s476 + $0x7c8] sm:$0xff] %v975
                %v977 = vld [vmem:[%s475 + $0x7d0] sm:$0xff]
                %978 = vst [vmem:[%s476 + $0x7d0] sm:$0xff] %v977
                %v979 = vld [vmem:[%s475 + $0x7d8] sm:$0xff]
                %980 = vst [vmem:[%s476 + $0x7d8] sm:$0xff] %v979
                %v981 = vld [vmem:[%s475 + $0x7e0] sm:$0xff]
                %982 = vst [vmem:[%s476 + $0x7e0] sm:$0xff] %v981
                %v983 = vld [vmem:[%s475 + $0x7e8] sm:$0xff]
                %984 = vst [vmem:[%s476 + $0x7e8] sm:$0xff] %v983
                %v985 = vld [vmem:[%s475 + $0x7f0] sm:$0xff]
                %986 = vst [vmem:[%s476 + $0x7f0] sm:$0xff] %v985
                %v987 = vld [vmem:[%s475 + $0x7f8] sm:$0xff]
                %988 = vst [vmem:[%s476 + $0x7f8] sm:$0xff] %v987
                %v989 = vld [vmem:[%s475 + $0x800] sm:$0xff]
                %990 = vst [vmem:[%s476 + $0x800] sm:$0xff] %v989
                %v991 = vld [vmem:[%s475 + $0x808] sm:$0xff]
                %992 = vst [vmem:[%s476 + $0x808] sm:$0xff] %v991
                %v993 = vld [vmem:[%s475 + $0x810] sm:$0xff]
                %994 = vst [vmem:[%s476 + $0x810] sm:$0xff] %v993
                %v995 = vld [vmem:[%s475 + $0x818] sm:$0xff]
                %996 = vst [vmem:[%s476 + $0x818] sm:$0xff] %v995
                %v997 = vld [vmem:[%s475 + $0x820] sm:$0xff]
                %998 = vst [vmem:[%s476 + $0x820] sm:$0xff] %v997
                %v999 = vld [vmem:[%s475 + $0x828] sm:$0xff]
                %1000 = vst [vmem:[%s476 + $0x828] sm:$0xff] %v999
                %v1001 = vld [vmem:[%s475 + $0x830] sm:$0xff]
                %1002 = vst [vmem:[%s476 + $0x830] sm:$0xff] %v1001
                %v1003 = vld [vmem:[%s475 + $0x838] sm:$0xff]
                %1004 = vst [vmem:[%s476 + $0x838] sm:$0xff] %v1003
                %v1005 = vld [vmem:[%s475 + $0x840] sm:$0xff]
                %1006 = vst [vmem:[%s476 + $0x840] sm:$0xff] %v1005
                %v1007 = vld [vmem:[%s475 + $0x848] sm:$0xff]
                %1008 = vst [vmem:[%s476 + $0x848] sm:$0xff] %v1007
                %v1009 = vld [vmem:[%s475 + $0x850] sm:$0xff]
                %1010 = vst [vmem:[%s476 + $0x850] sm:$0xff] %v1009
                %v1011 = vld [vmem:[%s475 + $0x858] sm:$0xff]
                %1012 = vst [vmem:[%s476 + $0x858] sm:$0xff] %v1011
                %v1013 = vld [vmem:[%s475 + $0x860] sm:$0xff]
                %1014 = vst [vmem:[%s476 + $0x860] sm:$0xff] %v1013
                %v1015 = vld [vmem:[%s475 + $0x868] sm:$0xff]
                %1016 = vst [vmem:[%s476 + $0x868] sm:$0xff] %v1015
                %v1017 = vld [vmem:[%s475 + $0x870] sm:$0xff]
                %1018 = vst [vmem:[%s476 + $0x870] sm:$0xff] %v1017
                %v1019 = vld [vmem:[%s475 + $0x878] sm:$0xff]
                %1020 = vst [vmem:[%s476 + $0x878] sm:$0xff] %v1019
                %v1021 = vld [vmem:[%s475 + $0x880] sm:$0xff]
                %1022 = vst [vmem:[%s476 + $0x880] sm:$0xff] %v1021
                %v1023 = vld [vmem:[%s475 + $0x888] sm:$0xff]
                %1024 = vst [vmem:[%s476 + $0x888] sm:$0xff] %v1023
                %v1025 = vld [vmem:[%s475 + $0x890] sm:$0xff]
                %1026 = vst [vmem:[%s476 + $0x890] sm:$0xff] %v1025
                %v1027 = vld [vmem:[%s475 + $0x898] sm:$0xff]
                %1028 = vst [vmem:[%s476 + $0x898] sm:$0xff] %v1027
                %v1029 = vld [vmem:[%s475 + $0x8a0] sm:$0xff]
                %1030 = vst [vmem:[%s476 + $0x8a0] sm:$0xff] %v1029
                %v1031 = vld [vmem:[%s475 + $0x8a8] sm:$0xff]
                %1032 = vst [vmem:[%s476 + $0x8a8] sm:$0xff] %v1031
                %v1033 = vld [vmem:[%s475 + $0x8b0] sm:$0xff]
                %1034 = vst [vmem:[%s476 + $0x8b0] sm:$0xff] %v1033
                %v1035 = vld [vmem:[%s475 + $0x8b8] sm:$0xff]
                %1036 = vst [vmem:[%s476 + $0x8b8] sm:$0xff] %v1035
                %v1037 = vld [vmem:[%s475 + $0x8c0] sm:$0xff]
                %1038 = vst [vmem:[%s476 + $0x8c0] sm:$0xff] %v1037
                %v1039 = vld [vmem:[%s475 + $0x8c8] sm:$0xff]
                %1040 = vst [vmem:[%s476 + $0x8c8] sm:$0xff] %v1039
                %v1041 = vld [vmem:[%s475 + $0x8d0] sm:$0xff]
                %1042 = vst [vmem:[%s476 + $0x8d0] sm:$0xff] %v1041
                %v1043 = vld [vmem:[%s475 + $0x8d8] sm:$0xff]
                %1044 = vst [vmem:[%s476 + $0x8d8] sm:$0xff] %v1043
                %v1045 = vld [vmem:[%s475 + $0x8e0] sm:$0xff]
                %1046 = vst [vmem:[%s476 + $0x8e0] sm:$0xff] %v1045
                %v1047 = vld [vmem:[%s475 + $0x8e8] sm:$0xff]
                %1048 = vst [vmem:[%s476 + $0x8e8] sm:$0xff] %v1047
                %v1049 = vld [vmem:[%s475 + $0x8f0] sm:$0xff]
                %1050 = vst [vmem:[%s476 + $0x8f0] sm:$0xff] %v1049
                %v1051 = vld [vmem:[%s475 + $0x8f8] sm:$0xff]
                %1052 = vst [vmem:[%s476 + $0x8f8] sm:$0xff] %v1051
                %v1053 = vld [vmem:[%s475 + $0x900] sm:$0xff]
                %1054 = vst [vmem:[%s476 + $0x900] sm:$0xff] %v1053
                %v1055 = vld [vmem:[%s475 + $0x908] sm:$0xff]
                %1056 = vst [vmem:[%s476 + $0x908] sm:$0xff] %v1055
                %v1057 = vld [vmem:[%s475 + $0x910] sm:$0xff]
                %1058 = vst [vmem:[%s476 + $0x910] sm:$0xff] %v1057
                %v1059 = vld [vmem:[%s475 + $0x918] sm:$0xff]
                %1060 = vst [vmem:[%s476 + $0x918] sm:$0xff] %v1059
                %v1061 = vld [vmem:[%s475 + $0x920] sm:$0xff]
                %1062 = vst [vmem:[%s476 + $0x920] sm:$0xff] %v1061
                %v1063 = vld [vmem:[%s475 + $0x928] sm:$0xff]
                %1064 = vst [vmem:[%s476 + $0x928] sm:$0xff] %v1063
                %v1065 = vld [vmem:[%s475 + $0x930] sm:$0xff]
                %1066 = vst [vmem:[%s476 + $0x930] sm:$0xff] %v1065
                %v1067 = vld [vmem:[%s475 + $0x938] sm:$0xff]
                %1068 = vst [vmem:[%s476 + $0x938] sm:$0xff] %v1067
                %v1069 = vld [vmem:[%s475 + $0x940] sm:$0xff]
                %1070 = vst [vmem:[%s476 + $0x940] sm:$0xff] %v1069
                %v1071 = vld [vmem:[%s475 + $0x948] sm:$0xff]
                %1072 = vst [vmem:[%s476 + $0x948] sm:$0xff] %v1071
                %v1073 = vld [vmem:[%s475 + $0x950] sm:$0xff]
                %1074 = vst [vmem:[%s476 + $0x950] sm:$0xff] %v1073
                %v1075 = vld [vmem:[%s475 + $0x958] sm:$0xff]
                %1076 = vst [vmem:[%s476 + $0x958] sm:$0xff] %v1075
                %v1077 = vld [vmem:[%s475 + $0x960] sm:$0xff]
                %1078 = vst [vmem:[%s476 + $0x960] sm:$0xff] %v1077
                %v1079 = vld [vmem:[%s475 + $0x968] sm:$0xff]
                %1080 = vst [vmem:[%s476 + $0x968] sm:$0xff] %v1079
                %v1081 = vld [vmem:[%s475 + $0x970] sm:$0xff]
                %1082 = vst [vmem:[%s476 + $0x970] sm:$0xff] %v1081
                %v1083 = vld [vmem:[%s475 + $0x978] sm:$0xff]
                %1084 = vst [vmem:[%s476 + $0x978] sm:$0xff] %v1083
                %v1085 = vld [vmem:[%s475 + $0x980] sm:$0xff]
                %1086 = vst [vmem:[%s476 + $0x980] sm:$0xff] %v1085
                %v1087 = vld [vmem:[%s475 + $0x988] sm:$0xff]
                %1088 = vst [vmem:[%s476 + $0x988] sm:$0xff] %v1087
                %v1089 = vld [vmem:[%s475 + $0x990] sm:$0xff]
                %1090 = vst [vmem:[%s476 + $0x990] sm:$0xff] %v1089
                %v1091 = vld [vmem:[%s475 + $0x998] sm:$0xff]
                %1092 = vst [vmem:[%s476 + $0x998] sm:$0xff] %v1091
                %v1093 = vld [vmem:[%s475 + $0x9a0] sm:$0xff]
                %1094 = vst [vmem:[%s476 + $0x9a0] sm:$0xff] %v1093
                %v1095 = vld [vmem:[%s475 + $0x9a8] sm:$0xff]
                %1096 = vst [vmem:[%s476 + $0x9a8] sm:$0xff] %v1095
                %v1097 = vld [vmem:[%s475 + $0x9b0] sm:$0xff]
                %1098 = vst [vmem:[%s476 + $0x9b0] sm:$0xff] %v1097
                %v1099 = vld [vmem:[%s475 + $0x9b8] sm:$0xff]
                %1100 = vst [vmem:[%s476 + $0x9b8] sm:$0xff] %v1099
                %v1101 = vld [vmem:[%s475 + $0x9c0] sm:$0xff]
                %1102 = vst [vmem:[%s476 + $0x9c0] sm:$0xff] %v1101
                %v1103 = vld [vmem:[%s475 + $0x9c8] sm:$0xff]
                %1104 = vst [vmem:[%s476 + $0x9c8] sm:$0xff] %v1103
                %v1105 = vld [vmem:[%s475 + $0x9d0] sm:$0xff]
                %1106 = vst [vmem:[%s476 + $0x9d0] sm:$0xff] %v1105
                %v1107 = vld [vmem:[%s475 + $0x9d8] sm:$0xff]
                %1108 = vst [vmem:[%s476 + $0x9d8] sm:$0xff] %v1107
                %v1109 = vld [vmem:[%s475 + $0x9e0] sm:$0xff]
                %1110 = vst [vmem:[%s476 + $0x9e0] sm:$0xff] %v1109
                %v1111 = vld [vmem:[%s475 + $0x9e8] sm:$0xff]
                %1112 = vst [vmem:[%s476 + $0x9e8] sm:$0xff] %v1111
                %v1113 = vld [vmem:[%s475 + $0x9f0] sm:$0xff]
                %1114 = vst [vmem:[%s476 + $0x9f0] sm:$0xff] %v1113
                %v1115 = vld [vmem:[%s475 + $0x9f8] sm:$0xff]
                %1116 = vst [vmem:[%s476 + $0x9f8] sm:$0xff] %v1115
                %v1117 = vld [vmem:[%s475 + $0xa00] sm:$0xff]
                %1118 = vst [vmem:[%s476 + $0xa00] sm:$0xff] %v1117
                %v1119 = vld [vmem:[%s475 + $0xa08] sm:$0xff]
                %1120 = vst [vmem:[%s476 + $0xa08] sm:$0xff] %v1119
                %v1121 = vld [vmem:[%s475 + $0xa10] sm:$0xff]
                %1122 = vst [vmem:[%s476 + $0xa10] sm:$0xff] %v1121
                %v1123 = vld [vmem:[%s475 + $0xa18] sm:$0xff]
                %1124 = vst [vmem:[%s476 + $0xa18] sm:$0xff] %v1123
                %v1125 = vld [vmem:[%s475 + $0xa20] sm:$0xff]
                %1126 = vst [vmem:[%s476 + $0xa20] sm:$0xff] %v1125
                %v1127 = vld [vmem:[%s475 + $0xa28] sm:$0xff]
                %1128 = vst [vmem:[%s476 + $0xa28] sm:$0xff] %v1127
                %v1129 = vld [vmem:[%s475 + $0xa30] sm:$0xff]
                %1130 = vst [vmem:[%s476 + $0xa30] sm:$0xff] %v1129
                %v1131 = vld [vmem:[%s475 + $0xa38] sm:$0xff]
                %1132 = vst [vmem:[%s476 + $0xa38] sm:$0xff] %v1131
                %v1133 = vld [vmem:[%s475 + $0xa40] sm:$0xff]
                %1134 = vst [vmem:[%s476 + $0xa40] sm:$0xff] %v1133
                %v1135 = vld [vmem:[%s475 + $0xa48] sm:$0xff]
                %1136 = vst [vmem:[%s476 + $0xa48] sm:$0xff] %v1135
                %v1137 = vld [vmem:[%s475 + $0xa50] sm:$0xff]
                %1138 = vst [vmem:[%s476 + $0xa50] sm:$0xff] %v1137
                %v1139 = vld [vmem:[%s475 + $0xa58] sm:$0xff]
                %1140 = vst [vmem:[%s476 + $0xa58] sm:$0xff] %v1139
                %v1141 = vld [vmem:[%s475 + $0xa60] sm:$0xff]
                %1142 = vst [vmem:[%s476 + $0xa60] sm:$0xff] %v1141
                %v1143 = vld [vmem:[%s475 + $0xa68] sm:$0xff]
                %1144 = vst [vmem:[%s476 + $0xa68] sm:$0xff] %v1143
                %v1145 = vld [vmem:[%s475 + $0xa70] sm:$0xff]
                %1146 = vst [vmem:[%s476 + $0xa70] sm:$0xff] %v1145
                %v1147 = vld [vmem:[%s475 + $0xa78] sm:$0xff]
                %1148 = vst [vmem:[%s476 + $0xa78] sm:$0xff] %v1147
                %v1149 = vld [vmem:[%s475 + $0xa80] sm:$0xff]
                %1150 = vst [vmem:[%s476 + $0xa80] sm:$0xff] %v1149
                %v1151 = vld [vmem:[%s475 + $0xa88] sm:$0xff]
                %1152 = vst [vmem:[%s476 + $0xa88] sm:$0xff] %v1151
                %v1153 = vld [vmem:[%s475 + $0xa90] sm:$0xff]
                %1154 = vst [vmem:[%s476 + $0xa90] sm:$0xff] %v1153
                %v1155 = vld [vmem:[%s475 + $0xa98] sm:$0xff]
                %1156 = vst [vmem:[%s476 + $0xa98] sm:$0xff] %v1155
                %v1157 = vld [vmem:[%s475 + $0xaa0] sm:$0xff]
                %1158 = vst [vmem:[%s476 + $0xaa0] sm:$0xff] %v1157
                %v1159 = vld [vmem:[%s475 + $0xaa8] sm:$0xff]
                %1160 = vst [vmem:[%s476 + $0xaa8] sm:$0xff] %v1159
                %v1161 = vld [vmem:[%s475 + $0xab0] sm:$0xff]
                %1162 = vst [vmem:[%s476 + $0xab0] sm:$0xff] %v1161
                %v1163 = vld [vmem:[%s475 + $0xab8] sm:$0xff]
                %1164 = vst [vmem:[%s476 + $0xab8] sm:$0xff] %v1163
                %v1165 = vld [vmem:[%s475 + $0xac0] sm:$0xff]
                %1166 = vst [vmem:[%s476 + $0xac0] sm:$0xff] %v1165
                %v1167 = vld [vmem:[%s475 + $0xac8] sm:$0xff]
                %1168 = vst [vmem:[%s476 + $0xac8] sm:$0xff] %v1167
                %v1169 = vld [vmem:[%s475 + $0xad0] sm:$0xff]
                %1170 = vst [vmem:[%s476 + $0xad0] sm:$0xff] %v1169
                %v1171 = vld [vmem:[%s475 + $0xad8] sm:$0xff]
                %1172 = vst [vmem:[%s476 + $0xad8] sm:$0xff] %v1171
                %v1173 = vld [vmem:[%s475 + $0xae0] sm:$0xff]
                %1174 = vst [vmem:[%s476 + $0xae0] sm:$0xff] %v1173
                %v1175 = vld [vmem:[%s475 + $0xae8] sm:$0xff]
                %1176 = vst [vmem:[%s476 + $0xae8] sm:$0xff] %v1175
                %v1177 = vld [vmem:[%s475 + $0xaf0] sm:$0xff]
                %1178 = vst [vmem:[%s476 + $0xaf0] sm:$0xff] %v1177
                %v1179 = vld [vmem:[%s475 + $0xaf8] sm:$0xff]
                %1180 = vst [vmem:[%s476 + $0xaf8] sm:$0xff] %v1179
                %v1181 = vld [vmem:[%s475 + $0xb00] sm:$0xff]
                %1182 = vst [vmem:[%s476 + $0xb00] sm:$0xff] %v1181
                %v1183 = vld [vmem:[%s475 + $0xb08] sm:$0xff]
                %1184 = vst [vmem:[%s476 + $0xb08] sm:$0xff] %v1183
                %v1185 = vld [vmem:[%s475 + $0xb10] sm:$0xff]
                %1186 = vst [vmem:[%s476 + $0xb10] sm:$0xff] %v1185
                %v1187 = vld [vmem:[%s475 + $0xb18] sm:$0xff]
                %1188 = vst [vmem:[%s476 + $0xb18] sm:$0xff] %v1187
                %v1189 = vld [vmem:[%s475 + $0xb20] sm:$0xff]
                %1190 = vst [vmem:[%s476 + $0xb20] sm:$0xff] %v1189
                %v1191 = vld [vmem:[%s475 + $0xb28] sm:$0xff]
                %1192 = vst [vmem:[%s476 + $0xb28] sm:$0xff] %v1191
                %v1193 = vld [vmem:[%s475 + $0xb30] sm:$0xff]
                %1194 = vst [vmem:[%s476 + $0xb30] sm:$0xff] %v1193
                %v1195 = vld [vmem:[%s475 + $0xb38] sm:$0xff]
                %1196 = vst [vmem:[%s476 + $0xb38] sm:$0xff] %v1195
                %v1197 = vld [vmem:[%s475 + $0xb40] sm:$0xff]
                %1198 = vst [vmem:[%s476 + $0xb40] sm:$0xff] %v1197
                %v1199 = vld [vmem:[%s475 + $0xb48] sm:$0xff]
                %1200 = vst [vmem:[%s476 + $0xb48] sm:$0xff] %v1199
                %v1201 = vld [vmem:[%s475 + $0xb50] sm:$0xff]
                %1202 = vst [vmem:[%s476 + $0xb50] sm:$0xff] %v1201
                %v1203 = vld [vmem:[%s475 + $0xb58] sm:$0xff]
                %1204 = vst [vmem:[%s476 + $0xb58] sm:$0xff] %v1203
                %v1205 = vld [vmem:[%s475 + $0xb60] sm:$0xff]
                %1206 = vst [vmem:[%s476 + $0xb60] sm:$0xff] %v1205
                %v1207 = vld [vmem:[%s475 + $0xb68] sm:$0xff]
                %1208 = vst [vmem:[%s476 + $0xb68] sm:$0xff] %v1207
                %v1209 = vld [vmem:[%s475 + $0xb70] sm:$0xff]
                %1210 = vst [vmem:[%s476 + $0xb70] sm:$0xff] %v1209
                %v1211 = vld [vmem:[%s475 + $0xb78] sm:$0xff]
                %1212 = vst [vmem:[%s476 + $0xb78] sm:$0xff] %v1211
                %v1213 = vld [vmem:[%s475 + $0xb80] sm:$0xff]
                %1214 = vst [vmem:[%s476 + $0xb80] sm:$0xff] %v1213
                %v1215 = vld [vmem:[%s475 + $0xb88] sm:$0xff]
                %1216 = vst [vmem:[%s476 + $0xb88] sm:$0xff] %v1215
                %v1217 = vld [vmem:[%s475 + $0xb90] sm:$0xff]
                %1218 = vst [vmem:[%s476 + $0xb90] sm:$0xff] %v1217
                %v1219 = vld [vmem:[%s475 + $0xb98] sm:$0xff]
                %1220 = vst [vmem:[%s476 + $0xb98] sm:$0xff] %v1219
                %v1221 = vld [vmem:[%s475 + $0xba0] sm:$0xff]
                %1222 = vst [vmem:[%s476 + $0xba0] sm:$0xff] %v1221
                %v1223 = vld [vmem:[%s475 + $0xba8] sm:$0xff]
                %1224 = vst [vmem:[%s476 + $0xba8] sm:$0xff] %v1223
                %v1225 = vld [vmem:[%s475 + $0xbb0] sm:$0xff]
                %1226 = vst [vmem:[%s476 + $0xbb0] sm:$0xff] %v1225
                %v1227 = vld [vmem:[%s475 + $0xbb8] sm:$0xff]
                %1228 = vst [vmem:[%s476 + $0xbb8] sm:$0xff] %v1227
                %v1229 = vld [vmem:[%s475 + $0xbc0] sm:$0xff]
                %1230 = vst [vmem:[%s476 + $0xbc0] sm:$0xff] %v1229
                %v1231 = vld [vmem:[%s475 + $0xbc8] sm:$0xff]
                %1232 = vst [vmem:[%s476 + $0xbc8] sm:$0xff] %v1231
                %v1233 = vld [vmem:[%s475 + $0xbd0] sm:$0xff]
                %1234 = vst [vmem:[%s476 + $0xbd0] sm:$0xff] %v1233
                %v1235 = vld [vmem:[%s475 + $0xbd8] sm:$0xff]
                %1236 = vst [vmem:[%s476 + $0xbd8] sm:$0xff] %v1235
                %v1237 = vld [vmem:[%s475 + $0xbe0] sm:$0xff]
                %1238 = vst [vmem:[%s476 + $0xbe0] sm:$0xff] %v1237
                %v1239 = vld [vmem:[%s475 + $0xbe8] sm:$0xff]
                %1240 = vst [vmem:[%s476 + $0xbe8] sm:$0xff] %v1239
                %v1241 = vld [vmem:[%s475 + $0xbf0] sm:$0xff]
                %1242 = vst [vmem:[%s476 + $0xbf0] sm:$0xff] %v1241
                %v1243 = vld [vmem:[%s475 + $0xbf8] sm:$0xff]
                %1244 = vst [vmem:[%s476 + $0xbf8] sm:$0xff] %v1243
                %v1245 = vld [vmem:[%s475 + $0xc00] sm:$0xff]
                %1246 = vst [vmem:[%s476 + $0xc00] sm:$0xff] %v1245
                %v1247 = vld [vmem:[%s475 + $0xc08] sm:$0xff]
                %1248 = vst [vmem:[%s476 + $0xc08] sm:$0xff] %v1247
                %v1249 = vld [vmem:[%s475 + $0xc10] sm:$0xff]
                %1250 = vst [vmem:[%s476 + $0xc10] sm:$0xff] %v1249
                %v1251 = vld [vmem:[%s475 + $0xc18] sm:$0xff]
                %1252 = vst [vmem:[%s476 + $0xc18] sm:$0xff] %v1251
                %v1253 = vld [vmem:[%s475 + $0xc20] sm:$0xff]
                %1254 = vst [vmem:[%s476 + $0xc20] sm:$0xff] %v1253
                %v1255 = vld [vmem:[%s475 + $0xc28] sm:$0xff]
                %1256 = vst [vmem:[%s476 + $0xc28] sm:$0xff] %v1255
                %v1257 = vld [vmem:[%s475 + $0xc30] sm:$0xff]
                %1258 = vst [vmem:[%s476 + $0xc30] sm:$0xff] %v1257
                %v1259 = vld [vmem:[%s475 + $0xc38] sm:$0xff]
                %1260 = vst [vmem:[%s476 + $0xc38] sm:$0xff] %v1259
                %v1261 = vld [vmem:[%s475 + $0xc40] sm:$0xff]
                %1262 = vst [vmem:[%s476 + $0xc40] sm:$0xff] %v1261
                %v1263 = vld [vmem:[%s475 + $0xc48] sm:$0xff]
                %1264 = vst [vmem:[%s476 + $0xc48] sm:$0xff] %v1263
                %v1265 = vld [vmem:[%s475 + $0xc50] sm:$0xff]
                %1266 = vst [vmem:[%s476 + $0xc50] sm:$0xff] %v1265
                %v1267 = vld [vmem:[%s475 + $0xc58] sm:$0xff]
                %1268 = vst [vmem:[%s476 + $0xc58] sm:$0xff] %v1267
                %v1269 = vld [vmem:[%s475 + $0xc60] sm:$0xff]
                %1270 = vst [vmem:[%s476 + $0xc60] sm:$0xff] %v1269
                %v1271 = vld [vmem:[%s475 + $0xc68] sm:$0xff]
                %1272 = vst [vmem:[%s476 + $0xc68] sm:$0xff] %v1271
                %v1273 = vld [vmem:[%s475 + $0xc70] sm:$0xff]
                %1274 = vst [vmem:[%s476 + $0xc70] sm:$0xff] %v1273
                %v1275 = vld [vmem:[%s475 + $0xc78] sm:$0xff]
                %1276 = vst [vmem:[%s476 + $0xc78] sm:$0xff] %v1275
                %v1277 = vld [vmem:[%s475 + $0xc80] sm:$0xff]
                %1278 = vst [vmem:[%s476 + $0xc80] sm:$0xff] %v1277
                %v1279 = vld [vmem:[%s475 + $0xc88] sm:$0xff]
                %1280 = vst [vmem:[%s476 + $0xc88] sm:$0xff] %v1279
                %v1281 = vld [vmem:[%s475 + $0xc90] sm:$0xff]
                %1282 = vst [vmem:[%s476 + $0xc90] sm:$0xff] %v1281
                %v1283 = vld [vmem:[%s475 + $0xc98] sm:$0xff]
                %1284 = vst [vmem:[%s476 + $0xc98] sm:$0xff] %v1283
                %v1285 = vld [vmem:[%s475 + $0xca0] sm:$0xff]
                %1286 = vst [vmem:[%s476 + $0xca0] sm:$0xff] %v1285
                %v1287 = vld [vmem:[%s475 + $0xca8] sm:$0xff]
                %1288 = vst [vmem:[%s476 + $0xca8] sm:$0xff] %v1287
                %v1289 = vld [vmem:[%s475 + $0xcb0] sm:$0xff]
                %1290 = vst [vmem:[%s476 + $0xcb0] sm:$0xff] %v1289
                %v1291 = vld [vmem:[%s475 + $0xcb8] sm:$0xff]
                %1292 = vst [vmem:[%s476 + $0xcb8] sm:$0xff] %v1291
                %v1293 = vld [vmem:[%s475 + $0xcc0] sm:$0xff]
                %1294 = vst [vmem:[%s476 + $0xcc0] sm:$0xff] %v1293
                %v1295 = vld [vmem:[%s475 + $0xcc8] sm:$0xff]
                %1296 = vst [vmem:[%s476 + $0xcc8] sm:$0xff] %v1295
                %v1297 = vld [vmem:[%s475 + $0xcd0] sm:$0xff]
                %1298 = vst [vmem:[%s476 + $0xcd0] sm:$0xff] %v1297
                %v1299 = vld [vmem:[%s475 + $0xcd8] sm:$0xff]
                %1300 = vst [vmem:[%s476 + $0xcd8] sm:$0xff] %v1299
                %v1301 = vld [vmem:[%s475 + $0xce0] sm:$0xff]
                %1302 = vst [vmem:[%s476 + $0xce0] sm:$0xff] %v1301
                %v1303 = vld [vmem:[%s475 + $0xce8] sm:$0xff]
                %1304 = vst [vmem:[%s476 + $0xce8] sm:$0xff] %v1303
                %v1305 = vld [vmem:[%s475 + $0xcf0] sm:$0xff]
                %1306 = vst [vmem:[%s476 + $0xcf0] sm:$0xff] %v1305
                %v1307 = vld [vmem:[%s475 + $0xcf8] sm:$0xff]
                %1308 = vst [vmem:[%s476 + $0xcf8] sm:$0xff] %v1307
                %v1309 = vld [vmem:[%s475 + $0xd00] sm:$0xff]
                %1310 = vst [vmem:[%s476 + $0xd00] sm:$0xff] %v1309
                %v1311 = vld [vmem:[%s475 + $0xd08] sm:$0xff]
                %1312 = vst [vmem:[%s476 + $0xd08] sm:$0xff] %v1311
                %v1313 = vld [vmem:[%s475 + $0xd10] sm:$0xff]
                %1314 = vst [vmem:[%s476 + $0xd10] sm:$0xff] %v1313
                %v1315 = vld [vmem:[%s475 + $0xd18] sm:$0xff]
                %1316 = vst [vmem:[%s476 + $0xd18] sm:$0xff] %v1315
                %v1317 = vld [vmem:[%s475 + $0xd20] sm:$0xff]
                %1318 = vst [vmem:[%s476 + $0xd20] sm:$0xff] %v1317
                %v1319 = vld [vmem:[%s475 + $0xd28] sm:$0xff]
                %1320 = vst [vmem:[%s476 + $0xd28] sm:$0xff] %v1319
                %v1321 = vld [vmem:[%s475 + $0xd30] sm:$0xff]
                %1322 = vst [vmem:[%s476 + $0xd30] sm:$0xff] %v1321
                %v1323 = vld [vmem:[%s475 + $0xd38] sm:$0xff]
                %1324 = vst [vmem:[%s476 + $0xd38] sm:$0xff] %v1323
                %v1325 = vld [vmem:[%s475 + $0xd40] sm:$0xff]
                %1326 = vst [vmem:[%s476 + $0xd40] sm:$0xff] %v1325
                %v1327 = vld [vmem:[%s475 + $0xd48] sm:$0xff]
                %1328 = vst [vmem:[%s476 + $0xd48] sm:$0xff] %v1327
                %v1329 = vld [vmem:[%s475 + $0xd50] sm:$0xff]
                %1330 = vst [vmem:[%s476 + $0xd50] sm:$0xff] %v1329
                %v1331 = vld [vmem:[%s475 + $0xd58] sm:$0xff]
                %1332 = vst [vmem:[%s476 + $0xd58] sm:$0xff] %v1331
                %v1333 = vld [vmem:[%s475 + $0xd60] sm:$0xff]
                %1334 = vst [vmem:[%s476 + $0xd60] sm:$0xff] %v1333
                %v1335 = vld [vmem:[%s475 + $0xd68] sm:$0xff]
                %1336 = vst [vmem:[%s476 + $0xd68] sm:$0xff] %v1335
                %v1337 = vld [vmem:[%s475 + $0xd70] sm:$0xff]
                %1338 = vst [vmem:[%s476 + $0xd70] sm:$0xff] %v1337
                %v1339 = vld [vmem:[%s475 + $0xd78] sm:$0xff]
                %1340 = vst [vmem:[%s476 + $0xd78] sm:$0xff] %v1339
                %v1341 = vld [vmem:[%s475 + $0xd80] sm:$0xff]
                %1342 = vst [vmem:[%s476 + $0xd80] sm:$0xff] %v1341
                %v1343 = vld [vmem:[%s475 + $0xd88] sm:$0xff]
                %1344 = vst [vmem:[%s476 + $0xd88] sm:$0xff] %v1343
                %v1345 = vld [vmem:[%s475 + $0xd90] sm:$0xff]
                %1346 = vst [vmem:[%s476 + $0xd90] sm:$0xff] %v1345
                %v1347 = vld [vmem:[%s475 + $0xd98] sm:$0xff]
                %1348 = vst [vmem:[%s476 + $0xd98] sm:$0xff] %v1347
                %v1349 = vld [vmem:[%s475 + $0xda0] sm:$0xff]
                %1350 = vst [vmem:[%s476 + $0xda0] sm:$0xff] %v1349
                %v1351 = vld [vmem:[%s475 + $0xda8] sm:$0xff]
                %1352 = vst [vmem:[%s476 + $0xda8] sm:$0xff] %v1351
                %v1353 = vld [vmem:[%s475 + $0xdb0] sm:$0xff]
                %1354 = vst [vmem:[%s476 + $0xdb0] sm:$0xff] %v1353
                %v1355 = vld [vmem:[%s475 + $0xdb8] sm:$0xff]
                %1356 = vst [vmem:[%s476 + $0xdb8] sm:$0xff] %v1355
                %v1357 = vld [vmem:[%s475 + $0xdc0] sm:$0xff]
                %1358 = vst [vmem:[%s476 + $0xdc0] sm:$0xff] %v1357
                %v1359 = vld [vmem:[%s475 + $0xdc8] sm:$0xff]
                %1360 = vst [vmem:[%s476 + $0xdc8] sm:$0xff] %v1359
                %v1361 = vld [vmem:[%s475 + $0xdd0] sm:$0xff]
                %1362 = vst [vmem:[%s476 + $0xdd0] sm:$0xff] %v1361
                %v1363 = vld [vmem:[%s475 + $0xdd8] sm:$0xff]
                %1364 = vst [vmem:[%s476 + $0xdd8] sm:$0xff] %v1363
                %v1365 = vld [vmem:[%s475 + $0xde0] sm:$0xff]
                %1366 = vst [vmem:[%s476 + $0xde0] sm:$0xff] %v1365
                %v1367 = vld [vmem:[%s475 + $0xde8] sm:$0xff]
                %1368 = vst [vmem:[%s476 + $0xde8] sm:$0xff] %v1367
                %v1369 = vld [vmem:[%s475 + $0xdf0] sm:$0xff]
                %1370 = vst [vmem:[%s476 + $0xdf0] sm:$0xff] %v1369
                %v1371 = vld [vmem:[%s475 + $0xdf8] sm:$0xff]
                %1372 = vst [vmem:[%s476 + $0xdf8] sm:$0xff] %v1371
                %v1373 = vld [vmem:[%s475 + $0xe00] sm:$0xff]
                %1374 = vst [vmem:[%s476 + $0xe00] sm:$0xff] %v1373
                %v1375 = vld [vmem:[%s475 + $0xe08] sm:$0xff]
                %1376 = vst [vmem:[%s476 + $0xe08] sm:$0xff] %v1375
                %v1377 = vld [vmem:[%s475 + $0xe10] sm:$0xff]
                %1378 = vst [vmem:[%s476 + $0xe10] sm:$0xff] %v1377
                %v1379 = vld [vmem:[%s475 + $0xe18] sm:$0xff]
                %1380 = vst [vmem:[%s476 + $0xe18] sm:$0xff] %v1379
                %v1381 = vld [vmem:[%s475 + $0xe20] sm:$0xff]
                %1382 = vst [vmem:[%s476 + $0xe20] sm:$0xff] %v1381
                %v1383 = vld [vmem:[%s475 + $0xe28] sm:$0xff]
                %1384 = vst [vmem:[%s476 + $0xe28] sm:$0xff] %v1383
                %v1385 = vld [vmem:[%s475 + $0xe30] sm:$0xff]
                %1386 = vst [vmem:[%s476 + $0xe30] sm:$0xff] %v1385
                %v1387 = vld [vmem:[%s475 + $0xe38] sm:$0xff]
                %1388 = vst [vmem:[%s476 + $0xe38] sm:$0xff] %v1387
                %v1389 = vld [vmem:[%s475 + $0xe40] sm:$0xff]
                %1390 = vst [vmem:[%s476 + $0xe40] sm:$0xff] %v1389
                %v1391 = vld [vmem:[%s475 + $0xe48] sm:$0xff]
                %1392 = vst [vmem:[%s476 + $0xe48] sm:$0xff] %v1391
                %v1393 = vld [vmem:[%s475 + $0xe50] sm:$0xff]
                %1394 = vst [vmem:[%s476 + $0xe50] sm:$0xff] %v1393
                %v1395 = vld [vmem:[%s475 + $0xe58] sm:$0xff]
                %1396 = vst [vmem:[%s476 + $0xe58] sm:$0xff] %v1395
                %v1397 = vld [vmem:[%s475 + $0xe60] sm:$0xff]
                %1398 = vst [vmem:[%s476 + $0xe60] sm:$0xff] %v1397
                %v1399 = vld [vmem:[%s475 + $0xe68] sm:$0xff]
                %1400 = vst [vmem:[%s476 + $0xe68] sm:$0xff] %v1399
                %v1401 = vld [vmem:[%s475 + $0xe70] sm:$0xff]
                %1402 = vst [vmem:[%s476 + $0xe70] sm:$0xff] %v1401
                %v1403 = vld [vmem:[%s475 + $0xe78] sm:$0xff]
                %1404 = vst [vmem:[%s476 + $0xe78] sm:$0xff] %v1403
                %v1405 = vld [vmem:[%s475 + $0xe80] sm:$0xff]
                %1406 = vst [vmem:[%s476 + $0xe80] sm:$0xff] %v1405
                %v1407 = vld [vmem:[%s475 + $0xe88] sm:$0xff]
                %1408 = vst [vmem:[%s476 + $0xe88] sm:$0xff] %v1407
                %v1409 = vld [vmem:[%s475 + $0xe90] sm:$0xff]
                %1410 = vst [vmem:[%s476 + $0xe90] sm:$0xff] %v1409
                %v1411 = vld [vmem:[%s475 + $0xe98] sm:$0xff]
                %1412 = vst [vmem:[%s476 + $0xe98] sm:$0xff] %v1411
                %v1413 = vld [vmem:[%s475 + $0xea0] sm:$0xff]
                %1414 = vst [vmem:[%s476 + $0xea0] sm:$0xff] %v1413
                %v1415 = vld [vmem:[%s475 + $0xea8] sm:$0xff]
                %1416 = vst [vmem:[%s476 + $0xea8] sm:$0xff] %v1415
                %v1417 = vld [vmem:[%s475 + $0xeb0] sm:$0xff]
                %1418 = vst [vmem:[%s476 + $0xeb0] sm:$0xff] %v1417
                %v1419 = vld [vmem:[%s475 + $0xeb8] sm:$0xff]
                %1420 = vst [vmem:[%s476 + $0xeb8] sm:$0xff] %v1419
                %v1421 = vld [vmem:[%s475 + $0xec0] sm:$0xff]
                %1422 = vst [vmem:[%s476 + $0xec0] sm:$0xff] %v1421
                %v1423 = vld [vmem:[%s475 + $0xec8] sm:$0xff]
                %1424 = vst [vmem:[%s476 + $0xec8] sm:$0xff] %v1423
                %v1425 = vld [vmem:[%s475 + $0xed0] sm:$0xff]
                %1426 = vst [vmem:[%s476 + $0xed0] sm:$0xff] %v1425
                %v1427 = vld [vmem:[%s475 + $0xed8] sm:$0xff]
                %1428 = vst [vmem:[%s476 + $0xed8] sm:$0xff] %v1427
                %v1429 = vld [vmem:[%s475 + $0xee0] sm:$0xff]
                %1430 = vst [vmem:[%s476 + $0xee0] sm:$0xff] %v1429
                %v1431 = vld [vmem:[%s475 + $0xee8] sm:$0xff]
                %1432 = vst [vmem:[%s476 + $0xee8] sm:$0xff] %v1431
                %v1433 = vld [vmem:[%s475 + $0xef0] sm:$0xff]
                %1434 = vst [vmem:[%s476 + $0xef0] sm:$0xff] %v1433
                %v1435 = vld [vmem:[%s475 + $0xef8] sm:$0xff]
                %1436 = vst [vmem:[%s476 + $0xef8] sm:$0xff] %v1435
                %v1437 = vld [vmem:[%s475 + $0xf00] sm:$0xff]
                %1438 = vst [vmem:[%s476 + $0xf00] sm:$0xff] %v1437
                %v1439 = vld [vmem:[%s475 + $0xf08] sm:$0xff]
                %1440 = vst [vmem:[%s476 + $0xf08] sm:$0xff] %v1439
                %v1441 = vld [vmem:[%s475 + $0xf10] sm:$0xff]
                %1442 = vst [vmem:[%s476 + $0xf10] sm:$0xff] %v1441
                %v1443 = vld [vmem:[%s475 + $0xf18] sm:$0xff]
                %1444 = vst [vmem:[%s476 + $0xf18] sm:$0xff] %v1443
                %v1445 = vld [vmem:[%s475 + $0xf20] sm:$0xff]
                %1446 = vst [vmem:[%s476 + $0xf20] sm:$0xff] %v1445
                %v1447 = vld [vmem:[%s475 + $0xf28] sm:$0xff]
                %1448 = vst [vmem:[%s476 + $0xf28] sm:$0xff] %v1447
                %v1449 = vld [vmem:[%s475 + $0xf30] sm:$0xff]
                %1450 = vst [vmem:[%s476 + $0xf30] sm:$0xff] %v1449
                %v1451 = vld [vmem:[%s475 + $0xf38] sm:$0xff]
                %1452 = vst [vmem:[%s476 + $0xf38] sm:$0xff] %v1451
                %v1453 = vld [vmem:[%s475 + $0xf40] sm:$0xff]
                %1454 = vst [vmem:[%s476 + $0xf40] sm:$0xff] %v1453
                %v1455 = vld [vmem:[%s475 + $0xf48] sm:$0xff]
                %1456 = vst [vmem:[%s476 + $0xf48] sm:$0xff] %v1455
                %v1457 = vld [vmem:[%s475 + $0xf50] sm:$0xff]
                %1458 = vst [vmem:[%s476 + $0xf50] sm:$0xff] %v1457
                %v1459 = vld [vmem:[%s475 + $0xf58] sm:$0xff]
                %1460 = vst [vmem:[%s476 + $0xf58] sm:$0xff] %v1459
                %v1461 = vld [vmem:[%s475 + $0xf60] sm:$0xff]
                %1462 = vst [vmem:[%s476 + $0xf60] sm:$0xff] %v1461
                %v1463 = vld [vmem:[%s475 + $0xf68] sm:$0xff]
                %1464 = vst [vmem:[%s476 + $0xf68] sm:$0xff] %v1463
                %v1465 = vld [vmem:[%s475 + $0xf70] sm:$0xff]
                %1466 = vst [vmem:[%s476 + $0xf70] sm:$0xff] %v1465
                %v1467 = vld [vmem:[%s475 + $0xf78] sm:$0xff]
                %1468 = vst [vmem:[%s476 + $0xf78] sm:$0xff] %v1467
                %v1469 = vld [vmem:[%s475 + $0xf80] sm:$0xff]
                %1470 = vst [vmem:[%s476 + $0xf80] sm:$0xff] %v1469
                %v1471 = vld [vmem:[%s475 + $0xf88] sm:$0xff]
                %1472 = vst [vmem:[%s476 + $0xf88] sm:$0xff] %v1471
                %v1473 = vld [vmem:[%s475 + $0xf90] sm:$0xff]
                %1474 = vst [vmem:[%s476 + $0xf90] sm:$0xff] %v1473
                %v1475 = vld [vmem:[%s475 + $0xf98] sm:$0xff]
                %1476 = vst [vmem:[%s476 + $0xf98] sm:$0xff] %v1475
                %v1477 = vld [vmem:[%s475 + $0xfa0] sm:$0xff]
                %1478 = vst [vmem:[%s476 + $0xfa0] sm:$0xff] %v1477
                %v1479 = vld [vmem:[%s475 + $0xfa8] sm:$0xff]
                %1480 = vst [vmem:[%s476 + $0xfa8] sm:$0xff] %v1479
                %v1481 = vld [vmem:[%s475 + $0xfb0] sm:$0xff]
                %1482 = vst [vmem:[%s476 + $0xfb0] sm:$0xff] %v1481
                %v1483 = vld [vmem:[%s475 + $0xfb8] sm:$0xff]
                %1484 = vst [vmem:[%s476 + $0xfb8] sm:$0xff] %v1483
                %v1485 = vld [vmem:[%s475 + $0xfc0] sm:$0xff]
                %1486 = vst [vmem:[%s476 + $0xfc0] sm:$0xff] %v1485
                %v1487 = vld [vmem:[%s475 + $0xfc8] sm:$0xff]
                %1488 = vst [vmem:[%s476 + $0xfc8] sm:$0xff] %v1487
                %v1489 = vld [vmem:[%s475 + $0xfd0] sm:$0xff]
                %1490 = vst [vmem:[%s476 + $0xfd0] sm:$0xff] %v1489
                %v1491 = vld [vmem:[%s475 + $0xfd8] sm:$0xff]
                %1492 = vst [vmem:[%s476 + $0xfd8] sm:$0xff] %v1491
                %v1493 = vld [vmem:[%s475 + $0xfe0] sm:$0xff]
                %1494 = vst [vmem:[%s476 + $0xfe0] sm:$0xff] %v1493
                %v1495 = vld [vmem:[%s475 + $0xfe8] sm:$0xff]
                %1496 = vst [vmem:[%s476 + $0xfe8] sm:$0xff] %v1495
                %v1497 = vld [vmem:[%s475 + $0xff0] sm:$0xff]
                %1498 = vst [vmem:[%s476 + $0xff0] sm:$0xff] %v1497
                %v1499 = vld [vmem:[%s475 + $0xff8] sm:$0xff]
                %1500 = vst [vmem:[%s476 + $0xff8] sm:$0xff] %v1499
              $region117: #{fishnet_forward.1} parent=111 // loop_footer
                %s474 = sadd.s32 1, %s470
              $region118: #{fishnet_forward.1} parent=111 // loop_footer_branch
                %469 = sbr.rel target = $region114
              $region119: #{fishnet_forward.1} parent=111 // loop_exit
                _
            $region112: #{fishnet_forward.1} parent=96 // pred_fallthru
              _
            %p1501 = pneg %p465
            // Predicated region
            $region120: #{fishnet_forward.1} parent=96 // pred_check
              _
            $region121: #{fishnet_forward.1} parent=96 // pred_check_branch
              %1503 = sbr.rel (%p465) target = $region123
            $region122: #{fishnet_forward.1} parent=96 // pred_region
              %s1504 = sand.u32 4096, 7
            $region123: #{fishnet_forward.1} parent=96 // pred_fallthru
              _
          $region97: #{fishnet_forward.1} parent=92 // pred_fallthru
            _
          // Predicated region
          $region98: #{fishnet_forward.1} parent=92 // pred_check
            %p449 = pneg %p445
          $region99: #{fishnet_forward.1} parent=92 // pred_check_branch
            %451 = sbr.rel (%p449) target = $region101
          $region100: #{fishnet_forward.1} parent=92 // pred_region
            %s452 = sshll.u32 1, 4096
            %s453 = ssub.s32 %s452, 1
            loop: start=0, step=1, limit=1
            $region102: #{fishnet_forward.1} parent=100 // loop_pre_header
              _
            $region103: #{fishnet_forward.1} parent=100 // loop_header
              %s455 = sphi 0, %s459
              %p456 = scmp.ge.s32.totalorder %s455, 1
              %s460 = sphi %s3, %s3
              %s461 = sphi [#allocation3], [#allocation3]
            $region104: #{fishnet_forward.1} parent=100 // loop_header_branch
              %458 = sbr.rel (%p456) target = $region108
            $region105: #{fishnet_forward.1} parent=100 // loop_body
              %v462 = vld [vmem:[%s460] sm:%s453]
              %463 = vst [vmem:[%s461] sm:%s453] %v462
            $region106: #{fishnet_forward.1} parent=100 // loop_footer
              %s459 = sadd.s32 1, %s455
            $region107: #{fishnet_forward.1} parent=100 // loop_footer_branch
              %454 = sbr.rel target = $region103
            $region108: #{fishnet_forward.1} parent=100 // loop_exit
              _
          $region101: #{fishnet_forward.1} parent=92 // pred_fallthru
            _
          // Predicated region
          $region124: #{fishnet_forward.1} parent=92 // pred_check
            _
          $region125: #{fishnet_forward.1} parent=92 // pred_check_branch
            %1507 = sbr.rel (0) target = $region127
          $region126: #{fishnet_forward.1} parent=92 // pred_region
            %1508 = vsyncadd [#allocation4], 65536
          $region127: #{fishnet_forward.1} parent=92 // pred_fallthru
            _
        $region93: #{fishnet_forward.1} parent=84 // pred_fallthru
          _
        %v1509 = vld [vmem:[%s1] sm:$0xff]
        %v1510 = vld [vmem:[%s1 + $0x8] sm:$0xff]
        %v1511 = vld [vmem:[%s1 + $0x10] sm:$0xff]
        %v1512 = vld [vmem:[%s1 + $0x18] sm:$0xff]
        %v1513 = vld [vmem:[%s1 + $0x20] sm:$0xff]
        %v1514 = vld [vmem:[%s1 + $0x28] sm:$0xff]
        %v1515 = vld [vmem:[%s1 + $0x30] sm:$0xff]
        %v1516 = vld [vmem:[%s1 + $0x38] sm:$0xff]
        %v1517 = vld [vmem:[%s1 + $0x40] sm:$0xff]
        %v1518 = vld [vmem:[%s1 + $0x48] sm:$0xff]
        %v1519 = vld [vmem:[%s1 + $0x50] sm:$0xff]
        %v1520 = vld [vmem:[%s1 + $0x58] sm:$0xff]
        %v1521 = vld [vmem:[%s1 + $0x60] sm:$0xff]
        %v1522 = vld [vmem:[%s1 + $0x68] sm:$0xff]
        %v1523 = vld [vmem:[%s1 + $0x70] sm:$0xff]
        %v1524 = vld [vmem:[%s1 + $0x78] sm:$0xff]
        %v1525 = vld [vmem:[%s1 + $0x80] sm:$0xff]
        %v1526 = vld [vmem:[%s1 + $0x88] sm:$0xff]
        %v1527 = vld [vmem:[%s1 + $0x90] sm:$0xff]
        %v1528 = vld [vmem:[%s1 + $0x98] sm:$0xff]
        %v1529 = vld [vmem:[%s1 + $0xa0] sm:$0xff]
        %v1530 = vld [vmem:[%s1 + $0xa8] sm:$0xff]
        %v1531 = vld [vmem:[%s1 + $0xb0] sm:$0xff]
        %v1532 = vld [vmem:[%s1 + $0xb8] sm:$0xff]
        %v1533 = vld [vmem:[%s1 + $0xc0] sm:$0x33]
        %v1534 = vld [vmem:[%s1 + $0xc8] sm:$0x33]
        %v1535 = vld [vmem:[%s1 + $0xd0] sm:$0x33]
        %v1536 = vld [vmem:[%s1 + $0xd8] sm:$0x33]
        %v1537 = vld [vmem:[%s1 + $0xe0] sm:$0x33]
        %v1538 = vld [vmem:[%s1 + $0xe8] sm:$0x33]
        %v1539 = vld [vmem:[%s1 + $0xf0] sm:$0x33]
        %v1540 = vld [vmem:[%s1 + $0xf8] sm:$0x33]
        %v1541 = vld [vmem:[%s2] sm:$0xff]
        %v1542 = vld [vmem:[%s2 + $0x8] sm:$0xff]
        %v1543 = vld [vmem:[%s410] sm:$0xf]
        %v1544 = vld [vmem:[%s410 + $0x4] sm:$0xf]
        %v1545 = vld [vmem:[%s410 + $0x8] sm:$0xf]
        %v1546 = vld [vmem:[%s410 + $0xc] sm:$0xf]
        %v1547 = vld [vmem:[%s410 + $0x10] sm:$0xf]
        %v1548 = vld [vmem:[%s410 + $0x14] sm:$0xf]
        %v1549 = vld [vmem:[%s410 + $0x18] sm:$0xf]
        %v1550 = vld [vmem:[%s410 + $0x1c] sm:$0xf]
        %v1551 = vld [vmem:[%s410 + $0x20] sm:$0xf]
        %v1552 = vld [vmem:[%s410 + $0x24] sm:$0xf]
        %v1553 = vld [vmem:[%s410 + $0x28] sm:$0xf]
        %v1554 = vld [vmem:[%s410 + $0x2c] sm:$0xf]
        %v1555 = vld [vmem:[%s410 + $0x30] sm:$0xf]
        %v1556 = vld [vmem:[%s410 + $0x34] sm:$0xf]
        %v1557 = vld [vmem:[%s410 + $0x38] sm:$0xf]
        %v1558 = vld [vmem:[%s410 + $0x3c] sm:$0xf]
        %v1561 = vlaneseq
        %v1562 = vshrl.u32 %v1561, 7
        %v1563 = vsub.s32 0, %v1562
        %v1564 = vrot.slane %v1541, %v1563
        %v1565 = vlaneseq
        %v1566 = vshrl.u32 %v1565, 7
        %v1567 = vsub.s32 1, %v1566
        %v1568 = vrot.slane %v1541, %v1567
        %v1569 = vlaneseq
        %v1570 = vshrl.u32 %v1569, 7
        %v1571 = vsub.s32 2, %v1570
        %v1572 = vrot.slane %v1541, %v1571
        %v1573 = vlaneseq
        %v1574 = vshrl.u32 %v1573, 7
        %v1575 = vsub.s32 3, %v1574
        %v1576 = vrot.slane %v1541, %v1575
        %v1577 = vlaneseq
        %v1578 = vshrl.u32 %v1577, 7
        %v1579 = vsub.s32 4, %v1578
        %v1580 = vrot.slane %v1541, %v1579
        %v1581 = vlaneseq
        %v1582 = vshrl.u32 %v1581, 7
        %v1583 = vsub.s32 5, %v1582
        %v1584 = vrot.slane %v1541, %v1583
        %v1585 = vlaneseq
        %v1586 = vshrl.u32 %v1585, 7
        %v1587 = vsub.s32 6, %v1586
        %v1588 = vrot.slane %v1541, %v1587
        %v1589 = vlaneseq
        %v1590 = vshrl.u32 %v1589, 7
        %v1591 = vsub.s32 7, %v1590
        %v1592 = vrot.slane %v1541, %v1591
        %v1593 = vlaneseq
        %v1594 = vshrl.u32 %v1593, 7
        %v1595 = vsub.s32 0, %v1594
        %v1596 = vrot.slane %v1542, %v1595
        %v1597 = vlaneseq
        %v1598 = vshrl.u32 %v1597, 7
        %v1599 = vsub.s32 1, %v1598
        %v1600 = vrot.slane %v1542, %v1599
        %v1601 = vlaneseq
        %v1602 = vshrl.u32 %v1601, 7
        %v1603 = vsub.s32 2, %v1602
        %v1604 = vrot.slane %v1542, %v1603
        %v1605 = vlaneseq
        %v1606 = vshrl.u32 %v1605, 7
        %v1607 = vsub.s32 3, %v1606
        %v1608 = vrot.slane %v1542, %v1607
        %v1609 = vlaneseq
        %v1610 = vshrl.u32 %v1609, 7
        %v1611 = vsub.s32 4, %v1610
        %v1612 = vrot.slane %v1542, %v1611
        %v1613 = vlaneseq
        %v1614 = vshrl.u32 %v1613, 7
        %v1615 = vsub.s32 5, %v1614
        %v1616 = vrot.slane %v1542, %v1615
        %v1617 = vlaneseq
        %v1618 = vshrl.u32 %v1617, 7
        %v1619 = vsub.s32 6, %v1618
        %v1620 = vrot.slane %v1542, %v1619
        %v1621 = vlaneseq
        %v1622 = vshrl.u32 %v1621, 7
        %v1623 = vsub.s32 7, %v1622
        %v1624 = vrot.slane %v1542, %v1623
        %v1657 = vunpack.c.l.b16 %v1543
        %v1658 = vunpack.c.l.b16 %v1544
        %v1659 = vunpack.c.l.b16 %v1545
        %v1660 = vunpack.c.l.b16 %v1546
        %v1661 = vunpack.c.l.b16 %v1547
        %v1662 = vunpack.c.l.b16 %v1548
        %v1663 = vunpack.c.l.b16 %v1549
        %v1664 = vunpack.c.l.b16 %v1550
        %v1665 = vunpack.c.l.b16 %v1551
        %v1666 = vunpack.c.l.b16 %v1552
        %v1667 = vunpack.c.l.b16 %v1553
        %v1668 = vunpack.c.l.b16 %v1554
        %v1669 = vunpack.c.l.b16 %v1555
        %v1670 = vunpack.c.l.b16 %v1556
        %v1671 = vunpack.c.l.b16 %v1557
        %v1672 = vunpack.c.l.b16 %v1558
        %v1673 = vpack.c.b16 %v1658, %v1657
        %v1674 = vpack.c.b16 %v1660, %v1659
        %v1675 = vpack.c.b16 %v1662, %v1661
        %v1676 = vpack.c.b16 %v1664, %v1663
        %v1677 = vpack.c.b16 %v1666, %v1665
        %v1678 = vpack.c.b16 %v1668, %v1667
        %v1679 = vpack.c.b16 %v1670, %v1669
        %v1680 = vpack.c.b16 %v1672, %v1671
        %v1713 = vunpack.c.l.b16 %v1509
        %v1714 = vunpack.c.h.b16 %v1509
        %v1715 = vunpack.c.l.b16 %v1510
        %v1716 = vunpack.c.h.b16 %v1510
        %v1717 = vunpack.c.l.b16 %v1511
        %v1718 = vunpack.c.h.b16 %v1511
        %v1719 = vunpack.c.l.b16 %v1512
        %v1720 = vunpack.c.h.b16 %v1512
        %v1721 = vunpack.c.l.b16 %v1513
        %v1722 = vunpack.c.h.b16 %v1513
        %v1723 = vunpack.c.l.b16 %v1514
        %v1724 = vunpack.c.h.b16 %v1514
        %v1725 = vunpack.c.l.b16 %v1515
        %v1726 = vunpack.c.h.b16 %v1515
        %v1727 = vunpack.c.l.b16 %v1516
        %v1728 = vunpack.c.h.b16 %v1516
        %v1729 = vunpack.c.l.b16 %v1517
        %v1730 = vunpack.c.h.b16 %v1517
        %v1731 = vunpack.c.l.b16 %v1518
        %v1732 = vunpack.c.h.b16 %v1518
        %v1733 = vunpack.c.l.b16 %v1519
        %v1734 = vunpack.c.h.b16 %v1519
        %v1735 = vunpack.c.l.b16 %v1520
        %v1736 = vunpack.c.h.b16 %v1520
        %v1737 = vunpack.c.l.b16 %v1521
        %v1738 = vunpack.c.h.b16 %v1521
        %v1739 = vunpack.c.l.b16 %v1522
        %v1740 = vunpack.c.h.b16 %v1522
        %v1741 = vunpack.c.l.b16 %v1523
        %v1742 = vunpack.c.h.b16 %v1523
        %v1743 = vunpack.c.l.b16 %v1524
        %v1744 = vunpack.c.h.b16 %v1524
        %v1745 = vunpack.c.l.b16 %v1525
        %v1746 = vunpack.c.h.b16 %v1525
        %v1747 = vunpack.c.l.b16 %v1526
        %v1748 = vunpack.c.h.b16 %v1526
        %v1749 = vunpack.c.l.b16 %v1527
        %v1750 = vunpack.c.h.b16 %v1527
        %v1751 = vunpack.c.l.b16 %v1528
        %v1752 = vunpack.c.h.b16 %v1528
        %v1753 = vunpack.c.l.b16 %v1529
        %v1754 = vunpack.c.h.b16 %v1529
        %v1755 = vunpack.c.l.b16 %v1530
        %v1756 = vunpack.c.h.b16 %v1530
        %v1757 = vunpack.c.l.b16 %v1531
        %v1758 = vunpack.c.h.b16 %v1531
        %v1759 = vunpack.c.l.b16 %v1532
        %v1760 = vunpack.c.h.b16 %v1532
        %v1761 = vunpack.c.l.b16 %v1533
        %v1762 = vunpack.c.h.b16 %v1533
        %v1763 = vunpack.c.l.b16 %v1534
        %v1764 = vunpack.c.h.b16 %v1534
        %v1765 = vunpack.c.l.b16 %v1535
        %v1766 = vunpack.c.h.b16 %v1535
        %v1767 = vunpack.c.l.b16 %v1536
        %v1768 = vunpack.c.h.b16 %v1536
        %v1769 = vunpack.c.l.b16 %v1537
        %v1770 = vunpack.c.h.b16 %v1537
        %v1771 = vunpack.c.l.b16 %v1538
        %v1772 = vunpack.c.h.b16 %v1538
        %v1773 = vunpack.c.l.b16 %v1539
        %v1774 = vunpack.c.h.b16 %v1539
        %v1775 = vunpack.c.l.b16 %v1540
        %v1776 = vunpack.c.h.b16 %v1540
        %v1777 = vpack.c.b16 %v1729, %v1713
        %v1778 = vpack.c.b16 %v1730, %v1714
        %v1779 = vpack.c.b16 %v1731, %v1715
        %v1780 = vpack.c.b16 %v1732, %v1716
        %v1781 = vpack.c.b16 %v1733, %v1717
        %v1782 = vpack.c.b16 %v1734, %v1718
        %v1783 = vpack.c.b16 %v1735, %v1719
        %v1784 = vpack.c.b16 %v1736, %v1720
        %v1785 = vpack.c.b16 %v1737, %v1721
        %v1786 = vpack.c.b16 %v1738, %v1722
        %v1787 = vpack.c.b16 %v1739, %v1723
        %v1788 = vpack.c.b16 %v1740, %v1724
        %v1789 = vpack.c.b16 %v1741, %v1725
        %v1790 = vpack.c.b16 %v1742, %v1726
        %v1791 = vpack.c.b16 %v1743, %v1727
        %v1792 = vpack.c.b16 %v1744, %v1728
        %v1793 = vpack.c.b16 %v1761, %v1745
        %v1794 = vpack.c.b16 %v1762, %v1746
        %v1795 = vpack.c.b16 %v1763, %v1747
        %v1796 = vpack.c.b16 %v1764, %v1748
        %v1797 = vpack.c.b16 %v1765, %v1749
        %v1798 = vpack.c.b16 %v1766, %v1750
        %v1799 = vpack.c.b16 %v1767, %v1751
        %v1800 = vpack.c.b16 %v1768, %v1752
        %v1801 = vpack.c.b16 %v1769, %v1753
        %v1802 = vpack.c.b16 %v1770, %v1754
        %v1803 = vpack.c.b16 %v1771, %v1755
        %v1804 = vpack.c.b16 %v1772, %v1756
        %v1805 = vpack.c.b16 %v1773, %v1757
        %v1806 = vpack.c.b16 %v1774, %v1758
        %v1807 = vpack.c.b16 %v1775, %v1759
        %v1808 = vpack.c.b16 %v1776, %v1760
        %vm1825 = vcmask 220160
        %v1827 = vsel %vm1825, %v1673, 0
        %v1830 = vsel %vm1825, %v1674, 0
        %v1833 = vsel %vm1825, %v1675, 0
        %v1836 = vsel %vm1825, %v1676, 0
        %v1839 = vsel %vm1825, %v1677, 0
        %v1842 = vsel %vm1825, %v1678, 0
        %v1845 = vsel %vm1825, %v1679, 0
        %v1848 = vsel %vm1825, %v1680, 0
        %vm1850 = vcmask 1044480
        %vm1851 = vcmask 1045504
        %v1852 = vsel %vm1850, 4294967295, 65535
        %v1853 = vsel %vm1851, %v1852, 0
        %v1855 = vand.u32 %v1793, %v1853
        %v1858 = vand.u32 %v1794, %v1853
        %v1861 = vand.u32 %v1795, %v1853
        %v1864 = vand.u32 %v1796, %v1853
        %v1867 = vand.u32 %v1797, %v1853
        %v1870 = vand.u32 %v1798, %v1853
        %v1873 = vand.u32 %v1799, %v1853
        %v1876 = vand.u32 %v1800, %v1853
        %v1879 = vand.u32 %v1801, %v1853
        %v1882 = vand.u32 %v1802, %v1853
        %v1885 = vand.u32 %v1803, %v1853
        %v1888 = vand.u32 %v1804, %v1853
        %v1891 = vand.u32 %v1805, %v1853
        %v1894 = vand.u32 %v1806, %v1853
        %v1897 = vand.u32 %v1807, %v1853
        %v1900 = vand.u32 %v1808, %v1853
        %1902 = vmatprep.subr.bf16.mxu0 0
        %1903 = vmatpush1.bf16.msra.mxu0 0
        %1904 = vmatprep.subr.bf16.mxu0 0
        %1905 = vmatpush1.bf16.msra.mxu0 0
        %1906 = vmatprep.subr.bf16.mxu0 0
        %1907 = vmatpush1.bf16.msra.mxu0 0
        %1908 = vmatprep.subr.bf16.mxu0 0
        %1909 = vmatpush1.bf16.msra.mxu0 0
        %1910 = vmatprep.subr.bf16.mxu0 0
        %1911 = vmatpush1.bf16.msra.mxu0 0
        %1912 = vmatprep.subr.bf16.mxu0 0
        %1913 = vmatpush1.bf16.msra.mxu0 0
        %1914 = vmatprep.subr.bf16.mxu0 %v1858
        %1915 = vmatpush1.bf16.msra.mxu0 %v1855
        %1916 = vmatprep.subr.bf16.mxu0 %v1778
        %1917 = vmatpush1.bf16.msra.mxu0 %v1777
        %1918 = vmatprep.subr.bf16.mxu0 0
        %1919 = vmatpush2.bf16.msra.mxu0 0
        %1920 = vmatprep.subr.bf16.mxu0 0
        %1921 = vmatpush2.bf16.msra.mxu0 0
        %1922 = vmatprep.subr.bf16.mxu0 0
        %1923 = vmatpush2.bf16.msra.mxu0 0
        %1924 = vmatprep.subr.bf16.mxu0 0
        %1925 = vmatpush2.bf16.msra.mxu0 0
        %1926 = vmatprep.subr.bf16.mxu0 0
        %1927 = vmatpush2.bf16.msra.mxu0 0
        %1928 = vmatprep.subr.bf16.mxu0 0
        %1929 = vmatpush2.bf16.msra.mxu0 0
        %1930 = vmatprep.subr.bf16.mxu0 0
        %1931 = vmatpush2.bf16.msra.mxu0 0
        %1932 = vmatprep.subr.bf16.mxu0 0
        %1933 = vmatpush2.bf16.msra.mxu0 0
        %1934 = vmatprep.mubr.bf16.mxu0 0
        %1935 = vmatmul.mubr.bf16.gmra.mxu0 %v1827
        %v1936 = vpop.f32.mrf.mxu0
        %v1937 = vadd.f32 %v1564, %v1936
        %v1938 = vpop.f32.mrf.mxu0
        %v1939 = vadd.f32 %v1568, %v1938
        %v1940 = vpop.f32.mrf.mxu0
        %v1941 = vadd.f32 %v1564, %v1940
        %v1942 = vpop.f32.mrf.mxu0
        %v1943 = vadd.f32 %v1568, %v1942
        %1944 = vmatprep.mubr.bf16.mxu0 0
        %1945 = vmatmul.mubr.bf16.gmra.mxu0 %v1830
        %v1946 = vpop.f32.mrf.mxu0
        %v1947 = vadd.f32 %v1564, %v1946
        %v1948 = vpop.f32.mrf.mxu0
        %v1949 = vadd.f32 %v1568, %v1948
        %v1950 = vpop.f32.mrf.mxu0
        %v1951 = vadd.f32 %v1564, %v1950
        %v1952 = vpop.f32.mrf.mxu0
        %v1953 = vadd.f32 %v1568, %v1952
        %1954 = vmatprep.mubr.bf16.mxu0 0
        %1955 = vmatmul.mubr.bf16.gmra.mxu0 %v1833
        %v1956 = vpop.f32.mrf.mxu0
        %v1957 = vadd.f32 %v1564, %v1956
        %v1958 = vpop.f32.mrf.mxu0
        %v1959 = vadd.f32 %v1568, %v1958
        %v1960 = vpop.f32.mrf.mxu0
        %v1961 = vadd.f32 %v1564, %v1960
        %v1962 = vpop.f32.mrf.mxu0
        %v1963 = vadd.f32 %v1568, %v1962
        %1964 = vmatprep.mubr.bf16.mxu0 0
        %1965 = vmatmul.mubr.bf16.gmra.mxu0 %v1836
        %v1966 = vpop.f32.mrf.mxu0
        %v1967 = vadd.f32 %v1564, %v1966
        %v1968 = vpop.f32.mrf.mxu0
        %v1969 = vadd.f32 %v1568, %v1968
        %v1970 = vpop.f32.mrf.mxu0
        %v1971 = vadd.f32 %v1564, %v1970
        %v1972 = vpop.f32.mrf.mxu0
        %v1973 = vadd.f32 %v1568, %v1972
        %1974 = vmatprep.mubr.bf16.mxu0 0
        %1975 = vmatmul.mubr.bf16.gmra.mxu0 %v1839
        %v1976 = vpop.f32.mrf.mxu0
        %v1977 = vadd.f32 %v1564, %v1976
        %v1978 = vpop.f32.mrf.mxu0
        %v1979 = vadd.f32 %v1568, %v1978
        %v1980 = vpop.f32.mrf.mxu0
        %v1981 = vadd.f32 %v1564, %v1980
        %v1982 = vpop.f32.mrf.mxu0
        %v1983 = vadd.f32 %v1568, %v1982
        %1984 = vmatprep.mubr.bf16.mxu0 0
        %1985 = vmatmul.mubr.bf16.gmra.mxu0 %v1842
        %v1986 = vpop.f32.mrf.mxu0
        %v1987 = vadd.f32 %v1564, %v1986
        %v1988 = vpop.f32.mrf.mxu0
        %v1989 = vadd.f32 %v1568, %v1988
        %v1990 = vpop.f32.mrf.mxu0
        %v1991 = vadd.f32 %v1564, %v1990
        %v1992 = vpop.f32.mrf.mxu0
        %v1993 = vadd.f32 %v1568, %v1992
        %1994 = vmatprep.mubr.bf16.mxu0 0
        %1995 = vmatmul.mubr.bf16.gmra.mxu0 %v1845
        %v1996 = vpop.f32.mrf.mxu0
        %v1997 = vadd.f32 %v1564, %v1996
        %v1998 = vpop.f32.mrf.mxu0
        %v1999 = vadd.f32 %v1568, %v1998
        %v2000 = vpop.f32.mrf.mxu0
        %v2001 = vadd.f32 %v1564, %v2000
        %v2002 = vpop.f32.mrf.mxu0
        %v2003 = vadd.f32 %v1568, %v2002
        %2004 = vmatprep.mubr.bf16.mxu0 0
        %2005 = vmatmul.mubr.bf16.gmra.mxu0 %v1848
        %v2006 = vpop.f32.mrf.mxu0
        %v2007 = vadd.f32 %v1564, %v2006
        %v2008 = vpop.f32.mrf.mxu0
        %v2009 = vadd.f32 %v1568, %v2008
        %v2010 = vpop.f32.mrf.mxu0
        %v2011 = vadd.f32 %v1564, %v2010
        %v2012 = vpop.f32.mrf.mxu0
        %v2013 = vadd.f32 %v1568, %v2012
        %2014 = vdwg.mxu0
        %2015 = vmatprep.subr.bf16.mxu0 0
        %2016 = vmatpush1.bf16.msra.mxu0 0
        %2017 = vmatprep.subr.bf16.mxu0 0
        %2018 = vmatpush1.bf16.msra.mxu0 0
        %2019 = vmatprep.subr.bf16.mxu0 0
        %2020 = vmatpush1.bf16.msra.mxu0 0
        %2021 = vmatprep.subr.bf16.mxu0 0
        %2022 = vmatpush1.bf16.msra.mxu0 0
        %2023 = vmatprep.subr.bf16.mxu0 0
        %2024 = vmatpush1.bf16.msra.mxu0 0
        %2025 = vmatprep.subr.bf16.mxu0 0
        %2026 = vmatpush1.bf16.msra.mxu0 0
        %2027 = vmatprep.subr.bf16.mxu0 %v1864
        %2028 = vmatpush1.bf16.msra.mxu0 %v1861
        %2029 = vmatprep.subr.bf16.mxu0 %v1780
        %2030 = vmatpush1.bf16.msra.mxu0 %v1779
        %2031 = vmatprep.subr.bf16.mxu0 0
        %2032 = vmatpush2.bf16.msra.mxu0 0
        %2033 = vmatprep.subr.bf16.mxu0 0
        %2034 = vmatpush2.bf16.msra.mxu0 0
        %2035 = vmatprep.subr.bf16.mxu0 0
        %2036 = vmatpush2.bf16.msra.mxu0 0
        %2037 = vmatprep.subr.bf16.mxu0 0
        %2038 = vmatpush2.bf16.msra.mxu0 0
        %2039 = vmatprep.subr.bf16.mxu0 0
        %2040 = vmatpush2.bf16.msra.mxu0 0
        %2041 = vmatprep.subr.bf16.mxu0 0
        %2042 = vmatpush2.bf16.msra.mxu0 0
        %2043 = vmatprep.subr.bf16.mxu0 0
        %2044 = vmatpush2.bf16.msra.mxu0 0
        %2045 = vmatprep.subr.bf16.mxu0 0
        %2046 = vmatpush2.bf16.msra.mxu0 0
        %2047 = vmatprep.mubr.bf16.mxu0 0
        %2048 = vmatmul.mubr.bf16.gmra.mxu0 %v1827
        %v2049 = vpop.f32.mrf.mxu0
        %v2050 = vadd.f32 %v1572, %v2049
        %v2051 = vpop.f32.mrf.mxu0
        %v2052 = vadd.f32 %v1576, %v2051
        %v2053 = vpop.f32.mrf.mxu0
        %v2054 = vadd.f32 %v1572, %v2053
        %v2055 = vpop.f32.mrf.mxu0
        %v2056 = vadd.f32 %v1576, %v2055
        %2057 = vmatprep.mubr.bf16.mxu0 0
        %2058 = vmatmul.mubr.bf16.gmra.mxu0 %v1830
        %v2059 = vpop.f32.mrf.mxu0
        %v2060 = vadd.f32 %v1572, %v2059
        %v2061 = vpop.f32.mrf.mxu0
        %v2062 = vadd.f32 %v1576, %v2061
        %v2063 = vpop.f32.mrf.mxu0
        %v2064 = vadd.f32 %v1572, %v2063
        %v2065 = vpop.f32.mrf.mxu0
        %v2066 = vadd.f32 %v1576, %v2065
        %2067 = vmatprep.mubr.bf16.mxu0 0
        %2068 = vmatmul.mubr.bf16.gmra.mxu0 %v1833
        %v2069 = vpop.f32.mrf.mxu0
        %v2070 = vadd.f32 %v1572, %v2069
        %v2071 = vpop.f32.mrf.mxu0
        %v2072 = vadd.f32 %v1576, %v2071
        %v2073 = vpop.f32.mrf.mxu0
        %v2074 = vadd.f32 %v1572, %v2073
        %v2075 = vpop.f32.mrf.mxu0
        %v2076 = vadd.f32 %v1576, %v2075
        %2077 = vmatprep.mubr.bf16.mxu0 0
        %2078 = vmatmul.mubr.bf16.gmra.mxu0 %v1836
        %v2079 = vpop.f32.mrf.mxu0
        %v2080 = vadd.f32 %v1572, %v2079
        %v2081 = vpop.f32.mrf.mxu0
        %v2082 = vadd.f32 %v1576, %v2081
        %v2083 = vpop.f32.mrf.mxu0
        %v2084 = vadd.f32 %v1572, %v2083
        %v2085 = vpop.f32.mrf.mxu0
        %v2086 = vadd.f32 %v1576, %v2085
        %2087 = vmatprep.mubr.bf16.mxu0 0
        %2088 = vmatmul.mubr.bf16.gmra.mxu0 %v1839
        %v2089 = vpop.f32.mrf.mxu0
        %v2090 = vadd.f32 %v1572, %v2089
        %v2091 = vpop.f32.mrf.mxu0
        %v2092 = vadd.f32 %v1576, %v2091
        %v2093 = vpop.f32.mrf.mxu0
        %v2094 = vadd.f32 %v1572, %v2093
        %v2095 = vpop.f32.mrf.mxu0
        %v2096 = vadd.f32 %v1576, %v2095
        %2097 = vmatprep.mubr.bf16.mxu0 0
        %2098 = vmatmul.mubr.bf16.gmra.mxu0 %v1842
        %v2099 = vpop.f32.mrf.mxu0
        %v2100 = vadd.f32 %v1572, %v2099
        %v2101 = vpop.f32.mrf.mxu0
        %v2102 = vadd.f32 %v1576, %v2101
        %v2103 = vpop.f32.mrf.mxu0
        %v2104 = vadd.f32 %v1572, %v2103
        %v2105 = vpop.f32.mrf.mxu0
        %v2106 = vadd.f32 %v1576, %v2105
        %2107 = vmatprep.mubr.bf16.mxu0 0
        %2108 = vmatmul.mubr.bf16.gmra.mxu0 %v1845
        %v2109 = vpop.f32.mrf.mxu0
        %v2110 = vadd.f32 %v1572, %v2109
        %v2111 = vpop.f32.mrf.mxu0
        %v2112 = vadd.f32 %v1576, %v2111
        %v2113 = vpop.f32.mrf.mxu0
        %v2114 = vadd.f32 %v1572, %v2113
        %v2115 = vpop.f32.mrf.mxu0
        %v2116 = vadd.f32 %v1576, %v2115
        %2117 = vmatprep.mubr.bf16.mxu0 0
        %2118 = vmatmul.mubr.bf16.gmra.mxu0 %v1848
        %v2119 = vpop.f32.mrf.mxu0
        %v2120 = vadd.f32 %v1572, %v2119
        %v2121 = vpop.f32.mrf.mxu0
        %v2122 = vadd.f32 %v1576, %v2121
        %v2123 = vpop.f32.mrf.mxu0
        %v2124 = vadd.f32 %v1572, %v2123
        %v2125 = vpop.f32.mrf.mxu0
        %v2126 = vadd.f32 %v1576, %v2125
        %2127 = vdwg.mxu0
        %2128 = vmatprep.subr.bf16.mxu0 0
        %2129 = vmatpush1.bf16.msra.mxu0 0
        %2130 = vmatprep.subr.bf16.mxu0 0
        %2131 = vmatpush1.bf16.msra.mxu0 0
        %2132 = vmatprep.subr.bf16.mxu0 0
        %2133 = vmatpush1.bf16.msra.mxu0 0
        %2134 = vmatprep.subr.bf16.mxu0 0
        %2135 = vmatpush1.bf16.msra.mxu0 0
        %2136 = vmatprep.subr.bf16.mxu0 0
        %2137 = vmatpush1.bf16.msra.mxu0 0
        %2138 = vmatprep.subr.bf16.mxu0 0
        %2139 = vmatpush1.bf16.msra.mxu0 0
        %2140 = vmatprep.subr.bf16.mxu0 %v1870
        %2141 = vmatpush1.bf16.msra.mxu0 %v1867
        %2142 = vmatprep.subr.bf16.mxu0 %v1782
        %2143 = vmatpush1.bf16.msra.mxu0 %v1781
        %2144 = vmatprep.subr.bf16.mxu0 0
        %2145 = vmatpush2.bf16.msra.mxu0 0
        %2146 = vmatprep.subr.bf16.mxu0 0
        %2147 = vmatpush2.bf16.msra.mxu0 0
        %2148 = vmatprep.subr.bf16.mxu0 0
        %2149 = vmatpush2.bf16.msra.mxu0 0
        %2150 = vmatprep.subr.bf16.mxu0 0
        %2151 = vmatpush2.bf16.msra.mxu0 0
        %2152 = vmatprep.subr.bf16.mxu0 0
        %2153 = vmatpush2.bf16.msra.mxu0 0
        %2154 = vmatprep.subr.bf16.mxu0 0
        %2155 = vmatpush2.bf16.msra.mxu0 0
        %2156 = vmatprep.subr.bf16.mxu0 0
        %2157 = vmatpush2.bf16.msra.mxu0 0
        %2158 = vmatprep.subr.bf16.mxu0 0
        %2159 = vmatpush2.bf16.msra.mxu0 0
        %2160 = vmatprep.mubr.bf16.mxu0 0
        %2161 = vmatmul.mubr.bf16.gmra.mxu0 %v1827
        %v2162 = vpop.f32.mrf.mxu0
        %v2163 = vadd.f32 %v1580, %v2162
        %v2164 = vpop.f32.mrf.mxu0
        %v2165 = vadd.f32 %v1584, %v2164
        %v2166 = vpop.f32.mrf.mxu0
        %v2167 = vadd.f32 %v1580, %v2166
        %v2168 = vpop.f32.mrf.mxu0
        %v2169 = vadd.f32 %v1584, %v2168
        %2170 = vmatprep.mubr.bf16.mxu0 0
        %2171 = vmatmul.mubr.bf16.gmra.mxu0 %v1830
        %v2172 = vpop.f32.mrf.mxu0
        %v2173 = vadd.f32 %v1580, %v2172
        %v2174 = vpop.f32.mrf.mxu0
        %v2175 = vadd.f32 %v1584, %v2174
        %v2176 = vpop.f32.mrf.mxu0
        %v2177 = vadd.f32 %v1580, %v2176
        %v2178 = vpop.f32.mrf.mxu0
        %v2179 = vadd.f32 %v1584, %v2178
        %2180 = vmatprep.mubr.bf16.mxu0 0
        %2181 = vmatmul.mubr.bf16.gmra.mxu0 %v1833
        %v2182 = vpop.f32.mrf.mxu0
        %v2183 = vadd.f32 %v1580, %v2182
        %v2184 = vpop.f32.mrf.mxu0
        %v2185 = vadd.f32 %v1584, %v2184
        %v2186 = vpop.f32.mrf.mxu0
        %v2187 = vadd.f32 %v1580, %v2186
        %v2188 = vpop.f32.mrf.mxu0
        %v2189 = vadd.f32 %v1584, %v2188
        %2190 = vmatprep.mubr.bf16.mxu0 0
        %2191 = vmatmul.mubr.bf16.gmra.mxu0 %v1836
        %v2192 = vpop.f32.mrf.mxu0
        %v2193 = vadd.f32 %v1580, %v2192
        %v2194 = vpop.f32.mrf.mxu0
        %v2195 = vadd.f32 %v1584, %v2194
        %v2196 = vpop.f32.mrf.mxu0
        %v2197 = vadd.f32 %v1580, %v2196
        %v2198 = vpop.f32.mrf.mxu0
        %v2199 = vadd.f32 %v1584, %v2198
        %2200 = vmatprep.mubr.bf16.mxu0 0
        %2201 = vmatmul.mubr.bf16.gmra.mxu0 %v1839
        %v2202 = vpop.f32.mrf.mxu0
        %v2203 = vadd.f32 %v1580, %v2202
        %v2204 = vpop.f32.mrf.mxu0
        %v2205 = vadd.f32 %v1584, %v2204
        %v2206 = vpop.f32.mrf.mxu0
        %v2207 = vadd.f32 %v1580, %v2206
        %v2208 = vpop.f32.mrf.mxu0
        %v2209 = vadd.f32 %v1584, %v2208
        %2210 = vmatprep.mubr.bf16.mxu0 0
        %2211 = vmatmul.mubr.bf16.gmra.mxu0 %v1842
        %v2212 = vpop.f32.mrf.mxu0
        %v2213 = vadd.f32 %v1580, %v2212
        %v2214 = vpop.f32.mrf.mxu0
        %v2215 = vadd.f32 %v1584, %v2214
        %v2216 = vpop.f32.mrf.mxu0
        %v2217 = vadd.f32 %v1580, %v2216
        %v2218 = vpop.f32.mrf.mxu0
        %v2219 = vadd.f32 %v1584, %v2218
        %2220 = vmatprep.mubr.bf16.mxu0 0
        %2221 = vmatmul.mubr.bf16.gmra.mxu0 %v1845
        %v2222 = vpop.f32.mrf.mxu0
        %v2223 = vadd.f32 %v1580, %v2222
        %v2224 = vpop.f32.mrf.mxu0
        %v2225 = vadd.f32 %v1584, %v2224
        %v2226 = vpop.f32.mrf.mxu0
        %v2227 = vadd.f32 %v1580, %v2226
        %v2228 = vpop.f32.mrf.mxu0
        %v2229 = vadd.f32 %v1584, %v2228
        %2230 = vmatprep.mubr.bf16.mxu0 0
        %2231 = vmatmul.mubr.bf16.gmra.mxu0 %v1848
        %v2232 = vpop.f32.mrf.mxu0
        %v2233 = vadd.f32 %v1580, %v2232
        %v2234 = vpop.f32.mrf.mxu0
        %v2235 = vadd.f32 %v1584, %v2234
        %v2236 = vpop.f32.mrf.mxu0
        %v2237 = vadd.f32 %v1580, %v2236
        %v2238 = vpop.f32.mrf.mxu0
        %v2239 = vadd.f32 %v1584, %v2238
        %2240 = vdwg.mxu0
        %2241 = vmatprep.subr.bf16.mxu0 0
        %2242 = vmatpush1.bf16.msra.mxu0 0
        %2243 = vmatprep.subr.bf16.mxu0 0
        %2244 = vmatpush1.bf16.msra.mxu0 0
        %2245 = vmatprep.subr.bf16.mxu0 0
        %2246 = vmatpush1.bf16.msra.mxu0 0
        %2247 = vmatprep.subr.bf16.mxu0 0
        %2248 = vmatpush1.bf16.msra.mxu0 0
        %2249 = vmatprep.subr.bf16.mxu0 0
        %2250 = vmatpush1.bf16.msra.mxu0 0
        %2251 = vmatprep.subr.bf16.mxu0 0
        %2252 = vmatpush1.bf16.msra.mxu0 0
        %2253 = vmatprep.subr.bf16.mxu0 %v1876
        %2254 = vmatpush1.bf16.msra.mxu0 %v1873
        %2255 = vmatprep.subr.bf16.mxu0 %v1784
        %2256 = vmatpush1.bf16.msra.mxu0 %v1783
        %2257 = vmatprep.subr.bf16.mxu0 0
        %2258 = vmatpush2.bf16.msra.mxu0 0
        %2259 = vmatprep.subr.bf16.mxu0 0
        %2260 = vmatpush2.bf16.msra.mxu0 0
        %2261 = vmatprep.subr.bf16.mxu0 0
        %2262 = vmatpush2.bf16.msra.mxu0 0
        %2263 = vmatprep.subr.bf16.mxu0 0
        %2264 = vmatpush2.bf16.msra.mxu0 0
        %2265 = vmatprep.subr.bf16.mxu0 0
        %2266 = vmatpush2.bf16.msra.mxu0 0
        %2267 = vmatprep.subr.bf16.mxu0 0
        %2268 = vmatpush2.bf16.msra.mxu0 0
        %2269 = vmatprep.subr.bf16.mxu0 0
        %2270 = vmatpush2.bf16.msra.mxu0 0
        %2271 = vmatprep.subr.bf16.mxu0 0
        %2272 = vmatpush2.bf16.msra.mxu0 0
        %2273 = vmatprep.mubr.bf16.mxu0 0
        %2274 = vmatmul.mubr.bf16.gmra.mxu0 %v1827
        %v2275 = vpop.f32.mrf.mxu0
        %v2276 = vadd.f32 %v1588, %v2275
        %v2277 = vpop.f32.mrf.mxu0
        %v2278 = vadd.f32 %v1592, %v2277
        %v2279 = vpop.f32.mrf.mxu0
        %v2280 = vadd.f32 %v1588, %v2279
        %v2281 = vpop.f32.mrf.mxu0
        %v2282 = vadd.f32 %v1592, %v2281
        %2283 = vmatprep.mubr.bf16.mxu0 0
        %2284 = vmatmul.mubr.bf16.gmra.mxu0 %v1830
        %v2285 = vpop.f32.mrf.mxu0
        %v2286 = vadd.f32 %v1588, %v2285
        %v2287 = vpop.f32.mrf.mxu0
        %v2288 = vadd.f32 %v1592, %v2287
        %v2289 = vpop.f32.mrf.mxu0
        %v2290 = vadd.f32 %v1588, %v2289
        %v2291 = vpop.f32.mrf.mxu0
        %v2292 = vadd.f32 %v1592, %v2291
        %2293 = vmatprep.mubr.bf16.mxu0 0
        %2294 = vmatmul.mubr.bf16.gmra.mxu0 %v1833
        %v2295 = vpop.f32.mrf.mxu0
        %v2296 = vadd.f32 %v1588, %v2295
        %v2297 = vpop.f32.mrf.mxu0
        %v2298 = vadd.f32 %v1592, %v2297
        %v2299 = vpop.f32.mrf.mxu0
        %v2300 = vadd.f32 %v1588, %v2299
        %v2301 = vpop.f32.mrf.mxu0
        %v2302 = vadd.f32 %v1592, %v2301
        %2303 = vmatprep.mubr.bf16.mxu0 0
        %2304 = vmatmul.mubr.bf16.gmra.mxu0 %v1836
        %v2305 = vpop.f32.mrf.mxu0
        %v2306 = vadd.f32 %v1588, %v2305
        %v2307 = vpop.f32.mrf.mxu0
        %v2308 = vadd.f32 %v1592, %v2307
        %v2309 = vpop.f32.mrf.mxu0
        %v2310 = vadd.f32 %v1588, %v2309
        %v2311 = vpop.f32.mrf.mxu0
        %v2312 = vadd.f32 %v1592, %v2311
        %2313 = vmatprep.mubr.bf16.mxu0 0
        %2314 = vmatmul.mubr.bf16.gmra.mxu0 %v1839
        %v2315 = vpop.f32.mrf.mxu0
        %v2316 = vadd.f32 %v1588, %v2315
        %v2317 = vpop.f32.mrf.mxu0
        %v2318 = vadd.f32 %v1592, %v2317
        %v2319 = vpop.f32.mrf.mxu0
        %v2320 = vadd.f32 %v1588, %v2319
        %v2321 = vpop.f32.mrf.mxu0
        %v2322 = vadd.f32 %v1592, %v2321
        %2323 = vmatprep.mubr.bf16.mxu0 0
        %2324 = vmatmul.mubr.bf16.gmra.mxu0 %v1842
        %v2325 = vpop.f32.mrf.mxu0
        %v2326 = vadd.f32 %v1588, %v2325
        %v2327 = vpop.f32.mrf.mxu0
        %v2328 = vadd.f32 %v1592, %v2327
        %v2329 = vpop.f32.mrf.mxu0
        %v2330 = vadd.f32 %v1588, %v2329
        %v2331 = vpop.f32.mrf.mxu0
        %v2332 = vadd.f32 %v1592, %v2331
        %2333 = vmatprep.mubr.bf16.mxu0 0
        %2334 = vmatmul.mubr.bf16.gmra.mxu0 %v1845
        %v2335 = vpop.f32.mrf.mxu0
        %v2336 = vadd.f32 %v1588, %v2335
        %v2337 = vpop.f32.mrf.mxu0
        %v2338 = vadd.f32 %v1592, %v2337
        %v2339 = vpop.f32.mrf.mxu0
        %v2340 = vadd.f32 %v1588, %v2339
        %v2341 = vpop.f32.mrf.mxu0
        %v2342 = vadd.f32 %v1592, %v2341
        %2343 = vmatprep.mubr.bf16.mxu0 0
        %2344 = vmatmul.mubr.bf16.gmra.mxu0 %v1848
        %v2345 = vpop.f32.mrf.mxu0
        %v2346 = vadd.f32 %v1588, %v2345
        %v2347 = vpop.f32.mrf.mxu0
        %v2348 = vadd.f32 %v1592, %v2347
        %v2349 = vpop.f32.mrf.mxu0
        %v2350 = vadd.f32 %v1588, %v2349
        %v2351 = vpop.f32.mrf.mxu0
        %v2352 = vadd.f32 %v1592, %v2351
        %2353 = vdwg.mxu0
        %2354 = vmatprep.subr.bf16.mxu0 0
        %2355 = vmatpush1.bf16.msra.mxu0 0
        %2356 = vmatprep.subr.bf16.mxu0 0
        %2357 = vmatpush1.bf16.msra.mxu0 0
        %2358 = vmatprep.subr.bf16.mxu0 0
        %2359 = vmatpush1.bf16.msra.mxu0 0
        %2360 = vmatprep.subr.bf16.mxu0 0
        %2361 = vmatpush1.bf16.msra.mxu0 0
        %2362 = vmatprep.subr.bf16.mxu0 0
        %2363 = vmatpush1.bf16.msra.mxu0 0
        %2364 = vmatprep.subr.bf16.mxu0 0
        %2365 = vmatpush1.bf16.msra.mxu0 0
        %2366 = vmatprep.subr.bf16.mxu0 %v1882
        %2367 = vmatpush1.bf16.msra.mxu0 %v1879
        %2368 = vmatprep.subr.bf16.mxu0 %v1786
        %2369 = vmatpush1.bf16.msra.mxu0 %v1785
        %2370 = vmatprep.subr.bf16.mxu0 0
        %2371 = vmatpush2.bf16.msra.mxu0 0
        %2372 = vmatprep.subr.bf16.mxu0 0
        %2373 = vmatpush2.bf16.msra.mxu0 0
        %2374 = vmatprep.subr.bf16.mxu0 0
        %2375 = vmatpush2.bf16.msra.mxu0 0
        %2376 = vmatprep.subr.bf16.mxu0 0
        %2377 = vmatpush2.bf16.msra.mxu0 0
        %2378 = vmatprep.subr.bf16.mxu0 0
        %2379 = vmatpush2.bf16.msra.mxu0 0
        %2380 = vmatprep.subr.bf16.mxu0 0
        %2381 = vmatpush2.bf16.msra.mxu0 0
        %2382 = vmatprep.subr.bf16.mxu0 0
        %2383 = vmatpush2.bf16.msra.mxu0 0
        %2384 = vmatprep.subr.bf16.mxu0 0
        %2385 = vmatpush2.bf16.msra.mxu0 0
        %2386 = vmatprep.mubr.bf16.mxu0 0
        %2387 = vmatmul.mubr.bf16.gmra.mxu0 %v1827
        %v2388 = vpop.f32.mrf.mxu0
        %v2389 = vadd.f32 %v1596, %v2388
        %v2390 = vpop.f32.mrf.mxu0
        %v2391 = vadd.f32 %v1600, %v2390
        %v2392 = vpop.f32.mrf.mxu0
        %v2393 = vadd.f32 %v1596, %v2392
        %v2394 = vpop.f32.mrf.mxu0
        %v2395 = vadd.f32 %v1600, %v2394
        %2396 = vmatprep.mubr.bf16.mxu0 0
        %2397 = vmatmul.mubr.bf16.gmra.mxu0 %v1830
        %v2398 = vpop.f32.mrf.mxu0
        %v2399 = vadd.f32 %v1596, %v2398
        %v2400 = vpop.f32.mrf.mxu0
        %v2401 = vadd.f32 %v1600, %v2400
        %v2402 = vpop.f32.mrf.mxu0
        %v2403 = vadd.f32 %v1596, %v2402
        %v2404 = vpop.f32.mrf.mxu0
        %v2405 = vadd.f32 %v1600, %v2404
        %2406 = vmatprep.mubr.bf16.mxu0 0
        %2407 = vmatmul.mubr.bf16.gmra.mxu0 %v1833
        %v2408 = vpop.f32.mrf.mxu0
        %v2409 = vadd.f32 %v1596, %v2408
        %v2410 = vpop.f32.mrf.mxu0
        %v2411 = vadd.f32 %v1600, %v2410
        %v2412 = vpop.f32.mrf.mxu0
        %v2413 = vadd.f32 %v1596, %v2412
        %v2414 = vpop.f32.mrf.mxu0
        %v2415 = vadd.f32 %v1600, %v2414
        %2416 = vmatprep.mubr.bf16.mxu0 0
        %2417 = vmatmul.mubr.bf16.gmra.mxu0 %v1836
        %v2418 = vpop.f32.mrf.mxu0
        %v2419 = vadd.f32 %v1596, %v2418
        %v2420 = vpop.f32.mrf.mxu0
        %v2421 = vadd.f32 %v1600, %v2420
        %v2422 = vpop.f32.mrf.mxu0
        %v2423 = vadd.f32 %v1596, %v2422
        %v2424 = vpop.f32.mrf.mxu0
        %v2425 = vadd.f32 %v1600, %v2424
        %2426 = vmatprep.mubr.bf16.mxu0 0
        %2427 = vmatmul.mubr.bf16.gmra.mxu0 %v1839
        %v2428 = vpop.f32.mrf.mxu0
        %v2429 = vadd.f32 %v1596, %v2428
        %v2430 = vpop.f32.mrf.mxu0
        %v2431 = vadd.f32 %v1600, %v2430
        %v2432 = vpop.f32.mrf.mxu0
        %v2433 = vadd.f32 %v1596, %v2432
        %v2434 = vpop.f32.mrf.mxu0
        %v2435 = vadd.f32 %v1600, %v2434
        %2436 = vmatprep.mubr.bf16.mxu0 0
        %2437 = vmatmul.mubr.bf16.gmra.mxu0 %v1842
        %v2438 = vpop.f32.mrf.mxu0
        %v2439 = vadd.f32 %v1596, %v2438
        %v2440 = vpop.f32.mrf.mxu0
        %v2441 = vadd.f32 %v1600, %v2440
        %v2442 = vpop.f32.mrf.mxu0
        %v2443 = vadd.f32 %v1596, %v2442
        %v2444 = vpop.f32.mrf.mxu0
        %v2445 = vadd.f32 %v1600, %v2444
        %2446 = vmatprep.mubr.bf16.mxu0 0
        %2447 = vmatmul.mubr.bf16.gmra.mxu0 %v1845
        %v2448 = vpop.f32.mrf.mxu0
        %v2449 = vadd.f32 %v1596, %v2448
        %v2450 = vpop.f32.mrf.mxu0
        %v2451 = vadd.f32 %v1600, %v2450
        %v2452 = vpop.f32.mrf.mxu0
        %v2453 = vadd.f32 %v1596, %v2452
        %v2454 = vpop.f32.mrf.mxu0
        %v2455 = vadd.f32 %v1600, %v2454
        %2456 = vmatprep.mubr.bf16.mxu0 0
        %2457 = vmatmul.mubr.bf16.gmra.mxu0 %v1848
        %v2458 = vpop.f32.mrf.mxu0
        %v2459 = vadd.f32 %v1596, %v2458
        %v2460 = vpop.f32.mrf.mxu0
        %v2461 = vadd.f32 %v1600, %v2460
        %v2462 = vpop.f32.mrf.mxu0
        %v2463 = vadd.f32 %v1596, %v2462
        %v2464 = vpop.f32.mrf.mxu0
        %v2465 = vadd.f32 %v1600, %v2464
        %2466 = vdwg.mxu0
        %2467 = vmatprep.subr.bf16.mxu0 0
        %2468 = vmatpush1.bf16.msra.mxu0 0
        %2469 = vmatprep.subr.bf16.mxu0 0
        %2470 = vmatpush1.bf16.msra.mxu0 0
        %2471 = vmatprep.subr.bf16.mxu0 0
        %2472 = vmatpush1.bf16.msra.mxu0 0
        %2473 = vmatprep.subr.bf16.mxu0 0
        %2474 = vmatpush1.bf16.msra.mxu0 0
        %2475 = vmatprep.subr.bf16.mxu0 0
        %2476 = vmatpush1.bf16.msra.mxu0 0
        %2477 = vmatprep.subr.bf16.mxu0 0
        %2478 = vmatpush1.bf16.msra.mxu0 0
        %2479 = vmatprep.subr.bf16.mxu0 %v1888
        %2480 = vmatpush1.bf16.msra.mxu0 %v1885
        %2481 = vmatprep.subr.bf16.mxu0 %v1788
        %2482 = vmatpush1.bf16.msra.mxu0 %v1787
        %2483 = vmatprep.subr.bf16.mxu0 0
        %2484 = vmatpush2.bf16.msra.mxu0 0
        %2485 = vmatprep.subr.bf16.mxu0 0
        %2486 = vmatpush2.bf16.msra.mxu0 0
        %2487 = vmatprep.subr.bf16.mxu0 0
        %2488 = vmatpush2.bf16.msra.mxu0 0
        %2489 = vmatprep.subr.bf16.mxu0 0
        %2490 = vmatpush2.bf16.msra.mxu0 0
        %2491 = vmatprep.subr.bf16.mxu0 0
        %2492 = vmatpush2.bf16.msra.mxu0 0
        %2493 = vmatprep.subr.bf16.mxu0 0
        %2494 = vmatpush2.bf16.msra.mxu0 0
        %2495 = vmatprep.subr.bf16.mxu0 0
        %2496 = vmatpush2.bf16.msra.mxu0 0
        %2497 = vmatprep.subr.bf16.mxu0 0
        %2498 = vmatpush2.bf16.msra.mxu0 0
        %2499 = vmatprep.mubr.bf16.mxu0 0
        %2500 = vmatmul.mubr.bf16.gmra.mxu0 %v1827
        %v2501 = vpop.f32.mrf.mxu0
        %v2502 = vadd.f32 %v1604, %v2501
        %v2503 = vpop.f32.mrf.mxu0
        %v2504 = vadd.f32 %v1608, %v2503
        %v2505 = vpop.f32.mrf.mxu0
        %v2506 = vadd.f32 %v1604, %v2505
        %v2507 = vpop.f32.mrf.mxu0
        %v2508 = vadd.f32 %v1608, %v2507
        %2509 = vmatprep.mubr.bf16.mxu0 0
        %2510 = vmatmul.mubr.bf16.gmra.mxu0 %v1830
        %v2511 = vpop.f32.mrf.mxu0
        %v2512 = vadd.f32 %v1604, %v2511
        %v2513 = vpop.f32.mrf.mxu0
        %v2514 = vadd.f32 %v1608, %v2513
        %v2515 = vpop.f32.mrf.mxu0
        %v2516 = vadd.f32 %v1604, %v2515
        %v2517 = vpop.f32.mrf.mxu0
        %v2518 = vadd.f32 %v1608, %v2517
        %2519 = vmatprep.mubr.bf16.mxu0 0
        %2520 = vmatmul.mubr.bf16.gmra.mxu0 %v1833
        %v2521 = vpop.f32.mrf.mxu0
        %v2522 = vadd.f32 %v1604, %v2521
        %v2523 = vpop.f32.mrf.mxu0
        %v2524 = vadd.f32 %v1608, %v2523
        %v2525 = vpop.f32.mrf.mxu0
        %v2526 = vadd.f32 %v1604, %v2525
        %v2527 = vpop.f32.mrf.mxu0
        %v2528 = vadd.f32 %v1608, %v2527
        %2529 = vmatprep.mubr.bf16.mxu0 0
        %2530 = vmatmul.mubr.bf16.gmra.mxu0 %v1836
        %v2531 = vpop.f32.mrf.mxu0
        %v2532 = vadd.f32 %v1604, %v2531
        %v2533 = vpop.f32.mrf.mxu0
        %v2534 = vadd.f32 %v1608, %v2533
        %v2535 = vpop.f32.mrf.mxu0
        %v2536 = vadd.f32 %v1604, %v2535
        %v2537 = vpop.f32.mrf.mxu0
        %v2538 = vadd.f32 %v1608, %v2537
        %2539 = vmatprep.mubr.bf16.mxu0 0
        %2540 = vmatmul.mubr.bf16.gmra.mxu0 %v1839
        %v2541 = vpop.f32.mrf.mxu0
        %v2542 = vadd.f32 %v1604, %v2541
        %v2543 = vpop.f32.mrf.mxu0
        %v2544 = vadd.f32 %v1608, %v2543
        %v2545 = vpop.f32.mrf.mxu0
        %v2546 = vadd.f32 %v1604, %v2545
        %v2547 = vpop.f32.mrf.mxu0
        %v2548 = vadd.f32 %v1608, %v2547
        %2549 = vmatprep.mubr.bf16.mxu0 0
        %2550 = vmatmul.mubr.bf16.gmra.mxu0 %v1842
        %v2551 = vpop.f32.mrf.mxu0
        %v2552 = vadd.f32 %v1604, %v2551
        %v2553 = vpop.f32.mrf.mxu0
        %v2554 = vadd.f32 %v1608, %v2553
        %v2555 = vpop.f32.mrf.mxu0
        %v2556 = vadd.f32 %v1604, %v2555
        %v2557 = vpop.f32.mrf.mxu0
        %v2558 = vadd.f32 %v1608, %v2557
        %2559 = vmatprep.mubr.bf16.mxu0 0
        %2560 = vmatmul.mubr.bf16.gmra.mxu0 %v1845
        %v2561 = vpop.f32.mrf.mxu0
        %v2562 = vadd.f32 %v1604, %v2561
        %v2563 = vpop.f32.mrf.mxu0
        %v2564 = vadd.f32 %v1608, %v2563
        %v2565 = vpop.f32.mrf.mxu0
        %v2566 = vadd.f32 %v1604, %v2565
        %v2567 = vpop.f32.mrf.mxu0
        %v2568 = vadd.f32 %v1608, %v2567
        %2569 = vmatprep.mubr.bf16.mxu0 0
        %2570 = vmatmul.mubr.bf16.gmra.mxu0 %v1848
        %v2571 = vpop.f32.mrf.mxu0
        %v2572 = vadd.f32 %v1604, %v2571
        %v2573 = vpop.f32.mrf.mxu0
        %v2574 = vadd.f32 %v1608, %v2573
        %v2575 = vpop.f32.mrf.mxu0
        %v2576 = vadd.f32 %v1604, %v2575
        %v2577 = vpop.f32.mrf.mxu0
        %v2578 = vadd.f32 %v1608, %v2577
        %2579 = vdwg.mxu0
        %2580 = vmatprep.subr.bf16.mxu0 0
        %2581 = vmatpush1.bf16.msra.mxu0 0
        %2582 = vmatprep.subr.bf16.mxu0 0
        %2583 = vmatpush1.bf16.msra.mxu0 0
        %2584 = vmatprep.subr.bf16.mxu0 0
        %2585 = vmatpush1.bf16.msra.mxu0 0
        %2586 = vmatprep.subr.bf16.mxu0 0
        %2587 = vmatpush1.bf16.msra.mxu0 0
        %2588 = vmatprep.subr.bf16.mxu0 0
        %2589 = vmatpush1.bf16.msra.mxu0 0
        %2590 = vmatprep.subr.bf16.mxu0 0
        %2591 = vmatpush1.bf16.msra.mxu0 0
        %2592 = vmatprep.subr.bf16.mxu0 %v1894
        %2593 = vmatpush1.bf16.msra.mxu0 %v1891
        %2594 = vmatprep.subr.bf16.mxu0 %v1790
        %2595 = vmatpush1.bf16.msra.mxu0 %v1789
        %2596 = vmatprep.subr.bf16.mxu0 0
        %2597 = vmatpush2.bf16.msra.mxu0 0
        %2598 = vmatprep.subr.bf16.mxu0 0
        %2599 = vmatpush2.bf16.msra.mxu0 0
        %2600 = vmatprep.subr.bf16.mxu0 0
        %2601 = vmatpush2.bf16.msra.mxu0 0
        %2602 = vmatprep.subr.bf16.mxu0 0
        %2603 = vmatpush2.bf16.msra.mxu0 0
        %2604 = vmatprep.subr.bf16.mxu0 0
        %2605 = vmatpush2.bf16.msra.mxu0 0
        %2606 = vmatprep.subr.bf16.mxu0 0
        %2607 = vmatpush2.bf16.msra.mxu0 0
        %2608 = vmatprep.subr.bf16.mxu0 0
        %2609 = vmatpush2.bf16.msra.mxu0 0
        %2610 = vmatprep.subr.bf16.mxu0 0
        %2611 = vmatpush2.bf16.msra.mxu0 0
        %2612 = vmatprep.mubr.bf16.mxu0 0
        %2613 = vmatmul.mubr.bf16.gmra.mxu0 %v1827
        %v2614 = vpop.f32.mrf.mxu0
        %v2615 = vadd.f32 %v1612, %v2614
        %v2616 = vpop.f32.mrf.mxu0
        %v2617 = vadd.f32 %v1616, %v2616
        %v2618 = vpop.f32.mrf.mxu0
        %v2619 = vadd.f32 %v1612, %v2618
        %v2620 = vpop.f32.mrf.mxu0
        %v2621 = vadd.f32 %v1616, %v2620
        %2622 = vmatprep.mubr.bf16.mxu0 0
        %2623 = vmatmul.mubr.bf16.gmra.mxu0 %v1830
        %v2624 = vpop.f32.mrf.mxu0
        %v2625 = vadd.f32 %v1612, %v2624
        %v2626 = vpop.f32.mrf.mxu0
        %v2627 = vadd.f32 %v1616, %v2626
        %v2628 = vpop.f32.mrf.mxu0
        %v2629 = vadd.f32 %v1612, %v2628
        %v2630 = vpop.f32.mrf.mxu0
        %v2631 = vadd.f32 %v1616, %v2630
        %2632 = vmatprep.mubr.bf16.mxu0 0
        %2633 = vmatmul.mubr.bf16.gmra.mxu0 %v1833
        %v2634 = vpop.f32.mrf.mxu0
        %v2635 = vadd.f32 %v1612, %v2634
        %v2636 = vpop.f32.mrf.mxu0
        %v2637 = vadd.f32 %v1616, %v2636
        %v2638 = vpop.f32.mrf.mxu0
        %v2639 = vadd.f32 %v1612, %v2638
        %v2640 = vpop.f32.mrf.mxu0
        %v2641 = vadd.f32 %v1616, %v2640
        %2642 = vmatprep.mubr.bf16.mxu0 0
        %2643 = vmatmul.mubr.bf16.gmra.mxu0 %v1836
        %v2644 = vpop.f32.mrf.mxu0
        %v2645 = vadd.f32 %v1612, %v2644
        %v2646 = vpop.f32.mrf.mxu0
        %v2647 = vadd.f32 %v1616, %v2646
        %v2648 = vpop.f32.mrf.mxu0
        %v2649 = vadd.f32 %v1612, %v2648
        %v2650 = vpop.f32.mrf.mxu0
        %v2651 = vadd.f32 %v1616, %v2650
        %2652 = vmatprep.mubr.bf16.mxu0 0
        %2653 = vmatmul.mubr.bf16.gmra.mxu0 %v1839
        %v2654 = vpop.f32.mrf.mxu0
        %v2655 = vadd.f32 %v1612, %v2654
        %v2656 = vpop.f32.mrf.mxu0
        %v2657 = vadd.f32 %v1616, %v2656
        %v2658 = vpop.f32.mrf.mxu0
        %v2659 = vadd.f32 %v1612, %v2658
        %v2660 = vpop.f32.mrf.mxu0
        %v2661 = vadd.f32 %v1616, %v2660
        %2662 = vmatprep.mubr.bf16.mxu0 0
        %2663 = vmatmul.mubr.bf16.gmra.mxu0 %v1842
        %v2664 = vpop.f32.mrf.mxu0
        %v2665 = vadd.f32 %v1612, %v2664
        %v2666 = vpop.f32.mrf.mxu0
        %v2667 = vadd.f32 %v1616, %v2666
        %v2668 = vpop.f32.mrf.mxu0
        %v2669 = vadd.f32 %v1612, %v2668
        %v2670 = vpop.f32.mrf.mxu0
        %v2671 = vadd.f32 %v1616, %v2670
        %2672 = vmatprep.mubr.bf16.mxu0 0
        %2673 = vmatmul.mubr.bf16.gmra.mxu0 %v1845
        %v2674 = vpop.f32.mrf.mxu0
        %v2675 = vadd.f32 %v1612, %v2674
        %v2676 = vpop.f32.mrf.mxu0
        %v2677 = vadd.f32 %v1616, %v2676
        %v2678 = vpop.f32.mrf.mxu0
        %v2679 = vadd.f32 %v1612, %v2678
        %v2680 = vpop.f32.mrf.mxu0
        %v2681 = vadd.f32 %v1616, %v2680
        %2682 = vmatprep.mubr.bf16.mxu0 0
        %2683 = vmatmul.mubr.bf16.gmra.mxu0 %v1848
        %v2684 = vpop.f32.mrf.mxu0
        %v2685 = vadd.f32 %v1612, %v2684
        %v2686 = vpop.f32.mrf.mxu0
        %v2687 = vadd.f32 %v1616, %v2686
        %v2688 = vpop.f32.mrf.mxu0
        %v2689 = vadd.f32 %v1612, %v2688
        %v2690 = vpop.f32.mrf.mxu0
        %v2691 = vadd.f32 %v1616, %v2690
        %2692 = vdwg.mxu0
        %2693 = vmatprep.subr.bf16.mxu0 0
        %2694 = vmatpush1.bf16.msra.mxu0 0
        %2695 = vmatprep.subr.bf16.mxu0 0
        %2696 = vmatpush1.bf16.msra.mxu0 0
        %2697 = vmatprep.subr.bf16.mxu0 0
        %2698 = vmatpush1.bf16.msra.mxu0 0
        %2699 = vmatprep.subr.bf16.mxu0 0
        %2700 = vmatpush1.bf16.msra.mxu0 0
        %2701 = vmatprep.subr.bf16.mxu0 0
        %2702 = vmatpush1.bf16.msra.mxu0 0
        %2703 = vmatprep.subr.bf16.mxu0 0
        %2704 = vmatpush1.bf16.msra.mxu0 0
        %2705 = vmatprep.subr.bf16.mxu0 %v1900
        %2706 = vmatpush1.bf16.msra.mxu0 %v1897
        %2707 = vmatprep.subr.bf16.mxu0 %v1792
        %2708 = vmatpush1.bf16.msra.mxu0 %v1791
        %2709 = vmatprep.subr.bf16.mxu0 0
        %2710 = vmatpush2.bf16.msra.mxu0 0
        %2711 = vmatprep.subr.bf16.mxu0 0
        %2712 = vmatpush2.bf16.msra.mxu0 0
        %2713 = vmatprep.subr.bf16.mxu0 0
        %2714 = vmatpush2.bf16.msra.mxu0 0
        %2715 = vmatprep.subr.bf16.mxu0 0
        %2716 = vmatpush2.bf16.msra.mxu0 0
        %2717 = vmatprep.subr.bf16.mxu0 0
        %2718 = vmatpush2.bf16.msra.mxu0 0
        %2719 = vmatprep.subr.bf16.mxu0 0
        %2720 = vmatpush2.bf16.msra.mxu0 0
        %2721 = vmatprep.subr.bf16.mxu0 0
        %2722 = vmatpush2.bf16.msra.mxu0 0
        %2723 = vmatprep.subr.bf16.mxu0 0
        %2724 = vmatpush2.bf16.msra.mxu0 0
        %2725 = vmatprep.mubr.bf16.mxu0 0
        %2726 = vmatmul.mubr.bf16.gmra.mxu0 %v1827
        %v2727 = vpop.f32.mrf.mxu0
        %v2728 = vadd.f32 %v1620, %v2727
        %v2729 = vpop.f32.mrf.mxu0
        %v2730 = vadd.f32 %v1624, %v2729
        %v2731 = vpop.f32.mrf.mxu0
        %v2732 = vadd.f32 %v1620, %v2731
        %v2733 = vpop.f32.mrf.mxu0
        %v2734 = vadd.f32 %v1624, %v2733
        %2735 = vmatprep.mubr.bf16.mxu0 0
        %2736 = vmatmul.mubr.bf16.gmra.mxu0 %v1830
        %v2737 = vpop.f32.mrf.mxu0
        %v2738 = vadd.f32 %v1620, %v2737
        %v2739 = vpop.f32.mrf.mxu0
        %v2740 = vadd.f32 %v1624, %v2739
        %v2741 = vpop.f32.mrf.mxu0
        %v2742 = vadd.f32 %v1620, %v2741
        %v2743 = vpop.f32.mrf.mxu0
        %v2744 = vadd.f32 %v1624, %v2743
        %2745 = vmatprep.mubr.bf16.mxu0 0
        %2746 = vmatmul.mubr.bf16.gmra.mxu0 %v1833
        %v2747 = vpop.f32.mrf.mxu0
        %v2748 = vadd.f32 %v1620, %v2747
        %v2749 = vpop.f32.mrf.mxu0
        %v2750 = vadd.f32 %v1624, %v2749
        %v2751 = vpop.f32.mrf.mxu0
        %v2752 = vadd.f32 %v1620, %v2751
        %v2753 = vpop.f32.mrf.mxu0
        %v2754 = vadd.f32 %v1624, %v2753
        %2755 = vmatprep.mubr.bf16.mxu0 0
        %2756 = vmatmul.mubr.bf16.gmra.mxu0 %v1836
        %v2757 = vpop.f32.mrf.mxu0
        %v2758 = vadd.f32 %v1620, %v2757
        %v2759 = vpop.f32.mrf.mxu0
        %v2760 = vadd.f32 %v1624, %v2759
        %v2761 = vpop.f32.mrf.mxu0
        %v2762 = vadd.f32 %v1620, %v2761
        %v2763 = vpop.f32.mrf.mxu0
        %v2764 = vadd.f32 %v1624, %v2763
        %2765 = vmatprep.mubr.bf16.mxu0 0
        %2766 = vmatmul.mubr.bf16.gmra.mxu0 %v1839
        %v2767 = vpop.f32.mrf.mxu0
        %v2768 = vadd.f32 %v1620, %v2767
        %v2769 = vpop.f32.mrf.mxu0
        %v2770 = vadd.f32 %v1624, %v2769
        %v2771 = vpop.f32.mrf.mxu0
        %v2772 = vadd.f32 %v1620, %v2771
        %v2773 = vpop.f32.mrf.mxu0
        %v2774 = vadd.f32 %v1624, %v2773
        %2775 = vmatprep.mubr.bf16.mxu0 0
        %2776 = vmatmul.mubr.bf16.gmra.mxu0 %v1842
        %v2777 = vpop.f32.mrf.mxu0
        %v2778 = vadd.f32 %v1620, %v2777
        %v2779 = vpop.f32.mrf.mxu0
        %v2780 = vadd.f32 %v1624, %v2779
        %v2781 = vpop.f32.mrf.mxu0
        %v2782 = vadd.f32 %v1620, %v2781
        %v2783 = vpop.f32.mrf.mxu0
        %v2784 = vadd.f32 %v1624, %v2783
        %2785 = vmatprep.mubr.bf16.mxu0 0
        %2786 = vmatmul.mubr.bf16.gmra.mxu0 %v1845
        %v2787 = vpop.f32.mrf.mxu0
        %v2788 = vadd.f32 %v1620, %v2787
        %v2789 = vpop.f32.mrf.mxu0
        %v2790 = vadd.f32 %v1624, %v2789
        %v2791 = vpop.f32.mrf.mxu0
        %v2792 = vadd.f32 %v1620, %v2791
        %v2793 = vpop.f32.mrf.mxu0
        %v2794 = vadd.f32 %v1624, %v2793
        %2795 = vmatprep.mubr.bf16.mxu0 0
        %2796 = vmatmul.mubr.bf16.gmra.mxu0 %v1848
        %v2797 = vpop.f32.mrf.mxu0
        %v2798 = vadd.f32 %v1620, %v2797
        %v2799 = vpop.f32.mrf.mxu0
        %v2800 = vadd.f32 %v1624, %v2799
        %v2801 = vpop.f32.mrf.mxu0
        %v2802 = vadd.f32 %v1620, %v2801
        %v2803 = vpop.f32.mrf.mxu0
        %v2804 = vadd.f32 %v1624, %v2803
        %2805 = vdwg.mxu0
        %v2806 = vmax.f32 %v1937, 0.0
        %v2807 = vmax.f32 %v1939, 0.0
        %v2808 = vmax.f32 %v2050, 0.0
        %v2809 = vmax.f32 %v2052, 0.0
        %v2810 = vmax.f32 %v2163, 0.0
        %v2811 = vmax.f32 %v2165, 0.0
        %v2812 = vmax.f32 %v2276, 0.0
        %v2813 = vmax.f32 %v2278, 0.0
        %v2814 = vmax.f32 %v2389, 0.0
        %v2815 = vmax.f32 %v2391, 0.0
        %v2816 = vmax.f32 %v2502, 0.0
        %v2817 = vmax.f32 %v2504, 0.0
        %v2818 = vmax.f32 %v2615, 0.0
        %v2819 = vmax.f32 %v2617, 0.0
        %v2820 = vmax.f32 %v2728, 0.0
        %v2821 = vmax.f32 %v2730, 0.0
        %v2822 = vmax.f32 %v1941, 0.0
        %v2823 = vmax.f32 %v1943, 0.0
        %v2824 = vmax.f32 %v2054, 0.0
        %v2825 = vmax.f32 %v2056, 0.0
        %v2826 = vmax.f32 %v2167, 0.0
        %v2827 = vmax.f32 %v2169, 0.0
        %v2828 = vmax.f32 %v2280, 0.0
        %v2829 = vmax.f32 %v2282, 0.0
        %v2830 = vmax.f32 %v2393, 0.0
        %v2831 = vmax.f32 %v2395, 0.0
        %v2832 = vmax.f32 %v2506, 0.0
        %v2833 = vmax.f32 %v2508, 0.0
        %v2834 = vmax.f32 %v2619, 0.0
        %v2835 = vmax.f32 %v2621, 0.0
        %v2836 = vmax.f32 %v2732, 0.0
        %v2837 = vmax.f32 %v2734, 0.0
        %v2838 = vmax.f32 %v1947, 0.0
        %v2839 = vmax.f32 %v1949, 0.0
        %v2840 = vmax.f32 %v2060, 0.0
        %v2841 = vmax.f32 %v2062, 0.0
        %v2842 = vmax.f32 %v2173, 0.0
        %v2843 = vmax.f32 %v2175, 0.0
        %v2844 = vmax.f32 %v2286, 0.0
        %v2845 = vmax.f32 %v2288, 0.0
        %v2846 = vmax.f32 %v2399, 0.0
        %v2847 = vmax.f32 %v2401, 0.0
        %v2848 = vmax.f32 %v2512, 0.0
        %v2849 = vmax.f32 %v2514, 0.0
        %v2850 = vmax.f32 %v2625, 0.0
        %v2851 = vmax.f32 %v2627, 0.0
        %v2852 = vmax.f32 %v2738, 0.0
        %v2853 = vmax.f32 %v2740, 0.0
        %v2854 = vmax.f32 %v1951, 0.0
        %v2855 = vmax.f32 %v1953, 0.0
        %v2856 = vmax.f32 %v2064, 0.0
        %v2857 = vmax.f32 %v2066, 0.0
        %v2858 = vmax.f32 %v2177, 0.0
        %v2859 = vmax.f32 %v2179, 0.0
        %v2860 = vmax.f32 %v2290, 0.0
        %v2861 = vmax.f32 %v2292, 0.0
        %v2862 = vmax.f32 %v2403, 0.0
        %v2863 = vmax.f32 %v2405, 0.0
        %v2864 = vmax.f32 %v2516, 0.0
        %v2865 = vmax.f32 %v2518, 0.0
        %v2866 = vmax.f32 %v2629, 0.0
        %v2867 = vmax.f32 %v2631, 0.0
        %v2868 = vmax.f32 %v2742, 0.0
        %v2869 = vmax.f32 %v2744, 0.0
        %v2870 = vmax.f32 %v1957, 0.0
        %v2871 = vmax.f32 %v1959, 0.0
        %v2872 = vmax.f32 %v2070, 0.0
        %v2873 = vmax.f32 %v2072, 0.0
        %v2874 = vmax.f32 %v2183, 0.0
        %v2875 = vmax.f32 %v2185, 0.0
        %v2876 = vmax.f32 %v2296, 0.0
        %v2877 = vmax.f32 %v2298, 0.0
        %v2878 = vmax.f32 %v2409, 0.0
        %v2879 = vmax.f32 %v2411, 0.0
        %v2880 = vmax.f32 %v2522, 0.0
        %v2881 = vmax.f32 %v2524, 0.0
        %v2882 = vmax.f32 %v2635, 0.0
        %v2883 = vmax.f32 %v2637, 0.0
        %v2884 = vmax.f32 %v2748, 0.0
        %v2885 = vmax.f32 %v2750, 0.0
        %v2886 = vmax.f32 %v1961, 0.0
        %v2887 = vmax.f32 %v1963, 0.0
        %v2888 = vmax.f32 %v2074, 0.0
        %v2889 = vmax.f32 %v2076, 0.0
        %v2890 = vmax.f32 %v2187, 0.0
        %v2891 = vmax.f32 %v2189, 0.0
        %v2892 = vmax.f32 %v2300, 0.0
        %v2893 = vmax.f32 %v2302, 0.0
        %v2894 = vmax.f32 %v2413, 0.0
        %v2895 = vmax.f32 %v2415, 0.0
        %v2896 = vmax.f32 %v2526, 0.0
        %v2897 = vmax.f32 %v2528, 0.0
        %v2898 = vmax.f32 %v2639, 0.0
        %v2899 = vmax.f32 %v2641, 0.0
        %v2900 = vmax.f32 %v2752, 0.0
        %v2901 = vmax.f32 %v2754, 0.0
        %v2902 = vmax.f32 %v1967, 0.0
        %v2903 = vmax.f32 %v1969, 0.0
        %v2904 = vmax.f32 %v2080, 0.0
        %v2905 = vmax.f32 %v2082, 0.0
        %v2906 = vmax.f32 %v2193, 0.0
        %v2907 = vmax.f32 %v2195, 0.0
        %v2908 = vmax.f32 %v2306, 0.0
        %v2909 = vmax.f32 %v2308, 0.0
        %v2910 = vmax.f32 %v2419, 0.0
        %v2911 = vmax.f32 %v2421, 0.0
        %v2912 = vmax.f32 %v2532, 0.0
        %v2913 = vmax.f32 %v2534, 0.0
        %v2914 = vmax.f32 %v2645, 0.0
        %v2915 = vmax.f32 %v2647, 0.0
        %v2916 = vmax.f32 %v2758, 0.0
        %v2917 = vmax.f32 %v2760, 0.0
        %v2918 = vmax.f32 %v1971, 0.0
        %v2919 = vmax.f32 %v1973, 0.0
        %v2920 = vmax.f32 %v2084, 0.0
        %v2921 = vmax.f32 %v2086, 0.0
        %v2922 = vmax.f32 %v2197, 0.0
        %v2923 = vmax.f32 %v2199, 0.0
        %v2924 = vmax.f32 %v2310, 0.0
        %v2925 = vmax.f32 %v2312, 0.0
        %v2926 = vmax.f32 %v2423, 0.0
        %v2927 = vmax.f32 %v2425, 0.0
        %v2928 = vmax.f32 %v2536, 0.0
        %v2929 = vmax.f32 %v2538, 0.0
        %v2930 = vmax.f32 %v2649, 0.0
        %v2931 = vmax.f32 %v2651, 0.0
        %v2932 = vmax.f32 %v2762, 0.0
        %v2933 = vmax.f32 %v2764, 0.0
        %v2934 = vmax.f32 %v1977, 0.0
        %v2935 = vmax.f32 %v1979, 0.0
        %v2936 = vmax.f32 %v2090, 0.0
        %v2937 = vmax.f32 %v2092, 0.0
        %v2938 = vmax.f32 %v2203, 0.0
        %v2939 = vmax.f32 %v2205, 0.0
        %v2940 = vmax.f32 %v2316, 0.0
        %v2941 = vmax.f32 %v2318, 0.0
        %v2942 = vmax.f32 %v2429, 0.0
        %v2943 = vmax.f32 %v2431, 0.0
        %v2944 = vmax.f32 %v2542, 0.0
        %v2945 = vmax.f32 %v2544, 0.0
        %v2946 = vmax.f32 %v2655, 0.0
        %v2947 = vmax.f32 %v2657, 0.0
        %v2948 = vmax.f32 %v2768, 0.0
        %v2949 = vmax.f32 %v2770, 0.0
        %v2950 = vmax.f32 %v1981, 0.0
        %v2951 = vmax.f32 %v1983, 0.0
        %v2952 = vmax.f32 %v2094, 0.0
        %v2953 = vmax.f32 %v2096, 0.0
        %v2954 = vmax.f32 %v2207, 0.0
        %v2955 = vmax.f32 %v2209, 0.0
        %v2956 = vmax.f32 %v2320, 0.0
        %v2957 = vmax.f32 %v2322, 0.0
        %v2958 = vmax.f32 %v2433, 0.0
        %v2959 = vmax.f32 %v2435, 0.0
        %v2960 = vmax.f32 %v2546, 0.0
        %v2961 = vmax.f32 %v2548, 0.0
        %v2962 = vmax.f32 %v2659, 0.0
        %v2963 = vmax.f32 %v2661, 0.0
        %v2964 = vmax.f32 %v2772, 0.0
        %v2965 = vmax.f32 %v2774, 0.0
        %v2966 = vmax.f32 %v1987, 0.0
        %v2967 = vmax.f32 %v1989, 0.0
        %v2968 = vmax.f32 %v2100, 0.0
        %v2969 = vmax.f32 %v2102, 0.0
        %v2970 = vmax.f32 %v2213, 0.0
        %v2971 = vmax.f32 %v2215, 0.0
        %v2972 = vmax.f32 %v2326, 0.0
        %v2973 = vmax.f32 %v2328, 0.0
        %v2974 = vmax.f32 %v2439, 0.0
        %v2975 = vmax.f32 %v2441, 0.0
        %v2976 = vmax.f32 %v2552, 0.0
        %v2977 = vmax.f32 %v2554, 0.0
        %v2978 = vmax.f32 %v2665, 0.0
        %v2979 = vmax.f32 %v2667, 0.0
        %v2980 = vmax.f32 %v2778, 0.0
        %v2981 = vmax.f32 %v2780, 0.0
        %v2982 = vmax.f32 %v1991, 0.0
        %v2983 = vmax.f32 %v1993, 0.0
        %v2984 = vmax.f32 %v2104, 0.0
        %v2985 = vmax.f32 %v2106, 0.0
        %v2986 = vmax.f32 %v2217, 0.0
        %v2987 = vmax.f32 %v2219, 0.0
        %v2988 = vmax.f32 %v2330, 0.0
        %v2989 = vmax.f32 %v2332, 0.0
        %v2990 = vmax.f32 %v2443, 0.0
        %v2991 = vmax.f32 %v2445, 0.0
        %v2992 = vmax.f32 %v2556, 0.0
        %v2993 = vmax.f32 %v2558, 0.0
        %v2994 = vmax.f32 %v2669, 0.0
        %v2995 = vmax.f32 %v2671, 0.0
        %v2996 = vmax.f32 %v2782, 0.0
        %v2997 = vmax.f32 %v2784, 0.0
        %v2998 = vmax.f32 %v1997, 0.0
        %v2999 = vmax.f32 %v1999, 0.0
        %v3000 = vmax.f32 %v2110, 0.0
        %v3001 = vmax.f32 %v2112, 0.0
        %v3002 = vmax.f32 %v2223, 0.0
        %v3003 = vmax.f32 %v2225, 0.0
        %v3004 = vmax.f32 %v2336, 0.0
        %v3005 = vmax.f32 %v2338, 0.0
        %v3006 = vmax.f32 %v2449, 0.0
        %v3007 = vmax.f32 %v2451, 0.0
        %v3008 = vmax.f32 %v2562, 0.0
        %v3009 = vmax.f32 %v2564, 0.0
        %v3010 = vmax.f32 %v2675, 0.0
        %v3011 = vmax.f32 %v2677, 0.0
        %v3012 = vmax.f32 %v2788, 0.0
        %v3013 = vmax.f32 %v2790, 0.0
        %v3014 = vmax.f32 %v2001, 0.0
        %v3015 = vmax.f32 %v2003, 0.0
        %v3016 = vmax.f32 %v2114, 0.0
        %v3017 = vmax.f32 %v2116, 0.0
        %v3018 = vmax.f32 %v2227, 0.0
        %v3019 = vmax.f32 %v2229, 0.0
        %v3020 = vmax.f32 %v2340, 0.0
        %v3021 = vmax.f32 %v2342, 0.0
        %v3022 = vmax.f32 %v2453, 0.0
        %v3023 = vmax.f32 %v2455, 0.0
        %v3024 = vmax.f32 %v2566, 0.0
        %v3025 = vmax.f32 %v2568, 0.0
        %v3026 = vmax.f32 %v2679, 0.0
        %v3027 = vmax.f32 %v2681, 0.0
        %v3028 = vmax.f32 %v2792, 0.0
        %v3029 = vmax.f32 %v2794, 0.0
        %v3030 = vmax.f32 %v2007, 0.0
        %v3031 = vmax.f32 %v2009, 0.0
        %v3032 = vmax.f32 %v2120, 0.0
        %v3033 = vmax.f32 %v2122, 0.0
        %v3034 = vmax.f32 %v2233, 0.0
        %v3035 = vmax.f32 %v2235, 0.0
        %v3036 = vmax.f32 %v2346, 0.0
        %v3037 = vmax.f32 %v2348, 0.0
        %v3038 = vmax.f32 %v2459, 0.0
        %v3039 = vmax.f32 %v2461, 0.0
        %v3040 = vmax.f32 %v2572, 0.0
        %v3041 = vmax.f32 %v2574, 0.0
        %v3042 = vmax.f32 %v2685, 0.0
        %v3043 = vmax.f32 %v2687, 0.0
        %v3044 = vmax.f32 %v2798, 0.0
        %v3045 = vmax.f32 %v2800, 0.0
        %v3046 = vmax.f32 %v2011, 0.0
        %v3047 = vmax.f32 %v2013, 0.0
        %v3048 = vmax.f32 %v2124, 0.0
        %v3049 = vmax.f32 %v2126, 0.0
        %v3050 = vmax.f32 %v2237, 0.0
        %v3051 = vmax.f32 %v2239, 0.0
        %v3052 = vmax.f32 %v2350, 0.0
        %v3053 = vmax.f32 %v2352, 0.0
        %v3054 = vmax.f32 %v2463, 0.0
        %v3055 = vmax.f32 %v2465, 0.0
        %v3056 = vmax.f32 %v2576, 0.0
        %v3057 = vmax.f32 %v2578, 0.0
        %v3058 = vmax.f32 %v2689, 0.0
        %v3059 = vmax.f32 %v2691, 0.0
        %v3060 = vmax.f32 %v2802, 0.0
        %v3061 = vmax.f32 %v2804, 0.0
        %v3062 = vld [vmem:[#allocation2] ss:$2 sm:$0xff]
        %s3063 = scalar_lea.vmem [#allocation2], 16
        %v3064 = vld [vmem:[%s3063] ss:$2 sm:$0xff]
        %v3065 = vadd.f32 %v2806, %v2822
        %v3066 = vadd.f32 %v3065, %v2838
        %v3067 = vadd.f32 %v3066, %v2854
        %v3068 = vadd.f32 %v3067, %v2870
        %v3069 = vadd.f32 %v3068, %v2886
        %v3070 = vadd.f32 %v3069, %v2902
        %v3071 = vadd.f32 %v3070, %v2918
        %v3072 = vadd.f32 %v3071, %v2934
        %v3073 = vadd.f32 %v3072, %v2950
        %v3074 = vadd.f32 %v3073, %v2966
        %v3075 = vadd.f32 %v3074, %v2982
        %v3076 = vadd.f32 %v3075, %v2998
        %v3077 = vadd.f32 %v3076, %v3014
        %v3078 = vadd.f32 %v3077, %v3030
        %v3079 = vadd.f32 %v3078, %v3046
        %v3080 = vrot.slane %v3079, 4
        %v3081 = vadd.f32 %v3079, %v3080
        %v3082 = vrot.slane %v3081, 2
        %v3083 = vadd.f32 %v3081, %v3082
        %v3084 = vrot.slane %v3083, 1
        %v3085 = vadd.f32 %v3083, %v3084
        %v3086 = vadd.f32 %v2807, %v2823
        %v3087 = vadd.f32 %v3086, %v2839
        %v3088 = vadd.f32 %v3087, %v2855
        %v3089 = vadd.f32 %v3088, %v2871
        %v3090 = vadd.f32 %v3089, %v2887
        %v3091 = vadd.f32 %v3090, %v2903
        %v3092 = vadd.f32 %v3091, %v2919
        %v3093 = vadd.f32 %v3092, %v2935
        %v3094 = vadd.f32 %v3093, %v2951
        %v3095 = vadd.f32 %v3094, %v2967
        %v3096 = vadd.f32 %v3095, %v2983
        %v3097 = vadd.f32 %v3096, %v2999
        %v3098 = vadd.f32 %v3097, %v3015
        %v3099 = vadd.f32 %v3098, %v3031
        %v3100 = vadd.f32 %v3099, %v3047
        %v3101 = vrot.slane %v3100, 4
        %v3102 = vadd.f32 %v3100, %v3101
        %v3103 = vrot.slane %v3102, 2
        %v3104 = vadd.f32 %v3102, %v3103
        %v3105 = vrot.slane %v3104, 1
        %v3106 = vadd.f32 %v3104, %v3105
        %v3107 = vadd.f32 %v2808, %v2824
        %v3108 = vadd.f32 %v3107, %v2840
        %v3109 = vadd.f32 %v3108, %v2856
        %v3110 = vadd.f32 %v3109, %v2872
        %v3111 = vadd.f32 %v3110, %v2888
        %v3112 = vadd.f32 %v3111, %v2904
        %v3113 = vadd.f32 %v3112, %v2920
        %v3114 = vadd.f32 %v3113, %v2936
        %v3115 = vadd.f32 %v3114, %v2952
        %v3116 = vadd.f32 %v3115, %v2968
        %v3117 = vadd.f32 %v3116, %v2984
        %v3118 = vadd.f32 %v3117, %v3000
        %v3119 = vadd.f32 %v3118, %v3016
        %v3120 = vadd.f32 %v3119, %v3032
        %v3121 = vadd.f32 %v3120, %v3048
        %v3122 = vrot.slane %v3121, 4
        %v3123 = vadd.f32 %v3121, %v3122
        %v3124 = vrot.slane %v3123, 2
        %v3125 = vadd.f32 %v3123, %v3124
        %v3126 = vrot.slane %v3125, 1
        %v3127 = vadd.f32 %v3125, %v3126
        %v3128 = vadd.f32 %v2809, %v2825
        %v3129 = vadd.f32 %v3128, %v2841
        %v3130 = vadd.f32 %v3129, %v2857
        %v3131 = vadd.f32 %v3130, %v2873
        %v3132 = vadd.f32 %v3131, %v2889
        %v3133 = vadd.f32 %v3132, %v2905
        %v3134 = vadd.f32 %v3133, %v2921
        %v3135 = vadd.f32 %v3134, %v2937
        %v3136 = vadd.f32 %v3135, %v2953
        %v3137 = vadd.f32 %v3136, %v2969
        %v3138 = vadd.f32 %v3137, %v2985
        %v3139 = vadd.f32 %v3138, %v3001
        %v3140 = vadd.f32 %v3139, %v3017
        %v3141 = vadd.f32 %v3140, %v3033
        %v3142 = vadd.f32 %v3141, %v3049
        %v3143 = vrot.slane %v3142, 4
        %v3144 = vadd.f32 %v3142, %v3143
        %v3145 = vrot.slane %v3144, 2
        %v3146 = vadd.f32 %v3144, %v3145
        %v3147 = vrot.slane %v3146, 1
        %v3148 = vadd.f32 %v3146, %v3147
        %v3149 = vadd.f32 %v2810, %v2826
        %v3150 = vadd.f32 %v3149, %v2842
        %v3151 = vadd.f32 %v3150, %v2858
        %v3152 = vadd.f32 %v3151, %v2874
        %v3153 = vadd.f32 %v3152, %v2890
        %v3154 = vadd.f32 %v3153, %v2906
        %v3155 = vadd.f32 %v3154, %v2922
        %v3156 = vadd.f32 %v3155, %v2938
        %v3157 = vadd.f32 %v3156, %v2954
        %v3158 = vadd.f32 %v3157, %v2970
        %v3159 = vadd.f32 %v3158, %v2986
        %v3160 = vadd.f32 %v3159, %v3002
        %v3161 = vadd.f32 %v3160, %v3018
        %v3162 = vadd.f32 %v3161, %v3034
        %v3163 = vadd.f32 %v3162, %v3050
        %v3164 = vrot.slane %v3163, 4
        %v3165 = vadd.f32 %v3163, %v3164
        %v3166 = vrot.slane %v3165, 2
        %v3167 = vadd.f32 %v3165, %v3166
        %v3168 = vrot.slane %v3167, 1
        %v3169 = vadd.f32 %v3167, %v3168
        %v3170 = vadd.f32 %v2811, %v2827
        %v3171 = vadd.f32 %v3170, %v2843
        %v3172 = vadd.f32 %v3171, %v2859
        %v3173 = vadd.f32 %v3172, %v2875
        %v3174 = vadd.f32 %v3173, %v2891
        %v3175 = vadd.f32 %v3174, %v2907
        %v3176 = vadd.f32 %v3175, %v2923
        %v3177 = vadd.f32 %v3176, %v2939
        %v3178 = vadd.f32 %v3177, %v2955
        %v3179 = vadd.f32 %v3178, %v2971
        %v3180 = vadd.f32 %v3179, %v2987
        %v3181 = vadd.f32 %v3180, %v3003
        %v3182 = vadd.f32 %v3181, %v3019
        %v3183 = vadd.f32 %v3182, %v3035
        %v3184 = vadd.f32 %v3183, %v3051
        %v3185 = vrot.slane %v3184, 4
        %v3186 = vadd.f32 %v3184, %v3185
        %v3187 = vrot.slane %v3186, 2
        %v3188 = vadd.f32 %v3186, %v3187
        %v3189 = vrot.slane %v3188, 1
        %v3190 = vadd.f32 %v3188, %v3189
        %v3191 = vadd.f32 %v2812, %v2828
        %v3192 = vadd.f32 %v3191, %v2844
        %v3193 = vadd.f32 %v3192, %v2860
        %v3194 = vadd.f32 %v3193, %v2876
        %v3195 = vadd.f32 %v3194, %v2892
        %v3196 = vadd.f32 %v3195, %v2908
        %v3197 = vadd.f32 %v3196, %v2924
        %v3198 = vadd.f32 %v3197, %v2940
        %v3199 = vadd.f32 %v3198, %v2956
        %v3200 = vadd.f32 %v3199, %v2972
        %v3201 = vadd.f32 %v3200, %v2988
        %v3202 = vadd.f32 %v3201, %v3004
        %v3203 = vadd.f32 %v3202, %v3020
        %v3204 = vadd.f32 %v3203, %v3036
        %v3205 = vadd.f32 %v3204, %v3052
        %v3206 = vrot.slane %v3205, 4
        %v3207 = vadd.f32 %v3205, %v3206
        %v3208 = vrot.slane %v3207, 2
        %v3209 = vadd.f32 %v3207, %v3208
        %v3210 = vrot.slane %v3209, 1
        %v3211 = vadd.f32 %v3209, %v3210
        %v3212 = vadd.f32 %v2813, %v2829
        %v3213 = vadd.f32 %v3212, %v2845
        %v3214 = vadd.f32 %v3213, %v2861
        %v3215 = vadd.f32 %v3214, %v2877
        %v3216 = vadd.f32 %v3215, %v2893
        %v3217 = vadd.f32 %v3216, %v2909
        %v3218 = vadd.f32 %v3217, %v2925
        %v3219 = vadd.f32 %v3218, %v2941
        %v3220 = vadd.f32 %v3219, %v2957
        %v3221 = vadd.f32 %v3220, %v2973
        %v3222 = vadd.f32 %v3221, %v2989
        %v3223 = vadd.f32 %v3222, %v3005
        %v3224 = vadd.f32 %v3223, %v3021
        %v3225 = vadd.f32 %v3224, %v3037
        %v3226 = vadd.f32 %v3225, %v3053
        %v3227 = vrot.slane %v3226, 4
        %v3228 = vadd.f32 %v3226, %v3227
        %v3229 = vrot.slane %v3228, 2
        %v3230 = vadd.f32 %v3228, %v3229
        %v3231 = vrot.slane %v3230, 1
        %v3232 = vadd.f32 %v3230, %v3231
        %v3233 = vadd.f32 %v2814, %v2830
        %v3234 = vadd.f32 %v3233, %v2846
        %v3235 = vadd.f32 %v3234, %v2862
        %v3236 = vadd.f32 %v3235, %v2878
        %v3237 = vadd.f32 %v3236, %v2894
        %v3238 = vadd.f32 %v3237, %v2910
        %v3239 = vadd.f32 %v3238, %v2926
        %v3240 = vadd.f32 %v3239, %v2942
        %v3241 = vadd.f32 %v3240, %v2958
        %v3242 = vadd.f32 %v3241, %v2974
        %v3243 = vadd.f32 %v3242, %v2990
        %v3244 = vadd.f32 %v3243, %v3006
        %v3245 = vadd.f32 %v3244, %v3022
        %v3246 = vadd.f32 %v3245, %v3038
        %v3247 = vadd.f32 %v3246, %v3054
        %v3248 = vrot.slane %v3247, 4
        %v3249 = vadd.f32 %v3247, %v3248
        %v3250 = vrot.slane %v3249, 2
        %v3251 = vadd.f32 %v3249, %v3250
        %v3252 = vrot.slane %v3251, 1
        %v3253 = vadd.f32 %v3251, %v3252
        %v3254 = vadd.f32 %v2815, %v2831
        %v3255 = vadd.f32 %v3254, %v2847
        %v3256 = vadd.f32 %v3255, %v2863
        %v3257 = vadd.f32 %v3256, %v2879
        %v3258 = vadd.f32 %v3257, %v2895
        %v3259 = vadd.f32 %v3258, %v2911
        %v3260 = vadd.f32 %v3259, %v2927
        %v3261 = vadd.f32 %v3260, %v2943
        %v3262 = vadd.f32 %v3261, %v2959
        %v3263 = vadd.f32 %v3262, %v2975
        %v3264 = vadd.f32 %v3263, %v2991
        %v3265 = vadd.f32 %v3264, %v3007
        %v3266 = vadd.f32 %v3265, %v3023
        %v3267 = vadd.f32 %v3266, %v3039
        %v3268 = vadd.f32 %v3267, %v3055
        %v3269 = vrot.slane %v3268, 4
        %v3270 = vadd.f32 %v3268, %v3269
        %v3271 = vrot.slane %v3270, 2
        %v3272 = vadd.f32 %v3270, %v3271
        %v3273 = vrot.slane %v3272, 1
        %v3274 = vadd.f32 %v3272, %v3273
        %v3275 = vadd.f32 %v2816, %v2832
        %v3276 = vadd.f32 %v3275, %v2848
        %v3277 = vadd.f32 %v3276, %v2864
        %v3278 = vadd.f32 %v3277, %v2880
        %v3279 = vadd.f32 %v3278, %v2896
        %v3280 = vadd.f32 %v3279, %v2912
        %v3281 = vadd.f32 %v3280, %v2928
        %v3282 = vadd.f32 %v3281, %v2944
        %v3283 = vadd.f32 %v3282, %v2960
        %v3284 = vadd.f32 %v3283, %v2976
        %v3285 = vadd.f32 %v3284, %v2992
        %v3286 = vadd.f32 %v3285, %v3008
        %v3287 = vadd.f32 %v3286, %v3024
        %v3288 = vadd.f32 %v3287, %v3040
        %v3289 = vadd.f32 %v3288, %v3056
        %v3290 = vrot.slane %v3289, 4
        %v3291 = vadd.f32 %v3289, %v3290
        %v3292 = vrot.slane %v3291, 2
        %v3293 = vadd.f32 %v3291, %v3292
        %v3294 = vrot.slane %v3293, 1
        %v3295 = vadd.f32 %v3293, %v3294
        %v3296 = vadd.f32 %v2817, %v2833
        %v3297 = vadd.f32 %v3296, %v2849
        %v3298 = vadd.f32 %v3297, %v2865
        %v3299 = vadd.f32 %v3298, %v2881
        %v3300 = vadd.f32 %v3299, %v2897
        %v3301 = vadd.f32 %v3300, %v2913
        %v3302 = vadd.f32 %v3301, %v2929
        %v3303 = vadd.f32 %v3302, %v2945
        %v3304 = vadd.f32 %v3303, %v2961
        %v3305 = vadd.f32 %v3304, %v2977
        %v3306 = vadd.f32 %v3305, %v2993
        %v3307 = vadd.f32 %v3306, %v3009
        %v3308 = vadd.f32 %v3307, %v3025
        %v3309 = vadd.f32 %v3308, %v3041
        %v3310 = vadd.f32 %v3309, %v3057
        %v3311 = vrot.slane %v3310, 4
        %v3312 = vadd.f32 %v3310, %v3311
        %v3313 = vrot.slane %v3312, 2
        %v3314 = vadd.f32 %v3312, %v3313
        %v3315 = vrot.slane %v3314, 1
        %v3316 = vadd.f32 %v3314, %v3315
        %v3317 = vadd.f32 %v2818, %v2834
        %v3318 = vadd.f32 %v3317, %v2850
        %v3319 = vadd.f32 %v3318, %v2866
        %v3320 = vadd.f32 %v3319, %v2882
        %v3321 = vadd.f32 %v3320, %v2898
        %v3322 = vadd.f32 %v3321, %v2914
        %v3323 = vadd.f32 %v3322, %v2930
        %v3324 = vadd.f32 %v3323, %v2946
        %v3325 = vadd.f32 %v3324, %v2962
        %v3326 = vadd.f32 %v3325, %v2978
        %v3327 = vadd.f32 %v3326, %v2994
        %v3328 = vadd.f32 %v3327, %v3010
        %v3329 = vadd.f32 %v3328, %v3026
        %v3330 = vadd.f32 %v3329, %v3042
        %v3331 = vadd.f32 %v3330, %v3058
        %v3332 = vrot.slane %v3331, 4
        %v3333 = vadd.f32 %v3331, %v3332
        %v3334 = vrot.slane %v3333, 2
        %v3335 = vadd.f32 %v3333, %v3334
        %v3336 = vrot.slane %v3335, 1
        %v3337 = vadd.f32 %v3335, %v3336
        %v3338 = vadd.f32 %v2819, %v2835
        %v3339 = vadd.f32 %v3338, %v2851
        %v3340 = vadd.f32 %v3339, %v2867
        %v3341 = vadd.f32 %v3340, %v2883
        %v3342 = vadd.f32 %v3341, %v2899
        %v3343 = vadd.f32 %v3342, %v2915
        %v3344 = vadd.f32 %v3343, %v2931
        %v3345 = vadd.f32 %v3344, %v2947
        %v3346 = vadd.f32 %v3345, %v2963
        %v3347 = vadd.f32 %v3346, %v2979
        %v3348 = vadd.f32 %v3347, %v2995
        %v3349 = vadd.f32 %v3348, %v3011
        %v3350 = vadd.f32 %v3349, %v3027
        %v3351 = vadd.f32 %v3350, %v3043
        %v3352 = vadd.f32 %v3351, %v3059
        %v3353 = vrot.slane %v3352, 4
        %v3354 = vadd.f32 %v3352, %v3353
        %v3355 = vrot.slane %v3354, 2
        %v3356 = vadd.f32 %v3354, %v3355
        %v3357 = vrot.slane %v3356, 1
        %v3358 = vadd.f32 %v3356, %v3357
        %v3359 = vadd.f32 %v2820, %v2836
        %v3360 = vadd.f32 %v3359, %v2852
        %v3361 = vadd.f32 %v3360, %v2868
        %v3362 = vadd.f32 %v3361, %v2884
        %v3363 = vadd.f32 %v3362, %v2900
        %v3364 = vadd.f32 %v3363, %v2916
        %v3365 = vadd.f32 %v3364, %v2932
        %v3366 = vadd.f32 %v3365, %v2948
        %v3367 = vadd.f32 %v3366, %v2964
        %v3368 = vadd.f32 %v3367, %v2980
        %v3369 = vadd.f32 %v3368, %v2996
        %v3370 = vadd.f32 %v3369, %v3012
        %v3371 = vadd.f32 %v3370, %v3028
        %v3372 = vadd.f32 %v3371, %v3044
        %v3373 = vadd.f32 %v3372, %v3060
        %v3374 = vrot.slane %v3373, 4
        %v3375 = vadd.f32 %v3373, %v3374
        %v3376 = vrot.slane %v3375, 2
        %v3377 = vadd.f32 %v3375, %v3376
        %v3378 = vrot.slane %v3377, 1
        %v3379 = vadd.f32 %v3377, %v3378
        %v3380 = vadd.f32 %v2821, %v2837
        %v3381 = vadd.f32 %v3380, %v2853
        %v3382 = vadd.f32 %v3381, %v2869
        %v3383 = vadd.f32 %v3382, %v2885
        %v3384 = vadd.f32 %v3383, %v2901
        %v3385 = vadd.f32 %v3384, %v2917
        %v3386 = vadd.f32 %v3385, %v2933
        %v3387 = vadd.f32 %v3386, %v2949
        %v3388 = vadd.f32 %v3387, %v2965
        %v3389 = vadd.f32 %v3388, %v2981
        %v3390 = vadd.f32 %v3389, %v2997
        %v3391 = vadd.f32 %v3390, %v3013
        %v3392 = vadd.f32 %v3391, %v3029
        %v3393 = vadd.f32 %v3392, %v3045
        %v3394 = vadd.f32 %v3393, %v3061
        %v3395 = vrot.slane %v3394, 4
        %v3396 = vadd.f32 %v3394, %v3395
        %v3397 = vrot.slane %v3396, 2
        %v3398 = vadd.f32 %v3396, %v3397
        %v3399 = vrot.slane %v3398, 1
        %v3400 = vadd.f32 %v3398, %v3399
        %v3417 = vcombine.low %v3085, %v3106
        %v3418 = vcombine.low %v3127, %v3148
        %v3419 = vcombine.low %v3169, %v3190
        %v3420 = vcombine.low %v3211, %v3232
        %v3422 = vunpack.c.l.s4 1966171168
        %v3423 = vunpack.c.0.s8 %v3422
        %v3424 = vlaneseq
        %v3425 = vshrl.u32 %v3424, 7
        %v3426 = vsub.s32 %v3423, %v3425
        %v3427 = vrot.slane %v3417, %v3426
        %v3429 = vunpack.c.l.s4 1966171168
        %v3430 = vunpack.c.0.s8 %v3429
        %v3431 = vlaneseq
        %v3432 = vshrl.u32 %v3431, 7
        %v3433 = vsub.s32 %v3430, %v3432
        %v3434 = vrot.slane %v3418, %v3433
        %v3436 = vunpack.c.l.s4 1966171168
        %v3437 = vunpack.c.0.s8 %v3436
        %v3438 = vlaneseq
        %v3439 = vshrl.u32 %v3438, 7
        %v3440 = vsub.s32 %v3437, %v3439
        %v3441 = vrot.slane %v3419, %v3440
        %v3443 = vunpack.c.l.s4 1966171168
        %v3444 = vunpack.c.0.s8 %v3443
        %v3445 = vlaneseq
        %v3446 = vshrl.u32 %v3445, 7
        %v3447 = vsub.s32 %v3444, %v3446
        %v3448 = vrot.slane %v3420, %v3447
        %v3449 = vcombine.low %v3427, %v3434
        %v3450 = vcombine.low %v3441, %v3448
        %v3452 = vunpack.c.l.s4 1966171168
        %v3453 = vunpack.c.0.s8 %v3452
        %v3454 = vlaneseq
        %v3455 = vshrl.u32 %v3454, 7
        %v3456 = vsub.s32 %v3453, %v3455
        %v3457 = vrot.slane %v3449, %v3456
        %v3459 = vunpack.c.l.s4 1966171168
        %v3460 = vunpack.c.0.s8 %v3459
        %v3461 = vlaneseq
        %v3462 = vshrl.u32 %v3461, 7
        %v3463 = vsub.s32 %v3460, %v3462
        %v3464 = vrot.slane %v3450, %v3463
        %v3465 = vcombine.low %v3457, %v3464
        %v3466 = vcombine.low %v3253, %v3274
        %v3467 = vcombine.low %v3295, %v3316
        %v3468 = vcombine.low %v3337, %v3358
        %v3469 = vcombine.low %v3379, %v3400
        %v3471 = vunpack.c.l.s4 1966171168
        %v3472 = vunpack.c.0.s8 %v3471
        %v3473 = vlaneseq
        %v3474 = vshrl.u32 %v3473, 7
        %v3475 = vsub.s32 %v3472, %v3474
        %v3476 = vrot.slane %v3466, %v3475
        %v3478 = vunpack.c.l.s4 1966171168
        %v3479 = vunpack.c.0.s8 %v3478
        %v3480 = vlaneseq
        %v3481 = vshrl.u32 %v3480, 7
        %v3482 = vsub.s32 %v3479, %v3481
        %v3483 = vrot.slane %v3467, %v3482
        %v3485 = vunpack.c.l.s4 1966171168
        %v3486 = vunpack.c.0.s8 %v3485
        %v3487 = vlaneseq
        %v3488 = vshrl.u32 %v3487, 7
        %v3489 = vsub.s32 %v3486, %v3488
        %v3490 = vrot.slane %v3468, %v3489
        %v3492 = vunpack.c.l.s4 1966171168
        %v3493 = vunpack.c.0.s8 %v3492
        %v3494 = vlaneseq
        %v3495 = vshrl.u32 %v3494, 7
        %v3496 = vsub.s32 %v3493, %v3495
        %v3497 = vrot.slane %v3469, %v3496
        %v3498 = vcombine.low %v3476, %v3483
        %v3499 = vcombine.low %v3490, %v3497
        %v3501 = vunpack.c.l.s4 1966171168
        %v3502 = vunpack.c.0.s8 %v3501
        %v3503 = vlaneseq
        %v3504 = vshrl.u32 %v3503, 7
        %v3505 = vsub.s32 %v3502, %v3504
        %v3506 = vrot.slane %v3498, %v3505
        %v3508 = vunpack.c.l.s4 1966171168
        %v3509 = vunpack.c.0.s8 %v3508
        %v3510 = vlaneseq
        %v3511 = vshrl.u32 %v3510, 7
        %v3512 = vsub.s32 %v3509, %v3511
        %v3513 = vrot.slane %v3499, %v3512
        %v3514 = vcombine.low %v3506, %v3513
        %v3517 = vadd.f32 %v3062, %v3465
        %v3518 = vadd.f32 %v3064, %v3514
        %3519 = vst [vmem:[#allocation2] ss:$2 sm:$0xff] %v3517
        %3520 = vst [vmem:[%s3063] ss:$2 sm:$0xff] %v3518
        %s3521 = scalar_lea.vmem %s410, 64 [#allocation5]
        %v3522 = vld [vmem:[%s3521] sm:$0xf]
        %v3523 = vld [vmem:[%s3521 + $0x4] sm:$0xf]
        %v3524 = vld [vmem:[%s3521 + $0x8] sm:$0xf]
        %v3525 = vld [vmem:[%s3521 + $0xc] sm:$0xf]
        %v3526 = vld [vmem:[%s3521 + $0x10] sm:$0xf]
        %v3527 = vld [vmem:[%s3521 + $0x14] sm:$0xf]
        %v3528 = vld [vmem:[%s3521 + $0x18] sm:$0xf]
        %v3529 = vld [vmem:[%s3521 + $0x1c] sm:$0xf]
        %v3530 = vld [vmem:[%s3521 + $0x20] sm:$0xf]
        %v3531 = vld [vmem:[%s3521 + $0x24] sm:$0xf]
        %v3532 = vld [vmem:[%s3521 + $0x28] sm:$0xf]
        %v3533 = vld [vmem:[%s3521 + $0x2c] sm:$0xf]
        %v3534 = vld [vmem:[%s3521 + $0x30] sm:$0xf]
        %v3535 = vld [vmem:[%s3521 + $0x34] sm:$0xf]
        %v3536 = vld [vmem:[%s3521 + $0x38] sm:$0xf]
        %v3537 = vld [vmem:[%s3521 + $0x3c] sm:$0xf]
        %v3554 = vunpack.c.l.b16 %v3522
        %v3555 = vunpack.c.l.b16 %v3523
        %v3556 = vunpack.c.l.b16 %v3524
        %v3557 = vunpack.c.l.b16 %v3525
        %v3558 = vunpack.c.l.b16 %v3526
        %v3559 = vunpack.c.l.b16 %v3527
        %v3560 = vunpack.c.l.b16 %v3528
        %v3561 = vunpack.c.l.b16 %v3529
        %v3562 = vunpack.c.l.b16 %v3530
        %v3563 = vunpack.c.l.b16 %v3531
        %v3564 = vunpack.c.l.b16 %v3532
        %v3565 = vunpack.c.l.b16 %v3533
        %v3566 = vunpack.c.l.b16 %v3534
        %v3567 = vunpack.c.l.b16 %v3535
        %v3568 = vunpack.c.l.b16 %v3536
        %v3569 = vunpack.c.l.b16 %v3537
        %v3570 = vpack.c.b16 %v3555, %v3554
        %v3571 = vpack.c.b16 %v3557, %v3556
        %v3572 = vpack.c.b16 %v3559, %v3558
        %v3573 = vpack.c.b16 %v3561, %v3560
        %v3574 = vpack.c.b16 %v3563, %v3562
        %v3575 = vpack.c.b16 %v3565, %v3564
        %v3576 = vpack.c.b16 %v3567, %v3566
        %v3577 = vpack.c.b16 %v3569, %v3568
        %v3579 = vsel %vm1825, %v3570, 0
        %v3582 = vsel %vm1825, %v3571, 0
        %v3585 = vsel %vm1825, %v3572, 0
        %v3588 = vsel %vm1825, %v3573, 0
        %v3591 = vsel %vm1825, %v3574, 0
        %v3594 = vsel %vm1825, %v3575, 0
        %v3597 = vsel %vm1825, %v3576, 0
        %v3600 = vsel %vm1825, %v3577, 0
        %3602 = vmatprep.subr.bf16.mxu0 0
        %3603 = vmatpush1.bf16.msra.mxu0 0
        %3604 = vmatprep.subr.bf16.mxu0 0
        %3605 = vmatpush1.bf16.msra.mxu0 0
        %3606 = vmatprep.subr.bf16.mxu0 0
        %3607 = vmatpush1.bf16.msra.mxu0 0
        %3608 = vmatprep.subr.bf16.mxu0 0
        %3609 = vmatpush1.bf16.msra.mxu0 0
        %3610 = vmatprep.subr.bf16.mxu0 0
        %3611 = vmatpush1.bf16.msra.mxu0 0
        %3612 = vmatprep.subr.bf16.mxu0 0
        %3613 = vmatpush1.bf16.msra.mxu0 0
        %3614 = vmatprep.subr.bf16.mxu0 %v1858
        %3615 = vmatpush1.bf16.msra.mxu0 %v1855
        %3616 = vmatprep.subr.bf16.mxu0 %v1778
        %3617 = vmatpush1.bf16.msra.mxu0 %v1777
        %3618 = vmatprep.subr.bf16.mxu0 0
        %3619 = vmatpush2.bf16.msra.mxu0 0
        %3620 = vmatprep.subr.bf16.mxu0 0
        %3621 = vmatpush2.bf16.msra.mxu0 0
        %3622 = vmatprep.subr.bf16.mxu0 0
        %3623 = vmatpush2.bf16.msra.mxu0 0
        %3624 = vmatprep.subr.bf16.mxu0 0
        %3625 = vmatpush2.bf16.msra.mxu0 0
        %3626 = vmatprep.subr.bf16.mxu0 0
        %3627 = vmatpush2.bf16.msra.mxu0 0
        %3628 = vmatprep.subr.bf16.mxu0 0
        %3629 = vmatpush2.bf16.msra.mxu0 0
        %3630 = vmatprep.subr.bf16.mxu0 0
        %3631 = vmatpush2.bf16.msra.mxu0 0
        %3632 = vmatprep.subr.bf16.mxu0 0
        %3633 = vmatpush2.bf16.msra.mxu0 0
        %3634 = vmatprep.mubr.bf16.mxu0 0
        %3635 = vmatmul.mubr.bf16.gmra.mxu0 %v3579
        %v3636 = vpop.f32.mrf.mxu0
        %v3637 = vadd.f32 %v1564, %v3636
        %v3638 = vpop.f32.mrf.mxu0
        %v3639 = vadd.f32 %v1568, %v3638
        %v3640 = vpop.f32.mrf.mxu0
        %v3641 = vadd.f32 %v1564, %v3640
        %v3642 = vpop.f32.mrf.mxu0
        %v3643 = vadd.f32 %v1568, %v3642
        %3644 = vmatprep.mubr.bf16.mxu0 0
        %3645 = vmatmul.mubr.bf16.gmra.mxu0 %v3582
        %v3646 = vpop.f32.mrf.mxu0
        %v3647 = vadd.f32 %v1564, %v3646
        %v3648 = vpop.f32.mrf.mxu0
        %v3649 = vadd.f32 %v1568, %v3648
        %v3650 = vpop.f32.mrf.mxu0
        %v3651 = vadd.f32 %v1564, %v3650
        %v3652 = vpop.f32.mrf.mxu0
        %v3653 = vadd.f32 %v1568, %v3652
        %3654 = vmatprep.mubr.bf16.mxu0 0
        %3655 = vmatmul.mubr.bf16.gmra.mxu0 %v3585
        %v3656 = vpop.f32.mrf.mxu0
        %v3657 = vadd.f32 %v1564, %v3656
        %v3658 = vpop.f32.mrf.mxu0
        %v3659 = vadd.f32 %v1568, %v3658
        %v3660 = vpop.f32.mrf.mxu0
        %v3661 = vadd.f32 %v1564, %v3660
        %v3662 = vpop.f32.mrf.mxu0
        %v3663 = vadd.f32 %v1568, %v3662
        %3664 = vmatprep.mubr.bf16.mxu0 0
        %3665 = vmatmul.mubr.bf16.gmra.mxu0 %v3588
        %v3666 = vpop.f32.mrf.mxu0
        %v3667 = vadd.f32 %v1564, %v3666
        %v3668 = vpop.f32.mrf.mxu0
        %v3669 = vadd.f32 %v1568, %v3668
        %v3670 = vpop.f32.mrf.mxu0
        %v3671 = vadd.f32 %v1564, %v3670
        %v3672 = vpop.f32.mrf.mxu0
        %v3673 = vadd.f32 %v1568, %v3672
        %3674 = vmatprep.mubr.bf16.mxu0 0
        %3675 = vmatmul.mubr.bf16.gmra.mxu0 %v3591
        %v3676 = vpop.f32.mrf.mxu0
        %v3677 = vadd.f32 %v1564, %v3676
        %v3678 = vpop.f32.mrf.mxu0
        %v3679 = vadd.f32 %v1568, %v3678
        %v3680 = vpop.f32.mrf.mxu0
        %v3681 = vadd.f32 %v1564, %v3680
        %v3682 = vpop.f32.mrf.mxu0
        %v3683 = vadd.f32 %v1568, %v3682
        %3684 = vmatprep.mubr.bf16.mxu0 0
        %3685 = vmatmul.mubr.bf16.gmra.mxu0 %v3594
        %v3686 = vpop.f32.mrf.mxu0
        %v3687 = vadd.f32 %v1564, %v3686
        %v3688 = vpop.f32.mrf.mxu0
        %v3689 = vadd.f32 %v1568, %v3688
        %v3690 = vpop.f32.mrf.mxu0
        %v3691 = vadd.f32 %v1564, %v3690
        %v3692 = vpop.f32.mrf.mxu0
        %v3693 = vadd.f32 %v1568, %v3692
        %3694 = vmatprep.mubr.bf16.mxu0 0
        %3695 = vmatmul.mubr.bf16.gmra.mxu0 %v3597
        %v3696 = vpop.f32.mrf.mxu0
        %v3697 = vadd.f32 %v1564, %v3696
        %v3698 = vpop.f32.mrf.mxu0
        %v3699 = vadd.f32 %v1568, %v3698
        %v3700 = vpop.f32.mrf.mxu0
        %v3701 = vadd.f32 %v1564, %v3700
        %v3702 = vpop.f32.mrf.mxu0
        %v3703 = vadd.f32 %v1568, %v3702
        %3704 = vmatprep.mubr.bf16.mxu0 0
        %3705 = vmatmul.mubr.bf16.gmra.mxu0 %v3600
        %v3706 = vpop.f32.mrf.mxu0
        %v3707 = vadd.f32 %v1564, %v3706
        %v3708 = vpop.f32.mrf.mxu0
        %v3709 = vadd.f32 %v1568, %v3708
        %v3710 = vpop.f32.mrf.mxu0
        %v3711 = vadd.f32 %v1564, %v3710
        %v3712 = vpop.f32.mrf.mxu0
        %v3713 = vadd.f32 %v1568, %v3712
        %3714 = vdwg.mxu0
        %3715 = vmatprep.subr.bf16.mxu0 0
        %3716 = vmatpush1.bf16.msra.mxu0 0
        %3717 = vmatprep.subr.bf16.mxu0 0
        %3718 = vmatpush1.bf16.msra.mxu0 0
        %3719 = vmatprep.subr.bf16.mxu0 0
        %3720 = vmatpush1.bf16.msra.mxu0 0
        %3721 = vmatprep.subr.bf16.mxu0 0
        %3722 = vmatpush1.bf16.msra.mxu0 0
        %3723 = vmatprep.subr.bf16.mxu0 0
        %3724 = vmatpush1.bf16.msra.mxu0 0
        %3725 = vmatprep.subr.bf16.mxu0 0
        %3726 = vmatpush1.bf16.msra.mxu0 0
        %3727 = vmatprep.subr.bf16.mxu0 %v1864
        %3728 = vmatpush1.bf16.msra.mxu0 %v1861
        %3729 = vmatprep.subr.bf16.mxu0 %v1780
        %3730 = vmatpush1.bf16.msra.mxu0 %v1779
        %3731 = vmatprep.subr.bf16.mxu0 0
        %3732 = vmatpush2.bf16.msra.mxu0 0
        %3733 = vmatprep.subr.bf16.mxu0 0
        %3734 = vmatpush2.bf16.msra.mxu0 0
        %3735 = vmatprep.subr.bf16.mxu0 0
        %3736 = vmatpush2.bf16.msra.mxu0 0
        %3737 = vmatprep.subr.bf16.mxu0 0
        %3738 = vmatpush2.bf16.msra.mxu0 0
        %3739 = vmatprep.subr.bf16.mxu0 0
        %3740 = vmatpush2.bf16.msra.mxu0 0
        %3741 = vmatprep.subr.bf16.mxu0 0
        %3742 = vmatpush2.bf16.msra.mxu0 0
        %3743 = vmatprep.subr.bf16.mxu0 0
        %3744 = vmatpush2.bf16.msra.mxu0 0
        %3745 = vmatprep.subr.bf16.mxu0 0
        %3746 = vmatpush2.bf16.msra.mxu0 0
        %3747 = vmatprep.mubr.bf16.mxu0 0
        %3748 = vmatmul.mubr.bf16.gmra.mxu0 %v3579
        %v3749 = vpop.f32.mrf.mxu0
        %v3750 = vadd.f32 %v1572, %v3749
        %v3751 = vpop.f32.mrf.mxu0
        %v3752 = vadd.f32 %v1576, %v3751
        %v3753 = vpop.f32.mrf.mxu0
        %v3754 = vadd.f32 %v1572, %v3753
        %v3755 = vpop.f32.mrf.mxu0
        %v3756 = vadd.f32 %v1576, %v3755
        %3757 = vmatprep.mubr.bf16.mxu0 0
        %3758 = vmatmul.mubr.bf16.gmra.mxu0 %v3582
        %v3759 = vpop.f32.mrf.mxu0
        %v3760 = vadd.f32 %v1572, %v3759
        %v3761 = vpop.f32.mrf.mxu0
        %v3762 = vadd.f32 %v1576, %v3761
        %v3763 = vpop.f32.mrf.mxu0
        %v3764 = vadd.f32 %v1572, %v3763
        %v3765 = vpop.f32.mrf.mxu0
        %v3766 = vadd.f32 %v1576, %v3765
        %3767 = vmatprep.mubr.bf16.mxu0 0
        %3768 = vmatmul.mubr.bf16.gmra.mxu0 %v3585
        %v3769 = vpop.f32.mrf.mxu0
        %v3770 = vadd.f32 %v1572, %v3769
        %v3771 = vpop.f32.mrf.mxu0
        %v3772 = vadd.f32 %v1576, %v3771
        %v3773 = vpop.f32.mrf.mxu0
        %v3774 = vadd.f32 %v1572, %v3773
        %v3775 = vpop.f32.mrf.mxu0
        %v3776 = vadd.f32 %v1576, %v3775
        %3777 = vmatprep.mubr.bf16.mxu0 0
        %3778 = vmatmul.mubr.bf16.gmra.mxu0 %v3588
        %v3779 = vpop.f32.mrf.mxu0
        %v3780 = vadd.f32 %v1572, %v3779
        %v3781 = vpop.f32.mrf.mxu0
        %v3782 = vadd.f32 %v1576, %v3781
        %v3783 = vpop.f32.mrf.mxu0
        %v3784 = vadd.f32 %v1572, %v3783
        %v3785 = vpop.f32.mrf.mxu0
        %v3786 = vadd.f32 %v1576, %v3785
        %3787 = vmatprep.mubr.bf16.mxu0 0
        %3788 = vmatmul.mubr.bf16.gmra.mxu0 %v3591
        %v3789 = vpop.f32.mrf.mxu0
        %v3790 = vadd.f32 %v1572, %v3789
        %v3791 = vpop.f32.mrf.mxu0
        %v3792 = vadd.f32 %v1576, %v3791
        %v3793 = vpop.f32.mrf.mxu0
        %v3794 = vadd.f32 %v1572, %v3793
        %v3795 = vpop.f32.mrf.mxu0
        %v3796 = vadd.f32 %v1576, %v3795
        %3797 = vmatprep.mubr.bf16.mxu0 0
        %3798 = vmatmul.mubr.bf16.gmra.mxu0 %v3594
        %v3799 = vpop.f32.mrf.mxu0
        %v3800 = vadd.f32 %v1572, %v3799
        %v3801 = vpop.f32.mrf.mxu0
        %v3802 = vadd.f32 %v1576, %v3801
        %v3803 = vpop.f32.mrf.mxu0
        %v3804 = vadd.f32 %v1572, %v3803
        %v3805 = vpop.f32.mrf.mxu0
        %v3806 = vadd.f32 %v1576, %v3805
        %3807 = vmatprep.mubr.bf16.mxu0 0
        %3808 = vmatmul.mubr.bf16.gmra.mxu0 %v3597
        %v3809 = vpop.f32.mrf.mxu0
        %v3810 = vadd.f32 %v1572, %v3809
        %v3811 = vpop.f32.mrf.mxu0
        %v3812 = vadd.f32 %v1576, %v3811
        %v3813 = vpop.f32.mrf.mxu0
        %v3814 = vadd.f32 %v1572, %v3813
        %v3815 = vpop.f32.mrf.mxu0
        %v3816 = vadd.f32 %v1576, %v3815
        %3817 = vmatprep.mubr.bf16.mxu0 0
        %3818 = vmatmul.mubr.bf16.gmra.mxu0 %v3600
        %v3819 = vpop.f32.mrf.mxu0
        %v3820 = vadd.f32 %v1572, %v3819
        %v3821 = vpop.f32.mrf.mxu0
        %v3822 = vadd.f32 %v1576, %v3821
        %v3823 = vpop.f32.mrf.mxu0
        %v3824 = vadd.f32 %v1572, %v3823
        %v3825 = vpop.f32.mrf.mxu0
        %v3826 = vadd.f32 %v1576, %v3825
        %3827 = vdwg.mxu0
        %3828 = vmatprep.subr.bf16.mxu0 0
        %3829 = vmatpush1.bf16.msra.mxu0 0
        %3830 = vmatprep.subr.bf16.mxu0 0
        %3831 = vmatpush1.bf16.msra.mxu0 0
        %3832 = vmatprep.subr.bf16.mxu0 0
        %3833 = vmatpush1.bf16.msra.mxu0 0
        %3834 = vmatprep.subr.bf16.mxu0 0
        %3835 = vmatpush1.bf16.msra.mxu0 0
        %3836 = vmatprep.subr.bf16.mxu0 0
        %3837 = vmatpush1.bf16.msra.mxu0 0
        %3838 = vmatprep.subr.bf16.mxu0 0
        %3839 = vmatpush1.bf16.msra.mxu0 0
        %3840 = vmatprep.subr.bf16.mxu0 %v1870
        %3841 = vmatpush1.bf16.msra.mxu0 %v1867
        %3842 = vmatprep.subr.bf16.mxu0 %v1782
        %3843 = vmatpush1.bf16.msra.mxu0 %v1781
        %3844 = vmatprep.subr.bf16.mxu0 0
        %3845 = vmatpush2.bf16.msra.mxu0 0
        %3846 = vmatprep.subr.bf16.mxu0 0
        %3847 = vmatpush2.bf16.msra.mxu0 0
        %3848 = vmatprep.subr.bf16.mxu0 0
        %3849 = vmatpush2.bf16.msra.mxu0 0
        %3850 = vmatprep.subr.bf16.mxu0 0
        %3851 = vmatpush2.bf16.msra.mxu0 0
        %3852 = vmatprep.subr.bf16.mxu0 0
        %3853 = vmatpush2.bf16.msra.mxu0 0
        %3854 = vmatprep.subr.bf16.mxu0 0
        %3855 = vmatpush2.bf16.msra.mxu0 0
        %3856 = vmatprep.subr.bf16.mxu0 0
        %3857 = vmatpush2.bf16.msra.mxu0 0
        %3858 = vmatprep.subr.bf16.mxu0 0
        %3859 = vmatpush2.bf16.msra.mxu0 0
        %3860 = vmatprep.mubr.bf16.mxu0 0
        %3861 = vmatmul.mubr.bf16.gmra.mxu0 %v3579
        %v3862 = vpop.f32.mrf.mxu0
        %v3863 = vadd.f32 %v1580, %v3862
        %v3864 = vpop.f32.mrf.mxu0
        %v3865 = vadd.f32 %v1584, %v3864
        %v3866 = vpop.f32.mrf.mxu0
        %v3867 = vadd.f32 %v1580, %v3866
        %v3868 = vpop.f32.mrf.mxu0
        %v3869 = vadd.f32 %v1584, %v3868
        %3870 = vmatprep.mubr.bf16.mxu0 0
        %3871 = vmatmul.mubr.bf16.gmra.mxu0 %v3582
        %v3872 = vpop.f32.mrf.mxu0
        %v3873 = vadd.f32 %v1580, %v3872
        %v3874 = vpop.f32.mrf.mxu0
        %v3875 = vadd.f32 %v1584, %v3874
        %v3876 = vpop.f32.mrf.mxu0
        %v3877 = vadd.f32 %v1580, %v3876
        %v3878 = vpop.f32.mrf.mxu0
        %v3879 = vadd.f32 %v1584, %v3878
        %3880 = vmatprep.mubr.bf16.mxu0 0
        %3881 = vmatmul.mubr.bf16.gmra.mxu0 %v3585
        %v3882 = vpop.f32.mrf.mxu0
        %v3883 = vadd.f32 %v1580, %v3882
        %v3884 = vpop.f32.mrf.mxu0
        %v3885 = vadd.f32 %v1584, %v3884
        %v3886 = vpop.f32.mrf.mxu0
        %v3887 = vadd.f32 %v1580, %v3886
        %v3888 = vpop.f32.mrf.mxu0
        %v3889 = vadd.f32 %v1584, %v3888
        %3890 = vmatprep.mubr.bf16.mxu0 0
        %3891 = vmatmul.mubr.bf16.gmra.mxu0 %v3588
        %v3892 = vpop.f32.mrf.mxu0
        %v3893 = vadd.f32 %v1580, %v3892
        %v3894 = vpop.f32.mrf.mxu0
        %v3895 = vadd.f32 %v1584, %v3894
        %v3896 = vpop.f32.mrf.mxu0
        %v3897 = vadd.f32 %v1580, %v3896
        %v3898 = vpop.f32.mrf.mxu0
        %v3899 = vadd.f32 %v1584, %v3898
        %3900 = vmatprep.mubr.bf16.mxu0 0
        %3901 = vmatmul.mubr.bf16.gmra.mxu0 %v3591
        %v3902 = vpop.f32.mrf.mxu0
        %v3903 = vadd.f32 %v1580, %v3902
        %v3904 = vpop.f32.mrf.mxu0
        %v3905 = vadd.f32 %v1584, %v3904
        %v3906 = vpop.f32.mrf.mxu0
        %v3907 = vadd.f32 %v1580, %v3906
        %v3908 = vpop.f32.mrf.mxu0
        %v3909 = vadd.f32 %v1584, %v3908
        %3910 = vmatprep.mubr.bf16.mxu0 0
        %3911 = vmatmul.mubr.bf16.gmra.mxu0 %v3594
        %v3912 = vpop.f32.mrf.mxu0
        %v3913 = vadd.f32 %v1580, %v3912
        %v3914 = vpop.f32.mrf.mxu0
        %v3915 = vadd.f32 %v1584, %v3914
        %v3916 = vpop.f32.mrf.mxu0
        %v3917 = vadd.f32 %v1580, %v3916
        %v3918 = vpop.f32.mrf.mxu0
        %v3919 = vadd.f32 %v1584, %v3918
        %3920 = vmatprep.mubr.bf16.mxu0 0
        %3921 = vmatmul.mubr.bf16.gmra.mxu0 %v3597
        %v3922 = vpop.f32.mrf.mxu0
        %v3923 = vadd.f32 %v1580, %v3922
        %v3924 = vpop.f32.mrf.mxu0
        %v3925 = vadd.f32 %v1584, %v3924
        %v3926 = vpop.f32.mrf.mxu0
        %v3927 = vadd.f32 %v1580, %v3926
        %v3928 = vpop.f32.mrf.mxu0
        %v3929 = vadd.f32 %v1584, %v3928
        %3930 = vmatprep.mubr.bf16.mxu0 0
        %3931 = vmatmul.mubr.bf16.gmra.mxu0 %v3600
        %v3932 = vpop.f32.mrf.mxu0
        %v3933 = vadd.f32 %v1580, %v3932
        %v3934 = vpop.f32.mrf.mxu0
        %v3935 = vadd.f32 %v1584, %v3934
        %v3936 = vpop.f32.mrf.mxu0
        %v3937 = vadd.f32 %v1580, %v3936
        %v3938 = vpop.f32.mrf.mxu0
        %v3939 = vadd.f32 %v1584, %v3938
        %3940 = vdwg.mxu0
        %3941 = vmatprep.subr.bf16.mxu0 0
        %3942 = vmatpush1.bf16.msra.mxu0 0
        %3943 = vmatprep.subr.bf16.mxu0 0
        %3944 = vmatpush1.bf16.msra.mxu0 0
        %3945 = vmatprep.subr.bf16.mxu0 0
        %3946 = vmatpush1.bf16.msra.mxu0 0
        %3947 = vmatprep.subr.bf16.mxu0 0
        %3948 = vmatpush1.bf16.msra.mxu0 0
        %3949 = vmatprep.subr.bf16.mxu0 0
        %3950 = vmatpush1.bf16.msra.mxu0 0
        %3951 = vmatprep.subr.bf16.mxu0 0
        %3952 = vmatpush1.bf16.msra.mxu0 0
        %3953 = vmatprep.subr.bf16.mxu0 %v1876
        %3954 = vmatpush1.bf16.msra.mxu0 %v1873
        %3955 = vmatprep.subr.bf16.mxu0 %v1784
        %3956 = vmatpush1.bf16.msra.mxu0 %v1783
        %3957 = vmatprep.subr.bf16.mxu0 0
        %3958 = vmatpush2.bf16.msra.mxu0 0
        %3959 = vmatprep.subr.bf16.mxu0 0
        %3960 = vmatpush2.bf16.msra.mxu0 0
        %3961 = vmatprep.subr.bf16.mxu0 0
        %3962 = vmatpush2.bf16.msra.mxu0 0
        %3963 = vmatprep.subr.bf16.mxu0 0
        %3964 = vmatpush2.bf16.msra.mxu0 0
        %3965 = vmatprep.subr.bf16.mxu0 0
        %3966 = vmatpush2.bf16.msra.mxu0 0
        %3967 = vmatprep.subr.bf16.mxu0 0
        %3968 = vmatpush2.bf16.msra.mxu0 0
        %3969 = vmatprep.subr.bf16.mxu0 0
        %3970 = vmatpush2.bf16.msra.mxu0 0
        %3971 = vmatprep.subr.bf16.mxu0 0
        %3972 = vmatpush2.bf16.msra.mxu0 0
        %3973 = vmatprep.mubr.bf16.mxu0 0
        %3974 = vmatmul.mubr.bf16.gmra.mxu0 %v3579
        %v3975 = vpop.f32.mrf.mxu0
        %v3976 = vadd.f32 %v1588, %v3975
        %v3977 = vpop.f32.mrf.mxu0
        %v3978 = vadd.f32 %v1592, %v3977
        %v3979 = vpop.f32.mrf.mxu0
        %v3980 = vadd.f32 %v1588, %v3979
        %v3981 = vpop.f32.mrf.mxu0
        %v3982 = vadd.f32 %v1592, %v3981
        %3983 = vmatprep.mubr.bf16.mxu0 0
        %3984 = vmatmul.mubr.bf16.gmra.mxu0 %v3582
        %v3985 = vpop.f32.mrf.mxu0
        %v3986 = vadd.f32 %v1588, %v3985
        %v3987 = vpop.f32.mrf.mxu0
        %v3988 = vadd.f32 %v1592, %v3987
        %v3989 = vpop.f32.mrf.mxu0
        %v3990 = vadd.f32 %v1588, %v3989
        %v3991 = vpop.f32.mrf.mxu0
        %v3992 = vadd.f32 %v1592, %v3991
        %3993 = vmatprep.mubr.bf16.mxu0 0
        %3994 = vmatmul.mubr.bf16.gmra.mxu0 %v3585
        %v3995 = vpop.f32.mrf.mxu0
        %v3996 = vadd.f32 %v1588, %v3995
        %v3997 = vpop.f32.mrf.mxu0
        %v3998 = vadd.f32 %v1592, %v3997
        %v3999 = vpop.f32.mrf.mxu0
        %v4000 = vadd.f32 %v1588, %v3999
        %v4001 = vpop.f32.mrf.mxu0
        %v4002 = vadd.f32 %v1592, %v4001
        %4003 = vmatprep.mubr.bf16.mxu0 0
        %4004 = vmatmul.mubr.bf16.gmra.mxu0 %v3588
        %v4005 = vpop.f32.mrf.mxu0
        %v4006 = vadd.f32 %v1588, %v4005
        %v4007 = vpop.f32.mrf.mxu0
        %v4008 = vadd.f32 %v1592, %v4007
        %v4009 = vpop.f32.mrf.mxu0
        %v4010 = vadd.f32 %v1588, %v4009
        %v4011 = vpop.f32.mrf.mxu0
        %v4012 = vadd.f32 %v1592, %v4011
        %4013 = vmatprep.mubr.bf16.mxu0 0
        %4014 = vmatmul.mubr.bf16.gmra.mxu0 %v3591
        %v4015 = vpop.f32.mrf.mxu0
        %v4016 = vadd.f32 %v1588, %v4015
        %v4017 = vpop.f32.mrf.mxu0
        %v4018 = vadd.f32 %v1592, %v4017
        %v4019 = vpop.f32.mrf.mxu0
        %v4020 = vadd.f32 %v1588, %v4019
        %v4021 = vpop.f32.mrf.mxu0
        %v4022 = vadd.f32 %v1592, %v4021
        %4023 = vmatprep.mubr.bf16.mxu0 0
        %4024 = vmatmul.mubr.bf16.gmra.mxu0 %v3594
        %v4025 = vpop.f32.mrf.mxu0
        %v4026 = vadd.f32 %v1588, %v4025
        %v4027 = vpop.f32.mrf.mxu0
        %v4028 = vadd.f32 %v1592, %v4027
        %v4029 = vpop.f32.mrf.mxu0
        %v4030 = vadd.f32 %v1588, %v4029
        %v4031 = vpop.f32.mrf.mxu0
        %v4032 = vadd.f32 %v1592, %v4031
        %4033 = vmatprep.mubr.bf16.mxu0 0
        %4034 = vmatmul.mubr.bf16.gmra.mxu0 %v3597
        %v4035 = vpop.f32.mrf.mxu0
        %v4036 = vadd.f32 %v1588, %v4035
        %v4037 = vpop.f32.mrf.mxu0
        %v4038 = vadd.f32 %v1592, %v4037
        %v4039 = vpop.f32.mrf.mxu0
        %v4040 = vadd.f32 %v1588, %v4039
        %v4041 = vpop.f32.mrf.mxu0
        %v4042 = vadd.f32 %v1592, %v4041
        %4043 = vmatprep.mubr.bf16.mxu0 0
        %4044 = vmatmul.mubr.bf16.gmra.mxu0 %v3600
        %v4045 = vpop.f32.mrf.mxu0
        %v4046 = vadd.f32 %v1588, %v4045
        %v4047 = vpop.f32.mrf.mxu0
        %v4048 = vadd.f32 %v1592, %v4047
        %v4049 = vpop.f32.mrf.mxu0
        %v4050 = vadd.f32 %v1588, %v4049
        %v4051 = vpop.f32.mrf.mxu0
        %v4052 = vadd.f32 %v1592, %v4051
        %4053 = vdwg.mxu0
        %4054 = vmatprep.subr.bf16.mxu0 0
        %4055 = vmatpush1.bf16.msra.mxu0 0
        %4056 = vmatprep.subr.bf16.mxu0 0
        %4057 = vmatpush1.bf16.msra.mxu0 0
        %4058 = vmatprep.subr.bf16.mxu0 0
        %4059 = vmatpush1.bf16.msra.mxu0 0
        %4060 = vmatprep.subr.bf16.mxu0 0
        %4061 = vmatpush1.bf16.msra.mxu0 0
        %4062 = vmatprep.subr.bf16.mxu0 0
        %4063 = vmatpush1.bf16.msra.mxu0 0
        %4064 = vmatprep.subr.bf16.mxu0 0
        %4065 = vmatpush1.bf16.msra.mxu0 0
        %4066 = vmatprep.subr.bf16.mxu0 %v1882
        %4067 = vmatpush1.bf16.msra.mxu0 %v1879
        %4068 = vmatprep.subr.bf16.mxu0 %v1786
        %4069 = vmatpush1.bf16.msra.mxu0 %v1785
        %4070 = vmatprep.subr.bf16.mxu0 0
        %4071 = vmatpush2.bf16.msra.mxu0 0
        %4072 = vmatprep.subr.bf16.mxu0 0
        %4073 = vmatpush2.bf16.msra.mxu0 0
        %4074 = vmatprep.subr.bf16.mxu0 0
        %4075 = vmatpush2.bf16.msra.mxu0 0
        %4076 = vmatprep.subr.bf16.mxu0 0
        %4077 = vmatpush2.bf16.msra.mxu0 0
        %4078 = vmatprep.subr.bf16.mxu0 0
        %4079 = vmatpush2.bf16.msra.mxu0 0
        %4080 = vmatprep.subr.bf16.mxu0 0
        %4081 = vmatpush2.bf16.msra.mxu0 0
        %4082 = vmatprep.subr.bf16.mxu0 0
        %4083 = vmatpush2.bf16.msra.mxu0 0
        %4084 = vmatprep.subr.bf16.mxu0 0
        %4085 = vmatpush2.bf16.msra.mxu0 0
        %4086 = vmatprep.mubr.bf16.mxu0 0
        %4087 = vmatmul.mubr.bf16.gmra.mxu0 %v3579
        %v4088 = vpop.f32.mrf.mxu0
        %v4089 = vadd.f32 %v1596, %v4088
        %v4090 = vpop.f32.mrf.mxu0
        %v4091 = vadd.f32 %v1600, %v4090
        %v4092 = vpop.f32.mrf.mxu0
        %v4093 = vadd.f32 %v1596, %v4092
        %v4094 = vpop.f32.mrf.mxu0
        %v4095 = vadd.f32 %v1600, %v4094
        %4096 = vmatprep.mubr.bf16.mxu0 0
        %4097 = vmatmul.mubr.bf16.gmra.mxu0 %v3582
        %v4098 = vpop.f32.mrf.mxu0
        %v4099 = vadd.f32 %v1596, %v4098
        %v4100 = vpop.f32.mrf.mxu0
        %v4101 = vadd.f32 %v1600, %v4100
        %v4102 = vpop.f32.mrf.mxu0
        %v4103 = vadd.f32 %v1596, %v4102
        %v4104 = vpop.f32.mrf.mxu0
        %v4105 = vadd.f32 %v1600, %v4104
        %4106 = vmatprep.mubr.bf16.mxu0 0
        %4107 = vmatmul.mubr.bf16.gmra.mxu0 %v3585
        %v4108 = vpop.f32.mrf.mxu0
        %v4109 = vadd.f32 %v1596, %v4108
        %v4110 = vpop.f32.mrf.mxu0
        %v4111 = vadd.f32 %v1600, %v4110
        %v4112 = vpop.f32.mrf.mxu0
        %v4113 = vadd.f32 %v1596, %v4112
        %v4114 = vpop.f32.mrf.mxu0
        %v4115 = vadd.f32 %v1600, %v4114
        %4116 = vmatprep.mubr.bf16.mxu0 0
        %4117 = vmatmul.mubr.bf16.gmra.mxu0 %v3588
        %v4118 = vpop.f32.mrf.mxu0
        %v4119 = vadd.f32 %v1596, %v4118
        %v4120 = vpop.f32.mrf.mxu0
        %v4121 = vadd.f32 %v1600, %v4120
        %v4122 = vpop.f32.mrf.mxu0
        %v4123 = vadd.f32 %v1596, %v4122
        %v4124 = vpop.f32.mrf.mxu0
        %v4125 = vadd.f32 %v1600, %v4124
        %4126 = vmatprep.mubr.bf16.mxu0 0
        %4127 = vmatmul.mubr.bf16.gmra.mxu0 %v3591
        %v4128 = vpop.f32.mrf.mxu0
        %v4129 = vadd.f32 %v1596, %v4128
        %v4130 = vpop.f32.mrf.mxu0
        %v4131 = vadd.f32 %v1600, %v4130
        %v4132 = vpop.f32.mrf.mxu0
        %v4133 = vadd.f32 %v1596, %v4132
        %v4134 = vpop.f32.mrf.mxu0
        %v4135 = vadd.f32 %v1600, %v4134
        %4136 = vmatprep.mubr.bf16.mxu0 0
        %4137 = vmatmul.mubr.bf16.gmra.mxu0 %v3594
        %v4138 = vpop.f32.mrf.mxu0
        %v4139 = vadd.f32 %v1596, %v4138
        %v4140 = vpop.f32.mrf.mxu0
        %v4141 = vadd.f32 %v1600, %v4140
        %v4142 = vpop.f32.mrf.mxu0
        %v4143 = vadd.f32 %v1596, %v4142
        %v4144 = vpop.f32.mrf.mxu0
        %v4145 = vadd.f32 %v1600, %v4144
        %4146 = vmatprep.mubr.bf16.mxu0 0
        %4147 = vmatmul.mubr.bf16.gmra.mxu0 %v3597
        %v4148 = vpop.f32.mrf.mxu0
        %v4149 = vadd.f32 %v1596, %v4148
        %v4150 = vpop.f32.mrf.mxu0
        %v4151 = vadd.f32 %v1600, %v4150
        %v4152 = vpop.f32.mrf.mxu0
        %v4153 = vadd.f32 %v1596, %v4152
        %v4154 = vpop.f32.mrf.mxu0
        %v4155 = vadd.f32 %v1600, %v4154
        %4156 = vmatprep.mubr.bf16.mxu0 0
        %4157 = vmatmul.mubr.bf16.gmra.mxu0 %v3600
        %v4158 = vpop.f32.mrf.mxu0
        %v4159 = vadd.f32 %v1596, %v4158
        %v4160 = vpop.f32.mrf.mxu0
        %v4161 = vadd.f32 %v1600, %v4160
        %v4162 = vpop.f32.mrf.mxu0
        %v4163 = vadd.f32 %v1596, %v4162
        %v4164 = vpop.f32.mrf.mxu0
        %v4165 = vadd.f32 %v1600, %v4164
        %4166 = vdwg.mxu0
        %4167 = vmatprep.subr.bf16.mxu0 0
        %4168 = vmatpush1.bf16.msra.mxu0 0
        %4169 = vmatprep.subr.bf16.mxu0 0
        %4170 = vmatpush1.bf16.msra.mxu0 0
        %4171 = vmatprep.subr.bf16.mxu0 0
        %4172 = vmatpush1.bf16.msra.mxu0 0
        %4173 = vmatprep.subr.bf16.mxu0 0
        %4174 = vmatpush1.bf16.msra.mxu0 0
        %4175 = vmatprep.subr.bf16.mxu0 0
        %4176 = vmatpush1.bf16.msra.mxu0 0
        %4177 = vmatprep.subr.bf16.mxu0 0
        %4178 = vmatpush1.bf16.msra.mxu0 0
        %4179 = vmatprep.subr.bf16.mxu0 %v1888
        %4180 = vmatpush1.bf16.msra.mxu0 %v1885
        %4181 = vmatprep.subr.bf16.mxu0 %v1788
        %4182 = vmatpush1.bf16.msra.mxu0 %v1787
        %4183 = vmatprep.subr.bf16.mxu0 0
        %4184 = vmatpush2.bf16.msra.mxu0 0
        %4185 = vmatprep.subr.bf16.mxu0 0
        %4186 = vmatpush2.bf16.msra.mxu0 0
        %4187 = vmatprep.subr.bf16.mxu0 0
        %4188 = vmatpush2.bf16.msra.mxu0 0
        %4189 = vmatprep.subr.bf16.mxu0 0
        %4190 = vmatpush2.bf16.msra.mxu0 0
        %4191 = vmatprep.subr.bf16.mxu0 0
        %4192 = vmatpush2.bf16.msra.mxu0 0
        %4193 = vmatprep.subr.bf16.mxu0 0
        %4194 = vmatpush2.bf16.msra.mxu0 0
        %4195 = vmatprep.subr.bf16.mxu0 0
        %4196 = vmatpush2.bf16.msra.mxu0 0
        %4197 = vmatprep.subr.bf16.mxu0 0
        %4198 = vmatpush2.bf16.msra.mxu0 0
        %4199 = vmatprep.mubr.bf16.mxu0 0
        %4200 = vmatmul.mubr.bf16.gmra.mxu0 %v3579
        %v4201 = vpop.f32.mrf.mxu0
        %v4202 = vadd.f32 %v1604, %v4201
        %v4203 = vpop.f32.mrf.mxu0
        %v4204 = vadd.f32 %v1608, %v4203
        %v4205 = vpop.f32.mrf.mxu0
        %v4206 = vadd.f32 %v1604, %v4205
        %v4207 = vpop.f32.mrf.mxu0
        %v4208 = vadd.f32 %v1608, %v4207
        %4209 = vmatprep.mubr.bf16.mxu0 0
        %4210 = vmatmul.mubr.bf16.gmra.mxu0 %v3582
        %v4211 = vpop.f32.mrf.mxu0
        %v4212 = vadd.f32 %v1604, %v4211
        %v4213 = vpop.f32.mrf.mxu0
        %v4214 = vadd.f32 %v1608, %v4213
        %v4215 = vpop.f32.mrf.mxu0
        %v4216 = vadd.f32 %v1604, %v4215
        %v4217 = vpop.f32.mrf.mxu0
        %v4218 = vadd.f32 %v1608, %v4217
        %4219 = vmatprep.mubr.bf16.mxu0 0
        %4220 = vmatmul.mubr.bf16.gmra.mxu0 %v3585
        %v4221 = vpop.f32.mrf.mxu0
        %v4222 = vadd.f32 %v1604, %v4221
        %v4223 = vpop.f32.mrf.mxu0
        %v4224 = vadd.f32 %v1608, %v4223
        %v4225 = vpop.f32.mrf.mxu0
        %v4226 = vadd.f32 %v1604, %v4225
        %v4227 = vpop.f32.mrf.mxu0
        %v4228 = vadd.f32 %v1608, %v4227
        %4229 = vmatprep.mubr.bf16.mxu0 0
        %4230 = vmatmul.mubr.bf16.gmra.mxu0 %v3588
        %v4231 = vpop.f32.mrf.mxu0
        %v4232 = vadd.f32 %v1604, %v4231
        %v4233 = vpop.f32.mrf.mxu0
        %v4234 = vadd.f32 %v1608, %v4233
        %v4235 = vpop.f32.mrf.mxu0
        %v4236 = vadd.f32 %v1604, %v4235
        %v4237 = vpop.f32.mrf.mxu0
        %v4238 = vadd.f32 %v1608, %v4237
        %4239 = vmatprep.mubr.bf16.mxu0 0
        %4240 = vmatmul.mubr.bf16.gmra.mxu0 %v3591
        %v4241 = vpop.f32.mrf.mxu0
        %v4242 = vadd.f32 %v1604, %v4241
        %v4243 = vpop.f32.mrf.mxu0
        %v4244 = vadd.f32 %v1608, %v4243
        %v4245 = vpop.f32.mrf.mxu0
        %v4246 = vadd.f32 %v1604, %v4245
        %v4247 = vpop.f32.mrf.mxu0
        %v4248 = vadd.f32 %v1608, %v4247
        %4249 = vmatprep.mubr.bf16.mxu0 0
        %4250 = vmatmul.mubr.bf16.gmra.mxu0 %v3594
        %v4251 = vpop.f32.mrf.mxu0
        %v4252 = vadd.f32 %v1604, %v4251
        %v4253 = vpop.f32.mrf.mxu0
        %v4254 = vadd.f32 %v1608, %v4253
        %v4255 = vpop.f32.mrf.mxu0
        %v4256 = vadd.f32 %v1604, %v4255
        %v4257 = vpop.f32.mrf.mxu0
        %v4258 = vadd.f32 %v1608, %v4257
        %4259 = vmatprep.mubr.bf16.mxu0 0
        %4260 = vmatmul.mubr.bf16.gmra.mxu0 %v3597
        %v4261 = vpop.f32.mrf.mxu0
        %v4262 = vadd.f32 %v1604, %v4261
        %v4263 = vpop.f32.mrf.mxu0
        %v4264 = vadd.f32 %v1608, %v4263
        %v4265 = vpop.f32.mrf.mxu0
        %v4266 = vadd.f32 %v1604, %v4265
        %v4267 = vpop.f32.mrf.mxu0
        %v4268 = vadd.f32 %v1608, %v4267
        %4269 = vmatprep.mubr.bf16.mxu0 0
        %4270 = vmatmul.mubr.bf16.gmra.mxu0 %v3600
        %v4271 = vpop.f32.mrf.mxu0
        %v4272 = vadd.f32 %v1604, %v4271
        %v4273 = vpop.f32.mrf.mxu0
        %v4274 = vadd.f32 %v1608, %v4273
        %v4275 = vpop.f32.mrf.mxu0
        %v4276 = vadd.f32 %v1604, %v4275
        %v4277 = vpop.f32.mrf.mxu0
        %v4278 = vadd.f32 %v1608, %v4277
        %4279 = vdwg.mxu0
        %4280 = vmatprep.subr.bf16.mxu0 0
        %4281 = vmatpush1.bf16.msra.mxu0 0
        %4282 = vmatprep.subr.bf16.mxu0 0
        %4283 = vmatpush1.bf16.msra.mxu0 0
        %4284 = vmatprep.subr.bf16.mxu0 0
        %4285 = vmatpush1.bf16.msra.mxu0 0
        %4286 = vmatprep.subr.bf16.mxu0 0
        %4287 = vmatpush1.bf16.msra.mxu0 0
        %4288 = vmatprep.subr.bf16.mxu0 0
        %4289 = vmatpush1.bf16.msra.mxu0 0
        %4290 = vmatprep.subr.bf16.mxu0 0
        %4291 = vmatpush1.bf16.msra.mxu0 0
        %4292 = vmatprep.subr.bf16.mxu0 %v1894
        %4293 = vmatpush1.bf16.msra.mxu0 %v1891
        %4294 = vmatprep.subr.bf16.mxu0 %v1790
        %4295 = vmatpush1.bf16.msra.mxu0 %v1789
        %4296 = vmatprep.subr.bf16.mxu0 0
        %4297 = vmatpush2.bf16.msra.mxu0 0
        %4298 = vmatprep.subr.bf16.mxu0 0
        %4299 = vmatpush2.bf16.msra.mxu0 0
        %4300 = vmatprep.subr.bf16.mxu0 0
        %4301 = vmatpush2.bf16.msra.mxu0 0
        %4302 = vmatprep.subr.bf16.mxu0 0
        %4303 = vmatpush2.bf16.msra.mxu0 0
        %4304 = vmatprep.subr.bf16.mxu0 0
        %4305 = vmatpush2.bf16.msra.mxu0 0
        %4306 = vmatprep.subr.bf16.mxu0 0
        %4307 = vmatpush2.bf16.msra.mxu0 0
        %4308 = vmatprep.subr.bf16.mxu0 0
        %4309 = vmatpush2.bf16.msra.mxu0 0
        %4310 = vmatprep.subr.bf16.mxu0 0
        %4311 = vmatpush2.bf16.msra.mxu0 0
        %4312 = vmatprep.mubr.bf16.mxu0 0
        %4313 = vmatmul.mubr.bf16.gmra.mxu0 %v3579
        %v4314 = vpop.f32.mrf.mxu0
        %v4315 = vadd.f32 %v1612, %v4314
        %v4316 = vpop.f32.mrf.mxu0
        %v4317 = vadd.f32 %v1616, %v4316
        %v4318 = vpop.f32.mrf.mxu0
        %v4319 = vadd.f32 %v1612, %v4318
        %v4320 = vpop.f32.mrf.mxu0
        %v4321 = vadd.f32 %v1616, %v4320
        %4322 = vmatprep.mubr.bf16.mxu0 0
        %4323 = vmatmul.mubr.bf16.gmra.mxu0 %v3582
        %v4324 = vpop.f32.mrf.mxu0
        %v4325 = vadd.f32 %v1612, %v4324
        %v4326 = vpop.f32.mrf.mxu0
        %v4327 = vadd.f32 %v1616, %v4326
        %v4328 = vpop.f32.mrf.mxu0
        %v4329 = vadd.f32 %v1612, %v4328
        %v4330 = vpop.f32.mrf.mxu0
        %v4331 = vadd.f32 %v1616, %v4330
        %4332 = vmatprep.mubr.bf16.mxu0 0
        %4333 = vmatmul.mubr.bf16.gmra.mxu0 %v3585
        %v4334 = vpop.f32.mrf.mxu0
        %v4335 = vadd.f32 %v1612, %v4334
        %v4336 = vpop.f32.mrf.mxu0
        %v4337 = vadd.f32 %v1616, %v4336
        %v4338 = vpop.f32.mrf.mxu0
        %v4339 = vadd.f32 %v1612, %v4338
        %v4340 = vpop.f32.mrf.mxu0
        %v4341 = vadd.f32 %v1616, %v4340
        %4342 = vmatprep.mubr.bf16.mxu0 0
        %4343 = vmatmul.mubr.bf16.gmra.mxu0 %v3588
        %v4344 = vpop.f32.mrf.mxu0
        %v4345 = vadd.f32 %v1612, %v4344
        %v4346 = vpop.f32.mrf.mxu0
        %v4347 = vadd.f32 %v1616, %v4346
        %v4348 = vpop.f32.mrf.mxu0
        %v4349 = vadd.f32 %v1612, %v4348
        %v4350 = vpop.f32.mrf.mxu0
        %v4351 = vadd.f32 %v1616, %v4350
        %4352 = vmatprep.mubr.bf16.mxu0 0
        %4353 = vmatmul.mubr.bf16.gmra.mxu0 %v3591
        %v4354 = vpop.f32.mrf.mxu0
        %v4355 = vadd.f32 %v1612, %v4354
        %v4356 = vpop.f32.mrf.mxu0
        %v4357 = vadd.f32 %v1616, %v4356
        %v4358 = vpop.f32.mrf.mxu0
        %v4359 = vadd.f32 %v1612, %v4358
        %v4360 = vpop.f32.mrf.mxu0
        %v4361 = vadd.f32 %v1616, %v4360
        %4362 = vmatprep.mubr.bf16.mxu0 0
        %4363 = vmatmul.mubr.bf16.gmra.mxu0 %v3594
        %v4364 = vpop.f32.mrf.mxu0
        %v4365 = vadd.f32 %v1612, %v4364
        %v4366 = vpop.f32.mrf.mxu0
        %v4367 = vadd.f32 %v1616, %v4366
        %v4368 = vpop.f32.mrf.mxu0
        %v4369 = vadd.f32 %v1612, %v4368
        %v4370 = vpop.f32.mrf.mxu0
        %v4371 = vadd.f32 %v1616, %v4370
        %4372 = vmatprep.mubr.bf16.mxu0 0
        %4373 = vmatmul.mubr.bf16.gmra.mxu0 %v3597
        %v4374 = vpop.f32.mrf.mxu0
        %v4375 = vadd.f32 %v1612, %v4374
        %v4376 = vpop.f32.mrf.mxu0
        %v4377 = vadd.f32 %v1616, %v4376
        %v4378 = vpop.f32.mrf.mxu0
        %v4379 = vadd.f32 %v1612, %v4378
        %v4380 = vpop.f32.mrf.mxu0
        %v4381 = vadd.f32 %v1616, %v4380
        %4382 = vmatprep.mubr.bf16.mxu0 0
        %4383 = vmatmul.mubr.bf16.gmra.mxu0 %v3600
        %v4384 = vpop.f32.mrf.mxu0
        %v4385 = vadd.f32 %v1612, %v4384
        %v4386 = vpop.f32.mrf.mxu0
        %v4387 = vadd.f32 %v1616, %v4386
        %v4388 = vpop.f32.mrf.mxu0
        %v4389 = vadd.f32 %v1612, %v4388
        %v4390 = vpop.f32.mrf.mxu0
        %v4391 = vadd.f32 %v1616, %v4390
        %4392 = vdwg.mxu0
        %4393 = vmatprep.subr.bf16.mxu0 0
        %4394 = vmatpush1.bf16.msra.mxu0 0
        %4395 = vmatprep.subr.bf16.mxu0 0
        %4396 = vmatpush1.bf16.msra.mxu0 0
        %4397 = vmatprep.subr.bf16.mxu0 0
        %4398 = vmatpush1.bf16.msra.mxu0 0
        %4399 = vmatprep.subr.bf16.mxu0 0
        %4400 = vmatpush1.bf16.msra.mxu0 0
        %4401 = vmatprep.subr.bf16.mxu0 0
        %4402 = vmatpush1.bf16.msra.mxu0 0
        %4403 = vmatprep.subr.bf16.mxu0 0
        %4404 = vmatpush1.bf16.msra.mxu0 0
        %4405 = vmatprep.subr.bf16.mxu0 %v1900
        %4406 = vmatpush1.bf16.msra.mxu0 %v1897
        %4407 = vmatprep.subr.bf16.mxu0 %v1792
        %4408 = vmatpush1.bf16.msra.mxu0 %v1791
        %4409 = vmatprep.subr.bf16.mxu0 0
        %4410 = vmatpush2.bf16.msra.mxu0 0
        %4411 = vmatprep.subr.bf16.mxu0 0
        %4412 = vmatpush2.bf16.msra.mxu0 0
        %4413 = vmatprep.subr.bf16.mxu0 0
        %4414 = vmatpush2.bf16.msra.mxu0 0
        %4415 = vmatprep.subr.bf16.mxu0 0
        %4416 = vmatpush2.bf16.msra.mxu0 0
        %4417 = vmatprep.subr.bf16.mxu0 0
        %4418 = vmatpush2.bf16.msra.mxu0 0
        %4419 = vmatprep.subr.bf16.mxu0 0
        %4420 = vmatpush2.bf16.msra.mxu0 0
        %4421 = vmatprep.subr.bf16.mxu0 0
        %4422 = vmatpush2.bf16.msra.mxu0 0
        %4423 = vmatprep.subr.bf16.mxu0 0
        %4424 = vmatpush2.bf16.msra.mxu0 0
        %4425 = vmatprep.mubr.bf16.mxu0 0
        %4426 = vmatmul.mubr.bf16.gmra.mxu0 %v3579
        %v4427 = vpop.f32.mrf.mxu0
        %v4428 = vadd.f32 %v1620, %v4427
        %v4429 = vpop.f32.mrf.mxu0
        %v4430 = vadd.f32 %v1624, %v4429
        %v4431 = vpop.f32.mrf.mxu0
        %v4432 = vadd.f32 %v1620, %v4431
        %v4433 = vpop.f32.mrf.mxu0
        %v4434 = vadd.f32 %v1624, %v4433
        %4435 = vmatprep.mubr.bf16.mxu0 0
        %4436 = vmatmul.mubr.bf16.gmra.mxu0 %v3582
        %v4437 = vpop.f32.mrf.mxu0
        %v4438 = vadd.f32 %v1620, %v4437
        %v4439 = vpop.f32.mrf.mxu0
        %v4440 = vadd.f32 %v1624, %v4439
        %v4441 = vpop.f32.mrf.mxu0
        %v4442 = vadd.f32 %v1620, %v4441
        %v4443 = vpop.f32.mrf.mxu0
        %v4444 = vadd.f32 %v1624, %v4443
        %4445 = vmatprep.mubr.bf16.mxu0 0
        %4446 = vmatmul.mubr.bf16.gmra.mxu0 %v3585
        %v4447 = vpop.f32.mrf.mxu0
        %v4448 = vadd.f32 %v1620, %v4447
        %v4449 = vpop.f32.mrf.mxu0
        %v4450 = vadd.f32 %v1624, %v4449
        %v4451 = vpop.f32.mrf.mxu0
        %v4452 = vadd.f32 %v1620, %v4451
        %v4453 = vpop.f32.mrf.mxu0
        %v4454 = vadd.f32 %v1624, %v4453
        %4455 = vmatprep.mubr.bf16.mxu0 0
        %4456 = vmatmul.mubr.bf16.gmra.mxu0 %v3588
        %v4457 = vpop.f32.mrf.mxu0
        %v4458 = vadd.f32 %v1620, %v4457
        %v4459 = vpop.f32.mrf.mxu0
        %v4460 = vadd.f32 %v1624, %v4459
        %v4461 = vpop.f32.mrf.mxu0
        %v4462 = vadd.f32 %v1620, %v4461
        %v4463 = vpop.f32.mrf.mxu0
        %v4464 = vadd.f32 %v1624, %v4463
        %4465 = vmatprep.mubr.bf16.mxu0 0
        %4466 = vmatmul.mubr.bf16.gmra.mxu0 %v3591
        %v4467 = vpop.f32.mrf.mxu0
        %v4468 = vadd.f32 %v1620, %v4467
        %v4469 = vpop.f32.mrf.mxu0
        %v4470 = vadd.f32 %v1624, %v4469
        %v4471 = vpop.f32.mrf.mxu0
        %v4472 = vadd.f32 %v1620, %v4471
        %v4473 = vpop.f32.mrf.mxu0
        %v4474 = vadd.f32 %v1624, %v4473
        %4475 = vmatprep.mubr.bf16.mxu0 0
        %4476 = vmatmul.mubr.bf16.gmra.mxu0 %v3594
        %v4477 = vpop.f32.mrf.mxu0
        %v4478 = vadd.f32 %v1620, %v4477
        %v4479 = vpop.f32.mrf.mxu0
        %v4480 = vadd.f32 %v1624, %v4479
        %v4481 = vpop.f32.mrf.mxu0
        %v4482 = vadd.f32 %v1620, %v4481
        %v4483 = vpop.f32.mrf.mxu0
        %v4484 = vadd.f32 %v1624, %v4483
        %4485 = vmatprep.mubr.bf16.mxu0 0
        %4486 = vmatmul.mubr.bf16.gmra.mxu0 %v3597
        %v4487 = vpop.f32.mrf.mxu0
        %v4488 = vadd.f32 %v1620, %v4487
        %v4489 = vpop.f32.mrf.mxu0
        %v4490 = vadd.f32 %v1624, %v4489
        %v4491 = vpop.f32.mrf.mxu0
        %v4492 = vadd.f32 %v1620, %v4491
        %v4493 = vpop.f32.mrf.mxu0
        %v4494 = vadd.f32 %v1624, %v4493
        %4495 = vmatprep.mubr.bf16.mxu0 0
        %4496 = vmatmul.mubr.bf16.gmra.mxu0 %v3600
        %v4497 = vpop.f32.mrf.mxu0
        %v4498 = vadd.f32 %v1620, %v4497
        %v4499 = vpop.f32.mrf.mxu0
        %v4500 = vadd.f32 %v1624, %v4499
        %v4501 = vpop.f32.mrf.mxu0
        %v4502 = vadd.f32 %v1620, %v4501
        %v4503 = vpop.f32.mrf.mxu0
        %v4504 = vadd.f32 %v1624, %v4503
        %4505 = vdwg.mxu0
        %v4506 = vmax.f32 %v3637, 0.0
        %v4507 = vmax.f32 %v3639, 0.0
        %v4508 = vmax.f32 %v3750, 0.0
        %v4509 = vmax.f32 %v3752, 0.0
        %v4510 = vmax.f32 %v3863, 0.0
        %v4511 = vmax.f32 %v3865, 0.0
        %v4512 = vmax.f32 %v3976, 0.0
        %v4513 = vmax.f32 %v3978, 0.0
        %v4514 = vmax.f32 %v4089, 0.0
        %v4515 = vmax.f32 %v4091, 0.0
        %v4516 = vmax.f32 %v4202, 0.0
        %v4517 = vmax.f32 %v4204, 0.0
        %v4518 = vmax.f32 %v4315, 0.0
        %v4519 = vmax.f32 %v4317, 0.0
        %v4520 = vmax.f32 %v4428, 0.0
        %v4521 = vmax.f32 %v4430, 0.0
        %v4522 = vmax.f32 %v3641, 0.0
        %v4523 = vmax.f32 %v3643, 0.0
        %v4524 = vmax.f32 %v3754, 0.0
        %v4525 = vmax.f32 %v3756, 0.0
        %v4526 = vmax.f32 %v3867, 0.0
        %v4527 = vmax.f32 %v3869, 0.0
        %v4528 = vmax.f32 %v3980, 0.0
        %v4529 = vmax.f32 %v3982, 0.0
        %v4530 = vmax.f32 %v4093, 0.0
        %v4531 = vmax.f32 %v4095, 0.0
        %v4532 = vmax.f32 %v4206, 0.0
        %v4533 = vmax.f32 %v4208, 0.0
        %v4534 = vmax.f32 %v4319, 0.0
        %v4535 = vmax.f32 %v4321, 0.0
        %v4536 = vmax.f32 %v4432, 0.0
        %v4537 = vmax.f32 %v4434, 0.0
        %v4538 = vmax.f32 %v3647, 0.0
        %v4539 = vmax.f32 %v3649, 0.0
        %v4540 = vmax.f32 %v3760, 0.0
        %v4541 = vmax.f32 %v3762, 0.0
        %v4542 = vmax.f32 %v3873, 0.0
        %v4543 = vmax.f32 %v3875, 0.0
        %v4544 = vmax.f32 %v3986, 0.0
        %v4545 = vmax.f32 %v3988, 0.0
        %v4546 = vmax.f32 %v4099, 0.0
        %v4547 = vmax.f32 %v4101, 0.0
        %v4548 = vmax.f32 %v4212, 0.0
        %v4549 = vmax.f32 %v4214, 0.0
        %v4550 = vmax.f32 %v4325, 0.0
        %v4551 = vmax.f32 %v4327, 0.0
        %v4552 = vmax.f32 %v4438, 0.0
        %v4553 = vmax.f32 %v4440, 0.0
        %v4554 = vmax.f32 %v3651, 0.0
        %v4555 = vmax.f32 %v3653, 0.0
        %v4556 = vmax.f32 %v3764, 0.0
        %v4557 = vmax.f32 %v3766, 0.0
        %v4558 = vmax.f32 %v3877, 0.0
        %v4559 = vmax.f32 %v3879, 0.0
        %v4560 = vmax.f32 %v3990, 0.0
        %v4561 = vmax.f32 %v3992, 0.0
        %v4562 = vmax.f32 %v4103, 0.0
        %v4563 = vmax.f32 %v4105, 0.0
        %v4564 = vmax.f32 %v4216, 0.0
        %v4565 = vmax.f32 %v4218, 0.0
        %v4566 = vmax.f32 %v4329, 0.0
        %v4567 = vmax.f32 %v4331, 0.0
        %v4568 = vmax.f32 %v4442, 0.0
        %v4569 = vmax.f32 %v4444, 0.0
        %v4570 = vmax.f32 %v3657, 0.0
        %v4571 = vmax.f32 %v3659, 0.0
        %v4572 = vmax.f32 %v3770, 0.0
        %v4573 = vmax.f32 %v3772, 0.0
        %v4574 = vmax.f32 %v3883, 0.0
        %v4575 = vmax.f32 %v3885, 0.0
        %v4576 = vmax.f32 %v3996, 0.0
        %v4577 = vmax.f32 %v3998, 0.0
        %v4578 = vmax.f32 %v4109, 0.0
        %v4579 = vmax.f32 %v4111, 0.0
        %v4580 = vmax.f32 %v4222, 0.0
        %v4581 = vmax.f32 %v4224, 0.0
        %v4582 = vmax.f32 %v4335, 0.0
        %v4583 = vmax.f32 %v4337, 0.0
        %v4584 = vmax.f32 %v4448, 0.0
        %v4585 = vmax.f32 %v4450, 0.0
        %v4586 = vmax.f32 %v3661, 0.0
        %v4587 = vmax.f32 %v3663, 0.0
        %v4588 = vmax.f32 %v3774, 0.0
        %v4589 = vmax.f32 %v3776, 0.0
        %v4590 = vmax.f32 %v3887, 0.0
        %v4591 = vmax.f32 %v3889, 0.0
        %v4592 = vmax.f32 %v4000, 0.0
        %v4593 = vmax.f32 %v4002, 0.0
        %v4594 = vmax.f32 %v4113, 0.0
        %v4595 = vmax.f32 %v4115, 0.0
        %v4596 = vmax.f32 %v4226, 0.0
        %v4597 = vmax.f32 %v4228, 0.0
        %v4598 = vmax.f32 %v4339, 0.0
        %v4599 = vmax.f32 %v4341, 0.0
        %v4600 = vmax.f32 %v4452, 0.0
        %v4601 = vmax.f32 %v4454, 0.0
        %v4602 = vmax.f32 %v3667, 0.0
        %v4603 = vmax.f32 %v3669, 0.0
        %v4604 = vmax.f32 %v3780, 0.0
        %v4605 = vmax.f32 %v3782, 0.0
        %v4606 = vmax.f32 %v3893, 0.0
        %v4607 = vmax.f32 %v3895, 0.0
        %v4608 = vmax.f32 %v4006, 0.0
        %v4609 = vmax.f32 %v4008, 0.0
        %v4610 = vmax.f32 %v4119, 0.0
        %v4611 = vmax.f32 %v4121, 0.0
        %v4612 = vmax.f32 %v4232, 0.0
        %v4613 = vmax.f32 %v4234, 0.0
        %v4614 = vmax.f32 %v4345, 0.0
        %v4615 = vmax.f32 %v4347, 0.0
        %v4616 = vmax.f32 %v4458, 0.0
        %v4617 = vmax.f32 %v4460, 0.0
        %v4618 = vmax.f32 %v3671, 0.0
        %v4619 = vmax.f32 %v3673, 0.0
        %v4620 = vmax.f32 %v3784, 0.0
        %v4621 = vmax.f32 %v3786, 0.0
        %v4622 = vmax.f32 %v3897, 0.0
        %v4623 = vmax.f32 %v3899, 0.0
        %v4624 = vmax.f32 %v4010, 0.0
        %v4625 = vmax.f32 %v4012, 0.0
        %v4626 = vmax.f32 %v4123, 0.0
        %v4627 = vmax.f32 %v4125, 0.0
        %v4628 = vmax.f32 %v4236, 0.0
        %v4629 = vmax.f32 %v4238, 0.0
        %v4630 = vmax.f32 %v4349, 0.0
        %v4631 = vmax.f32 %v4351, 0.0
        %v4632 = vmax.f32 %v4462, 0.0
        %v4633 = vmax.f32 %v4464, 0.0
        %v4634 = vmax.f32 %v3677, 0.0
        %v4635 = vmax.f32 %v3679, 0.0
        %v4636 = vmax.f32 %v3790, 0.0
        %v4637 = vmax.f32 %v3792, 0.0
        %v4638 = vmax.f32 %v3903, 0.0
        %v4639 = vmax.f32 %v3905, 0.0
        %v4640 = vmax.f32 %v4016, 0.0
        %v4641 = vmax.f32 %v4018, 0.0
        %v4642 = vmax.f32 %v4129, 0.0
        %v4643 = vmax.f32 %v4131, 0.0
        %v4644 = vmax.f32 %v4242, 0.0
        %v4645 = vmax.f32 %v4244, 0.0
        %v4646 = vmax.f32 %v4355, 0.0
        %v4647 = vmax.f32 %v4357, 0.0
        %v4648 = vmax.f32 %v4468, 0.0
        %v4649 = vmax.f32 %v4470, 0.0
        %v4650 = vmax.f32 %v3681, 0.0
        %v4651 = vmax.f32 %v3683, 0.0
        %v4652 = vmax.f32 %v3794, 0.0
        %v4653 = vmax.f32 %v3796, 0.0
        %v4654 = vmax.f32 %v3907, 0.0
        %v4655 = vmax.f32 %v3909, 0.0
        %v4656 = vmax.f32 %v4020, 0.0
        %v4657 = vmax.f32 %v4022, 0.0
        %v4658 = vmax.f32 %v4133, 0.0
        %v4659 = vmax.f32 %v4135, 0.0
        %v4660 = vmax.f32 %v4246, 0.0
        %v4661 = vmax.f32 %v4248, 0.0
        %v4662 = vmax.f32 %v4359, 0.0
        %v4663 = vmax.f32 %v4361, 0.0
        %v4664 = vmax.f32 %v4472, 0.0
        %v4665 = vmax.f32 %v4474, 0.0
        %v4666 = vmax.f32 %v3687, 0.0
        %v4667 = vmax.f32 %v3689, 0.0
        %v4668 = vmax.f32 %v3800, 0.0
        %v4669 = vmax.f32 %v3802, 0.0
        %v4670 = vmax.f32 %v3913, 0.0
        %v4671 = vmax.f32 %v3915, 0.0
        %v4672 = vmax.f32 %v4026, 0.0
        %v4673 = vmax.f32 %v4028, 0.0
        %v4674 = vmax.f32 %v4139, 0.0
        %v4675 = vmax.f32 %v4141, 0.0
        %v4676 = vmax.f32 %v4252, 0.0
        %v4677 = vmax.f32 %v4254, 0.0
        %v4678 = vmax.f32 %v4365, 0.0
        %v4679 = vmax.f32 %v4367, 0.0
        %v4680 = vmax.f32 %v4478, 0.0
        %v4681 = vmax.f32 %v4480, 0.0
        %v4682 = vmax.f32 %v3691, 0.0
        %v4683 = vmax.f32 %v3693, 0.0
        %v4684 = vmax.f32 %v3804, 0.0
        %v4685 = vmax.f32 %v3806, 0.0
        %v4686 = vmax.f32 %v3917, 0.0
        %v4687 = vmax.f32 %v3919, 0.0
        %v4688 = vmax.f32 %v4030, 0.0
        %v4689 = vmax.f32 %v4032, 0.0
        %v4690 = vmax.f32 %v4143, 0.0
        %v4691 = vmax.f32 %v4145, 0.0
        %v4692 = vmax.f32 %v4256, 0.0
        %v4693 = vmax.f32 %v4258, 0.0
        %v4694 = vmax.f32 %v4369, 0.0
        %v4695 = vmax.f32 %v4371, 0.0
        %v4696 = vmax.f32 %v4482, 0.0
        %v4697 = vmax.f32 %v4484, 0.0
        %v4698 = vmax.f32 %v3697, 0.0
        %v4699 = vmax.f32 %v3699, 0.0
        %v4700 = vmax.f32 %v3810, 0.0
        %v4701 = vmax.f32 %v3812, 0.0
        %v4702 = vmax.f32 %v3923, 0.0
        %v4703 = vmax.f32 %v3925, 0.0
        %v4704 = vmax.f32 %v4036, 0.0
        %v4705 = vmax.f32 %v4038, 0.0
        %v4706 = vmax.f32 %v4149, 0.0
        %v4707 = vmax.f32 %v4151, 0.0
        %v4708 = vmax.f32 %v4262, 0.0
        %v4709 = vmax.f32 %v4264, 0.0
        %v4710 = vmax.f32 %v4375, 0.0
        %v4711 = vmax.f32 %v4377, 0.0
        %v4712 = vmax.f32 %v4488, 0.0
        %v4713 = vmax.f32 %v4490, 0.0
        %v4714 = vmax.f32 %v3701, 0.0
        %v4715 = vmax.f32 %v3703, 0.0
        %v4716 = vmax.f32 %v3814, 0.0
        %v4717 = vmax.f32 %v3816, 0.0
        %v4718 = vmax.f32 %v3927, 0.0
        %v4719 = vmax.f32 %v3929, 0.0
        %v4720 = vmax.f32 %v4040, 0.0
        %v4721 = vmax.f32 %v4042, 0.0
        %v4722 = vmax.f32 %v4153, 0.0
        %v4723 = vmax.f32 %v4155, 0.0
        %v4724 = vmax.f32 %v4266, 0.0
        %v4725 = vmax.f32 %v4268, 0.0
        %v4726 = vmax.f32 %v4379, 0.0
        %v4727 = vmax.f32 %v4381, 0.0
        %v4728 = vmax.f32 %v4492, 0.0
        %v4729 = vmax.f32 %v4494, 0.0
        %v4730 = vmax.f32 %v3707, 0.0
        %v4731 = vmax.f32 %v3709, 0.0
        %v4732 = vmax.f32 %v3820, 0.0
        %v4733 = vmax.f32 %v3822, 0.0
        %v4734 = vmax.f32 %v3933, 0.0
        %v4735 = vmax.f32 %v3935, 0.0
        %v4736 = vmax.f32 %v4046, 0.0
        %v4737 = vmax.f32 %v4048, 0.0
        %v4738 = vmax.f32 %v4159, 0.0
        %v4739 = vmax.f32 %v4161, 0.0
        %v4740 = vmax.f32 %v4272, 0.0
        %v4741 = vmax.f32 %v4274, 0.0
        %v4742 = vmax.f32 %v4385, 0.0
        %v4743 = vmax.f32 %v4387, 0.0
        %v4744 = vmax.f32 %v4498, 0.0
        %v4745 = vmax.f32 %v4500, 0.0
        %v4746 = vmax.f32 %v3711, 0.0
        %v4747 = vmax.f32 %v3713, 0.0
        %v4748 = vmax.f32 %v3824, 0.0
        %v4749 = vmax.f32 %v3826, 0.0
        %v4750 = vmax.f32 %v3937, 0.0
        %v4751 = vmax.f32 %v3939, 0.0
        %v4752 = vmax.f32 %v4050, 0.0
        %v4753 = vmax.f32 %v4052, 0.0
        %v4754 = vmax.f32 %v4163, 0.0
        %v4755 = vmax.f32 %v4165, 0.0
        %v4756 = vmax.f32 %v4276, 0.0
        %v4757 = vmax.f32 %v4278, 0.0
        %v4758 = vmax.f32 %v4389, 0.0
        %v4759 = vmax.f32 %v4391, 0.0
        %v4760 = vmax.f32 %v4502, 0.0
        %v4761 = vmax.f32 %v4504, 0.0
        %s4762 = scalar_lea.vmem [#allocation2], 1
        %v4763 = vld [vmem:[%s4762] ss:$2 sm:$0xff]
        %s4764 = scalar_lea.vmem [#allocation2], 17
        %v4765 = vld [vmem:[%s4764] ss:$2 sm:$0xff]
        %v4766 = vadd.f32 %v4506, %v4522
        %v4767 = vadd.f32 %v4766, %v4538
        %v4768 = vadd.f32 %v4767, %v4554
        %v4769 = vadd.f32 %v4768, %v4570
        %v4770 = vadd.f32 %v4769, %v4586
        %v4771 = vadd.f32 %v4770, %v4602
        %v4772 = vadd.f32 %v4771, %v4618
        %v4773 = vadd.f32 %v4772, %v4634
        %v4774 = vadd.f32 %v4773, %v4650
        %v4775 = vadd.f32 %v4774, %v4666
        %v4776 = vadd.f32 %v4775, %v4682
        %v4777 = vadd.f32 %v4776, %v4698
        %v4778 = vadd.f32 %v4777, %v4714
        %v4779 = vadd.f32 %v4778, %v4730
        %v4780 = vadd.f32 %v4779, %v4746
        %v4781 = vrot.slane %v4780, 4
        %v4782 = vadd.f32 %v4780, %v4781
        %v4783 = vrot.slane %v4782, 2
        %v4784 = vadd.f32 %v4782, %v4783
        %v4785 = vrot.slane %v4784, 1
        %v4786 = vadd.f32 %v4784, %v4785
        %v4787 = vadd.f32 %v4507, %v4523
        %v4788 = vadd.f32 %v4787, %v4539
        %v4789 = vadd.f32 %v4788, %v4555
        %v4790 = vadd.f32 %v4789, %v4571
        %v4791 = vadd.f32 %v4790, %v4587
        %v4792 = vadd.f32 %v4791, %v4603
        %v4793 = vadd.f32 %v4792, %v4619
        %v4794 = vadd.f32 %v4793, %v4635
        %v4795 = vadd.f32 %v4794, %v4651
        %v4796 = vadd.f32 %v4795, %v4667
        %v4797 = vadd.f32 %v4796, %v4683
        %v4798 = vadd.f32 %v4797, %v4699
        %v4799 = vadd.f32 %v4798, %v4715
        %v4800 = vadd.f32 %v4799, %v4731
        %v4801 = vadd.f32 %v4800, %v4747
        %v4802 = vrot.slane %v4801, 4
        %v4803 = vadd.f32 %v4801, %v4802
        %v4804 = vrot.slane %v4803, 2
        %v4805 = vadd.f32 %v4803, %v4804
        %v4806 = vrot.slane %v4805, 1
        %v4807 = vadd.f32 %v4805, %v4806
        %v4808 = vadd.f32 %v4508, %v4524
        %v4809 = vadd.f32 %v4808, %v4540
        %v4810 = vadd.f32 %v4809, %v4556
        %v4811 = vadd.f32 %v4810, %v4572
        %v4812 = vadd.f32 %v4811, %v4588
        %v4813 = vadd.f32 %v4812, %v4604
        %v4814 = vadd.f32 %v4813, %v4620
        %v4815 = vadd.f32 %v4814, %v4636
        %v4816 = vadd.f32 %v4815, %v4652
        %v4817 = vadd.f32 %v4816, %v4668
        %v4818 = vadd.f32 %v4817, %v4684
        %v4819 = vadd.f32 %v4818, %v4700
        %v4820 = vadd.f32 %v4819, %v4716
        %v4821 = vadd.f32 %v4820, %v4732
        %v4822 = vadd.f32 %v4821, %v4748
        %v4823 = vrot.slane %v4822, 4
        %v4824 = vadd.f32 %v4822, %v4823
        %v4825 = vrot.slane %v4824, 2
        %v4826 = vadd.f32 %v4824, %v4825
        %v4827 = vrot.slane %v4826, 1
        %v4828 = vadd.f32 %v4826, %v4827
        %v4829 = vadd.f32 %v4509, %v4525
        %v4830 = vadd.f32 %v4829, %v4541
        %v4831 = vadd.f32 %v4830, %v4557
        %v4832 = vadd.f32 %v4831, %v4573
        %v4833 = vadd.f32 %v4832, %v4589
        %v4834 = vadd.f32 %v4833, %v4605
        %v4835 = vadd.f32 %v4834, %v4621
        %v4836 = vadd.f32 %v4835, %v4637
        %v4837 = vadd.f32 %v4836, %v4653
        %v4838 = vadd.f32 %v4837, %v4669
        %v4839 = vadd.f32 %v4838, %v4685
        %v4840 = vadd.f32 %v4839, %v4701
        %v4841 = vadd.f32 %v4840, %v4717
        %v4842 = vadd.f32 %v4841, %v4733
        %v4843 = vadd.f32 %v4842, %v4749
        %v4844 = vrot.slane %v4843, 4
        %v4845 = vadd.f32 %v4843, %v4844
        %v4846 = vrot.slane %v4845, 2
        %v4847 = vadd.f32 %v4845, %v4846
        %v4848 = vrot.slane %v4847, 1
        %v4849 = vadd.f32 %v4847, %v4848
        %v4850 = vadd.f32 %v4510, %v4526
        %v4851 = vadd.f32 %v4850, %v4542
        %v4852 = vadd.f32 %v4851, %v4558
        %v4853 = vadd.f32 %v4852, %v4574
        %v4854 = vadd.f32 %v4853, %v4590
        %v4855 = vadd.f32 %v4854, %v4606
        %v4856 = vadd.f32 %v4855, %v4622
        %v4857 = vadd.f32 %v4856, %v4638
        %v4858 = vadd.f32 %v4857, %v4654
        %v4859 = vadd.f32 %v4858, %v4670
        %v4860 = vadd.f32 %v4859, %v4686
        %v4861 = vadd.f32 %v4860, %v4702
        %v4862 = vadd.f32 %v4861, %v4718
        %v4863 = vadd.f32 %v4862, %v4734
        %v4864 = vadd.f32 %v4863, %v4750
        %v4865 = vrot.slane %v4864, 4
        %v4866 = vadd.f32 %v4864, %v4865
        %v4867 = vrot.slane %v4866, 2
        %v4868 = vadd.f32 %v4866, %v4867
        %v4869 = vrot.slane %v4868, 1
        %v4870 = vadd.f32 %v4868, %v4869
        %v4871 = vadd.f32 %v4511, %v4527
        %v4872 = vadd.f32 %v4871, %v4543
        %v4873 = vadd.f32 %v4872, %v4559
        %v4874 = vadd.f32 %v4873, %v4575
        %v4875 = vadd.f32 %v4874, %v4591
        %v4876 = vadd.f32 %v4875, %v4607
        %v4877 = vadd.f32 %v4876, %v4623
        %v4878 = vadd.f32 %v4877, %v4639
        %v4879 = vadd.f32 %v4878, %v4655
        %v4880 = vadd.f32 %v4879, %v4671
        %v4881 = vadd.f32 %v4880, %v4687
        %v4882 = vadd.f32 %v4881, %v4703
        %v4883 = vadd.f32 %v4882, %v4719
        %v4884 = vadd.f32 %v4883, %v4735
        %v4885 = vadd.f32 %v4884, %v4751
        %v4886 = vrot.slane %v4885, 4
        %v4887 = vadd.f32 %v4885, %v4886
        %v4888 = vrot.slane %v4887, 2
        %v4889 = vadd.f32 %v4887, %v4888
        %v4890 = vrot.slane %v4889, 1
        %v4891 = vadd.f32 %v4889, %v4890
        %v4892 = vadd.f32 %v4512, %v4528
        %v4893 = vadd.f32 %v4892, %v4544
        %v4894 = vadd.f32 %v4893, %v4560
        %v4895 = vadd.f32 %v4894, %v4576
        %v4896 = vadd.f32 %v4895, %v4592
        %v4897 = vadd.f32 %v4896, %v4608
        %v4898 = vadd.f32 %v4897, %v4624
        %v4899 = vadd.f32 %v4898, %v4640
        %v4900 = vadd.f32 %v4899, %v4656
        %v4901 = vadd.f32 %v4900, %v4672
        %v4902 = vadd.f32 %v4901, %v4688
        %v4903 = vadd.f32 %v4902, %v4704
        %v4904 = vadd.f32 %v4903, %v4720
        %v4905 = vadd.f32 %v4904, %v4736
        %v4906 = vadd.f32 %v4905, %v4752
        %v4907 = vrot.slane %v4906, 4
        %v4908 = vadd.f32 %v4906, %v4907
        %v4909 = vrot.slane %v4908, 2
        %v4910 = vadd.f32 %v4908, %v4909
        %v4911 = vrot.slane %v4910, 1
        %v4912 = vadd.f32 %v4910, %v4911
        %v4913 = vadd.f32 %v4513, %v4529
        %v4914 = vadd.f32 %v4913, %v4545
        %v4915 = vadd.f32 %v4914, %v4561
        %v4916 = vadd.f32 %v4915, %v4577
        %v4917 = vadd.f32 %v4916, %v4593
        %v4918 = vadd.f32 %v4917, %v4609
        %v4919 = vadd.f32 %v4918, %v4625
        %v4920 = vadd.f32 %v4919, %v4641
        %v4921 = vadd.f32 %v4920, %v4657
        %v4922 = vadd.f32 %v4921, %v4673
        %v4923 = vadd.f32 %v4922, %v4689
        %v4924 = vadd.f32 %v4923, %v4705
        %v4925 = vadd.f32 %v4924, %v4721
        %v4926 = vadd.f32 %v4925, %v4737
        %v4927 = vadd.f32 %v4926, %v4753
        %v4928 = vrot.slane %v4927, 4
        %v4929 = vadd.f32 %v4927, %v4928
        %v4930 = vrot.slane %v4929, 2
        %v4931 = vadd.f32 %v4929, %v4930
        %v4932 = vrot.slane %v4931, 1
        %v4933 = vadd.f32 %v4931, %v4932
        %v4934 = vadd.f32 %v4514, %v4530
        %v4935 = vadd.f32 %v4934, %v4546
        %v4936 = vadd.f32 %v4935, %v4562
        %v4937 = vadd.f32 %v4936, %v4578
        %v4938 = vadd.f32 %v4937, %v4594
        %v4939 = vadd.f32 %v4938, %v4610
        %v4940 = vadd.f32 %v4939, %v4626
        %v4941 = vadd.f32 %v4940, %v4642
        %v4942 = vadd.f32 %v4941, %v4658
        %v4943 = vadd.f32 %v4942, %v4674
        %v4944 = vadd.f32 %v4943, %v4690
        %v4945 = vadd.f32 %v4944, %v4706
        %v4946 = vadd.f32 %v4945, %v4722
        %v4947 = vadd.f32 %v4946, %v4738
        %v4948 = vadd.f32 %v4947, %v4754
        %v4949 = vrot.slane %v4948, 4
        %v4950 = vadd.f32 %v4948, %v4949
        %v4951 = vrot.slane %v4950, 2
        %v4952 = vadd.f32 %v4950, %v4951
        %v4953 = vrot.slane %v4952, 1
        %v4954 = vadd.f32 %v4952, %v4953
        %v4955 = vadd.f32 %v4515, %v4531
        %v4956 = vadd.f32 %v4955, %v4547
        %v4957 = vadd.f32 %v4956, %v4563
        %v4958 = vadd.f32 %v4957, %v4579
        %v4959 = vadd.f32 %v4958, %v4595
        %v4960 = vadd.f32 %v4959, %v4611
        %v4961 = vadd.f32 %v4960, %v4627
        %v4962 = vadd.f32 %v4961, %v4643
        %v4963 = vadd.f32 %v4962, %v4659
        %v4964 = vadd.f32 %v4963, %v4675
        %v4965 = vadd.f32 %v4964, %v4691
        %v4966 = vadd.f32 %v4965, %v4707
        %v4967 = vadd.f32 %v4966, %v4723
        %v4968 = vadd.f32 %v4967, %v4739
        %v4969 = vadd.f32 %v4968, %v4755
        %v4970 = vrot.slane %v4969, 4
        %v4971 = vadd.f32 %v4969, %v4970
        %v4972 = vrot.slane %v4971, 2
        %v4973 = vadd.f32 %v4971, %v4972
        %v4974 = vrot.slane %v4973, 1
        %v4975 = vadd.f32 %v4973, %v4974
        %v4976 = vadd.f32 %v4516, %v4532
        %v4977 = vadd.f32 %v4976, %v4548
        %v4978 = vadd.f32 %v4977, %v4564
        %v4979 = vadd.f32 %v4978, %v4580
        %v4980 = vadd.f32 %v4979, %v4596
        %v4981 = vadd.f32 %v4980, %v4612
        %v4982 = vadd.f32 %v4981, %v4628
        %v4983 = vadd.f32 %v4982, %v4644
        %v4984 = vadd.f32 %v4983, %v4660
        %v4985 = vadd.f32 %v4984, %v4676
        %v4986 = vadd.f32 %v4985, %v4692
        %v4987 = vadd.f32 %v4986, %v4708
        %v4988 = vadd.f32 %v4987, %v4724
        %v4989 = vadd.f32 %v4988, %v4740
        %v4990 = vadd.f32 %v4989, %v4756
        %v4991 = vrot.slane %v4990, 4
        %v4992 = vadd.f32 %v4990, %v4991
        %v4993 = vrot.slane %v4992, 2
        %v4994 = vadd.f32 %v4992, %v4993
        %v4995 = vrot.slane %v4994, 1
        %v4996 = vadd.f32 %v4994, %v4995
        %v4997 = vadd.f32 %v4517, %v4533
        %v4998 = vadd.f32 %v4997, %v4549
        %v4999 = vadd.f32 %v4998, %v4565
        %v5000 = vadd.f32 %v4999, %v4581
        %v5001 = vadd.f32 %v5000, %v4597
        %v5002 = vadd.f32 %v5001, %v4613
        %v5003 = vadd.f32 %v5002, %v4629
        %v5004 = vadd.f32 %v5003, %v4645
        %v5005 = vadd.f32 %v5004, %v4661
        %v5006 = vadd.f32 %v5005, %v4677
        %v5007 = vadd.f32 %v5006, %v4693
        %v5008 = vadd.f32 %v5007, %v4709
        %v5009 = vadd.f32 %v5008, %v4725
        %v5010 = vadd.f32 %v5009, %v4741
        %v5011 = vadd.f32 %v5010, %v4757
        %v5012 = vrot.slane %v5011, 4
        %v5013 = vadd.f32 %v5011, %v5012
        %v5014 = vrot.slane %v5013, 2
        %v5015 = vadd.f32 %v5013, %v5014
        %v5016 = vrot.slane %v5015, 1
        %v5017 = vadd.f32 %v5015, %v5016
        %v5018 = vadd.f32 %v4518, %v4534
        %v5019 = vadd.f32 %v5018, %v4550
        %v5020 = vadd.f32 %v5019, %v4566
        %v5021 = vadd.f32 %v5020, %v4582
        %v5022 = vadd.f32 %v5021, %v4598
        %v5023 = vadd.f32 %v5022, %v4614
        %v5024 = vadd.f32 %v5023, %v4630
        %v5025 = vadd.f32 %v5024, %v4646
        %v5026 = vadd.f32 %v5025, %v4662
        %v5027 = vadd.f32 %v5026, %v4678
        %v5028 = vadd.f32 %v5027, %v4694
        %v5029 = vadd.f32 %v5028, %v4710
        %v5030 = vadd.f32 %v5029, %v4726
        %v5031 = vadd.f32 %v5030, %v4742
        %v5032 = vadd.f32 %v5031, %v4758
        %v5033 = vrot.slane %v5032, 4
        %v5034 = vadd.f32 %v5032, %v5033
        %v5035 = vrot.slane %v5034, 2
        %v5036 = vadd.f32 %v5034, %v5035
        %v5037 = vrot.slane %v5036, 1
        %v5038 = vadd.f32 %v5036, %v5037
        %v5039 = vadd.f32 %v4519, %v4535
        %v5040 = vadd.f32 %v5039, %v4551
        %v5041 = vadd.f32 %v5040, %v4567
        %v5042 = vadd.f32 %v5041, %v4583
        %v5043 = vadd.f32 %v5042, %v4599
        %v5044 = vadd.f32 %v5043, %v4615
        %v5045 = vadd.f32 %v5044, %v4631
        %v5046 = vadd.f32 %v5045, %v4647
        %v5047 = vadd.f32 %v5046, %v4663
        %v5048 = vadd.f32 %v5047, %v4679
        %v5049 = vadd.f32 %v5048, %v4695
        %v5050 = vadd.f32 %v5049, %v4711
        %v5051 = vadd.f32 %v5050, %v4727
        %v5052 = vadd.f32 %v5051, %v4743
        %v5053 = vadd.f32 %v5052, %v4759
        %v5054 = vrot.slane %v5053, 4
        %v5055 = vadd.f32 %v5053, %v5054
        %v5056 = vrot.slane %v5055, 2
        %v5057 = vadd.f32 %v5055, %v5056
        %v5058 = vrot.slane %v5057, 1
        %v5059 = vadd.f32 %v5057, %v5058
        %v5060 = vadd.f32 %v4520, %v4536
        %v5061 = vadd.f32 %v5060, %v4552
        %v5062 = vadd.f32 %v5061, %v4568
        %v5063 = vadd.f32 %v5062, %v4584
        %v5064 = vadd.f32 %v5063, %v4600
        %v5065 = vadd.f32 %v5064, %v4616
        %v5066 = vadd.f32 %v5065, %v4632
        %v5067 = vadd.f32 %v5066, %v4648
        %v5068 = vadd.f32 %v5067, %v4664
        %v5069 = vadd.f32 %v5068, %v4680
        %v5070 = vadd.f32 %v5069, %v4696
        %v5071 = vadd.f32 %v5070, %v4712
        %v5072 = vadd.f32 %v5071, %v4728
        %v5073 = vadd.f32 %v5072, %v4744
        %v5074 = vadd.f32 %v5073, %v4760
        %v5075 = vrot.slane %v5074, 4
        %v5076 = vadd.f32 %v5074, %v5075
        %v5077 = vrot.slane %v5076, 2
        %v5078 = vadd.f32 %v5076, %v5077
        %v5079 = vrot.slane %v5078, 1
        %v5080 = vadd.f32 %v5078, %v5079
        %v5081 = vadd.f32 %v4521, %v4537
        %v5082 = vadd.f32 %v5081, %v4553
        %v5083 = vadd.f32 %v5082, %v4569
        %v5084 = vadd.f32 %v5083, %v4585
        %v5085 = vadd.f32 %v5084, %v4601
        %v5086 = vadd.f32 %v5085, %v4617
        %v5087 = vadd.f32 %v5086, %v4633
        %v5088 = vadd.f32 %v5087, %v4649
        %v5089 = vadd.f32 %v5088, %v4665
        %v5090 = vadd.f32 %v5089, %v4681
        %v5091 = vadd.f32 %v5090, %v4697
        %v5092 = vadd.f32 %v5091, %v4713
        %v5093 = vadd.f32 %v5092, %v4729
        %v5094 = vadd.f32 %v5093, %v4745
        %v5095 = vadd.f32 %v5094, %v4761
        %v5096 = vrot.slane %v5095, 4
        %v5097 = vadd.f32 %v5095, %v5096
        %v5098 = vrot.slane %v5097, 2
        %v5099 = vadd.f32 %v5097, %v5098
        %v5100 = vrot.slane %v5099, 1
        %v5101 = vadd.f32 %v5099, %v5100
        %v5118 = vcombine.low %v4786, %v4807
        %v5119 = vcombine.low %v4828, %v4849
        %v5120 = vcombine.low %v4870, %v4891
        %v5121 = vcombine.low %v4912, %v4933
        %v5123 = vunpack.c.l.s4 1966171168
        %v5124 = vunpack.c.0.s8 %v5123
        %v5125 = vlaneseq
        %v5126 = vshrl.u32 %v5125, 7
        %v5127 = vsub.s32 %v5124, %v5126
        %v5128 = vrot.slane %v5118, %v5127
        %v5130 = vunpack.c.l.s4 1966171168
        %v5131 = vunpack.c.0.s8 %v5130
        %v5132 = vlaneseq
        %v5133 = vshrl.u32 %v5132, 7
        %v5134 = vsub.s32 %v5131, %v5133
        %v5135 = vrot.slane %v5119, %v5134
        %v5137 = vunpack.c.l.s4 1966171168
        %v5138 = vunpack.c.0.s8 %v5137
        %v5139 = vlaneseq
        %v5140 = vshrl.u32 %v5139, 7
        %v5141 = vsub.s32 %v5138, %v5140
        %v5142 = vrot.slane %v5120, %v5141
        %v5144 = vunpack.c.l.s4 1966171168
        %v5145 = vunpack.c.0.s8 %v5144
        %v5146 = vlaneseq
        %v5147 = vshrl.u32 %v5146, 7
        %v5148 = vsub.s32 %v5145, %v5147
        %v5149 = vrot.slane %v5121, %v5148
        %v5150 = vcombine.low %v5128, %v5135
        %v5151 = vcombine.low %v5142, %v5149
        %v5153 = vunpack.c.l.s4 1966171168
        %v5154 = vunpack.c.0.s8 %v5153
        %v5155 = vlaneseq
        %v5156 = vshrl.u32 %v5155, 7
        %v5157 = vsub.s32 %v5154, %v5156
        %v5158 = vrot.slane %v5150, %v5157
        %v5160 = vunpack.c.l.s4 1966171168
        %v5161 = vunpack.c.0.s8 %v5160
        %v5162 = vlaneseq
        %v5163 = vshrl.u32 %v5162, 7
        %v5164 = vsub.s32 %v5161, %v5163
        %v5165 = vrot.slane %v5151, %v5164
        %v5166 = vcombine.low %v5158, %v5165
        %v5167 = vcombine.low %v4954, %v4975
        %v5168 = vcombine.low %v4996, %v5017
        %v5169 = vcombine.low %v5038, %v5059
        %v5170 = vcombine.low %v5080, %v5101
        %v5172 = vunpack.c.l.s4 1966171168
        %v5173 = vunpack.c.0.s8 %v5172
        %v5174 = vlaneseq
        %v5175 = vshrl.u32 %v5174, 7
        %v5176 = vsub.s32 %v5173, %v5175
        %v5177 = vrot.slane %v5167, %v5176
        %v5179 = vunpack.c.l.s4 1966171168
        %v5180 = vunpack.c.0.s8 %v5179
        %v5181 = vlaneseq
        %v5182 = vshrl.u32 %v5181, 7
        %v5183 = vsub.s32 %v5180, %v5182
        %v5184 = vrot.slane %v5168, %v5183
        %v5186 = vunpack.c.l.s4 1966171168
        %v5187 = vunpack.c.0.s8 %v5186
        %v5188 = vlaneseq
        %v5189 = vshrl.u32 %v5188, 7
        %v5190 = vsub.s32 %v5187, %v5189
        %v5191 = vrot.slane %v5169, %v5190
        %v5193 = vunpack.c.l.s4 1966171168
        %v5194 = vunpack.c.0.s8 %v5193
        %v5195 = vlaneseq
        %v5196 = vshrl.u32 %v5195, 7
        %v5197 = vsub.s32 %v5194, %v5196
        %v5198 = vrot.slane %v5170, %v5197
        %v5199 = vcombine.low %v5177, %v5184
        %v5200 = vcombine.low %v5191, %v5198
        %v5202 = vunpack.c.l.s4 1966171168
        %v5203 = vunpack.c.0.s8 %v5202
        %v5204 = vlaneseq
        %v5205 = vshrl.u32 %v5204, 7
        %v5206 = vsub.s32 %v5203, %v5205
        %v5207 = vrot.slane %v5199, %v5206
        %v5209 = vunpack.c.l.s4 1966171168
        %v5210 = vunpack.c.0.s8 %v5209
        %v5211 = vlaneseq
        %v5212 = vshrl.u32 %v5211, 7
        %v5213 = vsub.s32 %v5210, %v5212
        %v5214 = vrot.slane %v5200, %v5213
        %v5215 = vcombine.low %v5207, %v5214
        %v5218 = vadd.f32 %v4763, %v5166
        %v5219 = vadd.f32 %v4765, %v5215
        %5220 = vst [vmem:[%s4762] ss:$2 sm:$0xff] %v5218
        %5221 = vst [vmem:[%s4764] ss:$2 sm:$0xff] %v5219
        %p5222 = scmp.eq.s32.totalorder %s20, 1
        // Predicated region
        $region128: #{fishnet_forward.1} parent=84 // pred_check
          %p5223 = pneg %p5222
        $region129: #{fishnet_forward.1} parent=84 // pred_check_branch
          %5225 = sbr.rel (%p5223) target = $region131
        $region130: #{fishnet_forward.1} parent=84 // pred_region
          %s5226 = smul.u32 4, 256
          %s5227 = smul.u32 %s5226, 4
          %s5228 = sshll.u32 %s5227, 4
          %5229 = dma.done [#allocation4], %s5228
          %v5230 = vld [vmem:[#allocation2] sm:$0xff]
          %v5231 = vld [vmem:[#allocation2 + $0x8] sm:$0xff]
          %v5232 = vld [vmem:[#allocation2 + $0x10] sm:$0xff]
          %v5233 = vld [vmem:[#allocation2 + $0x18] sm:$0xff]
          %v5234 = vmul.f32 %v5230, 0.00390625
          %v5235 = vmul.f32 %v5231, 0.00390625
          %v5236 = vmul.f32 %v5232, 0.00390625
          %v5237 = vmul.f32 %v5233, 0.00390625
          %v5242 = vcombine.high %v5234, %v5234
          %v5244 = vunpack.c.l.s4 1983009808
          %v5245 = vunpack.c.0.s8 %v5244
          %v5246 = vlaneseq
          %v5247 = vshrl.u32 %v5246, 7
          %v5248 = vsub.s32 %v5245, %v5247
          %v5249 = vrot.slane %v5234, %v5248
          %v5251 = vunpack.c.l.s4 1983009808
          %v5252 = vunpack.c.0.s8 %v5251
          %v5253 = vlaneseq
          %v5254 = vshrl.u32 %v5253, 7
          %v5255 = vsub.s32 %v5252, %v5254
          %v5256 = vrot.slane %v5242, %v5255
          %v5257 = vcombine.high %v5249, %v5249
          %v5258 = vcombine.high %v5256, %v5256
          %v5259 = vcombine.high %v5235, %v5235
          %v5261 = vunpack.c.l.s4 1983009808
          %v5262 = vunpack.c.0.s8 %v5261
          %v5263 = vlaneseq
          %v5264 = vshrl.u32 %v5263, 7
          %v5265 = vsub.s32 %v5262, %v5264
          %v5266 = vrot.slane %v5235, %v5265
          %v5268 = vunpack.c.l.s4 1983009808
          %v5269 = vunpack.c.0.s8 %v5268
          %v5270 = vlaneseq
          %v5271 = vshrl.u32 %v5270, 7
          %v5272 = vsub.s32 %v5269, %v5271
          %v5273 = vrot.slane %v5259, %v5272
          %v5274 = vcombine.high %v5266, %v5266
          %v5275 = vcombine.high %v5273, %v5273
          %v5276 = vcombine.high %v5236, %v5236
          %v5278 = vunpack.c.l.s4 1983009808
          %v5279 = vunpack.c.0.s8 %v5278
          %v5280 = vlaneseq
          %v5281 = vshrl.u32 %v5280, 7
          %v5282 = vsub.s32 %v5279, %v5281
          %v5283 = vrot.slane %v5236, %v5282
          %v5285 = vunpack.c.l.s4 1983009808
          %v5286 = vunpack.c.0.s8 %v5285
          %v5287 = vlaneseq
          %v5288 = vshrl.u32 %v5287, 7
          %v5289 = vsub.s32 %v5286, %v5288
          %v5290 = vrot.slane %v5276, %v5289
          %v5291 = vcombine.high %v5283, %v5283
          %v5292 = vcombine.high %v5290, %v5290
          %v5293 = vcombine.high %v5237, %v5237
          %v5295 = vunpack.c.l.s4 1983009808
          %v5296 = vunpack.c.0.s8 %v5295
          %v5297 = vlaneseq
          %v5298 = vshrl.u32 %v5297, 7
          %v5299 = vsub.s32 %v5296, %v5298
          %v5300 = vrot.slane %v5237, %v5299
          %v5302 = vunpack.c.l.s4 1983009808
          %v5303 = vunpack.c.0.s8 %v5302
          %v5304 = vlaneseq
          %v5305 = vshrl.u32 %v5304, 7
          %v5306 = vsub.s32 %v5303, %v5305
          %v5307 = vrot.slane %v5293, %v5306
          %v5308 = vcombine.high %v5300, %v5300
          %v5309 = vcombine.high %v5307, %v5307
          %v5326 = vpack.c.bf16 %v5249, %v5249
          %v5327 = vpack.c.bf16 %v5257, %v5257
          %v5328 = vpack.c.bf16 %v5256, %v5256
          %v5329 = vpack.c.bf16 %v5258, %v5258
          %v5330 = vpack.c.bf16 %v5266, %v5266
          %v5331 = vpack.c.bf16 %v5274, %v5274
          %v5332 = vpack.c.bf16 %v5273, %v5273
          %v5333 = vpack.c.bf16 %v5275, %v5275
          %v5334 = vpack.c.bf16 %v5283, %v5283
          %v5335 = vpack.c.bf16 %v5291, %v5291
          %v5336 = vpack.c.bf16 %v5290, %v5290
          %v5337 = vpack.c.bf16 %v5292, %v5292
          %v5338 = vpack.c.bf16 %v5300, %v5300
          %v5339 = vpack.c.bf16 %v5308, %v5308
          %v5340 = vpack.c.bf16 %v5307, %v5307
          %v5341 = vpack.c.bf16 %v5309, %v5309
          %v5342 = vld [vmem:[#allocation3] sm:$0xff]
          %v5343 = vld [vmem:[#allocation3 + $0x8] sm:$0xff]
          %v5344 = vld [vmem:[#allocation3 + $0x10] sm:$0xff]
          %v5345 = vld [vmem:[#allocation3 + $0x18] sm:$0xff]
          %v5346 = vld [vmem:[#allocation3 + $0x20] sm:$0xff]
          %v5347 = vld [vmem:[#allocation3 + $0x28] sm:$0xff]
          %v5348 = vld [vmem:[#allocation3 + $0x30] sm:$0xff]
          %v5349 = vld [vmem:[#allocation3 + $0x38] sm:$0xff]
          %v5350 = vld [vmem:[#allocation3 + $0x40] sm:$0xff]
          %v5351 = vld [vmem:[#allocation3 + $0x48] sm:$0xff]
          %v5352 = vld [vmem:[#allocation3 + $0x50] sm:$0xff]
          %v5353 = vld [vmem:[#allocation3 + $0x58] sm:$0xff]
          %v5354 = vld [vmem:[#allocation3 + $0x60] sm:$0xff]
          %v5355 = vld [vmem:[#allocation3 + $0x68] sm:$0xff]
          %v5356 = vld [vmem:[#allocation3 + $0x70] sm:$0xff]
          %v5357 = vld [vmem:[#allocation3 + $0x78] sm:$0xff]
          %v5358 = vld [vmem:[#allocation3 + $0x80] sm:$0xff]
          %v5359 = vld [vmem:[#allocation3 + $0x88] sm:$0xff]
          %v5360 = vld [vmem:[#allocation3 + $0x90] sm:$0xff]
          %v5361 = vld [vmem:[#allocation3 + $0x98] sm:$0xff]
          %v5362 = vld [vmem:[#allocation3 + $0xa0] sm:$0xff]
          %v5363 = vld [vmem:[#allocation3 + $0xa8] sm:$0xff]
          %v5364 = vld [vmem:[#allocation3 + $0xb0] sm:$0xff]
          %v5365 = vld [vmem:[#allocation3 + $0xb8] sm:$0xff]
          %v5366 = vld [vmem:[#allocation3 + $0xc0] sm:$0xff]
          %v5367 = vld [vmem:[#allocation3 + $0xc8] sm:$0xff]
          %v5368 = vld [vmem:[#allocation3 + $0xd0] sm:$0xff]
          %v5369 = vld [vmem:[#allocation3 + $0xd8] sm:$0xff]
          %v5370 = vld [vmem:[#allocation3 + $0xe0] sm:$0xff]
          %v5371 = vld [vmem:[#allocation3 + $0xe8] sm:$0xff]
          %v5372 = vld [vmem:[#allocation3 + $0xf0] sm:$0xff]
          %v5373 = vld [vmem:[#allocation3 + $0xf8] sm:$0xff]
          %v5374 = vld [vmem:[#allocation3 + $0x100] sm:$0xff]
          %v5375 = vld [vmem:[#allocation3 + $0x108] sm:$0xff]
          %v5376 = vld [vmem:[#allocation3 + $0x110] sm:$0xff]
          %v5377 = vld [vmem:[#allocation3 + $0x118] sm:$0xff]
          %v5378 = vld [vmem:[#allocation3 + $0x120] sm:$0xff]
          %v5379 = vld [vmem:[#allocation3 + $0x128] sm:$0xff]
          %v5380 = vld [vmem:[#allocation3 + $0x130] sm:$0xff]
          %v5381 = vld [vmem:[#allocation3 + $0x138] sm:$0xff]
          %v5382 = vld [vmem:[#allocation3 + $0x140] sm:$0xff]
          %v5383 = vld [vmem:[#allocation3 + $0x148] sm:$0xff]
          %v5384 = vld [vmem:[#allocation3 + $0x150] sm:$0xff]
          %v5385 = vld [vmem:[#allocation3 + $0x158] sm:$0xff]
          %v5386 = vld [vmem:[#allocation3 + $0x160] sm:$0xff]
          %v5387 = vld [vmem:[#allocation3 + $0x168] sm:$0xff]
          %v5388 = vld [vmem:[#allocation3 + $0x170] sm:$0xff]
          %v5389 = vld [vmem:[#allocation3 + $0x178] sm:$0xff]
          %v5390 = vld [vmem:[#allocation3 + $0x180] sm:$0xff]
          %v5391 = vld [vmem:[#allocation3 + $0x188] sm:$0xff]
          %v5392 = vld [vmem:[#allocation3 + $0x190] sm:$0xff]
          %v5393 = vld [vmem:[#allocation3 + $0x198] sm:$0xff]
          %v5394 = vld [vmem:[#allocation3 + $0x1a0] sm:$0xff]
          %v5395 = vld [vmem:[#allocation3 + $0x1a8] sm:$0xff]
          %v5396 = vld [vmem:[#allocation3 + $0x1b0] sm:$0xff]
          %v5397 = vld [vmem:[#allocation3 + $0x1b8] sm:$0xff]
          %v5398 = vld [vmem:[#allocation3 + $0x1c0] sm:$0xff]
          %v5399 = vld [vmem:[#allocation3 + $0x1c8] sm:$0xff]
          %v5400 = vld [vmem:[#allocation3 + $0x1d0] sm:$0xff]
          %v5401 = vld [vmem:[#allocation3 + $0x1d8] sm:$0xff]
          %v5402 = vld [vmem:[#allocation3 + $0x1e0] sm:$0xff]
          %v5403 = vld [vmem:[#allocation3 + $0x1e8] sm:$0xff]
          %v5404 = vld [vmem:[#allocation3 + $0x1f0] sm:$0xff]
          %v5405 = vld [vmem:[#allocation3 + $0x1f8] sm:$0xff]
          %v5406 = vld [vmem:[#allocation3 + $0x200] sm:$0xff]
          %v5407 = vld [vmem:[#allocation3 + $0x208] sm:$0xff]
          %v5408 = vld [vmem:[#allocation3 + $0x210] sm:$0xff]
          %v5409 = vld [vmem:[#allocation3 + $0x218] sm:$0xff]
          %v5410 = vld [vmem:[#allocation3 + $0x220] sm:$0xff]
          %v5411 = vld [vmem:[#allocation3 + $0x228] sm:$0xff]
          %v5412 = vld [vmem:[#allocation3 + $0x230] sm:$0xff]
          %v5413 = vld [vmem:[#allocation3 + $0x238] sm:$0xff]
          %v5414 = vld [vmem:[#allocation3 + $0x240] sm:$0xff]
          %v5415 = vld [vmem:[#allocation3 + $0x248] sm:$0xff]
          %v5416 = vld [vmem:[#allocation3 + $0x250] sm:$0xff]
          %v5417 = vld [vmem:[#allocation3 + $0x258] sm:$0xff]
          %v5418 = vld [vmem:[#allocation3 + $0x260] sm:$0xff]
          %v5419 = vld [vmem:[#allocation3 + $0x268] sm:$0xff]
          %v5420 = vld [vmem:[#allocation3 + $0x270] sm:$0xff]
          %v5421 = vld [vmem:[#allocation3 + $0x278] sm:$0xff]
          %v5422 = vld [vmem:[#allocation3 + $0x280] sm:$0xff]
          %v5423 = vld [vmem:[#allocation3 + $0x288] sm:$0xff]
          %v5424 = vld [vmem:[#allocation3 + $0x290] sm:$0xff]
          %v5425 = vld [vmem:[#allocation3 + $0x298] sm:$0xff]
          %v5426 = vld [vmem:[#allocation3 + $0x2a0] sm:$0xff]
          %v5427 = vld [vmem:[#allocation3 + $0x2a8] sm:$0xff]
          %v5428 = vld [vmem:[#allocation3 + $0x2b0] sm:$0xff]
          %v5429 = vld [vmem:[#allocation3 + $0x2b8] sm:$0xff]
          %v5430 = vld [vmem:[#allocation3 + $0x2c0] sm:$0xff]
          %v5431 = vld [vmem:[#allocation3 + $0x2c8] sm:$0xff]
          %v5432 = vld [vmem:[#allocation3 + $0x2d0] sm:$0xff]
          %v5433 = vld [vmem:[#allocation3 + $0x2d8] sm:$0xff]
          %v5434 = vld [vmem:[#allocation3 + $0x2e0] sm:$0xff]
          %v5435 = vld [vmem:[#allocation3 + $0x2e8] sm:$0xff]
          %v5436 = vld [vmem:[#allocation3 + $0x2f0] sm:$0xff]
          %v5437 = vld [vmem:[#allocation3 + $0x2f8] sm:$0xff]
          %v5438 = vld [vmem:[#allocation3 + $0x300] sm:$0xff]
          %v5439 = vld [vmem:[#allocation3 + $0x308] sm:$0xff]
          %v5440 = vld [vmem:[#allocation3 + $0x310] sm:$0xff]
          %v5441 = vld [vmem:[#allocation3 + $0x318] sm:$0xff]
          %v5442 = vld [vmem:[#allocation3 + $0x320] sm:$0xff]
          %v5443 = vld [vmem:[#allocation3 + $0x328] sm:$0xff]
          %v5444 = vld [vmem:[#allocation3 + $0x330] sm:$0xff]
          %v5445 = vld [vmem:[#allocation3 + $0x338] sm:$0xff]
          %v5446 = vld [vmem:[#allocation3 + $0x340] sm:$0xff]
          %v5447 = vld [vmem:[#allocation3 + $0x348] sm:$0xff]
          %v5448 = vld [vmem:[#allocation3 + $0x350] sm:$0xff]
          %v5449 = vld [vmem:[#allocation3 + $0x358] sm:$0xff]
          %v5450 = vld [vmem:[#allocation3 + $0x360] sm:$0xff]
          %v5451 = vld [vmem:[#allocation3 + $0x368] sm:$0xff]
          %v5452 = vld [vmem:[#allocation3 + $0x370] sm:$0xff]
          %v5453 = vld [vmem:[#allocation3 + $0x378] sm:$0xff]
          %v5454 = vld [vmem:[#allocation3 + $0x380] sm:$0xff]
          %v5455 = vld [vmem:[#allocation3 + $0x388] sm:$0xff]
          %v5456 = vld [vmem:[#allocation3 + $0x390] sm:$0xff]
          %v5457 = vld [vmem:[#allocation3 + $0x398] sm:$0xff]
          %v5458 = vld [vmem:[#allocation3 + $0x3a0] sm:$0xff]
          %v5459 = vld [vmem:[#allocation3 + $0x3a8] sm:$0xff]
          %v5460 = vld [vmem:[#allocation3 + $0x3b0] sm:$0xff]
          %v5461 = vld [vmem:[#allocation3 + $0x3b8] sm:$0xff]
          %v5462 = vld [vmem:[#allocation3 + $0x3c0] sm:$0xff]
          %v5463 = vld [vmem:[#allocation3 + $0x3c8] sm:$0xff]
          %v5464 = vld [vmem:[#allocation3 + $0x3d0] sm:$0xff]
          %v5465 = vld [vmem:[#allocation3 + $0x3d8] sm:$0xff]
          %v5466 = vld [vmem:[#allocation3 + $0x3e0] sm:$0xff]
          %v5467 = vld [vmem:[#allocation3 + $0x3e8] sm:$0xff]
          %v5468 = vld [vmem:[#allocation3 + $0x3f0] sm:$0xff]
          %v5469 = vld [vmem:[#allocation3 + $0x3f8] sm:$0xff]
          %v5470 = vld [vmem:[#allocation3 + $0x400] sm:$0xff]
          %v5471 = vld [vmem:[#allocation3 + $0x408] sm:$0xff]
          %v5472 = vld [vmem:[#allocation3 + $0x410] sm:$0xff]
          %v5473 = vld [vmem:[#allocation3 + $0x418] sm:$0xff]
          %v5474 = vld [vmem:[#allocation3 + $0x420] sm:$0xff]
          %v5475 = vld [vmem:[#allocation3 + $0x428] sm:$0xff]
          %v5476 = vld [vmem:[#allocation3 + $0x430] sm:$0xff]
          %v5477 = vld [vmem:[#allocation3 + $0x438] sm:$0xff]
          %v5478 = vld [vmem:[#allocation3 + $0x440] sm:$0xff]
          %v5479 = vld [vmem:[#allocation3 + $0x448] sm:$0xff]
          %v5480 = vld [vmem:[#allocation3 + $0x450] sm:$0xff]
          %v5481 = vld [vmem:[#allocation3 + $0x458] sm:$0xff]
          %v5482 = vld [vmem:[#allocation3 + $0x460] sm:$0xff]
          %v5483 = vld [vmem:[#allocation3 + $0x468] sm:$0xff]
          %v5484 = vld [vmem:[#allocation3 + $0x470] sm:$0xff]
          %v5485 = vld [vmem:[#allocation3 + $0x478] sm:$0xff]
          %v5486 = vld [vmem:[#allocation3 + $0x480] sm:$0xff]
          %v5487 = vld [vmem:[#allocation3 + $0x488] sm:$0xff]
          %v5488 = vld [vmem:[#allocation3 + $0x490] sm:$0xff]
          %v5489 = vld [vmem:[#allocation3 + $0x498] sm:$0xff]
          %v5490 = vld [vmem:[#allocation3 + $0x4a0] sm:$0xff]
          %v5491 = vld [vmem:[#allocation3 + $0x4a8] sm:$0xff]
          %v5492 = vld [vmem:[#allocation3 + $0x4b0] sm:$0xff]
          %v5493 = vld [vmem:[#allocation3 + $0x4b8] sm:$0xff]
          %v5494 = vld [vmem:[#allocation3 + $0x4c0] sm:$0xff]
          %v5495 = vld [vmem:[#allocation3 + $0x4c8] sm:$0xff]
          %v5496 = vld [vmem:[#allocation3 + $0x4d0] sm:$0xff]
          %v5497 = vld [vmem:[#allocation3 + $0x4d8] sm:$0xff]
          %v5498 = vld [vmem:[#allocation3 + $0x4e0] sm:$0xff]
          %v5499 = vld [vmem:[#allocation3 + $0x4e8] sm:$0xff]
          %v5500 = vld [vmem:[#allocation3 + $0x4f0] sm:$0xff]
          %v5501 = vld [vmem:[#allocation3 + $0x4f8] sm:$0xff]
          %v5502 = vld [vmem:[#allocation3 + $0x500] sm:$0xff]
          %v5503 = vld [vmem:[#allocation3 + $0x508] sm:$0xff]
          %v5504 = vld [vmem:[#allocation3 + $0x510] sm:$0xff]
          %v5505 = vld [vmem:[#allocation3 + $0x518] sm:$0xff]
          %v5506 = vld [vmem:[#allocation3 + $0x520] sm:$0xff]
          %v5507 = vld [vmem:[#allocation3 + $0x528] sm:$0xff]
          %v5508 = vld [vmem:[#allocation3 + $0x530] sm:$0xff]
          %v5509 = vld [vmem:[#allocation3 + $0x538] sm:$0xff]
          %v5510 = vld [vmem:[#allocation3 + $0x540] sm:$0xff]
          %v5511 = vld [vmem:[#allocation3 + $0x548] sm:$0xff]
          %v5512 = vld [vmem:[#allocation3 + $0x550] sm:$0xff]
          %v5513 = vld [vmem:[#allocation3 + $0x558] sm:$0xff]
          %v5514 = vld [vmem:[#allocation3 + $0x560] sm:$0xff]
          %v5515 = vld [vmem:[#allocation3 + $0x568] sm:$0xff]
          %v5516 = vld [vmem:[#allocation3 + $0x570] sm:$0xff]
          %v5517 = vld [vmem:[#allocation3 + $0x578] sm:$0xff]
          %v5518 = vld [vmem:[#allocation3 + $0x580] sm:$0xff]
          %v5519 = vld [vmem:[#allocation3 + $0x588] sm:$0xff]
          %v5520 = vld [vmem:[#allocation3 + $0x590] sm:$0xff]
          %v5521 = vld [vmem:[#allocation3 + $0x598] sm:$0xff]
          %v5522 = vld [vmem:[#allocation3 + $0x5a0] sm:$0xff]
          %v5523 = vld [vmem:[#allocation3 + $0x5a8] sm:$0xff]
          %v5524 = vld [vmem:[#allocation3 + $0x5b0] sm:$0xff]
          %v5525 = vld [vmem:[#allocation3 + $0x5b8] sm:$0xff]
          %v5526 = vld [vmem:[#allocation3 + $0x5c0] sm:$0xff]
          %v5527 = vld [vmem:[#allocation3 + $0x5c8] sm:$0xff]
          %v5528 = vld [vmem:[#allocation3 + $0x5d0] sm:$0xff]
          %v5529 = vld [vmem:[#allocation3 + $0x5d8] sm:$0xff]
          %v5530 = vld [vmem:[#allocation3 + $0x5e0] sm:$0xff]
          %v5531 = vld [vmem:[#allocation3 + $0x5e8] sm:$0xff]
          %v5532 = vld [vmem:[#allocation3 + $0x5f0] sm:$0xff]
          %v5533 = vld [vmem:[#allocation3 + $0x5f8] sm:$0xff]
          %v5534 = vld [vmem:[#allocation3 + $0x600] sm:$0xff]
          %v5535 = vld [vmem:[#allocation3 + $0x608] sm:$0xff]
          %v5536 = vld [vmem:[#allocation3 + $0x610] sm:$0xff]
          %v5537 = vld [vmem:[#allocation3 + $0x618] sm:$0xff]
          %v5538 = vld [vmem:[#allocation3 + $0x620] sm:$0xff]
          %v5539 = vld [vmem:[#allocation3 + $0x628] sm:$0xff]
          %v5540 = vld [vmem:[#allocation3 + $0x630] sm:$0xff]
          %v5541 = vld [vmem:[#allocation3 + $0x638] sm:$0xff]
          %v5542 = vld [vmem:[#allocation3 + $0x640] sm:$0xff]
          %v5543 = vld [vmem:[#allocation3 + $0x648] sm:$0xff]
          %v5544 = vld [vmem:[#allocation3 + $0x650] sm:$0xff]
          %v5545 = vld [vmem:[#allocation3 + $0x658] sm:$0xff]
          %v5546 = vld [vmem:[#allocation3 + $0x660] sm:$0xff]
          %v5547 = vld [vmem:[#allocation3 + $0x668] sm:$0xff]
          %v5548 = vld [vmem:[#allocation3 + $0x670] sm:$0xff]
          %v5549 = vld [vmem:[#allocation3 + $0x678] sm:$0xff]
          %v5550 = vld [vmem:[#allocation3 + $0x680] sm:$0xff]
          %v5551 = vld [vmem:[#allocation3 + $0x688] sm:$0xff]
          %v5552 = vld [vmem:[#allocation3 + $0x690] sm:$0xff]
          %v5553 = vld [vmem:[#allocation3 + $0x698] sm:$0xff]
          %v5554 = vld [vmem:[#allocation3 + $0x6a0] sm:$0xff]
          %v5555 = vld [vmem:[#allocation3 + $0x6a8] sm:$0xff]
          %v5556 = vld [vmem:[#allocation3 + $0x6b0] sm:$0xff]
          %v5557 = vld [vmem:[#allocation3 + $0x6b8] sm:$0xff]
          %v5558 = vld [vmem:[#allocation3 + $0x6c0] sm:$0xff]
          %v5559 = vld [vmem:[#allocation3 + $0x6c8] sm:$0xff]
          %v5560 = vld [vmem:[#allocation3 + $0x6d0] sm:$0xff]
          %v5561 = vld [vmem:[#allocation3 + $0x6d8] sm:$0xff]
          %v5562 = vld [vmem:[#allocation3 + $0x6e0] sm:$0xff]
          %v5563 = vld [vmem:[#allocation3 + $0x6e8] sm:$0xff]
          %v5564 = vld [vmem:[#allocation3 + $0x6f0] sm:$0xff]
          %v5565 = vld [vmem:[#allocation3 + $0x6f8] sm:$0xff]
          %v5566 = vld [vmem:[#allocation3 + $0x700] sm:$0xff]
          %v5567 = vld [vmem:[#allocation3 + $0x708] sm:$0xff]
          %v5568 = vld [vmem:[#allocation3 + $0x710] sm:$0xff]
          %v5569 = vld [vmem:[#allocation3 + $0x718] sm:$0xff]
          %v5570 = vld [vmem:[#allocation3 + $0x720] sm:$0xff]
          %v5571 = vld [vmem:[#allocation3 + $0x728] sm:$0xff]
          %v5572 = vld [vmem:[#allocation3 + $0x730] sm:$0xff]
          %v5573 = vld [vmem:[#allocation3 + $0x738] sm:$0xff]
          %v5574 = vld [vmem:[#allocation3 + $0x740] sm:$0xff]
          %v5575 = vld [vmem:[#allocation3 + $0x748] sm:$0xff]
          %v5576 = vld [vmem:[#allocation3 + $0x750] sm:$0xff]
          %v5577 = vld [vmem:[#allocation3 + $0x758] sm:$0xff]
          %v5578 = vld [vmem:[#allocation3 + $0x760] sm:$0xff]
          %v5579 = vld [vmem:[#allocation3 + $0x768] sm:$0xff]
          %v5580 = vld [vmem:[#allocation3 + $0x770] sm:$0xff]
          %v5581 = vld [vmem:[#allocation3 + $0x778] sm:$0xff]
          %v5582 = vld [vmem:[#allocation3 + $0x780] sm:$0xff]
          %v5583 = vld [vmem:[#allocation3 + $0x788] sm:$0xff]
          %v5584 = vld [vmem:[#allocation3 + $0x790] sm:$0xff]
          %v5585 = vld [vmem:[#allocation3 + $0x798] sm:$0xff]
          %v5586 = vld [vmem:[#allocation3 + $0x7a0] sm:$0xff]
          %v5587 = vld [vmem:[#allocation3 + $0x7a8] sm:$0xff]
          %v5588 = vld [vmem:[#allocation3 + $0x7b0] sm:$0xff]
          %v5589 = vld [vmem:[#allocation3 + $0x7b8] sm:$0xff]
          %v5590 = vld [vmem:[#allocation3 + $0x7c0] sm:$0xff]
          %v5591 = vld [vmem:[#allocation3 + $0x7c8] sm:$0xff]
          %v5592 = vld [vmem:[#allocation3 + $0x7d0] sm:$0xff]
          %v5593 = vld [vmem:[#allocation3 + $0x7d8] sm:$0xff]
          %v5594 = vld [vmem:[#allocation3 + $0x7e0] sm:$0xff]
          %v5595 = vld [vmem:[#allocation3 + $0x7e8] sm:$0xff]
          %v5596 = vld [vmem:[#allocation3 + $0x7f0] sm:$0xff]
          %v5597 = vld [vmem:[#allocation3 + $0x7f8] sm:$0xff]
          %v5598 = vld [vmem:[#allocation3 + $0x800] sm:$0xff]
          %v5599 = vld [vmem:[#allocation3 + $0x808] sm:$0xff]
          %v5600 = vld [vmem:[#allocation3 + $0x810] sm:$0xff]
          %v5601 = vld [vmem:[#allocation3 + $0x818] sm:$0xff]
          %v5602 = vld [vmem:[#allocation3 + $0x820] sm:$0xff]
          %v5603 = vld [vmem:[#allocation3 + $0x828] sm:$0xff]
          %v5604 = vld [vmem:[#allocation3 + $0x830] sm:$0xff]
          %v5605 = vld [vmem:[#allocation3 + $0x838] sm:$0xff]
          %v5606 = vld [vmem:[#allocation3 + $0x840] sm:$0xff]
          %v5607 = vld [vmem:[#allocation3 + $0x848] sm:$0xff]
          %v5608 = vld [vmem:[#allocation3 + $0x850] sm:$0xff]
          %v5609 = vld [vmem:[#allocation3 + $0x858] sm:$0xff]
          %v5610 = vld [vmem:[#allocation3 + $0x860] sm:$0xff]
          %v5611 = vld [vmem:[#allocation3 + $0x868] sm:$0xff]
          %v5612 = vld [vmem:[#allocation3 + $0x870] sm:$0xff]
          %v5613 = vld [vmem:[#allocation3 + $0x878] sm:$0xff]
          %v5614 = vld [vmem:[#allocation3 + $0x880] sm:$0xff]
          %v5615 = vld [vmem:[#allocation3 + $0x888] sm:$0xff]
          %v5616 = vld [vmem:[#allocation3 + $0x890] sm:$0xff]
          %v5617 = vld [vmem:[#allocation3 + $0x898] sm:$0xff]
          %v5618 = vld [vmem:[#allocation3 + $0x8a0] sm:$0xff]
          %v5619 = vld [vmem:[#allocation3 + $0x8a8] sm:$0xff]
          %v5620 = vld [vmem:[#allocation3 + $0x8b0] sm:$0xff]
          %v5621 = vld [vmem:[#allocation3 + $0x8b8] sm:$0xff]
          %v5622 = vld [vmem:[#allocation3 + $0x8c0] sm:$0xff]
          %v5623 = vld [vmem:[#allocation3 + $0x8c8] sm:$0xff]
          %v5624 = vld [vmem:[#allocation3 + $0x8d0] sm:$0xff]
          %v5625 = vld [vmem:[#allocation3 + $0x8d8] sm:$0xff]
          %v5626 = vld [vmem:[#allocation3 + $0x8e0] sm:$0xff]
          %v5627 = vld [vmem:[#allocation3 + $0x8e8] sm:$0xff]
          %v5628 = vld [vmem:[#allocation3 + $0x8f0] sm:$0xff]
          %v5629 = vld [vmem:[#allocation3 + $0x8f8] sm:$0xff]
          %v5630 = vld [vmem:[#allocation3 + $0x900] sm:$0xff]
          %v5631 = vld [vmem:[#allocation3 + $0x908] sm:$0xff]
          %v5632 = vld [vmem:[#allocation3 + $0x910] sm:$0xff]
          %v5633 = vld [vmem:[#allocation3 + $0x918] sm:$0xff]
          %v5634 = vld [vmem:[#allocation3 + $0x920] sm:$0xff]
          %v5635 = vld [vmem:[#allocation3 + $0x928] sm:$0xff]
          %v5636 = vld [vmem:[#allocation3 + $0x930] sm:$0xff]
          %v5637 = vld [vmem:[#allocation3 + $0x938] sm:$0xff]
          %v5638 = vld [vmem:[#allocation3 + $0x940] sm:$0xff]
          %v5639 = vld [vmem:[#allocation3 + $0x948] sm:$0xff]
          %v5640 = vld [vmem:[#allocation3 + $0x950] sm:$0xff]
          %v5641 = vld [vmem:[#allocation3 + $0x958] sm:$0xff]
          %v5642 = vld [vmem:[#allocation3 + $0x960] sm:$0xff]
          %v5643 = vld [vmem:[#allocation3 + $0x968] sm:$0xff]
          %v5644 = vld [vmem:[#allocation3 + $0x970] sm:$0xff]
          %v5645 = vld [vmem:[#allocation3 + $0x978] sm:$0xff]
          %v5646 = vld [vmem:[#allocation3 + $0x980] sm:$0xff]
          %v5647 = vld [vmem:[#allocation3 + $0x988] sm:$0xff]
          %v5648 = vld [vmem:[#allocation3 + $0x990] sm:$0xff]
          %v5649 = vld [vmem:[#allocation3 + $0x998] sm:$0xff]
          %v5650 = vld [vmem:[#allocation3 + $0x9a0] sm:$0xff]
          %v5651 = vld [vmem:[#allocation3 + $0x9a8] sm:$0xff]
          %v5652 = vld [vmem:[#allocation3 + $0x9b0] sm:$0xff]
          %v5653 = vld [vmem:[#allocation3 + $0x9b8] sm:$0xff]
          %v5654 = vld [vmem:[#allocation3 + $0x9c0] sm:$0xff]
          %v5655 = vld [vmem:[#allocation3 + $0x9c8] sm:$0xff]
          %v5656 = vld [vmem:[#allocation3 + $0x9d0] sm:$0xff]
          %v5657 = vld [vmem:[#allocation3 + $0x9d8] sm:$0xff]
          %v5658 = vld [vmem:[#allocation3 + $0x9e0] sm:$0xff]
          %v5659 = vld [vmem:[#allocation3 + $0x9e8] sm:$0xff]
          %v5660 = vld [vmem:[#allocation3 + $0x9f0] sm:$0xff]
          %v5661 = vld [vmem:[#allocation3 + $0x9f8] sm:$0xff]
          %v5662 = vld [vmem:[#allocation3 + $0xa00] sm:$0xff]
          %v5663 = vld [vmem:[#allocation3 + $0xa08] sm:$0xff]
          %v5664 = vld [vmem:[#allocation3 + $0xa10] sm:$0xff]
          %v5665 = vld [vmem:[#allocation3 + $0xa18] sm:$0xff]
          %v5666 = vld [vmem:[#allocation3 + $0xa20] sm:$0xff]
          %v5667 = vld [vmem:[#allocation3 + $0xa28] sm:$0xff]
          %v5668 = vld [vmem:[#allocation3 + $0xa30] sm:$0xff]
          %v5669 = vld [vmem:[#allocation3 + $0xa38] sm:$0xff]
          %v5670 = vld [vmem:[#allocation3 + $0xa40] sm:$0xff]
          %v5671 = vld [vmem:[#allocation3 + $0xa48] sm:$0xff]
          %v5672 = vld [vmem:[#allocation3 + $0xa50] sm:$0xff]
          %v5673 = vld [vmem:[#allocation3 + $0xa58] sm:$0xff]
          %v5674 = vld [vmem:[#allocation3 + $0xa60] sm:$0xff]
          %v5675 = vld [vmem:[#allocation3 + $0xa68] sm:$0xff]
          %v5676 = vld [vmem:[#allocation3 + $0xa70] sm:$0xff]
          %v5677 = vld [vmem:[#allocation3 + $0xa78] sm:$0xff]
          %v5678 = vld [vmem:[#allocation3 + $0xa80] sm:$0xff]
          %v5679 = vld [vmem:[#allocation3 + $0xa88] sm:$0xff]
          %v5680 = vld [vmem:[#allocation3 + $0xa90] sm:$0xff]
          %v5681 = vld [vmem:[#allocation3 + $0xa98] sm:$0xff]
          %v5682 = vld [vmem:[#allocation3 + $0xaa0] sm:$0xff]
          %v5683 = vld [vmem:[#allocation3 + $0xaa8] sm:$0xff]
          %v5684 = vld [vmem:[#allocation3 + $0xab0] sm:$0xff]
          %v5685 = vld [vmem:[#allocation3 + $0xab8] sm:$0xff]
          %v5686 = vld [vmem:[#allocation3 + $0xac0] sm:$0xff]
          %v5687 = vld [vmem:[#allocation3 + $0xac8] sm:$0xff]
          %v5688 = vld [vmem:[#allocation3 + $0xad0] sm:$0xff]
          %v5689 = vld [vmem:[#allocation3 + $0xad8] sm:$0xff]
          %v5690 = vld [vmem:[#allocation3 + $0xae0] sm:$0xff]
          %v5691 = vld [vmem:[#allocation3 + $0xae8] sm:$0xff]
          %v5692 = vld [vmem:[#allocation3 + $0xaf0] sm:$0xff]
          %v5693 = vld [vmem:[#allocation3 + $0xaf8] sm:$0xff]
          %v5694 = vld [vmem:[#allocation3 + $0xb00] sm:$0xff]
          %v5695 = vld [vmem:[#allocation3 + $0xb08] sm:$0xff]
          %v5696 = vld [vmem:[#allocation3 + $0xb10] sm:$0xff]
          %v5697 = vld [vmem:[#allocation3 + $0xb18] sm:$0xff]
          %v5698 = vld [vmem:[#allocation3 + $0xb20] sm:$0xff]
          %v5699 = vld [vmem:[#allocation3 + $0xb28] sm:$0xff]
          %v5700 = vld [vmem:[#allocation3 + $0xb30] sm:$0xff]
          %v5701 = vld [vmem:[#allocation3 + $0xb38] sm:$0xff]
          %v5702 = vld [vmem:[#allocation3 + $0xb40] sm:$0xff]
          %v5703 = vld [vmem:[#allocation3 + $0xb48] sm:$0xff]
          %v5704 = vld [vmem:[#allocation3 + $0xb50] sm:$0xff]
          %v5705 = vld [vmem:[#allocation3 + $0xb58] sm:$0xff]
          %v5706 = vld [vmem:[#allocation3 + $0xb60] sm:$0xff]
          %v5707 = vld [vmem:[#allocation3 + $0xb68] sm:$0xff]
          %v5708 = vld [vmem:[#allocation3 + $0xb70] sm:$0xff]
          %v5709 = vld [vmem:[#allocation3 + $0xb78] sm:$0xff]
          %v5710 = vld [vmem:[#allocation3 + $0xb80] sm:$0xff]
          %v5711 = vld [vmem:[#allocation3 + $0xb88] sm:$0xff]
          %v5712 = vld [vmem:[#allocation3 + $0xb90] sm:$0xff]
          %v5713 = vld [vmem:[#allocation3 + $0xb98] sm:$0xff]
          %v5714 = vld [vmem:[#allocation3 + $0xba0] sm:$0xff]
          %v5715 = vld [vmem:[#allocation3 + $0xba8] sm:$0xff]
          %v5716 = vld [vmem:[#allocation3 + $0xbb0] sm:$0xff]
          %v5717 = vld [vmem:[#allocation3 + $0xbb8] sm:$0xff]
          %v5718 = vld [vmem:[#allocation3 + $0xbc0] sm:$0xff]
          %v5719 = vld [vmem:[#allocation3 + $0xbc8] sm:$0xff]
          %v5720 = vld [vmem:[#allocation3 + $0xbd0] sm:$0xff]
          %v5721 = vld [vmem:[#allocation3 + $0xbd8] sm:$0xff]
          %v5722 = vld [vmem:[#allocation3 + $0xbe0] sm:$0xff]
          %v5723 = vld [vmem:[#allocation3 + $0xbe8] sm:$0xff]
          %v5724 = vld [vmem:[#allocation3 + $0xbf0] sm:$0xff]
          %v5725 = vld [vmem:[#allocation3 + $0xbf8] sm:$0xff]
          %v5726 = vld [vmem:[#allocation3 + $0xc00] sm:$0xff]
          %v5727 = vld [vmem:[#allocation3 + $0xc08] sm:$0xff]
          %v5728 = vld [vmem:[#allocation3 + $0xc10] sm:$0xff]
          %v5729 = vld [vmem:[#allocation3 + $0xc18] sm:$0xff]
          %v5730 = vld [vmem:[#allocation3 + $0xc20] sm:$0xff]
          %v5731 = vld [vmem:[#allocation3 + $0xc28] sm:$0xff]
          %v5732 = vld [vmem:[#allocation3 + $0xc30] sm:$0xff]
          %v5733 = vld [vmem:[#allocation3 + $0xc38] sm:$0xff]
          %v5734 = vld [vmem:[#allocation3 + $0xc40] sm:$0xff]
          %v5735 = vld [vmem:[#allocation3 + $0xc48] sm:$0xff]
          %v5736 = vld [vmem:[#allocation3 + $0xc50] sm:$0xff]
          %v5737 = vld [vmem:[#allocation3 + $0xc58] sm:$0xff]
          %v5738 = vld [vmem:[#allocation3 + $0xc60] sm:$0xff]
          %v5739 = vld [vmem:[#allocation3 + $0xc68] sm:$0xff]
          %v5740 = vld [vmem:[#allocation3 + $0xc70] sm:$0xff]
          %v5741 = vld [vmem:[#allocation3 + $0xc78] sm:$0xff]
          %v5742 = vld [vmem:[#allocation3 + $0xc80] sm:$0xff]
          %v5743 = vld [vmem:[#allocation3 + $0xc88] sm:$0xff]
          %v5744 = vld [vmem:[#allocation3 + $0xc90] sm:$0xff]
          %v5745 = vld [vmem:[#allocation3 + $0xc98] sm:$0xff]
          %v5746 = vld [vmem:[#allocation3 + $0xca0] sm:$0xff]
          %v5747 = vld [vmem:[#allocation3 + $0xca8] sm:$0xff]
          %v5748 = vld [vmem:[#allocation3 + $0xcb0] sm:$0xff]
          %v5749 = vld [vmem:[#allocation3 + $0xcb8] sm:$0xff]
          %v5750 = vld [vmem:[#allocation3 + $0xcc0] sm:$0xff]
          %v5751 = vld [vmem:[#allocation3 + $0xcc8] sm:$0xff]
          %v5752 = vld [vmem:[#allocation3 + $0xcd0] sm:$0xff]
          %v5753 = vld [vmem:[#allocation3 + $0xcd8] sm:$0xff]
          %v5754 = vld [vmem:[#allocation3 + $0xce0] sm:$0xff]
          %v5755 = vld [vmem:[#allocation3 + $0xce8] sm:$0xff]
          %v5756 = vld [vmem:[#allocation3 + $0xcf0] sm:$0xff]
          %v5757 = vld [vmem:[#allocation3 + $0xcf8] sm:$0xff]
          %v5758 = vld [vmem:[#allocation3 + $0xd00] sm:$0xff]
          %v5759 = vld [vmem:[#allocation3 + $0xd08] sm:$0xff]
          %v5760 = vld [vmem:[#allocation3 + $0xd10] sm:$0xff]
          %v5761 = vld [vmem:[#allocation3 + $0xd18] sm:$0xff]
          %v5762 = vld [vmem:[#allocation3 + $0xd20] sm:$0xff]
          %v5763 = vld [vmem:[#allocation3 + $0xd28] sm:$0xff]
          %v5764 = vld [vmem:[#allocation3 + $0xd30] sm:$0xff]
          %v5765 = vld [vmem:[#allocation3 + $0xd38] sm:$0xff]
          %v5766 = vld [vmem:[#allocation3 + $0xd40] sm:$0xff]
          %v5767 = vld [vmem:[#allocation3 + $0xd48] sm:$0xff]
          %v5768 = vld [vmem:[#allocation3 + $0xd50] sm:$0xff]
          %v5769 = vld [vmem:[#allocation3 + $0xd58] sm:$0xff]
          %v5770 = vld [vmem:[#allocation3 + $0xd60] sm:$0xff]
          %v5771 = vld [vmem:[#allocation3 + $0xd68] sm:$0xff]
          %v5772 = vld [vmem:[#allocation3 + $0xd70] sm:$0xff]
          %v5773 = vld [vmem:[#allocation3 + $0xd78] sm:$0xff]
          %v5774 = vld [vmem:[#allocation3 + $0xd80] sm:$0xff]
          %v5775 = vld [vmem:[#allocation3 + $0xd88] sm:$0xff]
          %v5776 = vld [vmem:[#allocation3 + $0xd90] sm:$0xff]
          %v5777 = vld [vmem:[#allocation3 + $0xd98] sm:$0xff]
          %v5778 = vld [vmem:[#allocation3 + $0xda0] sm:$0xff]
          %v5779 = vld [vmem:[#allocation3 + $0xda8] sm:$0xff]
          %v5780 = vld [vmem:[#allocation3 + $0xdb0] sm:$0xff]
          %v5781 = vld [vmem:[#allocation3 + $0xdb8] sm:$0xff]
          %v5782 = vld [vmem:[#allocation3 + $0xdc0] sm:$0xff]
          %v5783 = vld [vmem:[#allocation3 + $0xdc8] sm:$0xff]
          %v5784 = vld [vmem:[#allocation3 + $0xdd0] sm:$0xff]
          %v5785 = vld [vmem:[#allocation3 + $0xdd8] sm:$0xff]
          %v5786 = vld [vmem:[#allocation3 + $0xde0] sm:$0xff]
          %v5787 = vld [vmem:[#allocation3 + $0xde8] sm:$0xff]
          %v5788 = vld [vmem:[#allocation3 + $0xdf0] sm:$0xff]
          %v5789 = vld [vmem:[#allocation3 + $0xdf8] sm:$0xff]
          %v5790 = vld [vmem:[#allocation3 + $0xe00] sm:$0xff]
          %v5791 = vld [vmem:[#allocation3 + $0xe08] sm:$0xff]
          %v5792 = vld [vmem:[#allocation3 + $0xe10] sm:$0xff]
          %v5793 = vld [vmem:[#allocation3 + $0xe18] sm:$0xff]
          %v5794 = vld [vmem:[#allocation3 + $0xe20] sm:$0xff]
          %v5795 = vld [vmem:[#allocation3 + $0xe28] sm:$0xff]
          %v5796 = vld [vmem:[#allocation3 + $0xe30] sm:$0xff]
          %v5797 = vld [vmem:[#allocation3 + $0xe38] sm:$0xff]
          %v5798 = vld [vmem:[#allocation3 + $0xe40] sm:$0xff]
          %v5799 = vld [vmem:[#allocation3 + $0xe48] sm:$0xff]
          %v5800 = vld [vmem:[#allocation3 + $0xe50] sm:$0xff]
          %v5801 = vld [vmem:[#allocation3 + $0xe58] sm:$0xff]
          %v5802 = vld [vmem:[#allocation3 + $0xe60] sm:$0xff]
          %v5803 = vld [vmem:[#allocation3 + $0xe68] sm:$0xff]
          %v5804 = vld [vmem:[#allocation3 + $0xe70] sm:$0xff]
          %v5805 = vld [vmem:[#allocation3 + $0xe78] sm:$0xff]
          %v5806 = vld [vmem:[#allocation3 + $0xe80] sm:$0xff]
          %v5807 = vld [vmem:[#allocation3 + $0xe88] sm:$0xff]
          %v5808 = vld [vmem:[#allocation3 + $0xe90] sm:$0xff]
          %v5809 = vld [vmem:[#allocation3 + $0xe98] sm:$0xff]
          %v5810 = vld [vmem:[#allocation3 + $0xea0] sm:$0xff]
          %v5811 = vld [vmem:[#allocation3 + $0xea8] sm:$0xff]
          %v5812 = vld [vmem:[#allocation3 + $0xeb0] sm:$0xff]
          %v5813 = vld [vmem:[#allocation3 + $0xeb8] sm:$0xff]
          %v5814 = vld [vmem:[#allocation3 + $0xec0] sm:$0xff]
          %v5815 = vld [vmem:[#allocation3 + $0xec8] sm:$0xff]
          %v5816 = vld [vmem:[#allocation3 + $0xed0] sm:$0xff]
          %v5817 = vld [vmem:[#allocation3 + $0xed8] sm:$0xff]
          %v5818 = vld [vmem:[#allocation3 + $0xee0] sm:$0xff]
          %v5819 = vld [vmem:[#allocation3 + $0xee8] sm:$0xff]
          %v5820 = vld [vmem:[#allocation3 + $0xef0] sm:$0xff]
          %v5821 = vld [vmem:[#allocation3 + $0xef8] sm:$0xff]
          %v5822 = vld [vmem:[#allocation3 + $0xf00] sm:$0xff]
          %v5823 = vld [vmem:[#allocation3 + $0xf08] sm:$0xff]
          %v5824 = vld [vmem:[#allocation3 + $0xf10] sm:$0xff]
          %v5825 = vld [vmem:[#allocation3 + $0xf18] sm:$0xff]
          %v5826 = vld [vmem:[#allocation3 + $0xf20] sm:$0xff]
          %v5827 = vld [vmem:[#allocation3 + $0xf28] sm:$0xff]
          %v5828 = vld [vmem:[#allocation3 + $0xf30] sm:$0xff]
          %v5829 = vld [vmem:[#allocation3 + $0xf38] sm:$0xff]
          %v5830 = vld [vmem:[#allocation3 + $0xf40] sm:$0xff]
          %v5831 = vld [vmem:[#allocation3 + $0xf48] sm:$0xff]
          %v5832 = vld [vmem:[#allocation3 + $0xf50] sm:$0xff]
          %v5833 = vld [vmem:[#allocation3 + $0xf58] sm:$0xff]
          %v5834 = vld [vmem:[#allocation3 + $0xf60] sm:$0xff]
          %v5835 = vld [vmem:[#allocation3 + $0xf68] sm:$0xff]
          %v5836 = vld [vmem:[#allocation3 + $0xf70] sm:$0xff]
          %v5837 = vld [vmem:[#allocation3 + $0xf78] sm:$0xff]
          %v5838 = vld [vmem:[#allocation3 + $0xf80] sm:$0xff]
          %v5839 = vld [vmem:[#allocation3 + $0xf88] sm:$0xff]
          %v5840 = vld [vmem:[#allocation3 + $0xf90] sm:$0xff]
          %v5841 = vld [vmem:[#allocation3 + $0xf98] sm:$0xff]
          %v5842 = vld [vmem:[#allocation3 + $0xfa0] sm:$0xff]
          %v5843 = vld [vmem:[#allocation3 + $0xfa8] sm:$0xff]
          %v5844 = vld [vmem:[#allocation3 + $0xfb0] sm:$0xff]
          %v5845 = vld [vmem:[#allocation3 + $0xfb8] sm:$0xff]
          %v5846 = vld [vmem:[#allocation3 + $0xfc0] sm:$0xff]
          %v5847 = vld [vmem:[#allocation3 + $0xfc8] sm:$0xff]
          %v5848 = vld [vmem:[#allocation3 + $0xfd0] sm:$0xff]
          %v5849 = vld [vmem:[#allocation3 + $0xfd8] sm:$0xff]
          %v5850 = vld [vmem:[#allocation3 + $0xfe0] sm:$0xff]
          %v5851 = vld [vmem:[#allocation3 + $0xfe8] sm:$0xff]
          %v5852 = vld [vmem:[#allocation3 + $0xff0] sm:$0xff]
          %v5853 = vld [vmem:[#allocation3 + $0xff8] sm:$0xff]
          %v5854 = vld [vmem:[%s4] sm:$0xf]
          %v5856 = vlaneseq
          %v5857 = vshrl.u32 %v5856, 7
          %v5858 = vsub.s32 0, %v5857
          %v5859 = vrot.slane %v5854, %v5858
          %v5860 = vlaneseq
          %v5861 = vshrl.u32 %v5860, 7
          %v5862 = vsub.s32 1, %v5861
          %v5863 = vrot.slane %v5854, %v5862
          %v5864 = vlaneseq
          %v5865 = vshrl.u32 %v5864, 7
          %v5866 = vsub.s32 2, %v5865
          %v5867 = vrot.slane %v5854, %v5866
          %v5868 = vlaneseq
          %v5869 = vshrl.u32 %v5868, 7
          %v5870 = vsub.s32 3, %v5869
          %v5871 = vrot.slane %v5854, %v5870
          %v6388 = vunpack.c.l.b16 %v5342
          %v6389 = vunpack.c.h.b16 %v5342
          %v6390 = vunpack.c.l.b16 %v5343
          %v6391 = vunpack.c.h.b16 %v5343
          %v6392 = vunpack.c.l.b16 %v5344
          %v6393 = vunpack.c.h.b16 %v5344
          %v6394 = vunpack.c.l.b16 %v5345
          %v6395 = vunpack.c.h.b16 %v5345
          %v6396 = vunpack.c.l.b16 %v5346
          %v6397 = vunpack.c.h.b16 %v5346
          %v6398 = vunpack.c.l.b16 %v5347
          %v6399 = vunpack.c.h.b16 %v5347
          %v6400 = vunpack.c.l.b16 %v5348
          %v6401 = vunpack.c.h.b16 %v5348
          %v6402 = vunpack.c.l.b16 %v5349
          %v6403 = vunpack.c.h.b16 %v5349
          %v6404 = vunpack.c.l.b16 %v5350
          %v6405 = vunpack.c.h.b16 %v5350
          %v6406 = vunpack.c.l.b16 %v5351
          %v6407 = vunpack.c.h.b16 %v5351
          %v6408 = vunpack.c.l.b16 %v5352
          %v6409 = vunpack.c.h.b16 %v5352
          %v6410 = vunpack.c.l.b16 %v5353
          %v6411 = vunpack.c.h.b16 %v5353
          %v6412 = vunpack.c.l.b16 %v5354
          %v6413 = vunpack.c.h.b16 %v5354
          %v6414 = vunpack.c.l.b16 %v5355
          %v6415 = vunpack.c.h.b16 %v5355
          %v6416 = vunpack.c.l.b16 %v5356
          %v6417 = vunpack.c.h.b16 %v5356
          %v6418 = vunpack.c.l.b16 %v5357
          %v6419 = vunpack.c.h.b16 %v5357
          %v6420 = vunpack.c.l.b16 %v5358
          %v6421 = vunpack.c.h.b16 %v5358
          %v6422 = vunpack.c.l.b16 %v5359
          %v6423 = vunpack.c.h.b16 %v5359
          %v6424 = vunpack.c.l.b16 %v5360
          %v6425 = vunpack.c.h.b16 %v5360
          %v6426 = vunpack.c.l.b16 %v5361
          %v6427 = vunpack.c.h.b16 %v5361
          %v6428 = vunpack.c.l.b16 %v5362
          %v6429 = vunpack.c.h.b16 %v5362
          %v6430 = vunpack.c.l.b16 %v5363
          %v6431 = vunpack.c.h.b16 %v5363
          %v6432 = vunpack.c.l.b16 %v5364
          %v6433 = vunpack.c.h.b16 %v5364
          %v6434 = vunpack.c.l.b16 %v5365
          %v6435 = vunpack.c.h.b16 %v5365
          %v6436 = vunpack.c.l.b16 %v5366
          %v6437 = vunpack.c.h.b16 %v5366
          %v6438 = vunpack.c.l.b16 %v5367
          %v6439 = vunpack.c.h.b16 %v5367
          %v6440 = vunpack.c.l.b16 %v5368
          %v6441 = vunpack.c.h.b16 %v5368
          %v6442 = vunpack.c.l.b16 %v5369
          %v6443 = vunpack.c.h.b16 %v5369
          %v6444 = vunpack.c.l.b16 %v5370
          %v6445 = vunpack.c.h.b16 %v5370
          %v6446 = vunpack.c.l.b16 %v5371
          %v6447 = vunpack.c.h.b16 %v5371
          %v6448 = vunpack.c.l.b16 %v5372
          %v6449 = vunpack.c.h.b16 %v5372
          %v6450 = vunpack.c.l.b16 %v5373
          %v6451 = vunpack.c.h.b16 %v5373
          %v6452 = vunpack.c.l.b16 %v5374
          %v6453 = vunpack.c.h.b16 %v5374
          %v6454 = vunpack.c.l.b16 %v5375
          %v6455 = vunpack.c.h.b16 %v5375
          %v6456 = vunpack.c.l.b16 %v5376
          %v6457 = vunpack.c.h.b16 %v5376
          %v6458 = vunpack.c.l.b16 %v5377
          %v6459 = vunpack.c.h.b16 %v5377
          %v6460 = vunpack.c.l.b16 %v5378
          %v6461 = vunpack.c.h.b16 %v5378
          %v6462 = vunpack.c.l.b16 %v5379
          %v6463 = vunpack.c.h.b16 %v5379
          %v6464 = vunpack.c.l.b16 %v5380
          %v6465 = vunpack.c.h.b16 %v5380
          %v6466 = vunpack.c.l.b16 %v5381
          %v6467 = vunpack.c.h.b16 %v5381
          %v6468 = vunpack.c.l.b16 %v5382
          %v6469 = vunpack.c.h.b16 %v5382
          %v6470 = vunpack.c.l.b16 %v5383
          %v6471 = vunpack.c.h.b16 %v5383
          %v6472 = vunpack.c.l.b16 %v5384
          %v6473 = vunpack.c.h.b16 %v5384
          %v6474 = vunpack.c.l.b16 %v5385
          %v6475 = vunpack.c.h.b16 %v5385
          %v6476 = vunpack.c.l.b16 %v5386
          %v6477 = vunpack.c.h.b16 %v5386
          %v6478 = vunpack.c.l.b16 %v5387
          %v6479 = vunpack.c.h.b16 %v5387
          %v6480 = vunpack.c.l.b16 %v5388
          %v6481 = vunpack.c.h.b16 %v5388
          %v6482 = vunpack.c.l.b16 %v5389
          %v6483 = vunpack.c.h.b16 %v5389
          %v6484 = vunpack.c.l.b16 %v5390
          %v6485 = vunpack.c.h.b16 %v5390
          %v6486 = vunpack.c.l.b16 %v5391
          %v6487 = vunpack.c.h.b16 %v5391
          %v6488 = vunpack.c.l.b16 %v5392
          %v6489 = vunpack.c.h.b16 %v5392
          %v6490 = vunpack.c.l.b16 %v5393
          %v6491 = vunpack.c.h.b16 %v5393
          %v6492 = vunpack.c.l.b16 %v5394
          %v6493 = vunpack.c.h.b16 %v5394
          %v6494 = vunpack.c.l.b16 %v5395
          %v6495 = vunpack.c.h.b16 %v5395
          %v6496 = vunpack.c.l.b16 %v5396
          %v6497 = vunpack.c.h.b16 %v5396
          %v6498 = vunpack.c.l.b16 %v5397
          %v6499 = vunpack.c.h.b16 %v5397
          %v6500 = vunpack.c.l.b16 %v5398
          %v6501 = vunpack.c.h.b16 %v5398
          %v6502 = vunpack.c.l.b16 %v5399
          %v6503 = vunpack.c.h.b16 %v5399
          %v6504 = vunpack.c.l.b16 %v5400
          %v6505 = vunpack.c.h.b16 %v5400
          %v6506 = vunpack.c.l.b16 %v5401
          %v6507 = vunpack.c.h.b16 %v5401
          %v6508 = vunpack.c.l.b16 %v5402
          %v6509 = vunpack.c.h.b16 %v5402
          %v6510 = vunpack.c.l.b16 %v5403
          %v6511 = vunpack.c.h.b16 %v5403
          %v6512 = vunpack.c.l.b16 %v5404
          %v6513 = vunpack.c.h.b16 %v5404
          %v6514 = vunpack.c.l.b16 %v5405
          %v6515 = vunpack.c.h.b16 %v5405
          %v6516 = vunpack.c.l.b16 %v5406
          %v6517 = vunpack.c.h.b16 %v5406
          %v6518 = vunpack.c.l.b16 %v5407
          %v6519 = vunpack.c.h.b16 %v5407
          %v6520 = vunpack.c.l.b16 %v5408
          %v6521 = vunpack.c.h.b16 %v5408
          %v6522 = vunpack.c.l.b16 %v5409
          %v6523 = vunpack.c.h.b16 %v5409
          %v6524 = vunpack.c.l.b16 %v5410
          %v6525 = vunpack.c.h.b16 %v5410
          %v6526 = vunpack.c.l.b16 %v5411
          %v6527 = vunpack.c.h.b16 %v5411
          %v6528 = vunpack.c.l.b16 %v5412
          %v6529 = vunpack.c.h.b16 %v5412
          %v6530 = vunpack.c.l.b16 %v5413
          %v6531 = vunpack.c.h.b16 %v5413
          %v6532 = vunpack.c.l.b16 %v5414
          %v6533 = vunpack.c.h.b16 %v5414
          %v6534 = vunpack.c.l.b16 %v5415
          %v6535 = vunpack.c.h.b16 %v5415
          %v6536 = vunpack.c.l.b16 %v5416
          %v6537 = vunpack.c.h.b16 %v5416
          %v6538 = vunpack.c.l.b16 %v5417
          %v6539 = vunpack.c.h.b16 %v5417
          %v6540 = vunpack.c.l.b16 %v5418
          %v6541 = vunpack.c.h.b16 %v5418
          %v6542 = vunpack.c.l.b16 %v5419
          %v6543 = vunpack.c.h.b16 %v5419
          %v6544 = vunpack.c.l.b16 %v5420
          %v6545 = vunpack.c.h.b16 %v5420
          %v6546 = vunpack.c.l.b16 %v5421
          %v6547 = vunpack.c.h.b16 %v5421
          %v6548 = vunpack.c.l.b16 %v5422
          %v6549 = vunpack.c.h.b16 %v5422
          %v6550 = vunpack.c.l.b16 %v5423
          %v6551 = vunpack.c.h.b16 %v5423
          %v6552 = vunpack.c.l.b16 %v5424
          %v6553 = vunpack.c.h.b16 %v5424
          %v6554 = vunpack.c.l.b16 %v5425
          %v6555 = vunpack.c.h.b16 %v5425
          %v6556 = vunpack.c.l.b16 %v5426
          %v6557 = vunpack.c.h.b16 %v5426
          %v6558 = vunpack.c.l.b16 %v5427
          %v6559 = vunpack.c.h.b16 %v5427
          %v6560 = vunpack.c.l.b16 %v5428
          %v6561 = vunpack.c.h.b16 %v5428
          %v6562 = vunpack.c.l.b16 %v5429
          %v6563 = vunpack.c.h.b16 %v5429
          %v6564 = vunpack.c.l.b16 %v5430
          %v6565 = vunpack.c.h.b16 %v5430
          %v6566 = vunpack.c.l.b16 %v5431
          %v6567 = vunpack.c.h.b16 %v5431
          %v6568 = vunpack.c.l.b16 %v5432
          %v6569 = vunpack.c.h.b16 %v5432
          %v6570 = vunpack.c.l.b16 %v5433
          %v6571 = vunpack.c.h.b16 %v5433
          %v6572 = vunpack.c.l.b16 %v5434
          %v6573 = vunpack.c.h.b16 %v5434
          %v6574 = vunpack.c.l.b16 %v5435
          %v6575 = vunpack.c.h.b16 %v5435
          %v6576 = vunpack.c.l.b16 %v5436
          %v6577 = vunpack.c.h.b16 %v5436
          %v6578 = vunpack.c.l.b16 %v5437
          %v6579 = vunpack.c.h.b16 %v5437
          %v6580 = vunpack.c.l.b16 %v5438
          %v6581 = vunpack.c.h.b16 %v5438
          %v6582 = vunpack.c.l.b16 %v5439
          %v6583 = vunpack.c.h.b16 %v5439
          %v6584 = vunpack.c.l.b16 %v5440
          %v6585 = vunpack.c.h.b16 %v5440
          %v6586 = vunpack.c.l.b16 %v5441
          %v6587 = vunpack.c.h.b16 %v5441
          %v6588 = vunpack.c.l.b16 %v5442
          %v6589 = vunpack.c.h.b16 %v5442
          %v6590 = vunpack.c.l.b16 %v5443
          %v6591 = vunpack.c.h.b16 %v5443
          %v6592 = vunpack.c.l.b16 %v5444
          %v6593 = vunpack.c.h.b16 %v5444
          %v6594 = vunpack.c.l.b16 %v5445
          %v6595 = vunpack.c.h.b16 %v5445
          %v6596 = vunpack.c.l.b16 %v5446
          %v6597 = vunpack.c.h.b16 %v5446
          %v6598 = vunpack.c.l.b16 %v5447
          %v6599 = vunpack.c.h.b16 %v5447
          %v6600 = vunpack.c.l.b16 %v5448
          %v6601 = vunpack.c.h.b16 %v5448
          %v6602 = vunpack.c.l.b16 %v5449
          %v6603 = vunpack.c.h.b16 %v5449
          %v6604 = vunpack.c.l.b16 %v5450
          %v6605 = vunpack.c.h.b16 %v5450
          %v6606 = vunpack.c.l.b16 %v5451
          %v6607 = vunpack.c.h.b16 %v5451
          %v6608 = vunpack.c.l.b16 %v5452
          %v6609 = vunpack.c.h.b16 %v5452
          %v6610 = vunpack.c.l.b16 %v5453
          %v6611 = vunpack.c.h.b16 %v5453
          %v6612 = vunpack.c.l.b16 %v5454
          %v6613 = vunpack.c.h.b16 %v5454
          %v6614 = vunpack.c.l.b16 %v5455
          %v6615 = vunpack.c.h.b16 %v5455
          %v6616 = vunpack.c.l.b16 %v5456
          %v6617 = vunpack.c.h.b16 %v5456
          %v6618 = vunpack.c.l.b16 %v5457
          %v6619 = vunpack.c.h.b16 %v5457
          %v6620 = vunpack.c.l.b16 %v5458
          %v6621 = vunpack.c.h.b16 %v5458
          %v6622 = vunpack.c.l.b16 %v5459
          %v6623 = vunpack.c.h.b16 %v5459
          %v6624 = vunpack.c.l.b16 %v5460
          %v6625 = vunpack.c.h.b16 %v5460
          %v6626 = vunpack.c.l.b16 %v5461
          %v6627 = vunpack.c.h.b16 %v5461
          %v6628 = vunpack.c.l.b16 %v5462
          %v6629 = vunpack.c.h.b16 %v5462
          %v6630 = vunpack.c.l.b16 %v5463
          %v6631 = vunpack.c.h.b16 %v5463
          %v6632 = vunpack.c.l.b16 %v5464
          %v6633 = vunpack.c.h.b16 %v5464
          %v6634 = vunpack.c.l.b16 %v5465
          %v6635 = vunpack.c.h.b16 %v5465
          %v6636 = vunpack.c.l.b16 %v5466
          %v6637 = vunpack.c.h.b16 %v5466
          %v6638 = vunpack.c.l.b16 %v5467
          %v6639 = vunpack.c.h.b16 %v5467
          %v6640 = vunpack.c.l.b16 %v5468
          %v6641 = vunpack.c.h.b16 %v5468
          %v6642 = vunpack.c.l.b16 %v5469
          %v6643 = vunpack.c.h.b16 %v5469
          %v6644 = vunpack.c.l.b16 %v5470
          %v6645 = vunpack.c.h.b16 %v5470
          %v6646 = vunpack.c.l.b16 %v5471
          %v6647 = vunpack.c.h.b16 %v5471
          %v6648 = vunpack.c.l.b16 %v5472
          %v6649 = vunpack.c.h.b16 %v5472
          %v6650 = vunpack.c.l.b16 %v5473
          %v6651 = vunpack.c.h.b16 %v5473
          %v6652 = vunpack.c.l.b16 %v5474
          %v6653 = vunpack.c.h.b16 %v5474
          %v6654 = vunpack.c.l.b16 %v5475
          %v6655 = vunpack.c.h.b16 %v5475
          %v6656 = vunpack.c.l.b16 %v5476
          %v6657 = vunpack.c.h.b16 %v5476
          %v6658 = vunpack.c.l.b16 %v5477
          %v6659 = vunpack.c.h.b16 %v5477
          %v6660 = vunpack.c.l.b16 %v5478
          %v6661 = vunpack.c.h.b16 %v5478
          %v6662 = vunpack.c.l.b16 %v5479
          %v6663 = vunpack.c.h.b16 %v5479
          %v6664 = vunpack.c.l.b16 %v5480
          %v6665 = vunpack.c.h.b16 %v5480
          %v6666 = vunpack.c.l.b16 %v5481
          %v6667 = vunpack.c.h.b16 %v5481
          %v6668 = vunpack.c.l.b16 %v5482
          %v6669 = vunpack.c.h.b16 %v5482
          %v6670 = vunpack.c.l.b16 %v5483
          %v6671 = vunpack.c.h.b16 %v5483
          %v6672 = vunpack.c.l.b16 %v5484
          %v6673 = vunpack.c.h.b16 %v5484
          %v6674 = vunpack.c.l.b16 %v5485
          %v6675 = vunpack.c.h.b16 %v5485
          %v6676 = vunpack.c.l.b16 %v5486
          %v6677 = vunpack.c.h.b16 %v5486
          %v6678 = vunpack.c.l.b16 %v5487
          %v6679 = vunpack.c.h.b16 %v5487
          %v6680 = vunpack.c.l.b16 %v5488
          %v6681 = vunpack.c.h.b16 %v5488
          %v6682 = vunpack.c.l.b16 %v5489
          %v6683 = vunpack.c.h.b16 %v5489
          %v6684 = vunpack.c.l.b16 %v5490
          %v6685 = vunpack.c.h.b16 %v5490
          %v6686 = vunpack.c.l.b16 %v5491
          %v6687 = vunpack.c.h.b16 %v5491
          %v6688 = vunpack.c.l.b16 %v5492
          %v6689 = vunpack.c.h.b16 %v5492
          %v6690 = vunpack.c.l.b16 %v5493
          %v6691 = vunpack.c.h.b16 %v5493
          %v6692 = vunpack.c.l.b16 %v5494
          %v6693 = vunpack.c.h.b16 %v5494
          %v6694 = vunpack.c.l.b16 %v5495
          %v6695 = vunpack.c.h.b16 %v5495
          %v6696 = vunpack.c.l.b16 %v5496
          %v6697 = vunpack.c.h.b16 %v5496
          %v6698 = vunpack.c.l.b16 %v5497
          %v6699 = vunpack.c.h.b16 %v5497
          %v6700 = vunpack.c.l.b16 %v5498
          %v6701 = vunpack.c.h.b16 %v5498
          %v6702 = vunpack.c.l.b16 %v5499
          %v6703 = vunpack.c.h.b16 %v5499
          %v6704 = vunpack.c.l.b16 %v5500
          %v6705 = vunpack.c.h.b16 %v5500
          %v6706 = vunpack.c.l.b16 %v5501
          %v6707 = vunpack.c.h.b16 %v5501
          %v6708 = vunpack.c.l.b16 %v5502
          %v6709 = vunpack.c.h.b16 %v5502
          %v6710 = vunpack.c.l.b16 %v5503
          %v6711 = vunpack.c.h.b16 %v5503
          %v6712 = vunpack.c.l.b16 %v5504
          %v6713 = vunpack.c.h.b16 %v5504
          %v6714 = vunpack.c.l.b16 %v5505
          %v6715 = vunpack.c.h.b16 %v5505
          %v6716 = vunpack.c.l.b16 %v5506
          %v6717 = vunpack.c.h.b16 %v5506
          %v6718 = vunpack.c.l.b16 %v5507
          %v6719 = vunpack.c.h.b16 %v5507
          %v6720 = vunpack.c.l.b16 %v5508
          %v6721 = vunpack.c.h.b16 %v5508
          %v6722 = vunpack.c.l.b16 %v5509
          %v6723 = vunpack.c.h.b16 %v5509
          %v6724 = vunpack.c.l.b16 %v5510
          %v6725 = vunpack.c.h.b16 %v5510
          %v6726 = vunpack.c.l.b16 %v5511
          %v6727 = vunpack.c.h.b16 %v5511
          %v6728 = vunpack.c.l.b16 %v5512
          %v6729 = vunpack.c.h.b16 %v5512
          %v6730 = vunpack.c.l.b16 %v5513
          %v6731 = vunpack.c.h.b16 %v5513
          %v6732 = vunpack.c.l.b16 %v5514
          %v6733 = vunpack.c.h.b16 %v5514
          %v6734 = vunpack.c.l.b16 %v5515
          %v6735 = vunpack.c.h.b16 %v5515
          %v6736 = vunpack.c.l.b16 %v5516
          %v6737 = vunpack.c.h.b16 %v5516
          %v6738 = vunpack.c.l.b16 %v5517
          %v6739 = vunpack.c.h.b16 %v5517
          %v6740 = vunpack.c.l.b16 %v5518
          %v6741 = vunpack.c.h.b16 %v5518
          %v6742 = vunpack.c.l.b16 %v5519
          %v6743 = vunpack.c.h.b16 %v5519
          %v6744 = vunpack.c.l.b16 %v5520
          %v6745 = vunpack.c.h.b16 %v5520
          %v6746 = vunpack.c.l.b16 %v5521
          %v6747 = vunpack.c.h.b16 %v5521
          %v6748 = vunpack.c.l.b16 %v5522
          %v6749 = vunpack.c.h.b16 %v5522
          %v6750 = vunpack.c.l.b16 %v5523
          %v6751 = vunpack.c.h.b16 %v5523
          %v6752 = vunpack.c.l.b16 %v5524
          %v6753 = vunpack.c.h.b16 %v5524
          %v6754 = vunpack.c.l.b16 %v5525
          %v6755 = vunpack.c.h.b16 %v5525
          %v6756 = vunpack.c.l.b16 %v5526
          %v6757 = vunpack.c.h.b16 %v5526
          %v6758 = vunpack.c.l.b16 %v5527
          %v6759 = vunpack.c.h.b16 %v5527
          %v6760 = vunpack.c.l.b16 %v5528
          %v6761 = vunpack.c.h.b16 %v5528
          %v6762 = vunpack.c.l.b16 %v5529
          %v6763 = vunpack.c.h.b16 %v5529
          %v6764 = vunpack.c.l.b16 %v5530
          %v6765 = vunpack.c.h.b16 %v5530
          %v6766 = vunpack.c.l.b16 %v5531
          %v6767 = vunpack.c.h.b16 %v5531
          %v6768 = vunpack.c.l.b16 %v5532
          %v6769 = vunpack.c.h.b16 %v5532
          %v6770 = vunpack.c.l.b16 %v5533
          %v6771 = vunpack.c.h.b16 %v5533
          %v6772 = vunpack.c.l.b16 %v5534
          %v6773 = vunpack.c.h.b16 %v5534
          %v6774 = vunpack.c.l.b16 %v5535
          %v6775 = vunpack.c.h.b16 %v5535
          %v6776 = vunpack.c.l.b16 %v5536
          %v6777 = vunpack.c.h.b16 %v5536
          %v6778 = vunpack.c.l.b16 %v5537
          %v6779 = vunpack.c.h.b16 %v5537
          %v6780 = vunpack.c.l.b16 %v5538
          %v6781 = vunpack.c.h.b16 %v5538
          %v6782 = vunpack.c.l.b16 %v5539
          %v6783 = vunpack.c.h.b16 %v5539
          %v6784 = vunpack.c.l.b16 %v5540
          %v6785 = vunpack.c.h.b16 %v5540
          %v6786 = vunpack.c.l.b16 %v5541
          %v6787 = vunpack.c.h.b16 %v5541
          %v6788 = vunpack.c.l.b16 %v5542
          %v6789 = vunpack.c.h.b16 %v5542
          %v6790 = vunpack.c.l.b16 %v5543
          %v6791 = vunpack.c.h.b16 %v5543
          %v6792 = vunpack.c.l.b16 %v5544
          %v6793 = vunpack.c.h.b16 %v5544
          %v6794 = vunpack.c.l.b16 %v5545
          %v6795 = vunpack.c.h.b16 %v5545
          %v6796 = vunpack.c.l.b16 %v5546
          %v6797 = vunpack.c.h.b16 %v5546
          %v6798 = vunpack.c.l.b16 %v5547
          %v6799 = vunpack.c.h.b16 %v5547
          %v6800 = vunpack.c.l.b16 %v5548
          %v6801 = vunpack.c.h.b16 %v5548
          %v6802 = vunpack.c.l.b16 %v5549
          %v6803 = vunpack.c.h.b16 %v5549
          %v6804 = vunpack.c.l.b16 %v5550
          %v6805 = vunpack.c.h.b16 %v5550
          %v6806 = vunpack.c.l.b16 %v5551
          %v6807 = vunpack.c.h.b16 %v5551
          %v6808 = vunpack.c.l.b16 %v5552
          %v6809 = vunpack.c.h.b16 %v5552
          %v6810 = vunpack.c.l.b16 %v5553
          %v6811 = vunpack.c.h.b16 %v5553
          %v6812 = vunpack.c.l.b16 %v5554
          %v6813 = vunpack.c.h.b16 %v5554
          %v6814 = vunpack.c.l.b16 %v5555
          %v6815 = vunpack.c.h.b16 %v5555
          %v6816 = vunpack.c.l.b16 %v5556
          %v6817 = vunpack.c.h.b16 %v5556
          %v6818 = vunpack.c.l.b16 %v5557
          %v6819 = vunpack.c.h.b16 %v5557
          %v6820 = vunpack.c.l.b16 %v5558
          %v6821 = vunpack.c.h.b16 %v5558
          %v6822 = vunpack.c.l.b16 %v5559
          %v6823 = vunpack.c.h.b16 %v5559
          %v6824 = vunpack.c.l.b16 %v5560
          %v6825 = vunpack.c.h.b16 %v5560
          %v6826 = vunpack.c.l.b16 %v5561
          %v6827 = vunpack.c.h.b16 %v5561
          %v6828 = vunpack.c.l.b16 %v5562
          %v6829 = vunpack.c.h.b16 %v5562
          %v6830 = vunpack.c.l.b16 %v5563
          %v6831 = vunpack.c.h.b16 %v5563
          %v6832 = vunpack.c.l.b16 %v5564
          %v6833 = vunpack.c.h.b16 %v5564
          %v6834 = vunpack.c.l.b16 %v5565
          %v6835 = vunpack.c.h.b16 %v5565
          %v6836 = vunpack.c.l.b16 %v5566
          %v6837 = vunpack.c.h.b16 %v5566
          %v6838 = vunpack.c.l.b16 %v5567
          %v6839 = vunpack.c.h.b16 %v5567
          %v6840 = vunpack.c.l.b16 %v5568
          %v6841 = vunpack.c.h.b16 %v5568
          %v6842 = vunpack.c.l.b16 %v5569
          %v6843 = vunpack.c.h.b16 %v5569
          %v6844 = vunpack.c.l.b16 %v5570
          %v6845 = vunpack.c.h.b16 %v5570
          %v6846 = vunpack.c.l.b16 %v5571
          %v6847 = vunpack.c.h.b16 %v5571
          %v6848 = vunpack.c.l.b16 %v5572
          %v6849 = vunpack.c.h.b16 %v5572
          %v6850 = vunpack.c.l.b16 %v5573
          %v6851 = vunpack.c.h.b16 %v5573
          %v6852 = vunpack.c.l.b16 %v5574
          %v6853 = vunpack.c.h.b16 %v5574
          %v6854 = vunpack.c.l.b16 %v5575
          %v6855 = vunpack.c.h.b16 %v5575
          %v6856 = vunpack.c.l.b16 %v5576
          %v6857 = vunpack.c.h.b16 %v5576
          %v6858 = vunpack.c.l.b16 %v5577
          %v6859 = vunpack.c.h.b16 %v5577
          %v6860 = vunpack.c.l.b16 %v5578
          %v6861 = vunpack.c.h.b16 %v5578
          %v6862 = vunpack.c.l.b16 %v5579
          %v6863 = vunpack.c.h.b16 %v5579
          %v6864 = vunpack.c.l.b16 %v5580
          %v6865 = vunpack.c.h.b16 %v5580
          %v6866 = vunpack.c.l.b16 %v5581
          %v6867 = vunpack.c.h.b16 %v5581
          %v6868 = vunpack.c.l.b16 %v5582
          %v6869 = vunpack.c.h.b16 %v5582
          %v6870 = vunpack.c.l.b16 %v5583
          %v6871 = vunpack.c.h.b16 %v5583
          %v6872 = vunpack.c.l.b16 %v5584
          %v6873 = vunpack.c.h.b16 %v5584
          %v6874 = vunpack.c.l.b16 %v5585
          %v6875 = vunpack.c.h.b16 %v5585
          %v6876 = vunpack.c.l.b16 %v5586
          %v6877 = vunpack.c.h.b16 %v5586
          %v6878 = vunpack.c.l.b16 %v5587
          %v6879 = vunpack.c.h.b16 %v5587
          %v6880 = vunpack.c.l.b16 %v5588
          %v6881 = vunpack.c.h.b16 %v5588
          %v6882 = vunpack.c.l.b16 %v5589
          %v6883 = vunpack.c.h.b16 %v5589
          %v6884 = vunpack.c.l.b16 %v5590
          %v6885 = vunpack.c.h.b16 %v5590
          %v6886 = vunpack.c.l.b16 %v5591
          %v6887 = vunpack.c.h.b16 %v5591
          %v6888 = vunpack.c.l.b16 %v5592
          %v6889 = vunpack.c.h.b16 %v5592
          %v6890 = vunpack.c.l.b16 %v5593
          %v6891 = vunpack.c.h.b16 %v5593
          %v6892 = vunpack.c.l.b16 %v5594
          %v6893 = vunpack.c.h.b16 %v5594
          %v6894 = vunpack.c.l.b16 %v5595
          %v6895 = vunpack.c.h.b16 %v5595
          %v6896 = vunpack.c.l.b16 %v5596
          %v6897 = vunpack.c.h.b16 %v5596
          %v6898 = vunpack.c.l.b16 %v5597
          %v6899 = vunpack.c.h.b16 %v5597
          %v6900 = vunpack.c.l.b16 %v5598
          %v6901 = vunpack.c.h.b16 %v5598
          %v6902 = vunpack.c.l.b16 %v5599
          %v6903 = vunpack.c.h.b16 %v5599
          %v6904 = vunpack.c.l.b16 %v5600
          %v6905 = vunpack.c.h.b16 %v5600
          %v6906 = vunpack.c.l.b16 %v5601
          %v6907 = vunpack.c.h.b16 %v5601
          %v6908 = vunpack.c.l.b16 %v5602
          %v6909 = vunpack.c.h.b16 %v5602
          %v6910 = vunpack.c.l.b16 %v5603
          %v6911 = vunpack.c.h.b16 %v5603
          %v6912 = vunpack.c.l.b16 %v5604
          %v6913 = vunpack.c.h.b16 %v5604
          %v6914 = vunpack.c.l.b16 %v5605
          %v6915 = vunpack.c.h.b16 %v5605
          %v6916 = vunpack.c.l.b16 %v5606
          %v6917 = vunpack.c.h.b16 %v5606
          %v6918 = vunpack.c.l.b16 %v5607
          %v6919 = vunpack.c.h.b16 %v5607
          %v6920 = vunpack.c.l.b16 %v5608
          %v6921 = vunpack.c.h.b16 %v5608
          %v6922 = vunpack.c.l.b16 %v5609
          %v6923 = vunpack.c.h.b16 %v5609
          %v6924 = vunpack.c.l.b16 %v5610
          %v6925 = vunpack.c.h.b16 %v5610
          %v6926 = vunpack.c.l.b16 %v5611
          %v6927 = vunpack.c.h.b16 %v5611
          %v6928 = vunpack.c.l.b16 %v5612
          %v6929 = vunpack.c.h.b16 %v5612
          %v6930 = vunpack.c.l.b16 %v5613
          %v6931 = vunpack.c.h.b16 %v5613
          %v6932 = vunpack.c.l.b16 %v5614
          %v6933 = vunpack.c.h.b16 %v5614
          %v6934 = vunpack.c.l.b16 %v5615
          %v6935 = vunpack.c.h.b16 %v5615
          %v6936 = vunpack.c.l.b16 %v5616
          %v6937 = vunpack.c.h.b16 %v5616
          %v6938 = vunpack.c.l.b16 %v5617
          %v6939 = vunpack.c.h.b16 %v5617
          %v6940 = vunpack.c.l.b16 %v5618
          %v6941 = vunpack.c.h.b16 %v5618
          %v6942 = vunpack.c.l.b16 %v5619
          %v6943 = vunpack.c.h.b16 %v5619
          %v6944 = vunpack.c.l.b16 %v5620
          %v6945 = vunpack.c.h.b16 %v5620
          %v6946 = vunpack.c.l.b16 %v5621
          %v6947 = vunpack.c.h.b16 %v5621
          %v6948 = vunpack.c.l.b16 %v5622
          %v6949 = vunpack.c.h.b16 %v5622
          %v6950 = vunpack.c.l.b16 %v5623
          %v6951 = vunpack.c.h.b16 %v5623
          %v6952 = vunpack.c.l.b16 %v5624
          %v6953 = vunpack.c.h.b16 %v5624
          %v6954 = vunpack.c.l.b16 %v5625
          %v6955 = vunpack.c.h.b16 %v5625
          %v6956 = vunpack.c.l.b16 %v5626
          %v6957 = vunpack.c.h.b16 %v5626
          %v6958 = vunpack.c.l.b16 %v5627
          %v6959 = vunpack.c.h.b16 %v5627
          %v6960 = vunpack.c.l.b16 %v5628
          %v6961 = vunpack.c.h.b16 %v5628
          %v6962 = vunpack.c.l.b16 %v5629
          %v6963 = vunpack.c.h.b16 %v5629
          %v6964 = vunpack.c.l.b16 %v5630
          %v6965 = vunpack.c.h.b16 %v5630
          %v6966 = vunpack.c.l.b16 %v5631
          %v6967 = vunpack.c.h.b16 %v5631
          %v6968 = vunpack.c.l.b16 %v5632
          %v6969 = vunpack.c.h.b16 %v5632
          %v6970 = vunpack.c.l.b16 %v5633
          %v6971 = vunpack.c.h.b16 %v5633
          %v6972 = vunpack.c.l.b16 %v5634
          %v6973 = vunpack.c.h.b16 %v5634
          %v6974 = vunpack.c.l.b16 %v5635
          %v6975 = vunpack.c.h.b16 %v5635
          %v6976 = vunpack.c.l.b16 %v5636
          %v6977 = vunpack.c.h.b16 %v5636
          %v6978 = vunpack.c.l.b16 %v5637
          %v6979 = vunpack.c.h.b16 %v5637
          %v6980 = vunpack.c.l.b16 %v5638
          %v6981 = vunpack.c.h.b16 %v5638
          %v6982 = vunpack.c.l.b16 %v5639
          %v6983 = vunpack.c.h.b16 %v5639
          %v6984 = vunpack.c.l.b16 %v5640
          %v6985 = vunpack.c.h.b16 %v5640
          %v6986 = vunpack.c.l.b16 %v5641
          %v6987 = vunpack.c.h.b16 %v5641
          %v6988 = vunpack.c.l.b16 %v5642
          %v6989 = vunpack.c.h.b16 %v5642
          %v6990 = vunpack.c.l.b16 %v5643
          %v6991 = vunpack.c.h.b16 %v5643
          %v6992 = vunpack.c.l.b16 %v5644
          %v6993 = vunpack.c.h.b16 %v5644
          %v6994 = vunpack.c.l.b16 %v5645
          %v6995 = vunpack.c.h.b16 %v5645
          %v6996 = vunpack.c.l.b16 %v5646
          %v6997 = vunpack.c.h.b16 %v5646
          %v6998 = vunpack.c.l.b16 %v5647
          %v6999 = vunpack.c.h.b16 %v5647
          %v7000 = vunpack.c.l.b16 %v5648
          %v7001 = vunpack.c.h.b16 %v5648
          %v7002 = vunpack.c.l.b16 %v5649
          %v7003 = vunpack.c.h.b16 %v5649
          %v7004 = vunpack.c.l.b16 %v5650
          %v7005 = vunpack.c.h.b16 %v5650
          %v7006 = vunpack.c.l.b16 %v5651
          %v7007 = vunpack.c.h.b16 %v5651
          %v7008 = vunpack.c.l.b16 %v5652
          %v7009 = vunpack.c.h.b16 %v5652
          %v7010 = vunpack.c.l.b16 %v5653
          %v7011 = vunpack.c.h.b16 %v5653
          %v7012 = vunpack.c.l.b16 %v5654
          %v7013 = vunpack.c.h.b16 %v5654
          %v7014 = vunpack.c.l.b16 %v5655
          %v7015 = vunpack.c.h.b16 %v5655
          %v7016 = vunpack.c.l.b16 %v5656
          %v7017 = vunpack.c.h.b16 %v5656
          %v7018 = vunpack.c.l.b16 %v5657
          %v7019 = vunpack.c.h.b16 %v5657
          %v7020 = vunpack.c.l.b16 %v5658
          %v7021 = vunpack.c.h.b16 %v5658
          %v7022 = vunpack.c.l.b16 %v5659
          %v7023 = vunpack.c.h.b16 %v5659
          %v7024 = vunpack.c.l.b16 %v5660
          %v7025 = vunpack.c.h.b16 %v5660
          %v7026 = vunpack.c.l.b16 %v5661
          %v7027 = vunpack.c.h.b16 %v5661
          %v7028 = vunpack.c.l.b16 %v5662
          %v7029 = vunpack.c.h.b16 %v5662
          %v7030 = vunpack.c.l.b16 %v5663
          %v7031 = vunpack.c.h.b16 %v5663
          %v7032 = vunpack.c.l.b16 %v5664
          %v7033 = vunpack.c.h.b16 %v5664
          %v7034 = vunpack.c.l.b16 %v5665
          %v7035 = vunpack.c.h.b16 %v5665
          %v7036 = vunpack.c.l.b16 %v5666
          %v7037 = vunpack.c.h.b16 %v5666
          %v7038 = vunpack.c.l.b16 %v5667
          %v7039 = vunpack.c.h.b16 %v5667
          %v7040 = vunpack.c.l.b16 %v5668
          %v7041 = vunpack.c.h.b16 %v5668
          %v7042 = vunpack.c.l.b16 %v5669
          %v7043 = vunpack.c.h.b16 %v5669
          %v7044 = vunpack.c.l.b16 %v5670
          %v7045 = vunpack.c.h.b16 %v5670
          %v7046 = vunpack.c.l.b16 %v5671
          %v7047 = vunpack.c.h.b16 %v5671
          %v7048 = vunpack.c.l.b16 %v5672
          %v7049 = vunpack.c.h.b16 %v5672
          %v7050 = vunpack.c.l.b16 %v5673
          %v7051 = vunpack.c.h.b16 %v5673
          %v7052 = vunpack.c.l.b16 %v5674
          %v7053 = vunpack.c.h.b16 %v5674
          %v7054 = vunpack.c.l.b16 %v5675
          %v7055 = vunpack.c.h.b16 %v5675
          %v7056 = vunpack.c.l.b16 %v5676
          %v7057 = vunpack.c.h.b16 %v5676
          %v7058 = vunpack.c.l.b16 %v5677
          %v7059 = vunpack.c.h.b16 %v5677
          %v7060 = vunpack.c.l.b16 %v5678
          %v7061 = vunpack.c.h.b16 %v5678
          %v7062 = vunpack.c.l.b16 %v5679
          %v7063 = vunpack.c.h.b16 %v5679
          %v7064 = vunpack.c.l.b16 %v5680
          %v7065 = vunpack.c.h.b16 %v5680
          %v7066 = vunpack.c.l.b16 %v5681
          %v7067 = vunpack.c.h.b16 %v5681
          %v7068 = vunpack.c.l.b16 %v5682
          %v7069 = vunpack.c.h.b16 %v5682
          %v7070 = vunpack.c.l.b16 %v5683
          %v7071 = vunpack.c.h.b16 %v5683
          %v7072 = vunpack.c.l.b16 %v5684
          %v7073 = vunpack.c.h.b16 %v5684
          %v7074 = vunpack.c.l.b16 %v5685
          %v7075 = vunpack.c.h.b16 %v5685
          %v7076 = vunpack.c.l.b16 %v5686
          %v7077 = vunpack.c.h.b16 %v5686
          %v7078 = vunpack.c.l.b16 %v5687
          %v7079 = vunpack.c.h.b16 %v5687
          %v7080 = vunpack.c.l.b16 %v5688
          %v7081 = vunpack.c.h.b16 %v5688
          %v7082 = vunpack.c.l.b16 %v5689
          %v7083 = vunpack.c.h.b16 %v5689
          %v7084 = vunpack.c.l.b16 %v5690
          %v7085 = vunpack.c.h.b16 %v5690
          %v7086 = vunpack.c.l.b16 %v5691
          %v7087 = vunpack.c.h.b16 %v5691
          %v7088 = vunpack.c.l.b16 %v5692
          %v7089 = vunpack.c.h.b16 %v5692
          %v7090 = vunpack.c.l.b16 %v5693
          %v7091 = vunpack.c.h.b16 %v5693
          %v7092 = vunpack.c.l.b16 %v5694
          %v7093 = vunpack.c.h.b16 %v5694
          %v7094 = vunpack.c.l.b16 %v5695
          %v7095 = vunpack.c.h.b16 %v5695
          %v7096 = vunpack.c.l.b16 %v5696
          %v7097 = vunpack.c.h.b16 %v5696
          %v7098 = vunpack.c.l.b16 %v5697
          %v7099 = vunpack.c.h.b16 %v5697
          %v7100 = vunpack.c.l.b16 %v5698
          %v7101 = vunpack.c.h.b16 %v5698
          %v7102 = vunpack.c.l.b16 %v5699
          %v7103 = vunpack.c.h.b16 %v5699
          %v7104 = vunpack.c.l.b16 %v5700
          %v7105 = vunpack.c.h.b16 %v5700
          %v7106 = vunpack.c.l.b16 %v5701
          %v7107 = vunpack.c.h.b16 %v5701
          %v7108 = vunpack.c.l.b16 %v5702
          %v7109 = vunpack.c.h.b16 %v5702
          %v7110 = vunpack.c.l.b16 %v5703
          %v7111 = vunpack.c.h.b16 %v5703
          %v7112 = vunpack.c.l.b16 %v5704
          %v7113 = vunpack.c.h.b16 %v5704
          %v7114 = vunpack.c.l.b16 %v5705
          %v7115 = vunpack.c.h.b16 %v5705
          %v7116 = vunpack.c.l.b16 %v5706
          %v7117 = vunpack.c.h.b16 %v5706
          %v7118 = vunpack.c.l.b16 %v5707
          %v7119 = vunpack.c.h.b16 %v5707
          %v7120 = vunpack.c.l.b16 %v5708
          %v7121 = vunpack.c.h.b16 %v5708
          %v7122 = vunpack.c.l.b16 %v5709
          %v7123 = vunpack.c.h.b16 %v5709
          %v7124 = vunpack.c.l.b16 %v5710
          %v7125 = vunpack.c.h.b16 %v5710
          %v7126 = vunpack.c.l.b16 %v5711
          %v7127 = vunpack.c.h.b16 %v5711
          %v7128 = vunpack.c.l.b16 %v5712
          %v7129 = vunpack.c.h.b16 %v5712
          %v7130 = vunpack.c.l.b16 %v5713
          %v7131 = vunpack.c.h.b16 %v5713
          %v7132 = vunpack.c.l.b16 %v5714
          %v7133 = vunpack.c.h.b16 %v5714
          %v7134 = vunpack.c.l.b16 %v5715
          %v7135 = vunpack.c.h.b16 %v5715
          %v7136 = vunpack.c.l.b16 %v5716
          %v7137 = vunpack.c.h.b16 %v5716
          %v7138 = vunpack.c.l.b16 %v5717
          %v7139 = vunpack.c.h.b16 %v5717
          %v7140 = vunpack.c.l.b16 %v5718
          %v7141 = vunpack.c.h.b16 %v5718
          %v7142 = vunpack.c.l.b16 %v5719
          %v7143 = vunpack.c.h.b16 %v5719
          %v7144 = vunpack.c.l.b16 %v5720
          %v7145 = vunpack.c.h.b16 %v5720
          %v7146 = vunpack.c.l.b16 %v5721
          %v7147 = vunpack.c.h.b16 %v5721
          %v7148 = vunpack.c.l.b16 %v5722
          %v7149 = vunpack.c.h.b16 %v5722
          %v7150 = vunpack.c.l.b16 %v5723
          %v7151 = vunpack.c.h.b16 %v5723
          %v7152 = vunpack.c.l.b16 %v5724
          %v7153 = vunpack.c.h.b16 %v5724
          %v7154 = vunpack.c.l.b16 %v5725
          %v7155 = vunpack.c.h.b16 %v5725
          %v7156 = vunpack.c.l.b16 %v5726
          %v7157 = vunpack.c.h.b16 %v5726
          %v7158 = vunpack.c.l.b16 %v5727
          %v7159 = vunpack.c.h.b16 %v5727
          %v7160 = vunpack.c.l.b16 %v5728
          %v7161 = vunpack.c.h.b16 %v5728
          %v7162 = vunpack.c.l.b16 %v5729
          %v7163 = vunpack.c.h.b16 %v5729
          %v7164 = vunpack.c.l.b16 %v5730
          %v7165 = vunpack.c.h.b16 %v5730
          %v7166 = vunpack.c.l.b16 %v5731
          %v7167 = vunpack.c.h.b16 %v5731
          %v7168 = vunpack.c.l.b16 %v5732
          %v7169 = vunpack.c.h.b16 %v5732
          %v7170 = vunpack.c.l.b16 %v5733
          %v7171 = vunpack.c.h.b16 %v5733
          %v7172 = vunpack.c.l.b16 %v5734
          %v7173 = vunpack.c.h.b16 %v5734
          %v7174 = vunpack.c.l.b16 %v5735
          %v7175 = vunpack.c.h.b16 %v5735
          %v7176 = vunpack.c.l.b16 %v5736
          %v7177 = vunpack.c.h.b16 %v5736
          %v7178 = vunpack.c.l.b16 %v5737
          %v7179 = vunpack.c.h.b16 %v5737
          %v7180 = vunpack.c.l.b16 %v5738
          %v7181 = vunpack.c.h.b16 %v5738
          %v7182 = vunpack.c.l.b16 %v5739
          %v7183 = vunpack.c.h.b16 %v5739
          %v7184 = vunpack.c.l.b16 %v5740
          %v7185 = vunpack.c.h.b16 %v5740
          %v7186 = vunpack.c.l.b16 %v5741
          %v7187 = vunpack.c.h.b16 %v5741
          %v7188 = vunpack.c.l.b16 %v5742
          %v7189 = vunpack.c.h.b16 %v5742
          %v7190 = vunpack.c.l.b16 %v5743
          %v7191 = vunpack.c.h.b16 %v5743
          %v7192 = vunpack.c.l.b16 %v5744
          %v7193 = vunpack.c.h.b16 %v5744
          %v7194 = vunpack.c.l.b16 %v5745
          %v7195 = vunpack.c.h.b16 %v5745
          %v7196 = vunpack.c.l.b16 %v5746
          %v7197 = vunpack.c.h.b16 %v5746
          %v7198 = vunpack.c.l.b16 %v5747
          %v7199 = vunpack.c.h.b16 %v5747
          %v7200 = vunpack.c.l.b16 %v5748
          %v7201 = vunpack.c.h.b16 %v5748
          %v7202 = vunpack.c.l.b16 %v5749
          %v7203 = vunpack.c.h.b16 %v5749
          %v7204 = vunpack.c.l.b16 %v5750
          %v7205 = vunpack.c.h.b16 %v5750
          %v7206 = vunpack.c.l.b16 %v5751
          %v7207 = vunpack.c.h.b16 %v5751
          %v7208 = vunpack.c.l.b16 %v5752
          %v7209 = vunpack.c.h.b16 %v5752
          %v7210 = vunpack.c.l.b16 %v5753
          %v7211 = vunpack.c.h.b16 %v5753
          %v7212 = vunpack.c.l.b16 %v5754
          %v7213 = vunpack.c.h.b16 %v5754
          %v7214 = vunpack.c.l.b16 %v5755
          %v7215 = vunpack.c.h.b16 %v5755
          %v7216 = vunpack.c.l.b16 %v5756
          %v7217 = vunpack.c.h.b16 %v5756
          %v7218 = vunpack.c.l.b16 %v5757
          %v7219 = vunpack.c.h.b16 %v5757
          %v7220 = vunpack.c.l.b16 %v5758
          %v7221 = vunpack.c.h.b16 %v5758
          %v7222 = vunpack.c.l.b16 %v5759
          %v7223 = vunpack.c.h.b16 %v5759
          %v7224 = vunpack.c.l.b16 %v5760
          %v7225 = vunpack.c.h.b16 %v5760
          %v7226 = vunpack.c.l.b16 %v5761
          %v7227 = vunpack.c.h.b16 %v5761
          %v7228 = vunpack.c.l.b16 %v5762
          %v7229 = vunpack.c.h.b16 %v5762
          %v7230 = vunpack.c.l.b16 %v5763
          %v7231 = vunpack.c.h.b16 %v5763
          %v7232 = vunpack.c.l.b16 %v5764
          %v7233 = vunpack.c.h.b16 %v5764
          %v7234 = vunpack.c.l.b16 %v5765
          %v7235 = vunpack.c.h.b16 %v5765
          %v7236 = vunpack.c.l.b16 %v5766
          %v7237 = vunpack.c.h.b16 %v5766
          %v7238 = vunpack.c.l.b16 %v5767
          %v7239 = vunpack.c.h.b16 %v5767
          %v7240 = vunpack.c.l.b16 %v5768
          %v7241 = vunpack.c.h.b16 %v5768
          %v7242 = vunpack.c.l.b16 %v5769
          %v7243 = vunpack.c.h.b16 %v5769
          %v7244 = vunpack.c.l.b16 %v5770
          %v7245 = vunpack.c.h.b16 %v5770
          %v7246 = vunpack.c.l.b16 %v5771
          %v7247 = vunpack.c.h.b16 %v5771
          %v7248 = vunpack.c.l.b16 %v5772
          %v7249 = vunpack.c.h.b16 %v5772
          %v7250 = vunpack.c.l.b16 %v5773
          %v7251 = vunpack.c.h.b16 %v5773
          %v7252 = vunpack.c.l.b16 %v5774
          %v7253 = vunpack.c.h.b16 %v5774
          %v7254 = vunpack.c.l.b16 %v5775
          %v7255 = vunpack.c.h.b16 %v5775
          %v7256 = vunpack.c.l.b16 %v5776
          %v7257 = vunpack.c.h.b16 %v5776
          %v7258 = vunpack.c.l.b16 %v5777
          %v7259 = vunpack.c.h.b16 %v5777
          %v7260 = vunpack.c.l.b16 %v5778
          %v7261 = vunpack.c.h.b16 %v5778
          %v7262 = vunpack.c.l.b16 %v5779
          %v7263 = vunpack.c.h.b16 %v5779
          %v7264 = vunpack.c.l.b16 %v5780
          %v7265 = vunpack.c.h.b16 %v5780
          %v7266 = vunpack.c.l.b16 %v5781
          %v7267 = vunpack.c.h.b16 %v5781
          %v7268 = vunpack.c.l.b16 %v5782
          %v7269 = vunpack.c.h.b16 %v5782
          %v7270 = vunpack.c.l.b16 %v5783
          %v7271 = vunpack.c.h.b16 %v5783
          %v7272 = vunpack.c.l.b16 %v5784
          %v7273 = vunpack.c.h.b16 %v5784
          %v7274 = vunpack.c.l.b16 %v5785
          %v7275 = vunpack.c.h.b16 %v5785
          %v7276 = vunpack.c.l.b16 %v5786
          %v7277 = vunpack.c.h.b16 %v5786
          %v7278 = vunpack.c.l.b16 %v5787
          %v7279 = vunpack.c.h.b16 %v5787
          %v7280 = vunpack.c.l.b16 %v5788
          %v7281 = vunpack.c.h.b16 %v5788
          %v7282 = vunpack.c.l.b16 %v5789
          %v7283 = vunpack.c.h.b16 %v5789
          %v7284 = vunpack.c.l.b16 %v5790
          %v7285 = vunpack.c.h.b16 %v5790
          %v7286 = vunpack.c.l.b16 %v5791
          %v7287 = vunpack.c.h.b16 %v5791
          %v7288 = vunpack.c.l.b16 %v5792
          %v7289 = vunpack.c.h.b16 %v5792
          %v7290 = vunpack.c.l.b16 %v5793
          %v7291 = vunpack.c.h.b16 %v5793
          %v7292 = vunpack.c.l.b16 %v5794
          %v7293 = vunpack.c.h.b16 %v5794
          %v7294 = vunpack.c.l.b16 %v5795
          %v7295 = vunpack.c.h.b16 %v5795
          %v7296 = vunpack.c.l.b16 %v5796
          %v7297 = vunpack.c.h.b16 %v5796
          %v7298 = vunpack.c.l.b16 %v5797
          %v7299 = vunpack.c.h.b16 %v5797
          %v7300 = vunpack.c.l.b16 %v5798
          %v7301 = vunpack.c.h.b16 %v5798
          %v7302 = vunpack.c.l.b16 %v5799
          %v7303 = vunpack.c.h.b16 %v5799
          %v7304 = vunpack.c.l.b16 %v5800
          %v7305 = vunpack.c.h.b16 %v5800
          %v7306 = vunpack.c.l.b16 %v5801
          %v7307 = vunpack.c.h.b16 %v5801
          %v7308 = vunpack.c.l.b16 %v5802
          %v7309 = vunpack.c.h.b16 %v5802
          %v7310 = vunpack.c.l.b16 %v5803
          %v7311 = vunpack.c.h.b16 %v5803
          %v7312 = vunpack.c.l.b16 %v5804
          %v7313 = vunpack.c.h.b16 %v5804
          %v7314 = vunpack.c.l.b16 %v5805
          %v7315 = vunpack.c.h.b16 %v5805
          %v7316 = vunpack.c.l.b16 %v5806
          %v7317 = vunpack.c.h.b16 %v5806
          %v7318 = vunpack.c.l.b16 %v5807
          %v7319 = vunpack.c.h.b16 %v5807
          %v7320 = vunpack.c.l.b16 %v5808
          %v7321 = vunpack.c.h.b16 %v5808
          %v7322 = vunpack.c.l.b16 %v5809
          %v7323 = vunpack.c.h.b16 %v5809
          %v7324 = vunpack.c.l.b16 %v5810
          %v7325 = vunpack.c.h.b16 %v5810
          %v7326 = vunpack.c.l.b16 %v5811
          %v7327 = vunpack.c.h.b16 %v5811
          %v7328 = vunpack.c.l.b16 %v5812
          %v7329 = vunpack.c.h.b16 %v5812
          %v7330 = vunpack.c.l.b16 %v5813
          %v7331 = vunpack.c.h.b16 %v5813
          %v7332 = vunpack.c.l.b16 %v5814
          %v7333 = vunpack.c.h.b16 %v5814
          %v7334 = vunpack.c.l.b16 %v5815
          %v7335 = vunpack.c.h.b16 %v5815
          %v7336 = vunpack.c.l.b16 %v5816
          %v7337 = vunpack.c.h.b16 %v5816
          %v7338 = vunpack.c.l.b16 %v5817
          %v7339 = vunpack.c.h.b16 %v5817
          %v7340 = vunpack.c.l.b16 %v5818
          %v7341 = vunpack.c.h.b16 %v5818
          %v7342 = vunpack.c.l.b16 %v5819
          %v7343 = vunpack.c.h.b16 %v5819
          %v7344 = vunpack.c.l.b16 %v5820
          %v7345 = vunpack.c.h.b16 %v5820
          %v7346 = vunpack.c.l.b16 %v5821
          %v7347 = vunpack.c.h.b16 %v5821
          %v7348 = vunpack.c.l.b16 %v5822
          %v7349 = vunpack.c.h.b16 %v5822
          %v7350 = vunpack.c.l.b16 %v5823
          %v7351 = vunpack.c.h.b16 %v5823
          %v7352 = vunpack.c.l.b16 %v5824
          %v7353 = vunpack.c.h.b16 %v5824
          %v7354 = vunpack.c.l.b16 %v5825
          %v7355 = vunpack.c.h.b16 %v5825
          %v7356 = vunpack.c.l.b16 %v5826
          %v7357 = vunpack.c.h.b16 %v5826
          %v7358 = vunpack.c.l.b16 %v5827
          %v7359 = vunpack.c.h.b16 %v5827
          %v7360 = vunpack.c.l.b16 %v5828
          %v7361 = vunpack.c.h.b16 %v5828
          %v7362 = vunpack.c.l.b16 %v5829
          %v7363 = vunpack.c.h.b16 %v5829
          %v7364 = vunpack.c.l.b16 %v5830
          %v7365 = vunpack.c.h.b16 %v5830
          %v7366 = vunpack.c.l.b16 %v5831
          %v7367 = vunpack.c.h.b16 %v5831
          %v7368 = vunpack.c.l.b16 %v5832
          %v7369 = vunpack.c.h.b16 %v5832
          %v7370 = vunpack.c.l.b16 %v5833
          %v7371 = vunpack.c.h.b16 %v5833
          %v7372 = vunpack.c.l.b16 %v5834
          %v7373 = vunpack.c.h.b16 %v5834
          %v7374 = vunpack.c.l.b16 %v5835
          %v7375 = vunpack.c.h.b16 %v5835
          %v7376 = vunpack.c.l.b16 %v5836
          %v7377 = vunpack.c.h.b16 %v5836
          %v7378 = vunpack.c.l.b16 %v5837
          %v7379 = vunpack.c.h.b16 %v5837
          %v7380 = vunpack.c.l.b16 %v5838
          %v7381 = vunpack.c.h.b16 %v5838
          %v7382 = vunpack.c.l.b16 %v5839
          %v7383 = vunpack.c.h.b16 %v5839
          %v7384 = vunpack.c.l.b16 %v5840
          %v7385 = vunpack.c.h.b16 %v5840
          %v7386 = vunpack.c.l.b16 %v5841
          %v7387 = vunpack.c.h.b16 %v5841
          %v7388 = vunpack.c.l.b16 %v5842
          %v7389 = vunpack.c.h.b16 %v5842
          %v7390 = vunpack.c.l.b16 %v5843
          %v7391 = vunpack.c.h.b16 %v5843
          %v7392 = vunpack.c.l.b16 %v5844
          %v7393 = vunpack.c.h.b16 %v5844
          %v7394 = vunpack.c.l.b16 %v5845
          %v7395 = vunpack.c.h.b16 %v5845
          %v7396 = vunpack.c.l.b16 %v5846
          %v7397 = vunpack.c.h.b16 %v5846
          %v7398 = vunpack.c.l.b16 %v5847
          %v7399 = vunpack.c.h.b16 %v5847
          %v7400 = vunpack.c.l.b16 %v5848
          %v7401 = vunpack.c.h.b16 %v5848
          %v7402 = vunpack.c.l.b16 %v5849
          %v7403 = vunpack.c.h.b16 %v5849
          %v7404 = vunpack.c.l.b16 %v5850
          %v7405 = vunpack.c.h.b16 %v5850
          %v7406 = vunpack.c.l.b16 %v5851
          %v7407 = vunpack.c.h.b16 %v5851
          %v7408 = vunpack.c.l.b16 %v5852
          %v7409 = vunpack.c.h.b16 %v5852
          %v7410 = vunpack.c.l.b16 %v5853
          %v7411 = vunpack.c.h.b16 %v5853
          %v7412 = vpack.c.b16 %v6392, %v6388
          %v7413 = vpack.c.b16 %v6393, %v6389
          %v7414 = vpack.c.b16 %v6394, %v6390
          %v7415 = vpack.c.b16 %v6395, %v6391
          %v7416 = vpack.c.b16 %v6400, %v6396
          %v7417 = vpack.c.b16 %v6401, %v6397
          %v7418 = vpack.c.b16 %v6402, %v6398
          %v7419 = vpack.c.b16 %v6403, %v6399
          %v7420 = vpack.c.b16 %v6408, %v6404
          %v7421 = vpack.c.b16 %v6409, %v6405
          %v7422 = vpack.c.b16 %v6410, %v6406
          %v7423 = vpack.c.b16 %v6411, %v6407
          %v7424 = vpack.c.b16 %v6416, %v6412
          %v7425 = vpack.c.b16 %v6417, %v6413
          %v7426 = vpack.c.b16 %v6418, %v6414
          %v7427 = vpack.c.b16 %v6419, %v6415
          %v7428 = vpack.c.b16 %v6424, %v6420
          %v7429 = vpack.c.b16 %v6425, %v6421
          %v7430 = vpack.c.b16 %v6426, %v6422
          %v7431 = vpack.c.b16 %v6427, %v6423
          %v7432 = vpack.c.b16 %v6432, %v6428
          %v7433 = vpack.c.b16 %v6433, %v6429
          %v7434 = vpack.c.b16 %v6434, %v6430
          %v7435 = vpack.c.b16 %v6435, %v6431
          %v7436 = vpack.c.b16 %v6440, %v6436
          %v7437 = vpack.c.b16 %v6441, %v6437
          %v7438 = vpack.c.b16 %v6442, %v6438
          %v7439 = vpack.c.b16 %v6443, %v6439
          %v7440 = vpack.c.b16 %v6448, %v6444
          %v7441 = vpack.c.b16 %v6449, %v6445
          %v7442 = vpack.c.b16 %v6450, %v6446
          %v7443 = vpack.c.b16 %v6451, %v6447
          %v7444 = vpack.c.b16 %v6456, %v6452
          %v7445 = vpack.c.b16 %v6457, %v6453
          %v7446 = vpack.c.b16 %v6458, %v6454
          %v7447 = vpack.c.b16 %v6459, %v6455
          %v7448 = vpack.c.b16 %v6464, %v6460
          %v7449 = vpack.c.b16 %v6465, %v6461
          %v7450 = vpack.c.b16 %v6466, %v6462
          %v7451 = vpack.c.b16 %v6467, %v6463
          %v7452 = vpack.c.b16 %v6472, %v6468
          %v7453 = vpack.c.b16 %v6473, %v6469
          %v7454 = vpack.c.b16 %v6474, %v6470
          %v7455 = vpack.c.b16 %v6475, %v6471
          %v7456 = vpack.c.b16 %v6480, %v6476
          %v7457 = vpack.c.b16 %v6481, %v6477
          %v7458 = vpack.c.b16 %v6482, %v6478
          %v7459 = vpack.c.b16 %v6483, %v6479
          %v7460 = vpack.c.b16 %v6488, %v6484
          %v7461 = vpack.c.b16 %v6489, %v6485
          %v7462 = vpack.c.b16 %v6490, %v6486
          %v7463 = vpack.c.b16 %v6491, %v6487
          %v7464 = vpack.c.b16 %v6496, %v6492
          %v7465 = vpack.c.b16 %v6497, %v6493
          %v7466 = vpack.c.b16 %v6498, %v6494
          %v7467 = vpack.c.b16 %v6499, %v6495
          %v7468 = vpack.c.b16 %v6504, %v6500
          %v7469 = vpack.c.b16 %v6505, %v6501
          %v7470 = vpack.c.b16 %v6506, %v6502
          %v7471 = vpack.c.b16 %v6507, %v6503
          %v7472 = vpack.c.b16 %v6512, %v6508
          %v7473 = vpack.c.b16 %v6513, %v6509
          %v7474 = vpack.c.b16 %v6514, %v6510
          %v7475 = vpack.c.b16 %v6515, %v6511
          %v7476 = vpack.c.b16 %v6520, %v6516
          %v7477 = vpack.c.b16 %v6521, %v6517
          %v7478 = vpack.c.b16 %v6522, %v6518
          %v7479 = vpack.c.b16 %v6523, %v6519
          %v7480 = vpack.c.b16 %v6528, %v6524
          %v7481 = vpack.c.b16 %v6529, %v6525
          %v7482 = vpack.c.b16 %v6530, %v6526
          %v7483 = vpack.c.b16 %v6531, %v6527
          %v7484 = vpack.c.b16 %v6536, %v6532
          %v7485 = vpack.c.b16 %v6537, %v6533
          %v7486 = vpack.c.b16 %v6538, %v6534
          %v7487 = vpack.c.b16 %v6539, %v6535
          %v7488 = vpack.c.b16 %v6544, %v6540
          %v7489 = vpack.c.b16 %v6545, %v6541
          %v7490 = vpack.c.b16 %v6546, %v6542
          %v7491 = vpack.c.b16 %v6547, %v6543
          %v7492 = vpack.c.b16 %v6552, %v6548
          %v7493 = vpack.c.b16 %v6553, %v6549
          %v7494 = vpack.c.b16 %v6554, %v6550
          %v7495 = vpack.c.b16 %v6555, %v6551
          %v7496 = vpack.c.b16 %v6560, %v6556
          %v7497 = vpack.c.b16 %v6561, %v6557
          %v7498 = vpack.c.b16 %v6562, %v6558
          %v7499 = vpack.c.b16 %v6563, %v6559
          %v7500 = vpack.c.b16 %v6568, %v6564
          %v7501 = vpack.c.b16 %v6569, %v6565
          %v7502 = vpack.c.b16 %v6570, %v6566
          %v7503 = vpack.c.b16 %v6571, %v6567
          %v7504 = vpack.c.b16 %v6576, %v6572
          %v7505 = vpack.c.b16 %v6577, %v6573
          %v7506 = vpack.c.b16 %v6578, %v6574
          %v7507 = vpack.c.b16 %v6579, %v6575
          %v7508 = vpack.c.b16 %v6584, %v6580
          %v7509 = vpack.c.b16 %v6585, %v6581
          %v7510 = vpack.c.b16 %v6586, %v6582
          %v7511 = vpack.c.b16 %v6587, %v6583
          %v7512 = vpack.c.b16 %v6592, %v6588
          %v7513 = vpack.c.b16 %v6593, %v6589
          %v7514 = vpack.c.b16 %v6594, %v6590
          %v7515 = vpack.c.b16 %v6595, %v6591
          %v7516 = vpack.c.b16 %v6600, %v6596
          %v7517 = vpack.c.b16 %v6601, %v6597
          %v7518 = vpack.c.b16 %v6602, %v6598
          %v7519 = vpack.c.b16 %v6603, %v6599
          %v7520 = vpack.c.b16 %v6608, %v6604
          %v7521 = vpack.c.b16 %v6609, %v6605
          %v7522 = vpack.c.b16 %v6610, %v6606
          %v7523 = vpack.c.b16 %v6611, %v6607
          %v7524 = vpack.c.b16 %v6616, %v6612
          %v7525 = vpack.c.b16 %v6617, %v6613
          %v7526 = vpack.c.b16 %v6618, %v6614
          %v7527 = vpack.c.b16 %v6619, %v6615
          %v7528 = vpack.c.b16 %v6624, %v6620
          %v7529 = vpack.c.b16 %v6625, %v6621
          %v7530 = vpack.c.b16 %v6626, %v6622
          %v7531 = vpack.c.b16 %v6627, %v6623
          %v7532 = vpack.c.b16 %v6632, %v6628
          %v7533 = vpack.c.b16 %v6633, %v6629
          %v7534 = vpack.c.b16 %v6634, %v6630
          %v7535 = vpack.c.b16 %v6635, %v6631
          %v7536 = vpack.c.b16 %v6640, %v6636
          %v7537 = vpack.c.b16 %v6641, %v6637
          %v7538 = vpack.c.b16 %v6642, %v6638
          %v7539 = vpack.c.b16 %v6643, %v6639
          %v7540 = vpack.c.b16 %v6648, %v6644
          %v7541 = vpack.c.b16 %v6649, %v6645
          %v7542 = vpack.c.b16 %v6650, %v6646
          %v7543 = vpack.c.b16 %v6651, %v6647
          %v7544 = vpack.c.b16 %v6656, %v6652
          %v7545 = vpack.c.b16 %v6657, %v6653
          %v7546 = vpack.c.b16 %v6658, %v6654
          %v7547 = vpack.c.b16 %v6659, %v6655
          %v7548 = vpack.c.b16 %v6664, %v6660
          %v7549 = vpack.c.b16 %v6665, %v6661
          %v7550 = vpack.c.b16 %v6666, %v6662
          %v7551 = vpack.c.b16 %v6667, %v6663
          %v7552 = vpack.c.b16 %v6672, %v6668
          %v7553 = vpack.c.b16 %v6673, %v6669
          %v7554 = vpack.c.b16 %v6674, %v6670
          %v7555 = vpack.c.b16 %v6675, %v6671
          %v7556 = vpack.c.b16 %v6680, %v6676
          %v7557 = vpack.c.b16 %v6681, %v6677
          %v7558 = vpack.c.b16 %v6682, %v6678
          %v7559 = vpack.c.b16 %v6683, %v6679
          %v7560 = vpack.c.b16 %v6688, %v6684
          %v7561 = vpack.c.b16 %v6689, %v6685
          %v7562 = vpack.c.b16 %v6690, %v6686
          %v7563 = vpack.c.b16 %v6691, %v6687
          %v7564 = vpack.c.b16 %v6696, %v6692
          %v7565 = vpack.c.b16 %v6697, %v6693
          %v7566 = vpack.c.b16 %v6698, %v6694
          %v7567 = vpack.c.b16 %v6699, %v6695
          %v7568 = vpack.c.b16 %v6704, %v6700
          %v7569 = vpack.c.b16 %v6705, %v6701
          %v7570 = vpack.c.b16 %v6706, %v6702
          %v7571 = vpack.c.b16 %v6707, %v6703
          %v7572 = vpack.c.b16 %v6712, %v6708
          %v7573 = vpack.c.b16 %v6713, %v6709
          %v7574 = vpack.c.b16 %v6714, %v6710
          %v7575 = vpack.c.b16 %v6715, %v6711
          %v7576 = vpack.c.b16 %v6720, %v6716
          %v7577 = vpack.c.b16 %v6721, %v6717
          %v7578 = vpack.c.b16 %v6722, %v6718
          %v7579 = vpack.c.b16 %v6723, %v6719
          %v7580 = vpack.c.b16 %v6728, %v6724
          %v7581 = vpack.c.b16 %v6729, %v6725
          %v7582 = vpack.c.b16 %v6730, %v6726
          %v7583 = vpack.c.b16 %v6731, %v6727
          %v7584 = vpack.c.b16 %v6736, %v6732
          %v7585 = vpack.c.b16 %v6737, %v6733
          %v7586 = vpack.c.b16 %v6738, %v6734
          %v7587 = vpack.c.b16 %v6739, %v6735
          %v7588 = vpack.c.b16 %v6744, %v6740
          %v7589 = vpack.c.b16 %v6745, %v6741
          %v7590 = vpack.c.b16 %v6746, %v6742
          %v7591 = vpack.c.b16 %v6747, %v6743
          %v7592 = vpack.c.b16 %v6752, %v6748
          %v7593 = vpack.c.b16 %v6753, %v6749
          %v7594 = vpack.c.b16 %v6754, %v6750
          %v7595 = vpack.c.b16 %v6755, %v6751
          %v7596 = vpack.c.b16 %v6760, %v6756
          %v7597 = vpack.c.b16 %v6761, %v6757
          %v7598 = vpack.c.b16 %v6762, %v6758
          %v7599 = vpack.c.b16 %v6763, %v6759
          %v7600 = vpack.c.b16 %v6768, %v6764
          %v7601 = vpack.c.b16 %v6769, %v6765
          %v7602 = vpack.c.b16 %v6770, %v6766
          %v7603 = vpack.c.b16 %v6771, %v6767
          %v7604 = vpack.c.b16 %v6776, %v6772
          %v7605 = vpack.c.b16 %v6777, %v6773
          %v7606 = vpack.c.b16 %v6778, %v6774
          %v7607 = vpack.c.b16 %v6779, %v6775
          %v7608 = vpack.c.b16 %v6784, %v6780
          %v7609 = vpack.c.b16 %v6785, %v6781
          %v7610 = vpack.c.b16 %v6786, %v6782
          %v7611 = vpack.c.b16 %v6787, %v6783
          %v7612 = vpack.c.b16 %v6792, %v6788
          %v7613 = vpack.c.b16 %v6793, %v6789
          %v7614 = vpack.c.b16 %v6794, %v6790
          %v7615 = vpack.c.b16 %v6795, %v6791
          %v7616 = vpack.c.b16 %v6800, %v6796
          %v7617 = vpack.c.b16 %v6801, %v6797
          %v7618 = vpack.c.b16 %v6802, %v6798
          %v7619 = vpack.c.b16 %v6803, %v6799
          %v7620 = vpack.c.b16 %v6808, %v6804
          %v7621 = vpack.c.b16 %v6809, %v6805
          %v7622 = vpack.c.b16 %v6810, %v6806
          %v7623 = vpack.c.b16 %v6811, %v6807
          %v7624 = vpack.c.b16 %v6816, %v6812
          %v7625 = vpack.c.b16 %v6817, %v6813
          %v7626 = vpack.c.b16 %v6818, %v6814
          %v7627 = vpack.c.b16 %v6819, %v6815
          %v7628 = vpack.c.b16 %v6824, %v6820
          %v7629 = vpack.c.b16 %v6825, %v6821
          %v7630 = vpack.c.b16 %v6826, %v6822
          %v7631 = vpack.c.b16 %v6827, %v6823
          %v7632 = vpack.c.b16 %v6832, %v6828
          %v7633 = vpack.c.b16 %v6833, %v6829
          %v7634 = vpack.c.b16 %v6834, %v6830
          %v7635 = vpack.c.b16 %v6835, %v6831
          %v7636 = vpack.c.b16 %v6840, %v6836
          %v7637 = vpack.c.b16 %v6841, %v6837
          %v7638 = vpack.c.b16 %v6842, %v6838
          %v7639 = vpack.c.b16 %v6843, %v6839
          %v7640 = vpack.c.b16 %v6848, %v6844
          %v7641 = vpack.c.b16 %v6849, %v6845
          %v7642 = vpack.c.b16 %v6850, %v6846
          %v7643 = vpack.c.b16 %v6851, %v6847
          %v7644 = vpack.c.b16 %v6856, %v6852
          %v7645 = vpack.c.b16 %v6857, %v6853
          %v7646 = vpack.c.b16 %v6858, %v6854
          %v7647 = vpack.c.b16 %v6859, %v6855
          %v7648 = vpack.c.b16 %v6864, %v6860
          %v7649 = vpack.c.b16 %v6865, %v6861
          %v7650 = vpack.c.b16 %v6866, %v6862
          %v7651 = vpack.c.b16 %v6867, %v6863
          %v7652 = vpack.c.b16 %v6872, %v6868
          %v7653 = vpack.c.b16 %v6873, %v6869
          %v7654 = vpack.c.b16 %v6874, %v6870
          %v7655 = vpack.c.b16 %v6875, %v6871
          %v7656 = vpack.c.b16 %v6880, %v6876
          %v7657 = vpack.c.b16 %v6881, %v6877
          %v7658 = vpack.c.b16 %v6882, %v6878
          %v7659 = vpack.c.b16 %v6883, %v6879
          %v7660 = vpack.c.b16 %v6888, %v6884
          %v7661 = vpack.c.b16 %v6889, %v6885
          %v7662 = vpack.c.b16 %v6890, %v6886
          %v7663 = vpack.c.b16 %v6891, %v6887
          %v7664 = vpack.c.b16 %v6896, %v6892
          %v7665 = vpack.c.b16 %v6897, %v6893
          %v7666 = vpack.c.b16 %v6898, %v6894
          %v7667 = vpack.c.b16 %v6899, %v6895
          %v7668 = vpack.c.b16 %v6904, %v6900
          %v7669 = vpack.c.b16 %v6905, %v6901
          %v7670 = vpack.c.b16 %v6906, %v6902
          %v7671 = vpack.c.b16 %v6907, %v6903
          %v7672 = vpack.c.b16 %v6912, %v6908
          %v7673 = vpack.c.b16 %v6913, %v6909
          %v7674 = vpack.c.b16 %v6914, %v6910
          %v7675 = vpack.c.b16 %v6915, %v6911
          %v7676 = vpack.c.b16 %v6920, %v6916
          %v7677 = vpack.c.b16 %v6921, %v6917
          %v7678 = vpack.c.b16 %v6922, %v6918
          %v7679 = vpack.c.b16 %v6923, %v6919
          %v7680 = vpack.c.b16 %v6928, %v6924
          %v7681 = vpack.c.b16 %v6929, %v6925
          %v7682 = vpack.c.b16 %v6930, %v6926
          %v7683 = vpack.c.b16 %v6931, %v6927
          %v7684 = vpack.c.b16 %v6936, %v6932
          %v7685 = vpack.c.b16 %v6937, %v6933
          %v7686 = vpack.c.b16 %v6938, %v6934
          %v7687 = vpack.c.b16 %v6939, %v6935
          %v7688 = vpack.c.b16 %v6944, %v6940
          %v7689 = vpack.c.b16 %v6945, %v6941
          %v7690 = vpack.c.b16 %v6946, %v6942
          %v7691 = vpack.c.b16 %v6947, %v6943
          %v7692 = vpack.c.b16 %v6952, %v6948
          %v7693 = vpack.c.b16 %v6953, %v6949
          %v7694 = vpack.c.b16 %v6954, %v6950
          %v7695 = vpack.c.b16 %v6955, %v6951
          %v7696 = vpack.c.b16 %v6960, %v6956
          %v7697 = vpack.c.b16 %v6961, %v6957
          %v7698 = vpack.c.b16 %v6962, %v6958
          %v7699 = vpack.c.b16 %v6963, %v6959
          %v7700 = vpack.c.b16 %v6968, %v6964
          %v7701 = vpack.c.b16 %v6969, %v6965
          %v7702 = vpack.c.b16 %v6970, %v6966
          %v7703 = vpack.c.b16 %v6971, %v6967
          %v7704 = vpack.c.b16 %v6976, %v6972
          %v7705 = vpack.c.b16 %v6977, %v6973
          %v7706 = vpack.c.b16 %v6978, %v6974
          %v7707 = vpack.c.b16 %v6979, %v6975
          %v7708 = vpack.c.b16 %v6984, %v6980
          %v7709 = vpack.c.b16 %v6985, %v6981
          %v7710 = vpack.c.b16 %v6986, %v6982
          %v7711 = vpack.c.b16 %v6987, %v6983
          %v7712 = vpack.c.b16 %v6992, %v6988
          %v7713 = vpack.c.b16 %v6993, %v6989
          %v7714 = vpack.c.b16 %v6994, %v6990
          %v7715 = vpack.c.b16 %v6995, %v6991
          %v7716 = vpack.c.b16 %v7000, %v6996
          %v7717 = vpack.c.b16 %v7001, %v6997
          %v7718 = vpack.c.b16 %v7002, %v6998
          %v7719 = vpack.c.b16 %v7003, %v6999
          %v7720 = vpack.c.b16 %v7008, %v7004
          %v7721 = vpack.c.b16 %v7009, %v7005
          %v7722 = vpack.c.b16 %v7010, %v7006
          %v7723 = vpack.c.b16 %v7011, %v7007
          %v7724 = vpack.c.b16 %v7016, %v7012
          %v7725 = vpack.c.b16 %v7017, %v7013
          %v7726 = vpack.c.b16 %v7018, %v7014
          %v7727 = vpack.c.b16 %v7019, %v7015
          %v7728 = vpack.c.b16 %v7024, %v7020
          %v7729 = vpack.c.b16 %v7025, %v7021
          %v7730 = vpack.c.b16 %v7026, %v7022
          %v7731 = vpack.c.b16 %v7027, %v7023
          %v7732 = vpack.c.b16 %v7032, %v7028
          %v7733 = vpack.c.b16 %v7033, %v7029
          %v7734 = vpack.c.b16 %v7034, %v7030
          %v7735 = vpack.c.b16 %v7035, %v7031
          %v7736 = vpack.c.b16 %v7040, %v7036
          %v7737 = vpack.c.b16 %v7041, %v7037
          %v7738 = vpack.c.b16 %v7042, %v7038
          %v7739 = vpack.c.b16 %v7043, %v7039
          %v7740 = vpack.c.b16 %v7048, %v7044
          %v7741 = vpack.c.b16 %v7049, %v7045
          %v7742 = vpack.c.b16 %v7050, %v7046
          %v7743 = vpack.c.b16 %v7051, %v7047
          %v7744 = vpack.c.b16 %v7056, %v7052
          %v7745 = vpack.c.b16 %v7057, %v7053
          %v7746 = vpack.c.b16 %v7058, %v7054
          %v7747 = vpack.c.b16 %v7059, %v7055
          %v7748 = vpack.c.b16 %v7064, %v7060
          %v7749 = vpack.c.b16 %v7065, %v7061
          %v7750 = vpack.c.b16 %v7066, %v7062
          %v7751 = vpack.c.b16 %v7067, %v7063
          %v7752 = vpack.c.b16 %v7072, %v7068
          %v7753 = vpack.c.b16 %v7073, %v7069
          %v7754 = vpack.c.b16 %v7074, %v7070
          %v7755 = vpack.c.b16 %v7075, %v7071
          %v7756 = vpack.c.b16 %v7080, %v7076
          %v7757 = vpack.c.b16 %v7081, %v7077
          %v7758 = vpack.c.b16 %v7082, %v7078
          %v7759 = vpack.c.b16 %v7083, %v7079
          %v7760 = vpack.c.b16 %v7088, %v7084
          %v7761 = vpack.c.b16 %v7089, %v7085
          %v7762 = vpack.c.b16 %v7090, %v7086
          %v7763 = vpack.c.b16 %v7091, %v7087
          %v7764 = vpack.c.b16 %v7096, %v7092
          %v7765 = vpack.c.b16 %v7097, %v7093
          %v7766 = vpack.c.b16 %v7098, %v7094
          %v7767 = vpack.c.b16 %v7099, %v7095
          %v7768 = vpack.c.b16 %v7104, %v7100
          %v7769 = vpack.c.b16 %v7105, %v7101
          %v7770 = vpack.c.b16 %v7106, %v7102
          %v7771 = vpack.c.b16 %v7107, %v7103
          %v7772 = vpack.c.b16 %v7112, %v7108
          %v7773 = vpack.c.b16 %v7113, %v7109
          %v7774 = vpack.c.b16 %v7114, %v7110
          %v7775 = vpack.c.b16 %v7115, %v7111
          %v7776 = vpack.c.b16 %v7120, %v7116
          %v7777 = vpack.c.b16 %v7121, %v7117
          %v7778 = vpack.c.b16 %v7122, %v7118
          %v7779 = vpack.c.b16 %v7123, %v7119
          %v7780 = vpack.c.b16 %v7128, %v7124
          %v7781 = vpack.c.b16 %v7129, %v7125
          %v7782 = vpack.c.b16 %v7130, %v7126
          %v7783 = vpack.c.b16 %v7131, %v7127
          %v7784 = vpack.c.b16 %v7136, %v7132
          %v7785 = vpack.c.b16 %v7137, %v7133
          %v7786 = vpack.c.b16 %v7138, %v7134
          %v7787 = vpack.c.b16 %v7139, %v7135
          %v7788 = vpack.c.b16 %v7144, %v7140
          %v7789 = vpack.c.b16 %v7145, %v7141
          %v7790 = vpack.c.b16 %v7146, %v7142
          %v7791 = vpack.c.b16 %v7147, %v7143
          %v7792 = vpack.c.b16 %v7152, %v7148
          %v7793 = vpack.c.b16 %v7153, %v7149
          %v7794 = vpack.c.b16 %v7154, %v7150
          %v7795 = vpack.c.b16 %v7155, %v7151
          %v7796 = vpack.c.b16 %v7160, %v7156
          %v7797 = vpack.c.b16 %v7161, %v7157
          %v7798 = vpack.c.b16 %v7162, %v7158
          %v7799 = vpack.c.b16 %v7163, %v7159
          %v7800 = vpack.c.b16 %v7168, %v7164
          %v7801 = vpack.c.b16 %v7169, %v7165
          %v7802 = vpack.c.b16 %v7170, %v7166
          %v7803 = vpack.c.b16 %v7171, %v7167
          %v7804 = vpack.c.b16 %v7176, %v7172
          %v7805 = vpack.c.b16 %v7177, %v7173
          %v7806 = vpack.c.b16 %v7178, %v7174
          %v7807 = vpack.c.b16 %v7179, %v7175
          %v7808 = vpack.c.b16 %v7184, %v7180
          %v7809 = vpack.c.b16 %v7185, %v7181
          %v7810 = vpack.c.b16 %v7186, %v7182
          %v7811 = vpack.c.b16 %v7187, %v7183
          %v7812 = vpack.c.b16 %v7192, %v7188
          %v7813 = vpack.c.b16 %v7193, %v7189
          %v7814 = vpack.c.b16 %v7194, %v7190
          %v7815 = vpack.c.b16 %v7195, %v7191
          %v7816 = vpack.c.b16 %v7200, %v7196
          %v7817 = vpack.c.b16 %v7201, %v7197
          %v7818 = vpack.c.b16 %v7202, %v7198
          %v7819 = vpack.c.b16 %v7203, %v7199
          %v7820 = vpack.c.b16 %v7208, %v7204
          %v7821 = vpack.c.b16 %v7209, %v7205
          %v7822 = vpack.c.b16 %v7210, %v7206
          %v7823 = vpack.c.b16 %v7211, %v7207
          %v7824 = vpack.c.b16 %v7216, %v7212
          %v7825 = vpack.c.b16 %v7217, %v7213
          %v7826 = vpack.c.b16 %v7218, %v7214
          %v7827 = vpack.c.b16 %v7219, %v7215
          %v7828 = vpack.c.b16 %v7224, %v7220
          %v7829 = vpack.c.b16 %v7225, %v7221
          %v7830 = vpack.c.b16 %v7226, %v7222
          %v7831 = vpack.c.b16 %v7227, %v7223
          %v7832 = vpack.c.b16 %v7232, %v7228
          %v7833 = vpack.c.b16 %v7233, %v7229
          %v7834 = vpack.c.b16 %v7234, %v7230
          %v7835 = vpack.c.b16 %v7235, %v7231
          %v7836 = vpack.c.b16 %v7240, %v7236
          %v7837 = vpack.c.b16 %v7241, %v7237
          %v7838 = vpack.c.b16 %v7242, %v7238
          %v7839 = vpack.c.b16 %v7243, %v7239
          %v7840 = vpack.c.b16 %v7248, %v7244
          %v7841 = vpack.c.b16 %v7249, %v7245
          %v7842 = vpack.c.b16 %v7250, %v7246
          %v7843 = vpack.c.b16 %v7251, %v7247
          %v7844 = vpack.c.b16 %v7256, %v7252
          %v7845 = vpack.c.b16 %v7257, %v7253
          %v7846 = vpack.c.b16 %v7258, %v7254
          %v7847 = vpack.c.b16 %v7259, %v7255
          %v7848 = vpack.c.b16 %v7264, %v7260
          %v7849 = vpack.c.b16 %v7265, %v7261
          %v7850 = vpack.c.b16 %v7266, %v7262
          %v7851 = vpack.c.b16 %v7267, %v7263
          %v7852 = vpack.c.b16 %v7272, %v7268
          %v7853 = vpack.c.b16 %v7273, %v7269
          %v7854 = vpack.c.b16 %v7274, %v7270
          %v7855 = vpack.c.b16 %v7275, %v7271
          %v7856 = vpack.c.b16 %v7280, %v7276
          %v7857 = vpack.c.b16 %v7281, %v7277
          %v7858 = vpack.c.b16 %v7282, %v7278
          %v7859 = vpack.c.b16 %v7283, %v7279
          %v7860 = vpack.c.b16 %v7288, %v7284
          %v7861 = vpack.c.b16 %v7289, %v7285
          %v7862 = vpack.c.b16 %v7290, %v7286
          %v7863 = vpack.c.b16 %v7291, %v7287
          %v7864 = vpack.c.b16 %v7296, %v7292
          %v7865 = vpack.c.b16 %v7297, %v7293
          %v7866 = vpack.c.b16 %v7298, %v7294
          %v7867 = vpack.c.b16 %v7299, %v7295
          %v7868 = vpack.c.b16 %v7304, %v7300
          %v7869 = vpack.c.b16 %v7305, %v7301
          %v7870 = vpack.c.b16 %v7306, %v7302
          %v7871 = vpack.c.b16 %v7307, %v7303
          %v7872 = vpack.c.b16 %v7312, %v7308
          %v7873 = vpack.c.b16 %v7313, %v7309
          %v7874 = vpack.c.b16 %v7314, %v7310
          %v7875 = vpack.c.b16 %v7315, %v7311
          %v7876 = vpack.c.b16 %v7320, %v7316
          %v7877 = vpack.c.b16 %v7321, %v7317
          %v7878 = vpack.c.b16 %v7322, %v7318
          %v7879 = vpack.c.b16 %v7323, %v7319
          %v7880 = vpack.c.b16 %v7328, %v7324
          %v7881 = vpack.c.b16 %v7329, %v7325
          %v7882 = vpack.c.b16 %v7330, %v7326
          %v7883 = vpack.c.b16 %v7331, %v7327
          %v7884 = vpack.c.b16 %v7336, %v7332
          %v7885 = vpack.c.b16 %v7337, %v7333
          %v7886 = vpack.c.b16 %v7338, %v7334
          %v7887 = vpack.c.b16 %v7339, %v7335
          %v7888 = vpack.c.b16 %v7344, %v7340
          %v7889 = vpack.c.b16 %v7345, %v7341
          %v7890 = vpack.c.b16 %v7346, %v7342
          %v7891 = vpack.c.b16 %v7347, %v7343
          %v7892 = vpack.c.b16 %v7352, %v7348
          %v7893 = vpack.c.b16 %v7353, %v7349
          %v7894 = vpack.c.b16 %v7354, %v7350
          %v7895 = vpack.c.b16 %v7355, %v7351
          %v7896 = vpack.c.b16 %v7360, %v7356
          %v7897 = vpack.c.b16 %v7361, %v7357
          %v7898 = vpack.c.b16 %v7362, %v7358
          %v7899 = vpack.c.b16 %v7363, %v7359
          %v7900 = vpack.c.b16 %v7368, %v7364
          %v7901 = vpack.c.b16 %v7369, %v7365
          %v7902 = vpack.c.b16 %v7370, %v7366
          %v7903 = vpack.c.b16 %v7371, %v7367
          %v7904 = vpack.c.b16 %v7376, %v7372
          %v7905 = vpack.c.b16 %v7377, %v7373
          %v7906 = vpack.c.b16 %v7378, %v7374
          %v7907 = vpack.c.b16 %v7379, %v7375
          %v7908 = vpack.c.b16 %v7384, %v7380
          %v7909 = vpack.c.b16 %v7385, %v7381
          %v7910 = vpack.c.b16 %v7386, %v7382
          %v7911 = vpack.c.b16 %v7387, %v7383
          %v7912 = vpack.c.b16 %v7392, %v7388
          %v7913 = vpack.c.b16 %v7393, %v7389
          %v7914 = vpack.c.b16 %v7394, %v7390
          %v7915 = vpack.c.b16 %v7395, %v7391
          %v7916 = vpack.c.b16 %v7400, %v7396
          %v7917 = vpack.c.b16 %v7401, %v7397
          %v7918 = vpack.c.b16 %v7402, %v7398
          %v7919 = vpack.c.b16 %v7403, %v7399
          %v7920 = vpack.c.b16 %v7408, %v7404
          %v7921 = vpack.c.b16 %v7409, %v7405
          %v7922 = vpack.c.b16 %v7410, %v7406
          %v7923 = vpack.c.b16 %v7411, %v7407
          %8436 = vmatprep.subr.bf16.mxu0 %v7441
          %8437 = vmatpush1.bf16.msra.mxu0 %v7440
          %8438 = vmatprep.subr.bf16.mxu0 %v7437
          %8439 = vmatpush1.bf16.msra.mxu0 %v7436
          %8440 = vmatprep.subr.bf16.mxu0 %v7433
          %8441 = vmatpush1.bf16.msra.mxu0 %v7432
          %8442 = vmatprep.subr.bf16.mxu0 %v7429
          %8443 = vmatpush1.bf16.msra.mxu0 %v7428
          %8444 = vmatprep.subr.bf16.mxu0 %v7425
          %8445 = vmatpush1.bf16.msra.mxu0 %v7424
          %8446 = vmatprep.subr.bf16.mxu0 %v7421
          %8447 = vmatpush1.bf16.msra.mxu0 %v7420
          %8448 = vmatprep.subr.bf16.mxu0 %v7417
          %8449 = vmatpush1.bf16.msra.mxu0 %v7416
          %8450 = vmatprep.subr.bf16.mxu0 %v7413
          %8451 = vmatpush1.bf16.msra.mxu0 %v7412
          %8452 = vmatprep.subr.bf16.mxu0 %v7473
          %8453 = vmatpush2.bf16.msra.mxu0 %v7472
          %8454 = vmatprep.subr.bf16.mxu0 %v7469
          %8455 = vmatpush2.bf16.msra.mxu0 %v7468
          %8456 = vmatprep.subr.bf16.mxu0 %v7465
          %8457 = vmatpush2.bf16.msra.mxu0 %v7464
          %8458 = vmatprep.subr.bf16.mxu0 %v7461
          %8459 = vmatpush2.bf16.msra.mxu0 %v7460
          %8460 = vmatprep.subr.bf16.mxu0 %v7457
          %8461 = vmatpush2.bf16.msra.mxu0 %v7456
          %8462 = vmatprep.subr.bf16.mxu0 %v7453
          %8463 = vmatpush2.bf16.msra.mxu0 %v7452
          %8464 = vmatprep.subr.bf16.mxu0 %v7449
          %8465 = vmatpush2.bf16.msra.mxu0 %v7448
          %8466 = vmatprep.subr.bf16.mxu0 %v7445
          %8467 = vmatpush2.bf16.msra.mxu0 %v7444
          %8468 = vmatprep.mubr.bf16.mxu0 %v5327
          %8469 = vmatmul.mubr.bf16.gmra.mxu0 %v5326
          %v8470 = vpop.f32.mrf.mxu0
          %v8471 = vadd.f32 %v5859, %v8470
          %v8472 = vpop.f32.mrf.mxu0
          %v8473 = vadd.f32 %v5863, %v8472
          %v8474 = vpop.f32.mrf.mxu0
          %v8475 = vpop.f32.mrf.mxu0
          %8476 = vdwg.mxu0
          %8477 = vmatprep.subr.bf16.mxu0 %v7505
          %8478 = vmatpush1.bf16.msra.mxu0 %v7504
          %8479 = vmatprep.subr.bf16.mxu0 %v7501
          %8480 = vmatpush1.bf16.msra.mxu0 %v7500
          %8481 = vmatprep.subr.bf16.mxu0 %v7497
          %8482 = vmatpush1.bf16.msra.mxu0 %v7496
          %8483 = vmatprep.subr.bf16.mxu0 %v7493
          %8484 = vmatpush1.bf16.msra.mxu0 %v7492
          %8485 = vmatprep.subr.bf16.mxu0 %v7489
          %8486 = vmatpush1.bf16.msra.mxu0 %v7488
          %8487 = vmatprep.subr.bf16.mxu0 %v7485
          %8488 = vmatpush1.bf16.msra.mxu0 %v7484
          %8489 = vmatprep.subr.bf16.mxu0 %v7481
          %8490 = vmatpush1.bf16.msra.mxu0 %v7480
          %8491 = vmatprep.subr.bf16.mxu0 %v7477
          %8492 = vmatpush1.bf16.msra.mxu0 %v7476
          %8493 = vmatprep.subr.bf16.mxu0 %v7537
          %8494 = vmatpush2.bf16.msra.mxu0 %v7536
          %8495 = vmatprep.subr.bf16.mxu0 %v7533
          %8496 = vmatpush2.bf16.msra.mxu0 %v7532
          %8497 = vmatprep.subr.bf16.mxu0 %v7529
          %8498 = vmatpush2.bf16.msra.mxu0 %v7528
          %8499 = vmatprep.subr.bf16.mxu0 %v7525
          %8500 = vmatpush2.bf16.msra.mxu0 %v7524
          %8501 = vmatprep.subr.bf16.mxu0 %v7521
          %8502 = vmatpush2.bf16.msra.mxu0 %v7520
          %8503 = vmatprep.subr.bf16.mxu0 %v7517
          %8504 = vmatpush2.bf16.msra.mxu0 %v7516
          %8505 = vmatprep.subr.bf16.mxu0 %v7513
          %8506 = vmatpush2.bf16.msra.mxu0 %v7512
          %8507 = vmatprep.subr.bf16.mxu0 %v7509
          %8508 = vmatpush2.bf16.msra.mxu0 %v7508
          %8509 = vmatprep.mubr.bf16.mxu0 %v5329
          %8510 = vmatmul.mubr.bf16.gmra.mxu0 %v5328
          %v8511 = vpop.f32.mrf.mxu0
          %v8512 = vadd.f32 %v8471, %v8511
          %v8513 = vpop.f32.mrf.mxu0
          %v8514 = vadd.f32 %v8473, %v8513
          %v8515 = vpop.f32.mrf.mxu0
          %v8516 = vpop.f32.mrf.mxu0
          %8517 = vdwg.mxu0
          %8518 = vmatprep.subr.bf16.mxu0 %v7569
          %8519 = vmatpush1.bf16.msra.mxu0 %v7568
          %8520 = vmatprep.subr.bf16.mxu0 %v7565
          %8521 = vmatpush1.bf16.msra.mxu0 %v7564
          %8522 = vmatprep.subr.bf16.mxu0 %v7561
          %8523 = vmatpush1.bf16.msra.mxu0 %v7560
          %8524 = vmatprep.subr.bf16.mxu0 %v7557
          %8525 = vmatpush1.bf16.msra.mxu0 %v7556
          %8526 = vmatprep.subr.bf16.mxu0 %v7553
          %8527 = vmatpush1.bf16.msra.mxu0 %v7552
          %8528 = vmatprep.subr.bf16.mxu0 %v7549
          %8529 = vmatpush1.bf16.msra.mxu0 %v7548
          %8530 = vmatprep.subr.bf16.mxu0 %v7545
          %8531 = vmatpush1.bf16.msra.mxu0 %v7544
          %8532 = vmatprep.subr.bf16.mxu0 %v7541
          %8533 = vmatpush1.bf16.msra.mxu0 %v7540
          %8534 = vmatprep.subr.bf16.mxu0 %v7601
          %8535 = vmatpush2.bf16.msra.mxu0 %v7600
          %8536 = vmatprep.subr.bf16.mxu0 %v7597
          %8537 = vmatpush2.bf16.msra.mxu0 %v7596
          %8538 = vmatprep.subr.bf16.mxu0 %v7593
          %8539 = vmatpush2.bf16.msra.mxu0 %v7592
          %8540 = vmatprep.subr.bf16.mxu0 %v7589
          %8541 = vmatpush2.bf16.msra.mxu0 %v7588
          %8542 = vmatprep.subr.bf16.mxu0 %v7585
          %8543 = vmatpush2.bf16.msra.mxu0 %v7584
          %8544 = vmatprep.subr.bf16.mxu0 %v7581
          %8545 = vmatpush2.bf16.msra.mxu0 %v7580
          %8546 = vmatprep.subr.bf16.mxu0 %v7577
          %8547 = vmatpush2.bf16.msra.mxu0 %v7576
          %8548 = vmatprep.subr.bf16.mxu0 %v7573
          %8549 = vmatpush2.bf16.msra.mxu0 %v7572
          %8550 = vmatprep.mubr.bf16.mxu0 %v5331
          %8551 = vmatmul.mubr.bf16.gmra.mxu0 %v5330
          %v8552 = vpop.f32.mrf.mxu0
          %v8553 = vadd.f32 %v8512, %v8552
          %v8554 = vpop.f32.mrf.mxu0
          %v8555 = vadd.f32 %v8514, %v8554
          %v8556 = vpop.f32.mrf.mxu0
          %v8557 = vpop.f32.mrf.mxu0
          %8558 = vdwg.mxu0
          %8559 = vmatprep.subr.bf16.mxu0 %v7633
          %8560 = vmatpush1.bf16.msra.mxu0 %v7632
          %8561 = vmatprep.subr.bf16.mxu0 %v7629
          %8562 = vmatpush1.bf16.msra.mxu0 %v7628
          %8563 = vmatprep.subr.bf16.mxu0 %v7625
          %8564 = vmatpush1.bf16.msra.mxu0 %v7624
          %8565 = vmatprep.subr.bf16.mxu0 %v7621
          %8566 = vmatpush1.bf16.msra.mxu0 %v7620
          %8567 = vmatprep.subr.bf16.mxu0 %v7617
          %8568 = vmatpush1.bf16.msra.mxu0 %v7616
          %8569 = vmatprep.subr.bf16.mxu0 %v7613
          %8570 = vmatpush1.bf16.msra.mxu0 %v7612
          %8571 = vmatprep.subr.bf16.mxu0 %v7609
          %8572 = vmatpush1.bf16.msra.mxu0 %v7608
          %8573 = vmatprep.subr.bf16.mxu0 %v7605
          %8574 = vmatpush1.bf16.msra.mxu0 %v7604
          %8575 = vmatprep.subr.bf16.mxu0 %v7665
          %8576 = vmatpush2.bf16.msra.mxu0 %v7664
          %8577 = vmatprep.subr.bf16.mxu0 %v7661
          %8578 = vmatpush2.bf16.msra.mxu0 %v7660
          %8579 = vmatprep.subr.bf16.mxu0 %v7657
          %8580 = vmatpush2.bf16.msra.mxu0 %v7656
          %8581 = vmatprep.subr.bf16.mxu0 %v7653
          %8582 = vmatpush2.bf16.msra.mxu0 %v7652
          %8583 = vmatprep.subr.bf16.mxu0 %v7649
          %8584 = vmatpush2.bf16.msra.mxu0 %v7648
          %8585 = vmatprep.subr.bf16.mxu0 %v7645
          %8586 = vmatpush2.bf16.msra.mxu0 %v7644
          %8587 = vmatprep.subr.bf16.mxu0 %v7641
          %8588 = vmatpush2.bf16.msra.mxu0 %v7640
          %8589 = vmatprep.subr.bf16.mxu0 %v7637
          %8590 = vmatpush2.bf16.msra.mxu0 %v7636
          %8591 = vmatprep.mubr.bf16.mxu0 %v5333
          %8592 = vmatmul.mubr.bf16.gmra.mxu0 %v5332
          %v8593 = vpop.f32.mrf.mxu0
          %v8594 = vadd.f32 %v8553, %v8593
          %v8595 = vpop.f32.mrf.mxu0
          %v8596 = vadd.f32 %v8555, %v8595
          %v8597 = vpop.f32.mrf.mxu0
          %v8598 = vpop.f32.mrf.mxu0
          %8599 = vdwg.mxu0
          %8600 = vmatprep.subr.bf16.mxu0 %v7697
          %8601 = vmatpush1.bf16.msra.mxu0 %v7696
          %8602 = vmatprep.subr.bf16.mxu0 %v7693
          %8603 = vmatpush1.bf16.msra.mxu0 %v7692
          %8604 = vmatprep.subr.bf16.mxu0 %v7689
          %8605 = vmatpush1.bf16.msra.mxu0 %v7688
          %8606 = vmatprep.subr.bf16.mxu0 %v7685
          %8607 = vmatpush1.bf16.msra.mxu0 %v7684
          %8608 = vmatprep.subr.bf16.mxu0 %v7681
          %8609 = vmatpush1.bf16.msra.mxu0 %v7680
          %8610 = vmatprep.subr.bf16.mxu0 %v7677
          %8611 = vmatpush1.bf16.msra.mxu0 %v7676
          %8612 = vmatprep.subr.bf16.mxu0 %v7673
          %8613 = vmatpush1.bf16.msra.mxu0 %v7672
          %8614 = vmatprep.subr.bf16.mxu0 %v7669
          %8615 = vmatpush1.bf16.msra.mxu0 %v7668
          %8616 = vmatprep.subr.bf16.mxu0 %v7729
          %8617 = vmatpush2.bf16.msra.mxu0 %v7728
          %8618 = vmatprep.subr.bf16.mxu0 %v7725
          %8619 = vmatpush2.bf16.msra.mxu0 %v7724
          %8620 = vmatprep.subr.bf16.mxu0 %v7721
          %8621 = vmatpush2.bf16.msra.mxu0 %v7720
          %8622 = vmatprep.subr.bf16.mxu0 %v7717
          %8623 = vmatpush2.bf16.msra.mxu0 %v7716
          %8624 = vmatprep.subr.bf16.mxu0 %v7713
          %8625 = vmatpush2.bf16.msra.mxu0 %v7712
          %8626 = vmatprep.subr.bf16.mxu0 %v7709
          %8627 = vmatpush2.bf16.msra.mxu0 %v7708
          %8628 = vmatprep.subr.bf16.mxu0 %v7705
          %8629 = vmatpush2.bf16.msra.mxu0 %v7704
          %8630 = vmatprep.subr.bf16.mxu0 %v7701
          %8631 = vmatpush2.bf16.msra.mxu0 %v7700
          %8632 = vmatprep.mubr.bf16.mxu0 %v5335
          %8633 = vmatmul.mubr.bf16.gmra.mxu0 %v5334
          %v8634 = vpop.f32.mrf.mxu0
          %v8635 = vadd.f32 %v8594, %v8634
          %v8636 = vpop.f32.mrf.mxu0
          %v8637 = vadd.f32 %v8596, %v8636
          %v8638 = vpop.f32.mrf.mxu0
          %v8639 = vpop.f32.mrf.mxu0
          %8640 = vdwg.mxu0
          %8641 = vmatprep.subr.bf16.mxu0 %v7761
          %8642 = vmatpush1.bf16.msra.mxu0 %v7760
          %8643 = vmatprep.subr.bf16.mxu0 %v7757
          %8644 = vmatpush1.bf16.msra.mxu0 %v7756
          %8645 = vmatprep.subr.bf16.mxu0 %v7753
          %8646 = vmatpush1.bf16.msra.mxu0 %v7752
          %8647 = vmatprep.subr.bf16.mxu0 %v7749
          %8648 = vmatpush1.bf16.msra.mxu0 %v7748
          %8649 = vmatprep.subr.bf16.mxu0 %v7745
          %8650 = vmatpush1.bf16.msra.mxu0 %v7744
          %8651 = vmatprep.subr.bf16.mxu0 %v7741
          %8652 = vmatpush1.bf16.msra.mxu0 %v7740
          %8653 = vmatprep.subr.bf16.mxu0 %v7737
          %8654 = vmatpush1.bf16.msra.mxu0 %v7736
          %8655 = vmatprep.subr.bf16.mxu0 %v7733
          %8656 = vmatpush1.bf16.msra.mxu0 %v7732
          %8657 = vmatprep.subr.bf16.mxu0 %v7793
          %8658 = vmatpush2.bf16.msra.mxu0 %v7792
          %8659 = vmatprep.subr.bf16.mxu0 %v7789
          %8660 = vmatpush2.bf16.msra.mxu0 %v7788
          %8661 = vmatprep.subr.bf16.mxu0 %v7785
          %8662 = vmatpush2.bf16.msra.mxu0 %v7784
          %8663 = vmatprep.subr.bf16.mxu0 %v7781
          %8664 = vmatpush2.bf16.msra.mxu0 %v7780
          %8665 = vmatprep.subr.bf16.mxu0 %v7777
          %8666 = vmatpush2.bf16.msra.mxu0 %v7776
          %8667 = vmatprep.subr.bf16.mxu0 %v7773
          %8668 = vmatpush2.bf16.msra.mxu0 %v7772
          %8669 = vmatprep.subr.bf16.mxu0 %v7769
          %8670 = vmatpush2.bf16.msra.mxu0 %v7768
          %8671 = vmatprep.subr.bf16.mxu0 %v7765
          %8672 = vmatpush2.bf16.msra.mxu0 %v7764
          %8673 = vmatprep.mubr.bf16.mxu0 %v5337
          %8674 = vmatmul.mubr.bf16.gmra.mxu0 %v5336
          %v8675 = vpop.f32.mrf.mxu0
          %v8676 = vadd.f32 %v8635, %v8675
          %v8677 = vpop.f32.mrf.mxu0
          %v8678 = vadd.f32 %v8637, %v8677
          %v8679 = vpop.f32.mrf.mxu0
          %v8680 = vpop.f32.mrf.mxu0
          %8681 = vdwg.mxu0
          %8682 = vmatprep.subr.bf16.mxu0 %v7825
          %8683 = vmatpush1.bf16.msra.mxu0 %v7824
          %8684 = vmatprep.subr.bf16.mxu0 %v7821
          %8685 = vmatpush1.bf16.msra.mxu0 %v7820
          %8686 = vmatprep.subr.bf16.mxu0 %v7817
          %8687 = vmatpush1.bf16.msra.mxu0 %v7816
          %8688 = vmatprep.subr.bf16.mxu0 %v7813
          %8689 = vmatpush1.bf16.msra.mxu0 %v7812
          %8690 = vmatprep.subr.bf16.mxu0 %v7809
          %8691 = vmatpush1.bf16.msra.mxu0 %v7808
          %8692 = vmatprep.subr.bf16.mxu0 %v7805
          %8693 = vmatpush1.bf16.msra.mxu0 %v7804
          %8694 = vmatprep.subr.bf16.mxu0 %v7801
          %8695 = vmatpush1.bf16.msra.mxu0 %v7800
          %8696 = vmatprep.subr.bf16.mxu0 %v7797
          %8697 = vmatpush1.bf16.msra.mxu0 %v7796
          %8698 = vmatprep.subr.bf16.mxu0 %v7857
          %8699 = vmatpush2.bf16.msra.mxu0 %v7856
          %8700 = vmatprep.subr.bf16.mxu0 %v7853
          %8701 = vmatpush2.bf16.msra.mxu0 %v7852
          %8702 = vmatprep.subr.bf16.mxu0 %v7849
          %8703 = vmatpush2.bf16.msra.mxu0 %v7848
          %8704 = vmatprep.subr.bf16.mxu0 %v7845
          %8705 = vmatpush2.bf16.msra.mxu0 %v7844
          %8706 = vmatprep.subr.bf16.mxu0 %v7841
          %8707 = vmatpush2.bf16.msra.mxu0 %v7840
          %8708 = vmatprep.subr.bf16.mxu0 %v7837
          %8709 = vmatpush2.bf16.msra.mxu0 %v7836
          %8710 = vmatprep.subr.bf16.mxu0 %v7833
          %8711 = vmatpush2.bf16.msra.mxu0 %v7832
          %8712 = vmatprep.subr.bf16.mxu0 %v7829
          %8713 = vmatpush2.bf16.msra.mxu0 %v7828
          %8714 = vmatprep.mubr.bf16.mxu0 %v5339
          %8715 = vmatmul.mubr.bf16.gmra.mxu0 %v5338
          %v8716 = vpop.f32.mrf.mxu0
          %v8717 = vadd.f32 %v8676, %v8716
          %v8718 = vpop.f32.mrf.mxu0
          %v8719 = vadd.f32 %v8678, %v8718
          %v8720 = vpop.f32.mrf.mxu0
          %v8721 = vpop.f32.mrf.mxu0
          %8722 = vdwg.mxu0
          %8723 = vmatprep.subr.bf16.mxu0 %v7889
          %8724 = vmatpush1.bf16.msra.mxu0 %v7888
          %8725 = vmatprep.subr.bf16.mxu0 %v7885
          %8726 = vmatpush1.bf16.msra.mxu0 %v7884
          %8727 = vmatprep.subr.bf16.mxu0 %v7881
          %8728 = vmatpush1.bf16.msra.mxu0 %v7880
          %8729 = vmatprep.subr.bf16.mxu0 %v7877
          %8730 = vmatpush1.bf16.msra.mxu0 %v7876
          %8731 = vmatprep.subr.bf16.mxu0 %v7873
          %8732 = vmatpush1.bf16.msra.mxu0 %v7872
          %8733 = vmatprep.subr.bf16.mxu0 %v7869
          %8734 = vmatpush1.bf16.msra.mxu0 %v7868
          %8735 = vmatprep.subr.bf16.mxu0 %v7865
          %8736 = vmatpush1.bf16.msra.mxu0 %v7864
          %8737 = vmatprep.subr.bf16.mxu0 %v7861
          %8738 = vmatpush1.bf16.msra.mxu0 %v7860
          %8739 = vmatprep.subr.bf16.mxu0 %v7921
          %8740 = vmatpush2.bf16.msra.mxu0 %v7920
          %8741 = vmatprep.subr.bf16.mxu0 %v7917
          %8742 = vmatpush2.bf16.msra.mxu0 %v7916
          %8743 = vmatprep.subr.bf16.mxu0 %v7913
          %8744 = vmatpush2.bf16.msra.mxu0 %v7912
          %8745 = vmatprep.subr.bf16.mxu0 %v7909
          %8746 = vmatpush2.bf16.msra.mxu0 %v7908
          %8747 = vmatprep.subr.bf16.mxu0 %v7905
          %8748 = vmatpush2.bf16.msra.mxu0 %v7904
          %8749 = vmatprep.subr.bf16.mxu0 %v7901
          %8750 = vmatpush2.bf16.msra.mxu0 %v7900
          %8751 = vmatprep.subr.bf16.mxu0 %v7897
          %8752 = vmatpush2.bf16.msra.mxu0 %v7896
          %8753 = vmatprep.subr.bf16.mxu0 %v7893
          %8754 = vmatpush2.bf16.msra.mxu0 %v7892
          %8755 = vmatprep.mubr.bf16.mxu0 %v5341
          %8756 = vmatmul.mubr.bf16.gmra.mxu0 %v5340
          %v8757 = vpop.f32.mrf.mxu0
          %v8758 = vadd.f32 %v8717, %v8757
          %v8759 = vpop.f32.mrf.mxu0
          %v8760 = vadd.f32 %v8719, %v8759
          %v8761 = vpop.f32.mrf.mxu0
          %v8762 = vpop.f32.mrf.mxu0
          %8763 = vdwg.mxu0
          %8764 = vmatprep.subr.bf16.mxu0 %v7443
          %8765 = vmatpush1.bf16.msra.mxu0 %v7442
          %8766 = vmatprep.subr.bf16.mxu0 %v7439
          %8767 = vmatpush1.bf16.msra.mxu0 %v7438
          %8768 = vmatprep.subr.bf16.mxu0 %v7435
          %8769 = vmatpush1.bf16.msra.mxu0 %v7434
          %8770 = vmatprep.subr.bf16.mxu0 %v7431
          %8771 = vmatpush1.bf16.msra.mxu0 %v7430
          %8772 = vmatprep.subr.bf16.mxu0 %v7427
          %8773 = vmatpush1.bf16.msra.mxu0 %v7426
          %8774 = vmatprep.subr.bf16.mxu0 %v7423
          %8775 = vmatpush1.bf16.msra.mxu0 %v7422
          %8776 = vmatprep.subr.bf16.mxu0 %v7419
          %8777 = vmatpush1.bf16.msra.mxu0 %v7418
          %8778 = vmatprep.subr.bf16.mxu0 %v7415
          %8779 = vmatpush1.bf16.msra.mxu0 %v7414
          %8780 = vmatprep.subr.bf16.mxu0 %v7475
          %8781 = vmatpush2.bf16.msra.mxu0 %v7474
          %8782 = vmatprep.subr.bf16.mxu0 %v7471
          %8783 = vmatpush2.bf16.msra.mxu0 %v7470
          %8784 = vmatprep.subr.bf16.mxu0 %v7467
          %8785 = vmatpush2.bf16.msra.mxu0 %v7466
          %8786 = vmatprep.subr.bf16.mxu0 %v7463
          %8787 = vmatpush2.bf16.msra.mxu0 %v7462
          %8788 = vmatprep.subr.bf16.mxu0 %v7459
          %8789 = vmatpush2.bf16.msra.mxu0 %v7458
          %8790 = vmatprep.subr.bf16.mxu0 %v7455
          %8791 = vmatpush2.bf16.msra.mxu0 %v7454
          %8792 = vmatprep.subr.bf16.mxu0 %v7451
          %8793 = vmatpush2.bf16.msra.mxu0 %v7450
          %8794 = vmatprep.subr.bf16.mxu0 %v7447
          %8795 = vmatpush2.bf16.msra.mxu0 %v7446
          %8796 = vmatprep.mubr.bf16.mxu0 %v5327
          %8797 = vmatmul.mubr.bf16.gmra.mxu0 %v5326
          %v8798 = vpop.f32.mrf.mxu0
          %v8799 = vadd.f32 %v5867, %v8798
          %v8800 = vpop.f32.mrf.mxu0
          %v8801 = vadd.f32 %v5871, %v8800
          %v8802 = vpop.f32.mrf.mxu0
          %v8803 = vpop.f32.mrf.mxu0
          %8804 = vdwg.mxu0
          %8805 = vmatprep.subr.bf16.mxu0 %v7507
          %8806 = vmatpush1.bf16.msra.mxu0 %v7506
          %8807 = vmatprep.subr.bf16.mxu0 %v7503
          %8808 = vmatpush1.bf16.msra.mxu0 %v7502
          %8809 = vmatprep.subr.bf16.mxu0 %v7499
          %8810 = vmatpush1.bf16.msra.mxu0 %v7498
          %8811 = vmatprep.subr.bf16.mxu0 %v7495
          %8812 = vmatpush1.bf16.msra.mxu0 %v7494
          %8813 = vmatprep.subr.bf16.mxu0 %v7491
          %8814 = vmatpush1.bf16.msra.mxu0 %v7490
          %8815 = vmatprep.subr.bf16.mxu0 %v7487
          %8816 = vmatpush1.bf16.msra.mxu0 %v7486
          %8817 = vmatprep.subr.bf16.mxu0 %v7483
          %8818 = vmatpush1.bf16.msra.mxu0 %v7482
          %8819 = vmatprep.subr.bf16.mxu0 %v7479
          %8820 = vmatpush1.bf16.msra.mxu0 %v7478
          %8821 = vmatprep.subr.bf16.mxu0 %v7539
          %8822 = vmatpush2.bf16.msra.mxu0 %v7538
          %8823 = vmatprep.subr.bf16.mxu0 %v7535
          %8824 = vmatpush2.bf16.msra.mxu0 %v7534
          %8825 = vmatprep.subr.bf16.mxu0 %v7531
          %8826 = vmatpush2.bf16.msra.mxu0 %v7530
          %8827 = vmatprep.subr.bf16.mxu0 %v7527
          %8828 = vmatpush2.bf16.msra.mxu0 %v7526
          %8829 = vmatprep.subr.bf16.mxu0 %v7523
          %8830 = vmatpush2.bf16.msra.mxu0 %v7522
          %8831 = vmatprep.subr.bf16.mxu0 %v7519
          %8832 = vmatpush2.bf16.msra.mxu0 %v7518
          %8833 = vmatprep.subr.bf16.mxu0 %v7515
          %8834 = vmatpush2.bf16.msra.mxu0 %v7514
          %8835 = vmatprep.subr.bf16.mxu0 %v7511
          %8836 = vmatpush2.bf16.msra.mxu0 %v7510
          %8837 = vmatprep.mubr.bf16.mxu0 %v5329
          %8838 = vmatmul.mubr.bf16.gmra.mxu0 %v5328
          %v8839 = vpop.f32.mrf.mxu0
          %v8840 = vadd.f32 %v8799, %v8839
          %v8841 = vpop.f32.mrf.mxu0
          %v8842 = vadd.f32 %v8801, %v8841
          %v8843 = vpop.f32.mrf.mxu0
          %v8844 = vpop.f32.mrf.mxu0
          %8845 = vdwg.mxu0
          %8846 = vmatprep.subr.bf16.mxu0 %v7571
          %8847 = vmatpush1.bf16.msra.mxu0 %v7570
          %8848 = vmatprep.subr.bf16.mxu0 %v7567
          %8849 = vmatpush1.bf16.msra.mxu0 %v7566
          %8850 = vmatprep.subr.bf16.mxu0 %v7563
          %8851 = vmatpush1.bf16.msra.mxu0 %v7562
          %8852 = vmatprep.subr.bf16.mxu0 %v7559
          %8853 = vmatpush1.bf16.msra.mxu0 %v7558
          %8854 = vmatprep.subr.bf16.mxu0 %v7555
          %8855 = vmatpush1.bf16.msra.mxu0 %v7554
          %8856 = vmatprep.subr.bf16.mxu0 %v7551
          %8857 = vmatpush1.bf16.msra.mxu0 %v7550
          %8858 = vmatprep.subr.bf16.mxu0 %v7547
          %8859 = vmatpush1.bf16.msra.mxu0 %v7546
          %8860 = vmatprep.subr.bf16.mxu0 %v7543
          %8861 = vmatpush1.bf16.msra.mxu0 %v7542
          %8862 = vmatprep.subr.bf16.mxu0 %v7603
          %8863 = vmatpush2.bf16.msra.mxu0 %v7602
          %8864 = vmatprep.subr.bf16.mxu0 %v7599
          %8865 = vmatpush2.bf16.msra.mxu0 %v7598
          %8866 = vmatprep.subr.bf16.mxu0 %v7595
          %8867 = vmatpush2.bf16.msra.mxu0 %v7594
          %8868 = vmatprep.subr.bf16.mxu0 %v7591
          %8869 = vmatpush2.bf16.msra.mxu0 %v7590
          %8870 = vmatprep.subr.bf16.mxu0 %v7587
          %8871 = vmatpush2.bf16.msra.mxu0 %v7586
          %8872 = vmatprep.subr.bf16.mxu0 %v7583
          %8873 = vmatpush2.bf16.msra.mxu0 %v7582
          %8874 = vmatprep.subr.bf16.mxu0 %v7579
          %8875 = vmatpush2.bf16.msra.mxu0 %v7578
          %8876 = vmatprep.subr.bf16.mxu0 %v7575
          %8877 = vmatpush2.bf16.msra.mxu0 %v7574
          %8878 = vmatprep.mubr.bf16.mxu0 %v5331
          %8879 = vmatmul.mubr.bf16.gmra.mxu0 %v5330
          %v8880 = vpop.f32.mrf.mxu0
          %v8881 = vadd.f32 %v8840, %v8880
          %v8882 = vpop.f32.mrf.mxu0
          %v8883 = vadd.f32 %v8842, %v8882
          %v8884 = vpop.f32.mrf.mxu0
          %v8885 = vpop.f32.mrf.mxu0
          %8886 = vdwg.mxu0
          %8887 = vmatprep.subr.bf16.mxu0 %v7635
          %8888 = vmatpush1.bf16.msra.mxu0 %v7634
          %8889 = vmatprep.subr.bf16.mxu0 %v7631
          %8890 = vmatpush1.bf16.msra.mxu0 %v7630
          %8891 = vmatprep.subr.bf16.mxu0 %v7627
          %8892 = vmatpush1.bf16.msra.mxu0 %v7626
          %8893 = vmatprep.subr.bf16.mxu0 %v7623
          %8894 = vmatpush1.bf16.msra.mxu0 %v7622
          %8895 = vmatprep.subr.bf16.mxu0 %v7619
          %8896 = vmatpush1.bf16.msra.mxu0 %v7618
          %8897 = vmatprep.subr.bf16.mxu0 %v7615
          %8898 = vmatpush1.bf16.msra.mxu0 %v7614
          %8899 = vmatprep.subr.bf16.mxu0 %v7611
          %8900 = vmatpush1.bf16.msra.mxu0 %v7610
          %8901 = vmatprep.subr.bf16.mxu0 %v7607
          %8902 = vmatpush1.bf16.msra.mxu0 %v7606
          %8903 = vmatprep.subr.bf16.mxu0 %v7667
          %8904 = vmatpush2.bf16.msra.mxu0 %v7666
          %8905 = vmatprep.subr.bf16.mxu0 %v7663
          %8906 = vmatpush2.bf16.msra.mxu0 %v7662
          %8907 = vmatprep.subr.bf16.mxu0 %v7659
          %8908 = vmatpush2.bf16.msra.mxu0 %v7658
          %8909 = vmatprep.subr.bf16.mxu0 %v7655
          %8910 = vmatpush2.bf16.msra.mxu0 %v7654
          %8911 = vmatprep.subr.bf16.mxu0 %v7651
          %8912 = vmatpush2.bf16.msra.mxu0 %v7650
          %8913 = vmatprep.subr.bf16.mxu0 %v7647
          %8914 = vmatpush2.bf16.msra.mxu0 %v7646
          %8915 = vmatprep.subr.bf16.mxu0 %v7643
          %8916 = vmatpush2.bf16.msra.mxu0 %v7642
          %8917 = vmatprep.subr.bf16.mxu0 %v7639
          %8918 = vmatpush2.bf16.msra.mxu0 %v7638
          %8919 = vmatprep.mubr.bf16.mxu0 %v5333
          %8920 = vmatmul.mubr.bf16.gmra.mxu0 %v5332
          %v8921 = vpop.f32.mrf.mxu0
          %v8922 = vadd.f32 %v8881, %v8921
          %v8923 = vpop.f32.mrf.mxu0
          %v8924 = vadd.f32 %v8883, %v8923
          %v8925 = vpop.f32.mrf.mxu0
          %v8926 = vpop.f32.mrf.mxu0
          %8927 = vdwg.mxu0
          %8928 = vmatprep.subr.bf16.mxu0 %v7699
          %8929 = vmatpush1.bf16.msra.mxu0 %v7698
          %8930 = vmatprep.subr.bf16.mxu0 %v7695
          %8931 = vmatpush1.bf16.msra.mxu0 %v7694
          %8932 = vmatprep.subr.bf16.mxu0 %v7691
          %8933 = vmatpush1.bf16.msra.mxu0 %v7690
          %8934 = vmatprep.subr.bf16.mxu0 %v7687
          %8935 = vmatpush1.bf16.msra.mxu0 %v7686
          %8936 = vmatprep.subr.bf16.mxu0 %v7683
          %8937 = vmatpush1.bf16.msra.mxu0 %v7682
          %8938 = vmatprep.subr.bf16.mxu0 %v7679
          %8939 = vmatpush1.bf16.msra.mxu0 %v7678
          %8940 = vmatprep.subr.bf16.mxu0 %v7675
          %8941 = vmatpush1.bf16.msra.mxu0 %v7674
          %8942 = vmatprep.subr.bf16.mxu0 %v7671
          %8943 = vmatpush1.bf16.msra.mxu0 %v7670
          %8944 = vmatprep.subr.bf16.mxu0 %v7731
          %8945 = vmatpush2.bf16.msra.mxu0 %v7730
          %8946 = vmatprep.subr.bf16.mxu0 %v7727
          %8947 = vmatpush2.bf16.msra.mxu0 %v7726
          %8948 = vmatprep.subr.bf16.mxu0 %v7723
          %8949 = vmatpush2.bf16.msra.mxu0 %v7722
          %8950 = vmatprep.subr.bf16.mxu0 %v7719
          %8951 = vmatpush2.bf16.msra.mxu0 %v7718
          %8952 = vmatprep.subr.bf16.mxu0 %v7715
          %8953 = vmatpush2.bf16.msra.mxu0 %v7714
          %8954 = vmatprep.subr.bf16.mxu0 %v7711
          %8955 = vmatpush2.bf16.msra.mxu0 %v7710
          %8956 = vmatprep.subr.bf16.mxu0 %v7707
          %8957 = vmatpush2.bf16.msra.mxu0 %v7706
          %8958 = vmatprep.subr.bf16.mxu0 %v7703
          %8959 = vmatpush2.bf16.msra.mxu0 %v7702
          %8960 = vmatprep.mubr.bf16.mxu0 %v5335
          %8961 = vmatmul.mubr.bf16.gmra.mxu0 %v5334
          %v8962 = vpop.f32.mrf.mxu0
          %v8963 = vadd.f32 %v8922, %v8962
          %v8964 = vpop.f32.mrf.mxu0
          %v8965 = vadd.f32 %v8924, %v8964
          %v8966 = vpop.f32.mrf.mxu0
          %v8967 = vpop.f32.mrf.mxu0
          %8968 = vdwg.mxu0
          %8969 = vmatprep.subr.bf16.mxu0 %v7763
          %8970 = vmatpush1.bf16.msra.mxu0 %v7762
          %8971 = vmatprep.subr.bf16.mxu0 %v7759
          %8972 = vmatpush1.bf16.msra.mxu0 %v7758
          %8973 = vmatprep.subr.bf16.mxu0 %v7755
          %8974 = vmatpush1.bf16.msra.mxu0 %v7754
          %8975 = vmatprep.subr.bf16.mxu0 %v7751
          %8976 = vmatpush1.bf16.msra.mxu0 %v7750
          %8977 = vmatprep.subr.bf16.mxu0 %v7747
          %8978 = vmatpush1.bf16.msra.mxu0 %v7746
          %8979 = vmatprep.subr.bf16.mxu0 %v7743
          %8980 = vmatpush1.bf16.msra.mxu0 %v7742
          %8981 = vmatprep.subr.bf16.mxu0 %v7739
          %8982 = vmatpush1.bf16.msra.mxu0 %v7738
          %8983 = vmatprep.subr.bf16.mxu0 %v7735
          %8984 = vmatpush1.bf16.msra.mxu0 %v7734
          %8985 = vmatprep.subr.bf16.mxu0 %v7795
          %8986 = vmatpush2.bf16.msra.mxu0 %v7794
          %8987 = vmatprep.subr.bf16.mxu0 %v7791
          %8988 = vmatpush2.bf16.msra.mxu0 %v7790
          %8989 = vmatprep.subr.bf16.mxu0 %v7787
          %8990 = vmatpush2.bf16.msra.mxu0 %v7786
          %8991 = vmatprep.subr.bf16.mxu0 %v7783
          %8992 = vmatpush2.bf16.msra.mxu0 %v7782
          %8993 = vmatprep.subr.bf16.mxu0 %v7779
          %8994 = vmatpush2.bf16.msra.mxu0 %v7778
          %8995 = vmatprep.subr.bf16.mxu0 %v7775
          %8996 = vmatpush2.bf16.msra.mxu0 %v7774
          %8997 = vmatprep.subr.bf16.mxu0 %v7771
          %8998 = vmatpush2.bf16.msra.mxu0 %v7770
          %8999 = vmatprep.subr.bf16.mxu0 %v7767
          %9000 = vmatpush2.bf16.msra.mxu0 %v7766
          %9001 = vmatprep.mubr.bf16.mxu0 %v5337
          %9002 = vmatmul.mubr.bf16.gmra.mxu0 %v5336
          %v9003 = vpop.f32.mrf.mxu0
          %v9004 = vadd.f32 %v8963, %v9003
          %v9005 = vpop.f32.mrf.mxu0
          %v9006 = vadd.f32 %v8965, %v9005
          %v9007 = vpop.f32.mrf.mxu0
          %v9008 = vpop.f32.mrf.mxu0
          %9009 = vdwg.mxu0
          %9010 = vmatprep.subr.bf16.mxu0 %v7827
          %9011 = vmatpush1.bf16.msra.mxu0 %v7826
          %9012 = vmatprep.subr.bf16.mxu0 %v7823
          %9013 = vmatpush1.bf16.msra.mxu0 %v7822
          %9014 = vmatprep.subr.bf16.mxu0 %v7819
          %9015 = vmatpush1.bf16.msra.mxu0 %v7818
          %9016 = vmatprep.subr.bf16.mxu0 %v7815
          %9017 = vmatpush1.bf16.msra.mxu0 %v7814
          %9018 = vmatprep.subr.bf16.mxu0 %v7811
          %9019 = vmatpush1.bf16.msra.mxu0 %v7810
          %9020 = vmatprep.subr.bf16.mxu0 %v7807
          %9021 = vmatpush1.bf16.msra.mxu0 %v7806
          %9022 = vmatprep.subr.bf16.mxu0 %v7803
          %9023 = vmatpush1.bf16.msra.mxu0 %v7802
          %9024 = vmatprep.subr.bf16.mxu0 %v7799
          %9025 = vmatpush1.bf16.msra.mxu0 %v7798
          %9026 = vmatprep.subr.bf16.mxu0 %v7859
          %9027 = vmatpush2.bf16.msra.mxu0 %v7858
          %9028 = vmatprep.subr.bf16.mxu0 %v7855
          %9029 = vmatpush2.bf16.msra.mxu0 %v7854
          %9030 = vmatprep.subr.bf16.mxu0 %v7851
          %9031 = vmatpush2.bf16.msra.mxu0 %v7850
          %9032 = vmatprep.subr.bf16.mxu0 %v7847
          %9033 = vmatpush2.bf16.msra.mxu0 %v7846
          %9034 = vmatprep.subr.bf16.mxu0 %v7843
          %9035 = vmatpush2.bf16.msra.mxu0 %v7842
          %9036 = vmatprep.subr.bf16.mxu0 %v7839
          %9037 = vmatpush2.bf16.msra.mxu0 %v7838
          %9038 = vmatprep.subr.bf16.mxu0 %v7835
          %9039 = vmatpush2.bf16.msra.mxu0 %v7834
          %9040 = vmatprep.subr.bf16.mxu0 %v7831
          %9041 = vmatpush2.bf16.msra.mxu0 %v7830
          %9042 = vmatprep.mubr.bf16.mxu0 %v5339
          %9043 = vmatmul.mubr.bf16.gmra.mxu0 %v5338
          %v9044 = vpop.f32.mrf.mxu0
          %v9045 = vadd.f32 %v9004, %v9044
          %v9046 = vpop.f32.mrf.mxu0
          %v9047 = vadd.f32 %v9006, %v9046
          %v9048 = vpop.f32.mrf.mxu0
          %v9049 = vpop.f32.mrf.mxu0
          %9050 = vdwg.mxu0
          %9051 = vmatprep.subr.bf16.mxu0 %v7891
          %9052 = vmatpush1.bf16.msra.mxu0 %v7890
          %9053 = vmatprep.subr.bf16.mxu0 %v7887
          %9054 = vmatpush1.bf16.msra.mxu0 %v7886
          %9055 = vmatprep.subr.bf16.mxu0 %v7883
          %9056 = vmatpush1.bf16.msra.mxu0 %v7882
          %9057 = vmatprep.subr.bf16.mxu0 %v7879
          %9058 = vmatpush1.bf16.msra.mxu0 %v7878
          %9059 = vmatprep.subr.bf16.mxu0 %v7875
          %9060 = vmatpush1.bf16.msra.mxu0 %v7874
          %9061 = vmatprep.subr.bf16.mxu0 %v7871
          %9062 = vmatpush1.bf16.msra.mxu0 %v7870
          %9063 = vmatprep.subr.bf16.mxu0 %v7867
          %9064 = vmatpush1.bf16.msra.mxu0 %v7866
          %9065 = vmatprep.subr.bf16.mxu0 %v7863
          %9066 = vmatpush1.bf16.msra.mxu0 %v7862
          %9067 = vmatprep.subr.bf16.mxu0 %v7923
          %9068 = vmatpush2.bf16.msra.mxu0 %v7922
          %9069 = vmatprep.subr.bf16.mxu0 %v7919
          %9070 = vmatpush2.bf16.msra.mxu0 %v7918
          %9071 = vmatprep.subr.bf16.mxu0 %v7915
          %9072 = vmatpush2.bf16.msra.mxu0 %v7914
          %9073 = vmatprep.subr.bf16.mxu0 %v7911
          %9074 = vmatpush2.bf16.msra.mxu0 %v7910
          %9075 = vmatprep.subr.bf16.mxu0 %v7907
          %9076 = vmatpush2.bf16.msra.mxu0 %v7906
          %9077 = vmatprep.subr.bf16.mxu0 %v7903
          %9078 = vmatpush2.bf16.msra.mxu0 %v7902
          %9079 = vmatprep.subr.bf16.mxu0 %v7899
          %9080 = vmatpush2.bf16.msra.mxu0 %v7898
          %9081 = vmatprep.subr.bf16.mxu0 %v7895
          %9082 = vmatpush2.bf16.msra.mxu0 %v7894
          %9083 = vmatprep.mubr.bf16.mxu0 %v5341
          %9084 = vmatmul.mubr.bf16.gmra.mxu0 %v5340
          %v9085 = vpop.f32.mrf.mxu0
          %v9086 = vadd.f32 %v9045, %v9085
          %v9087 = vpop.f32.mrf.mxu0
          %v9088 = vadd.f32 %v9047, %v9087
          %v9089 = vpop.f32.mrf.mxu0
          %v9090 = vpop.f32.mrf.mxu0
          %9091 = vdwg.mxu0
          %v9092 = vmax.f32 %v8758, 0.0
          %v9093 = vmax.f32 %v8760, 0.0
          %v9094 = vmax.f32 %v9086, 0.0
          %v9095 = vmax.f32 %v9088, 0.0
          %v9096 = vld [vmem:[%s5] sm:$0xff]
          %v9098 = vcombine.high %v9096, %v9096
          %v9100 = vunpack.c.l.s4 1983009808
          %v9101 = vunpack.c.0.s8 %v9100
          %v9102 = vlaneseq
          %v9103 = vshrl.u32 %v9102, 7
          %v9104 = vsub.s32 %v9101, %v9103
          %v9105 = vrot.slane %v9096, %v9104
          %v9107 = vunpack.c.l.s4 1983009808
          %v9108 = vunpack.c.0.s8 %v9107
          %v9109 = vlaneseq
          %v9110 = vshrl.u32 %v9109, 7
          %v9111 = vsub.s32 %v9108, %v9110
          %v9112 = vrot.slane %v9098, %v9111
          %v9113 = vcombine.high %v9105, %v9105
          %v9114 = vcombine.high %v9112, %v9112
          %v9119 = vmul.f32 %v9092, %v9105
          %v9120 = vmul.f32 %v9093, %v9113
          %v9121 = vmul.f32 %v9094, %v9112
          %v9122 = vmul.f32 %v9095, %v9114
          %v9123 = vpack.c.bf16 %v9119, %v9119
          %v9124 = vpack.c.bf16 %v9120, %v9120
          %v9125 = vpack.c.bf16 %v9121, %v9121
          %v9126 = vpack.c.bf16 %v9122, %v9122
          %v9127 = vld [vmem:[%s6] sm:$0xf]
          %v9128 = vld [vmem:[%s6 + $0x4] sm:$0xf]
          %v9129 = vld [vmem:[%s6 + $0x8] sm:$0xf]
          %v9130 = vld [vmem:[%s6 + $0xc] sm:$0xf]
          %v9131 = vld [vmem:[%s6 + $0x10] sm:$0xf]
          %v9132 = vld [vmem:[%s6 + $0x14] sm:$0xf]
          %v9133 = vld [vmem:[%s6 + $0x18] sm:$0xf]
          %v9134 = vld [vmem:[%s6 + $0x1c] sm:$0xf]
          %v9135 = vld [vmem:[%s6 + $0x20] sm:$0xf]
          %v9136 = vld [vmem:[%s6 + $0x24] sm:$0xf]
          %v9137 = vld [vmem:[%s6 + $0x28] sm:$0xf]
          %v9138 = vld [vmem:[%s6 + $0x2c] sm:$0xf]
          %v9139 = vld [vmem:[%s6 + $0x30] sm:$0xf]
          %v9140 = vld [vmem:[%s6 + $0x34] sm:$0xf]
          %v9141 = vld [vmem:[%s6 + $0x38] sm:$0xf]
          %v9142 = vld [vmem:[%s6 + $0x3c] sm:$0xf]
          %v9143 = vld [vmem:[%s6 + $0x40] sm:$0xf]
          %v9144 = vld [vmem:[%s6 + $0x44] sm:$0xf]
          %v9145 = vld [vmem:[%s6 + $0x48] sm:$0xf]
          %v9146 = vld [vmem:[%s6 + $0x4c] sm:$0xf]
          %v9147 = vld [vmem:[%s6 + $0x50] sm:$0xf]
          %v9148 = vld [vmem:[%s6 + $0x54] sm:$0xf]
          %v9149 = vld [vmem:[%s6 + $0x58] sm:$0xf]
          %v9150 = vld [vmem:[%s6 + $0x5c] sm:$0xf]
          %v9151 = vld [vmem:[%s6 + $0x60] sm:$0xf]
          %v9152 = vld [vmem:[%s6 + $0x64] sm:$0xf]
          %v9153 = vld [vmem:[%s6 + $0x68] sm:$0xf]
          %v9154 = vld [vmem:[%s6 + $0x6c] sm:$0xf]
          %v9155 = vld [vmem:[%s6 + $0x70] sm:$0xf]
          %v9156 = vld [vmem:[%s6 + $0x74] sm:$0xf]
          %v9157 = vld [vmem:[%s6 + $0x78] sm:$0xf]
          %v9158 = vld [vmem:[%s6 + $0x7c] sm:$0xf]
          %v9159 = vld [vmem:[%s6 + $0x80] sm:$0xf]
          %v9160 = vld [vmem:[%s6 + $0x84] sm:$0xf]
          %v9161 = vld [vmem:[%s6 + $0x88] sm:$0xf]
          %v9162 = vld [vmem:[%s6 + $0x8c] sm:$0xf]
          %v9163 = vld [vmem:[%s6 + $0x90] sm:$0xf]
          %v9164 = vld [vmem:[%s6 + $0x94] sm:$0xf]
          %v9165 = vld [vmem:[%s6 + $0x98] sm:$0xf]
          %v9166 = vld [vmem:[%s6 + $0x9c] sm:$0xf]
          %v9167 = vld [vmem:[%s6 + $0xa0] sm:$0xf]
          %v9168 = vld [vmem:[%s6 + $0xa4] sm:$0xf]
          %v9169 = vld [vmem:[%s6 + $0xa8] sm:$0xf]
          %v9170 = vld [vmem:[%s6 + $0xac] sm:$0xf]
          %v9171 = vld [vmem:[%s6 + $0xb0] sm:$0xf]
          %v9172 = vld [vmem:[%s6 + $0xb4] sm:$0xf]
          %v9173 = vld [vmem:[%s6 + $0xb8] sm:$0xf]
          %v9174 = vld [vmem:[%s6 + $0xbc] sm:$0xf]
          %v9175 = vld [vmem:[%s6 + $0xc0] sm:$0xf]
          %v9176 = vld [vmem:[%s6 + $0xc4] sm:$0xf]
          %v9177 = vld [vmem:[%s6 + $0xc8] sm:$0xf]
          %v9178 = vld [vmem:[%s6 + $0xcc] sm:$0xf]
          %v9179 = vld [vmem:[%s6 + $0xd0] sm:$0xf]
          %v9180 = vld [vmem:[%s6 + $0xd4] sm:$0xf]
          %v9181 = vld [vmem:[%s6 + $0xd8] sm:$0xf]
          %v9182 = vld [vmem:[%s6 + $0xdc] sm:$0xf]
          %v9183 = vld [vmem:[%s6 + $0xe0] sm:$0xf]
          %v9184 = vld [vmem:[%s6 + $0xe4] sm:$0xf]
          %v9185 = vld [vmem:[%s6 + $0xe8] sm:$0xf]
          %v9186 = vld [vmem:[%s6 + $0xec] sm:$0xf]
          %v9187 = vld [vmem:[%s6 + $0xf0] sm:$0xf]
          %v9188 = vld [vmem:[%s6 + $0xf4] sm:$0xf]
          %v9189 = vld [vmem:[%s6 + $0xf8] sm:$0xf]
          %v9190 = vld [vmem:[%s6 + $0xfc] sm:$0xf]
          %v9191 = vld [vmem:[%s7] sm:$0x1]
          %v9193 = vlaneseq
          %v9194 = vshrl.u32 %v9193, 7
          %v9195 = vsub.s32 0, %v9194
          %v9196 = vrot.slane %v9191, %v9195
          %v9262 = vunpack.c.l.b16 %v9127
          %v9263 = vunpack.c.l.b16 %v9128
          %v9264 = vunpack.c.l.b16 %v9129
          %v9265 = vunpack.c.l.b16 %v9130
          %v9266 = vunpack.c.l.b16 %v9131
          %v9267 = vunpack.c.l.b16 %v9132
          %v9268 = vunpack.c.l.b16 %v9133
          %v9269 = vunpack.c.l.b16 %v9134
          %v9270 = vunpack.c.l.b16 %v9135
          %v9271 = vunpack.c.l.b16 %v9136
          %v9272 = vunpack.c.l.b16 %v9137
          %v9273 = vunpack.c.l.b16 %v9138
          %v9274 = vunpack.c.l.b16 %v9139
          %v9275 = vunpack.c.l.b16 %v9140
          %v9276 = vunpack.c.l.b16 %v9141
          %v9277 = vunpack.c.l.b16 %v9142
          %v9278 = vunpack.c.l.b16 %v9143
          %v9279 = vunpack.c.l.b16 %v9144
          %v9280 = vunpack.c.l.b16 %v9145
          %v9281 = vunpack.c.l.b16 %v9146
          %v9282 = vunpack.c.l.b16 %v9147
          %v9283 = vunpack.c.l.b16 %v9148
          %v9284 = vunpack.c.l.b16 %v9149
          %v9285 = vunpack.c.l.b16 %v9150
          %v9286 = vunpack.c.l.b16 %v9151
          %v9287 = vunpack.c.l.b16 %v9152
          %v9288 = vunpack.c.l.b16 %v9153
          %v9289 = vunpack.c.l.b16 %v9154
          %v9290 = vunpack.c.l.b16 %v9155
          %v9291 = vunpack.c.l.b16 %v9156
          %v9292 = vunpack.c.l.b16 %v9157
          %v9293 = vunpack.c.l.b16 %v9158
          %v9294 = vunpack.c.l.b16 %v9159
          %v9295 = vunpack.c.l.b16 %v9160
          %v9296 = vunpack.c.l.b16 %v9161
          %v9297 = vunpack.c.l.b16 %v9162
          %v9298 = vunpack.c.l.b16 %v9163
          %v9299 = vunpack.c.l.b16 %v9164
          %v9300 = vunpack.c.l.b16 %v9165
          %v9301 = vunpack.c.l.b16 %v9166
          %v9302 = vunpack.c.l.b16 %v9167
          %v9303 = vunpack.c.l.b16 %v9168
          %v9304 = vunpack.c.l.b16 %v9169
          %v9305 = vunpack.c.l.b16 %v9170
          %v9306 = vunpack.c.l.b16 %v9171
          %v9307 = vunpack.c.l.b16 %v9172
          %v9308 = vunpack.c.l.b16 %v9173
          %v9309 = vunpack.c.l.b16 %v9174
          %v9310 = vunpack.c.l.b16 %v9175
          %v9311 = vunpack.c.l.b16 %v9176
          %v9312 = vunpack.c.l.b16 %v9177
          %v9313 = vunpack.c.l.b16 %v9178
          %v9314 = vunpack.c.l.b16 %v9179
          %v9315 = vunpack.c.l.b16 %v9180
          %v9316 = vunpack.c.l.b16 %v9181
          %v9317 = vunpack.c.l.b16 %v9182
          %v9318 = vunpack.c.l.b16 %v9183
          %v9319 = vunpack.c.l.b16 %v9184
          %v9320 = vunpack.c.l.b16 %v9185
          %v9321 = vunpack.c.l.b16 %v9186
          %v9322 = vunpack.c.l.b16 %v9187
          %v9323 = vunpack.c.l.b16 %v9188
          %v9324 = vunpack.c.l.b16 %v9189
          %v9325 = vunpack.c.l.b16 %v9190
          %v9326 = vpack.c.b16 %v9263, %v9262
          %v9327 = vpack.c.b16 %v9265, %v9264
          %v9328 = vpack.c.b16 %v9267, %v9266
          %v9329 = vpack.c.b16 %v9269, %v9268
          %v9330 = vpack.c.b16 %v9271, %v9270
          %v9331 = vpack.c.b16 %v9273, %v9272
          %v9332 = vpack.c.b16 %v9275, %v9274
          %v9333 = vpack.c.b16 %v9277, %v9276
          %v9334 = vpack.c.b16 %v9279, %v9278
          %v9335 = vpack.c.b16 %v9281, %v9280
          %v9336 = vpack.c.b16 %v9283, %v9282
          %v9337 = vpack.c.b16 %v9285, %v9284
          %v9338 = vpack.c.b16 %v9287, %v9286
          %v9339 = vpack.c.b16 %v9289, %v9288
          %v9340 = vpack.c.b16 %v9291, %v9290
          %v9341 = vpack.c.b16 %v9293, %v9292
          %v9342 = vpack.c.b16 %v9295, %v9294
          %v9343 = vpack.c.b16 %v9297, %v9296
          %v9344 = vpack.c.b16 %v9299, %v9298
          %v9345 = vpack.c.b16 %v9301, %v9300
          %v9346 = vpack.c.b16 %v9303, %v9302
          %v9347 = vpack.c.b16 %v9305, %v9304
          %v9348 = vpack.c.b16 %v9307, %v9306
          %v9349 = vpack.c.b16 %v9309, %v9308
          %v9350 = vpack.c.b16 %v9311, %v9310
          %v9351 = vpack.c.b16 %v9313, %v9312
          %v9352 = vpack.c.b16 %v9315, %v9314
          %v9353 = vpack.c.b16 %v9317, %v9316
          %v9354 = vpack.c.b16 %v9319, %v9318
          %v9355 = vpack.c.b16 %v9321, %v9320
          %v9356 = vpack.c.b16 %v9323, %v9322
          %v9357 = vpack.c.b16 %v9325, %v9324
          %9390 = vmatprep.subr.bf16.mxu0 0
          %9391 = vmatpush1.bf16.msra.mxu0 %v9333
          %9392 = vmatprep.subr.bf16.mxu0 0
          %9393 = vmatpush1.bf16.msra.mxu0 %v9332
          %9394 = vmatprep.subr.bf16.mxu0 0
          %9395 = vmatpush1.bf16.msra.mxu0 %v9331
          %9396 = vmatprep.subr.bf16.mxu0 0
          %9397 = vmatpush1.bf16.msra.mxu0 %v9330
          %9398 = vmatprep.subr.bf16.mxu0 0
          %9399 = vmatpush1.bf16.msra.mxu0 %v9329
          %9400 = vmatprep.subr.bf16.mxu0 0
          %9401 = vmatpush1.bf16.msra.mxu0 %v9328
          %9402 = vmatprep.subr.bf16.mxu0 0
          %9403 = vmatpush1.bf16.msra.mxu0 %v9327
          %9404 = vmatprep.subr.bf16.mxu0 0
          %9405 = vmatpush1.bf16.msra.mxu0 %v9326
          %9406 = vmatprep.subr.bf16.mxu0 0
          %9407 = vmatpush2.bf16.msra.mxu0 %v9341
          %9408 = vmatprep.subr.bf16.mxu0 0
          %9409 = vmatpush2.bf16.msra.mxu0 %v9340
          %9410 = vmatprep.subr.bf16.mxu0 0
          %9411 = vmatpush2.bf16.msra.mxu0 %v9339
          %9412 = vmatprep.subr.bf16.mxu0 0
          %9413 = vmatpush2.bf16.msra.mxu0 %v9338
          %9414 = vmatprep.subr.bf16.mxu0 0
          %9415 = vmatpush2.bf16.msra.mxu0 %v9337
          %9416 = vmatprep.subr.bf16.mxu0 0
          %9417 = vmatpush2.bf16.msra.mxu0 %v9336
          %9418 = vmatprep.subr.bf16.mxu0 0
          %9419 = vmatpush2.bf16.msra.mxu0 %v9335
          %9420 = vmatprep.subr.bf16.mxu0 0
          %9421 = vmatpush2.bf16.msra.mxu0 %v9334
          %9422 = vmatprep.mubr.bf16.mxu0 %v9124
          %9423 = vmatmul.mubr.bf16.gmra.mxu0 %v9123
          %v9424 = vpop.f32.mrf.mxu0
          %v9425 = vadd.f32 %v9196, %v9424
          %v9426 = vpop.f32.mrf.mxu0
          %v9427 = vpop.f32.mrf.mxu0
          %v9428 = vpop.f32.mrf.mxu0
          %9429 = vdwg.mxu0
          %9430 = vmatprep.subr.bf16.mxu0 0
          %9431 = vmatpush1.bf16.msra.mxu0 %v9349
          %9432 = vmatprep.subr.bf16.mxu0 0
          %9433 = vmatpush1.bf16.msra.mxu0 %v9348
          %9434 = vmatprep.subr.bf16.mxu0 0
          %9435 = vmatpush1.bf16.msra.mxu0 %v9347
          %9436 = vmatprep.subr.bf16.mxu0 0
          %9437 = vmatpush1.bf16.msra.mxu0 %v9346
          %9438 = vmatprep.subr.bf16.mxu0 0
          %9439 = vmatpush1.bf16.msra.mxu0 %v9345
          %9440 = vmatprep.subr.bf16.mxu0 0
          %9441 = vmatpush1.bf16.msra.mxu0 %v9344
          %9442 = vmatprep.subr.bf16.mxu0 0
          %9443 = vmatpush1.bf16.msra.mxu0 %v9343
          %9444 = vmatprep.subr.bf16.mxu0 0
          %9445 = vmatpush1.bf16.msra.mxu0 %v9342
          %9446 = vmatprep.subr.bf16.mxu0 0
          %9447 = vmatpush2.bf16.msra.mxu0 %v9357
          %9448 = vmatprep.subr.bf16.mxu0 0
          %9449 = vmatpush2.bf16.msra.mxu0 %v9356
          %9450 = vmatprep.subr.bf16.mxu0 0
          %9451 = vmatpush2.bf16.msra.mxu0 %v9355
          %9452 = vmatprep.subr.bf16.mxu0 0
          %9453 = vmatpush2.bf16.msra.mxu0 %v9354
          %9454 = vmatprep.subr.bf16.mxu0 0
          %9455 = vmatpush2.bf16.msra.mxu0 %v9353
          %9456 = vmatprep.subr.bf16.mxu0 0
          %9457 = vmatpush2.bf16.msra.mxu0 %v9352
          %9458 = vmatprep.subr.bf16.mxu0 0
          %9459 = vmatpush2.bf16.msra.mxu0 %v9351
          %9460 = vmatprep.subr.bf16.mxu0 0
          %9461 = vmatpush2.bf16.msra.mxu0 %v9350
          %9462 = vmatprep.mubr.bf16.mxu0 %v9126
          %9463 = vmatmul.mubr.bf16.gmra.mxu0 %v9125
          %v9464 = vpop.f32.mrf.mxu0
          %v9465 = vadd.f32 %v9425, %v9464
          %v9466 = vpop.f32.mrf.mxu0
          %v9467 = vpop.f32.mrf.mxu0
          %v9468 = vpop.f32.mrf.mxu0
          %9469 = vdwg.mxu0
          %v9470 = vlaneseq
          %v9471 = vand.u32 %v9470, 127
          %vm9472 = vcmp.lt.s32.totalorder %v9471, 8
          %v9473 = vsel %vm9472, %v9465, -1e+30
          %vm9474 = vcmask 1041408
          %v9475 = vsel %vm9474, %v9473, -inf
          %9476 = vmax.xlane.f32.xlu0 %v9475
          %v9477 = vpop.xlane.xlu0 %9476
          %v9478 = vsub.f32 %v9473, %v9477
          %v9479 = vmul.f32 %v9478, 1.442695
          %v9480 = vpow.pop %v9479
          %v9481 = vsel %vm9474, %v9480, 0.0
          %9482 = vadd.xlane.f32.xlu0 %v9481
          %v9483 = vpop.xlane.xlu0 %9482
          %v9484 = vlog2.pop %v9483
          %v9485 = vmul.f32 %v9484, 0.6931472
          %v9486 = vsub.f32 %v9465, %v9477
          %v9487 = vsub.f32 %v9486, %v9485
          %v9488 = vmax.f32 %v9465, 0.0
          %v9489 = vsel %vm9472, %v9487, %v9488
          %9490 = vst [vmem:[#allocation6] sm:$0x3] %v9489
        $region131: #{fishnet_forward.1} parent=84 // pred_fallthru
          _
        // Predicated region
        $region132: #{fishnet_forward.1} parent=84 // pred_check
          %p9491 = pneg %p185
        $region133: #{fishnet_forward.1} parent=84 // pred_check_branch
          %9493 = sbr.rel (%p9491) target = $region135
        $region134: #{fishnet_forward.1} parent=84 // pred_region
          %s9495 = ssub.s32 32, 32
          %9496 = vsyncadd [#allocation7], %s9495
          %s9498 = sshll.u32 [#allocation6], 4
          %s9499 = int_to_ptr.vmem [resolvable:$true] %s9498
          %9501 = dma.vmem_to_hbm [thread:$0]  %s9499, 32, %s8, [#allocation7]
        $region135: #{fishnet_forward.1} parent=84 // pred_fallthru
          _
        // Predicated region
        $region136: #{fishnet_forward.1} parent=84 // pred_check
          %p9502 = pneg %p185
        $region137: #{fishnet_forward.1} parent=84 // pred_check_branch
          %9504 = sbr.rel (%p9502) target = $region139
        $region138: #{fishnet_forward.1} parent=84 // pred_region
          %9505 = dma.done [#allocation7], 32
        $region139: #{fishnet_forward.1} parent=84 // pred_fallthru
          _
      $region85: #{fishnet_forward.1} parent=5 // pred_fallthru
        _
      %p9506 = scmp.le.s32.totalorder 2, %s15
      // Predicated region
      $region140: #{fishnet_forward.1} parent=5 // pred_check
        %p9507 = pneg %p9506
      $region141: #{fishnet_forward.1} parent=5 // pred_check_branch
        %9509 = sbr.rel (%p9507) target = $region143
      $region142: #{fishnet_forward.1} parent=5 // pred_region
        %s9510 = ssub.s32 %s15, 2
      $region143: #{fishnet_forward.1} parent=5 // pred_fallthru
        _
    $region6: #{fishnet_forward.1} parent=1 // loop_footer
      %s19 = sadd.s32 1, %s15
    $region7: #{fishnet_forward.1} parent=1 // loop_footer_branch
      %14 = sbr.rel target = $region3
    $region8: #{fishnet_forward.1} parent=1 // loop_exit
      _
    %9511 = vsyncpa [#allocation7], 1
    %s9512 = scalar_lea.sflag [#allocation7], 1
    %9513 = vsyncpa %s9512, 1
  %9514 = vsyncmov [#allocation4]
  %s9515 = vpop.sfrf %9514
  %p9516 = scmp.eq.s32.totalorder %s9515, 0
  %p9517 = pneg %p9516
  %9519 = shalt.err (%p9517)

</llo_original>
